<compile_context>
chip_gen: v7x
topology: tpu7x:2x2x1
jax: 0.10.0
libtpu: 0.0.40
codegen_flags: <defaults>
</compile_context>

<pallas_src>
import jax
import jax.numpy as jnp
from jax import lax
from jax.experimental import pallas as pl
from jax.experimental.pallas import tpu as pltpu


# ----------------------------------------------------------------------------
# small helpers (traced inside kernels)
# ----------------------------------------------------------------------------
def _even_odd_cols(n_in, n_out, parity):
    """(n_in, n_out) 0/1 selection matrix: S[i, k] = 1 iff i == 2*k + parity."""
    i = lax.broadcasted_iota(jnp.int32, (n_in, n_out), 0)
    k = lax.broadcasted_iota(jnp.int32, (n_in, n_out), 1)
    return jnp.where(i == 2 * k + parity, 1.0, 0.0).astype(jnp.float32)


def _even_odd_rows(n_out, n_in, parity):
    """(n_out, n_in) 0/1 selection matrix: S[p, i] = 1 iff i == 2*p + parity."""
    p = lax.broadcasted_iota(jnp.int32, (n_out, n_in), 0)
    i = lax.broadcasted_iota(jnp.int32, (n_out, n_in), 1)
    return jnp.where(i == 2 * p + parity, 1.0, 0.0).astype(jnp.float32)


def _dot(a, b):
    return jnp.dot(a, b, preferred_element_type=jnp.float32)


# ----------------------------------------------------------------------------
# fused conv2d(valid) -> +bias -> ReLU -> 2x2 max-pool kernel
# (one batch element per grid step; batch dim squeezed out of the refs)
# ----------------------------------------------------------------------------
def _conv_relu_pool_kernel(x_ref, w_ref, b_ref, o_ref):
    # x_ref: (Cin, H, W)              f32 VMEM
    # w_ref: (Cout*Cin*KH*KW,)        f32 SMEM (PyTorch OIHW order, flattened)
    # b_ref: (Cout,)                  f32 SMEM
    # o_ref: (Cout, Ho//2, Wo//2)     f32 VMEM
    c_in, h_in, w_in = x_ref.shape
    c_out, h_p, w_p = o_ref.shape
    h_out, w_out = 2 * h_p, 2 * w_p
    k_h, k_w = h_in - h_out + 1, w_in - w_out + 1
    k_taps = c_in * k_h * k_w

    # 0/1 even/odd selection matrices: the 2x2 max-pool becomes two MXU
    # matmuls per direction + elementwise max (the MXU is otherwise idle).
    se_w = _even_odd_cols(w_out, w_p, 0)     # (Wo, Wp)
    so_w = _even_odd_cols(w_out, w_p, 1)
    se_h = _even_odd_rows(h_p, h_out, 0)     # (Hp, Ho)
    so_h = _even_odd_rows(h_p, h_out, 1)

    # In-kernel im2col: the K shifted input windows, loaded once and shared by
    # every output channel.  They stay in VMEM / vregs (never touch HBM).
    taps = []
    for ci in range(c_in):
        for i in range(k_h):
            for j in range(k_w):
                taps.append(x_ref[ci, i:i + h_out, j:j + w_out])

    def channel_body(co, carry):
        base = co * k_taps
        acc = taps[0] * w_ref[base]                      # scalar * vector (VPU)
        for t in range(1, k_taps):
            acc = acc + taps[t] * w_ref[base + t]
        r = jnp.maximum(acc + b_ref[co], 0.0)            # bias + ReLU
        wpool = jnp.maximum(_dot(r, se_w), _dot(r, so_w))            # (Ho, Wp)
        pooled = jnp.maximum(_dot(se_h, wpool), _dot(so_h, wpool))   # (Hp, Wp)
        o_ref[co] = pooled
        return carry

    lax.fori_loop(0, c_out, channel_body, 0)


def conv_relu_pool(x, w, b):
    """pool2x2(relu(conv2d_valid(x, w) + b)).  x: (B,Cin,H,W), w: (Cout,Cin,kh,kw)."""
    batch, c_in, h_in, w_in = x.shape
    c_out, _, k_h, k_w = w.shape
    h_out, w_out = h_in - k_h + 1, w_in - k_w + 1
    h_p, w_p = h_out // 2, w_out // 2
    n_w = c_out * c_in * k_h * k_w
    return pl.pallas_call(
        _conv_relu_pool_kernel,
        out_shape=jax.ShapeDtypeStruct((batch, c_out, h_p, w_p), jnp.float32),
        grid=(batch,),
        in_specs=[
            pl.BlockSpec((None, c_in, h_in, w_in), lambda bi: (bi, 0, 0, 0)),
            pl.BlockSpec((n_w,), lambda bi: (0,),
                         memory_space=pltpu.MemorySpace.SMEM),
            pl.BlockSpec((c_out,), lambda bi: (0,),
                         memory_space=pltpu.MemorySpace.SMEM),
        ],
        out_specs=pl.BlockSpec((None, c_out, h_p, w_p),
                               lambda bi: (bi, 0, 0, 0)),
        compiler_params=pltpu.CompilerParams(
            dimension_semantics=("parallel",)),
    )(x, w.reshape(-1), b)


# ----------------------------------------------------------------------------
# fused fc1 -> ReLU -> fc2 -> ReLU -> fc3 kernel (single pallas_call)
# ----------------------------------------------------------------------------
def _fc_head_kernel(x_ref, w1_ref, b1_ref, w2_ref, b2_ref, w3_ref, b3_ref,
                    o_ref):
    h1 = jnp.maximum(_dot(x_ref[...], w1_ref[...]) + b1_ref[...], 0.0)
    h2 = jnp.maximum(_dot(h1, w2_ref[...]) + b2_ref[...], 0.0)
    o_ref[...] = _dot(h2, w3_ref[...]) + b3_ref[...]


def fc_head(x_flat, w1t, b1, w2t, b2, w3t, b3):
    batch = x_flat.shape[0]
    n_out = w3t.shape[1]
    vmem = pl.BlockSpec(memory_space=pltpu.MemorySpace.VMEM)
    return pl.pallas_call(
        _fc_head_kernel,
        out_shape=jax.ShapeDtypeStruct((batch, n_out), jnp.float32),
        in_specs=[vmem] * 7,
        out_specs=vmem,
    )(x_flat, w1t, b1, w2t, b2, w3t, b3)


# ----------------------------------------------------------------------------
# CNN forward (mirrors the PyTorch module; Print layer is a host-side no-op)
# ----------------------------------------------------------------------------
def cnn_forward(params, x):
    # x = self.pool(F.relu(self.conv1(x)))
    a1 = conv_relu_pool(x, params["conv1_w"], params["conv1_b"])    # (B,6,28,46)
    # x = self.pool(F.relu(self.conv2(x)))
    a2 = conv_relu_pool(a1, params["conv2_w"], params["conv2_b"])   # (B,16,12,21)
    # x = x.view(-1, 16 * 12 * 21)   (NCHW row-major flatten; free reshape)
    feat = a2.reshape(a2.shape[0], -1)                              # (B, 4032)
    # x = F.relu(fc1(x)); x = F.relu(fc2(x)); x = fc3(x)  -- one fused kernel
    return fc_head(feat,
                   params["fc1_wt"], params["fc1_b2"],
                   params["fc2_wt"], params["fc2_b2"],
                   params["fc3_wt"], params["fc3_b2"])


def init_params(key, num_input_time_steps=1):
    """Deterministic synthetic init (PyTorch-style uniform(-1/sqrt(fan_in), ...))."""
    ks = jax.random.split(key, 10)

    def u(k, shape, fan_in):
        bound = 1.0 / float(fan_in) ** 0.5
        return jax.random.uniform(k, shape, jnp.float32, -bound, bound)

    return {
        "conv1_w": u(ks[0], (6, num_input_time_steps, 3, 3), num_input_time_steps * 9),
        "conv1_b": u(ks[1], (6,), num_input_time_steps * 9),
        "conv2_w": u(ks[2], (16, 6, 5, 5), 6 * 25),
        "conv2_b": u(ks[3], (16,), 6 * 25),
        "fc1_w":   u(ks[4], (24, 16 * 12 * 21), 16 * 12 * 21),
        "fc1_b":   u(ks[5], (24,), 16 * 12 * 21),
        "fc2_w":   u(ks[6], (20, 24), 24),
        "fc2_b":   u(ks[7], (20,), 24),
        "fc3_w":   u(ks[8], (1, 20), 20),
        "fc3_b":   u(ks[9], (1,), 20),
    }


def prepare_params(p):
    """One-time, outside-jit parameter prep: pre-transposed fc weights, 2-D biases."""
    q = dict(p)
    q["fc1_wt"] = p["fc1_w"].T                 # (4032, 24)
    q["fc2_wt"] = p["fc2_w"].T                 # (24, 20)
    q["fc3_wt"] = p["fc3_w"].T                 # (20, 1)
    q["fc1_b2"] = p["fc1_b"].reshape(1, -1)
    q["fc2_b2"] = p["fc2_b"].reshape(1, -1)
    q["fc3_b2"] = p["fc3_b"].reshape(1, -1)
    return q


# ----------------------------------------------------------------------------
# plain-JAX reference (for an in-script sanity check only)
# ----------------------------------------------------------------------------
def _reference_forward(params, x):
    hi = lax.Precision.HIGHEST

    def conv(z, w, b):
        y = lax.conv_general_dilated(
            z, w, window_strides=(1, 1), padding="VALID",
            dimension_numbers=("NCHW", "OIHW", "NCHW"), precision=hi)
        return y + b[None, :, None, None]

    def pool(z):
        return lax.reduce_window(z, -jnp.inf, lax.max,
                                 (1, 1, 2, 2), (1, 1, 2, 2), "VALID")

    y = pool(jnp.maximum(conv(x, params["conv1_w"], params["conv1_b"]), 0.0))
    y = pool(jnp.maximum(conv(y, params["conv2_w"], params["conv2_b"]), 0.0))
    y = y.reshape(y.shape[0], -1)
    y = jnp.maximum(jnp.dot(y, params["fc1_w"].T, precision=hi) + params["fc1_b"], 0.0)
    y = jnp.maximum(jnp.dot(y, params["fc2_w"].T, precision=hi) + params["fc2_b"], 0.0)
    return jnp.dot(y, params["fc3_w"].T, precision=hi) + params["fc3_b"]


if __name__ == "__main__":
    key = jax.random.PRNGKey(0)
    pkey, xkey = jax.random.split(key)

    params = prepare_params(init_params(pkey, num_input_time_steps=1))

    # Batch = 2, channels = num_input_time_steps = 1.  Spatial (58, 94) is
    # dictated by fc1's fixed feature count 16*12*21.
    x = jax.random.normal(xkey, (2, 1, 58, 94), dtype=jnp.float32)

    out = jax.jit(cnn_forward)(params, x)
    out = jax.block_until_ready(out)

    assert out.shape == (2, 1), out.shape
    assert bool(jnp.all(jnp.isfinite(out)))

    # Sanity check against a plain-XLA reference (loose tolerance: the only
    # inexactness is default bf16-pass MXU rounding on tiny matmuls).
    ref = jax.jit(_reference_forward)(params, x)
    ref = jax.block_until_ready(ref)
    assert jnp.allclose(out, ref, rtol=2e-2, atol=2e-2)

    print("KERNEL_OK")
</pallas_src>

<mosaic_0001>
module attributes {stable_mosaic.version = 11 : i64} {
  func.func @_conv_relu_pool_kernel(%arg0: i32, %arg1: memref<1x1x58x94xf32, #tpu.memory_space<vmem>>, %arg2: memref<54xf32, #tpu.memory_space<smem>>, %arg3: memref<6xf32, #tpu.memory_space<smem>>, %arg4: memref<1x6x28x46xf32, #tpu.memory_space<vmem>>) attributes {dimension_semantics = [#tpu.dimension_semantics<parallel>], iteration_bounds = array<i64: 2>, scalar_prefetch = 0 : i64, scratch_operands = 0 : i64, tpu.core_type = #tpu.core_type<tc>, window_params = [{transform_indices = @transform_0, window_bounds = array<i64: 1, 1, 58, 94>}, {transform_indices = @transform_1, window_bounds = array<i64: 54>}, {transform_indices = @transform_2, window_bounds = array<i64: 6>}, {transform_indices = @transform_3, window_bounds = array<i64: 1, 6, 28, 46>}]} {
    %0 = tpu.iota {dimensions = array<i32: 0>} : vector<92x46xi32>
    %1 = tpu.iota {dimensions = array<i32: 1>} : vector<92x46xi32>
    %c2_i32 = arith.constant 2 : i32
    %2 = vector.broadcast %c2_i32 : i32 to vector<92x46xi32>
    %3 = arith.muli %2, %1 : vector<92x46xi32>
    %c0_i32 = arith.constant 0 : i32
    %4 = vector.broadcast %c0_i32 : i32 to vector<92x46xi32>
    %5 = arith.addi %3, %4 : vector<92x46xi32>
    %6 = arith.cmpi eq, %0, %5 : vector<92x46xi32>
    %cst = arith.constant 1.000000e+00 : f32
    %cst_0 = arith.constant 0.000000e+00 : f32
    %7 = vector.broadcast %cst : f32 to vector<92x46xf32>
    %8 = vector.broadcast %cst_0 : f32 to vector<92x46xf32>
    %9 = arith.select %6, %7, %8 : vector<92x46xi1>, vector<92x46xf32>
    %10 = tpu.iota {dimensions = array<i32: 0>} : vector<92x46xi32>
    %11 = tpu.iota {dimensions = array<i32: 1>} : vector<92x46xi32>
    %c2_i32_1 = arith.constant 2 : i32
    %12 = vector.broadcast %c2_i32_1 : i32 to vector<92x46xi32>
    %13 = arith.muli %12, %11 : vector<92x46xi32>
    %c1_i32 = arith.constant 1 : i32
    %14 = vector.broadcast %c1_i32 : i32 to vector<92x46xi32>
    %15 = arith.addi %13, %14 : vector<92x46xi32>
    %16 = arith.cmpi eq, %10, %15 : vector<92x46xi32>
    %cst_2 = arith.constant 1.000000e+00 : f32
    %cst_3 = arith.constant 0.000000e+00 : f32
    %17 = vector.broadcast %cst_2 : f32 to vector<92x46xf32>
    %18 = vector.broadcast %cst_3 : f32 to vector<92x46xf32>
    %19 = arith.select %16, %17, %18 : vector<92x46xi1>, vector<92x46xf32>
    %20 = tpu.iota {dimensions = array<i32: 0>} : vector<28x56xi32>
    %21 = tpu.iota {dimensions = array<i32: 1>} : vector<28x56xi32>
    %c2_i32_4 = arith.constant 2 : i32
    %22 = vector.broadcast %c2_i32_4 : i32 to vector<28x56xi32>
    %23 = arith.muli %22, %20 : vector<28x56xi32>
    %c0_i32_5 = arith.constant 0 : i32
    %24 = vector.broadcast %c0_i32_5 : i32 to vector<28x56xi32>
    %25 = arith.addi %23, %24 : vector<28x56xi32>
    %26 = arith.cmpi eq, %21, %25 : vector<28x56xi32>
    %cst_6 = arith.constant 1.000000e+00 : f32
    %cst_7 = arith.constant 0.000000e+00 : f32
    %27 = vector.broadcast %cst_6 : f32 to vector<28x56xf32>
    %28 = vector.broadcast %cst_7 : f32 to vector<28x56xf32>
    %29 = arith.select %26, %27, %28 : vector<28x56xi1>, vector<28x56xf32>
    %30 = tpu.iota {dimensions = array<i32: 0>} : vector<28x56xi32>
    %31 = tpu.iota {dimensions = array<i32: 1>} : vector<28x56xi32>
    %c2_i32_8 = arith.constant 2 : i32
    %32 = vector.broadcast %c2_i32_8 : i32 to vector<28x56xi32>
    %33 = arith.muli %32, %30 : vector<28x56xi32>
    %c1_i32_9 = arith.constant 1 : i32
    %34 = vector.broadcast %c1_i32_9 : i32 to vector<28x56xi32>
    %35 = arith.addi %33, %34 : vector<28x56xi32>
    %36 = arith.cmpi eq, %31, %35 : vector<28x56xi32>
    %cst_10 = arith.constant 1.000000e+00 : f32
    %cst_11 = arith.constant 0.000000e+00 : f32
    %37 = vector.broadcast %cst_10 : f32 to vector<28x56xf32>
    %38 = vector.broadcast %cst_11 : f32 to vector<28x56xf32>
    %39 = arith.select %36, %37, %38 : vector<28x56xi1>, vector<28x56xf32>
    %c0 = arith.constant 0 : index
    %c0_12 = arith.constant 0 : index
    %c0_13 = arith.constant 0 : index
    %c0_14 = arith.constant 0 : index
    %40 = vector.load %arg1[%c0, %c0_12, %c0_13, %c0_14] : memref<1x1x58x94xf32, #tpu.memory_space<vmem>>, vector<1x1x56x92xf32>
    %41 = vector.shape_cast %40 : vector<1x1x56x92xf32> to vector<56x92xf32>
    %c0_15 = arith.constant 0 : index
    %c0_16 = arith.constant 0 : index
    %c0_17 = arith.constant 0 : index
    %c1 = arith.constant 1 : index
    %42 = vector.load %arg1[%c0_15, %c0_16, %c0_17, %c1] : memref<1x1x58x94xf32, #tpu.memory_space<vmem>>, vector<1x1x56x92xf32>
    %43 = vector.shape_cast %42 : vector<1x1x56x92xf32> to vector<56x92xf32>
    %c0_18 = arith.constant 0 : index
    %c0_19 = arith.constant 0 : index
    %c0_20 = arith.constant 0 : index
    %c2 = arith.constant 2 : index
    %44 = vector.load %arg1[%c0_18, %c0_19, %c0_20, %c2] : memref<1x1x58x94xf32, #tpu.memory_space<vmem>>, vector<1x1x56x92xf32>
    %45 = vector.shape_cast %44 : vector<1x1x56x92xf32> to vector<56x92xf32>
    %c0_21 = arith.constant 0 : index
    %c0_22 = arith.constant 0 : index
    %c1_23 = arith.constant 1 : index
    %c0_24 = arith.constant 0 : index
    %46 = vector.load %arg1[%c0_21, %c0_22, %c1_23, %c0_24] : memref<1x1x58x94xf32, #tpu.memory_space<vmem>>, vector<1x1x56x92xf32>
    %47 = vector.shape_cast %46 : vector<1x1x56x92xf32> to vector<56x92xf32>
    %c0_25 = arith.constant 0 : index
    %c0_26 = arith.constant 0 : index
    %c1_27 = arith.constant 1 : index
    %c1_28 = arith.constant 1 : index
    %48 = vector.load %arg1[%c0_25, %c0_26, %c1_27, %c1_28] : memref<1x1x58x94xf32, #tpu.memory_space<vmem>>, vector<1x1x56x92xf32>
    %49 = vector.shape_cast %48 : vector<1x1x56x92xf32> to vector<56x92xf32>
    %c0_29 = arith.constant 0 : index
    %c0_30 = arith.constant 0 : index
    %c1_31 = arith.constant 1 : index
    %c2_32 = arith.constant 2 : index
    %50 = vector.load %arg1[%c0_29, %c0_30, %c1_31, %c2_32] : memref<1x1x58x94xf32, #tpu.memory_space<vmem>>, vector<1x1x56x92xf32>
    %51 = vector.shape_cast %50 : vector<1x1x56x92xf32> to vector<56x92xf32>
    %c0_33 = arith.constant 0 : index
    %c0_34 = arith.constant 0 : index
    %c2_35 = arith.constant 2 : index
    %c0_36 = arith.constant 0 : index
    %52 = vector.load %arg1[%c0_33, %c0_34, %c2_35, %c0_36] : memref<1x1x58x94xf32, #tpu.memory_space<vmem>>, vector<1x1x56x92xf32>
    %53 = vector.shape_cast %52 : vector<1x1x56x92xf32> to vector<56x92xf32>
    %c0_37 = arith.constant 0 : index
    %c0_38 = arith.constant 0 : index
    %c2_39 = arith.constant 2 : index
    %c1_40 = arith.constant 1 : index
    %54 = vector.load %arg1[%c0_37, %c0_38, %c2_39, %c1_40] : memref<1x1x58x94xf32, #tpu.memory_space<vmem>>, vector<1x1x56x92xf32>
    %55 = vector.shape_cast %54 : vector<1x1x56x92xf32> to vector<56x92xf32>
    %c0_41 = arith.constant 0 : index
    %c0_42 = arith.constant 0 : index
    %c2_43 = arith.constant 2 : index
    %c2_44 = arith.constant 2 : index
    %56 = vector.load %arg1[%c0_41, %c0_42, %c2_43, %c2_44] : memref<1x1x58x94xf32, #tpu.memory_space<vmem>>, vector<1x1x56x92xf32>
    %57 = vector.shape_cast %56 : vector<1x1x56x92xf32> to vector<56x92xf32>
    %c0_i32_45 = arith.constant 0 : i32
    %c6_i32 = arith.constant 6 : i32
    %58 = arith.addi %c0_i32_45, %c6_i32 : i32
    %c1_i32_46 = arith.constant 1 : i32
    scf.for %arg5 = %c0_i32_45 to %58 step %c1_i32_46  : i32 {
      %c9_i32 = arith.constant 9 : i32
      %59 = arith.muli %arg5, %c9_i32 : i32
      %60 = arith.index_cast %59 : i32 to index
      %61 = memref.load %arg2[%60] : memref<54xf32, #tpu.memory_space<smem>>
      %62 = vector.broadcast %61 : f32 to vector<56x92xf32>
      %63 = arith.mulf %41, %62 : vector<56x92xf32>
      %c1_i32_48 = arith.constant 1 : i32
      %64 = arith.addi %59, %c1_i32_48 : i32
      %65 = arith.index_cast %64 : i32 to index
      %66 = memref.load %arg2[%65] : memref<54xf32, #tpu.memory_space<smem>>
      %67 = vector.broadcast %66 : f32 to vector<56x92xf32>
      %68 = arith.mulf %43, %67 : vector<56x92xf32>
      %69 = arith.addf %63, %68 : vector<56x92xf32>
      %c2_i32_49 = arith.constant 2 : i32
      %70 = arith.addi %59, %c2_i32_49 : i32
      %71 = arith.index_cast %70 : i32 to index
      %72 = memref.load %arg2[%71] : memref<54xf32, #tpu.memory_space<smem>>
      %73 = vector.broadcast %72 : f32 to vector<56x92xf32>
      %74 = arith.mulf %45, %73 : vector<56x92xf32>
      %75 = arith.addf %69, %74 : vector<56x92xf32>
      %c3_i32 = arith.constant 3 : i32
      %76 = arith.addi %59, %c3_i32 : i32
      %77 = arith.index_cast %76 : i32 to index
      %78 = memref.load %arg2[%77] : memref<54xf32, #tpu.memory_space<smem>>
      %79 = vector.broadcast %78 : f32 to vector<56x92xf32>
      %80 = arith.mulf %47, %79 : vector<56x92xf32>
      %81 = arith.addf %75, %80 : vector<56x92xf32>
      %c4_i32 = arith.constant 4 : i32
      %82 = arith.addi %59, %c4_i32 : i32
      %83 = arith.index_cast %82 : i32 to index
      %84 = memref.load %arg2[%83] : memref<54xf32, #tpu.memory_space<smem>>
      %85 = vector.broadcast %84 : f32 to vector<56x92xf32>
      %86 = arith.mulf %49, %85 : vector<56x92xf32>
      %87 = arith.addf %81, %86 : vector<56x92xf32>
      %c5_i32 = arith.constant 5 : i32
      %88 = arith.addi %59, %c5_i32 : i32
      %89 = arith.index_cast %88 : i32 to index
      %90 = memref.load %arg2[%89] : memref<54xf32, #tpu.memory_space<smem>>
      %91 = vector.broadcast %90 : f32 to vector<56x92xf32>
      %92 = arith.mulf %51, %91 : vector<56x92xf32>
      %93 = arith.addf %87, %92 : vector<56x92xf32>
      %c6_i32_50 = arith.constant 6 : i32
      %94 = arith.addi %59, %c6_i32_50 : i32
      %95 = arith.index_cast %94 : i32 to index
      %96 = memref.load %arg2[%95] : memref<54xf32, #tpu.memory_space<smem>>
      %97 = vector.broadcast %96 : f32 to vector<56x92xf32>
      %98 = arith.mulf %53, %97 : vector<56x92xf32>
      %99 = arith.addf %93, %98 : vector<56x92xf32>
      %c7_i32 = arith.constant 7 : i32
      %100 = arith.addi %59, %c7_i32 : i32
      %101 = arith.index_cast %100 : i32 to index
      %102 = memref.load %arg2[%101] : memref<54xf32, #tpu.memory_space<smem>>
      %103 = vector.broadcast %102 : f32 to vector<56x92xf32>
      %104 = arith.mulf %55, %103 : vector<56x92xf32>
      %105 = arith.addf %99, %104 : vector<56x92xf32>
      %c8_i32 = arith.constant 8 : i32
      %106 = arith.addi %59, %c8_i32 : i32
      %107 = arith.index_cast %106 : i32 to index
      %108 = memref.load %arg2[%107] : memref<54xf32, #tpu.memory_space<smem>>
      %109 = vector.broadcast %108 : f32 to vector<56x92xf32>
      %110 = arith.mulf %57, %109 : vector<56x92xf32>
      %111 = arith.addf %105, %110 : vector<56x92xf32>
      %112 = arith.index_cast %arg5 : i32 to index
      %113 = memref.load %arg3[%112] : memref<6xf32, #tpu.memory_space<smem>>
      %114 = vector.broadcast %113 : f32 to vector<56x92xf32>
      %115 = arith.addf %111, %114 : vector<56x92xf32>
      %cst_51 = arith.constant 0.000000e+00 : f32
      %116 = vector.broadcast %cst_51 : f32 to vector<56x92xf32>
      %117 = arith.maximumf %115, %116 : vector<56x92xf32>
      %cst_52 = arith.constant dense<0.000000e+00> : vector<56x46xf32>
      %118 = tpu.matmul %117, %9, %cst_52 {dimension_numbers = #tpu.dot_dimension_numbers<[1], [0], [0], [1], [0, 0, 1, 1], [], []>} : vector<56x92xf32>, vector<92x46xf32>, vector<56x46xf32> -> vector<56x46xf32>
      %cst_53 = arith.constant dense<0.000000e+00> : vector<56x46xf32>
      %119 = tpu.matmul %117, %19, %cst_53 {dimension_numbers = #tpu.dot_dimension_numbers<[1], [0], [0], [1], [0, 0, 1, 1], [], []>} : vector<56x92xf32>, vector<92x46xf32>, vector<56x46xf32> -> vector<56x46xf32>
      %120 = arith.maximumf %118, %119 : vector<56x46xf32>
      %cst_54 = arith.constant dense<0.000000e+00> : vector<28x46xf32>
      %121 = tpu.matmul %29, %120, %cst_54 {dimension_numbers = #tpu.dot_dimension_numbers<[1], [0], [0], [1], [0, 0, 1, 1], [], []>} : vector<28x56xf32>, vector<56x46xf32>, vector<28x46xf32> -> vector<28x46xf32>
      %cst_55 = arith.constant dense<0.000000e+00> : vector<28x46xf32>
      %122 = tpu.matmul %39, %120, %cst_55 {dimension_numbers = #tpu.dot_dimension_numbers<[1], [0], [0], [1], [0, 0, 1, 1], [], []>} : vector<28x56xf32>, vector<56x46xf32>, vector<28x46xf32> -> vector<28x46xf32>
      %123 = arith.maximumf %121, %122 : vector<28x46xf32>
      %c0_56 = arith.constant 0 : index
      %124 = arith.index_cast %arg5 : i32 to index
      %c0_57 = arith.constant 0 : index
      %c0_58 = arith.constant 0 : index
      %125 = vector.load %arg4[%c0_56, %124, %c0_57, %c0_58] : memref<1x6x28x46xf32, #tpu.memory_space<vmem>>, vector<1x1x28x46xf32>
      %126 = vector.shape_cast %125 : vector<1x1x28x46xf32> to vector<28x46xf32>
      %127 = vector.shape_cast %123 : vector<28x46xf32> to vector<1x1x28x46xf32>
      tpu.vector_store %arg4[%c0_56, %124, %c0_57, %c0_58], %127 {strides = array<i32>} : memref<1x6x28x46xf32, #tpu.memory_space<vmem>>, vector<1x1x28x46xf32>,
    }
    %c6_i32_47 = arith.constant 6 : i32
    return
  }
  func.func @transform_0(%arg0: i32) -> (i32, i32, i32, i32) {
    %c0_i32 = arith.constant 0 : i32
    %c0_i32_0 = arith.constant 0 : i32
    %c0_i32_1 = arith.constant 0 : i32
    %c0_i32_2 = arith.constant 0 : i32
    return %arg0, %c0_i32, %c0_i32_0, %c0_i32_1 : i32, i32, i32, i32
  }
  func.func @transform_1(%arg0: i32) -> i32 {
    %c0_i32 = arith.constant 0 : i32
    %c0_i32_0 = arith.constant 0 : i32
    return %c0_i32 : i32
  }
  func.func @transform_2(%arg0: i32) -> i32 {
    %c0_i32 = arith.constant 0 : i32
    %c0_i32_0 = arith.constant 0 : i32
    return %c0_i32 : i32
  }
  func.func @transform_3(%arg0: i32) -> (i32, i32, i32, i32) {
    %c0_i32 = arith.constant 0 : i32
    %c0_i32_0 = arith.constant 0 : i32
    %c0_i32_1 = arith.constant 0 : i32
    %c0_i32_2 = arith.constant 0 : i32
    return %arg0, %c0_i32, %c0_i32_0, %c0_i32_1 : i32, i32, i32, i32
  }
}

module attributes {stable_mosaic.version = 11 : i64} {
  func.func @_conv_relu_pool_kernel(%arg0: i32, %arg1: memref<1x6x28x46xf32, #tpu.memory_space<vmem>>, %arg2: memref<2400xf32, #tpu.memory_space<smem>>, %arg3: memref<16xf32, #tpu.memory_space<smem>>, %arg4: memref<1x16x12x21xf32, #tpu.memory_space<vmem>>) attributes {dimension_semantics = [#tpu.dimension_semantics<parallel>], iteration_bounds = array<i64: 2>, scalar_prefetch = 0 : i64, scratch_operands = 0 : i64, tpu.core_type = #tpu.core_type<tc>, window_params = [{transform_indices = @transform_0, window_bounds = array<i64: 1, 6, 28, 46>}, {transform_indices = @transform_1, window_bounds = array<i64: 2400>}, {transform_indices = @transform_2, window_bounds = array<i64: 16>}, {transform_indices = @transform_3, window_bounds = array<i64: 1, 16, 12, 21>}]} {
    %0 = tpu.iota {dimensions = array<i32: 0>} : vector<42x21xi32>
    %1 = tpu.iota {dimensions = array<i32: 1>} : vector<42x21xi32>
    %c2_i32 = arith.constant 2 : i32
    %2 = vector.broadcast %c2_i32 : i32 to vector<42x21xi32>
    %3 = arith.muli %2, %1 : vector<42x21xi32>
    %c0_i32 = arith.constant 0 : i32
    %4 = vector.broadcast %c0_i32 : i32 to vector<42x21xi32>
    %5 = arith.addi %3, %4 : vector<42x21xi32>
    %6 = arith.cmpi eq, %0, %5 : vector<42x21xi32>
    %cst = arith.constant 1.000000e+00 : f32
    %cst_0 = arith.constant 0.000000e+00 : f32
    %7 = vector.broadcast %cst : f32 to vector<42x21xf32>
    %8 = vector.broadcast %cst_0 : f32 to vector<42x21xf32>
    %9 = arith.select %6, %7, %8 : vector<42x21xi1>, vector<42x21xf32>
    %10 = tpu.iota {dimensions = array<i32: 0>} : vector<42x21xi32>
    %11 = tpu.iota {dimensions = array<i32: 1>} : vector<42x21xi32>
    %c2_i32_1 = arith.constant 2 : i32
    %12 = vector.broadcast %c2_i32_1 : i32 to vector<42x21xi32>
    %13 = arith.muli %12, %11 : vector<42x21xi32>
    %c1_i32 = arith.constant 1 : i32
    %14 = vector.broadcast %c1_i32 : i32 to vector<42x21xi32>
    %15 = arith.addi %13, %14 : vector<42x21xi32>
    %16 = arith.cmpi eq, %10, %15 : vector<42x21xi32>
    %cst_2 = arith.constant 1.000000e+00 : f32
    %cst_3 = arith.constant 0.000000e+00 : f32
    %17 = vector.broadcast %cst_2 : f32 to vector<42x21xf32>
    %18 = vector.broadcast %cst_3 : f32 to vector<42x21xf32>
    %19 = arith.select %16, %17, %18 : vector<42x21xi1>, vector<42x21xf32>
    %20 = tpu.iota {dimensions = array<i32: 0>} : vector<12x24xi32>
    %21 = tpu.iota {dimensions = array<i32: 1>} : vector<12x24xi32>
    %c2_i32_4 = arith.constant 2 : i32
    %22 = vector.broadcast %c2_i32_4 : i32 to vector<12x24xi32>
    %23 = arith.muli %22, %20 : vector<12x24xi32>
    %c0_i32_5 = arith.constant 0 : i32
    %24 = vector.broadcast %c0_i32_5 : i32 to vector<12x24xi32>
    %25 = arith.addi %23, %24 : vector<12x24xi32>
    %26 = arith.cmpi eq, %21, %25 : vector<12x24xi32>
    %cst_6 = arith.constant 1.000000e+00 : f32
    %cst_7 = arith.constant 0.000000e+00 : f32
    %27 = vector.broadcast %cst_6 : f32 to vector<12x24xf32>
    %28 = vector.broadcast %cst_7 : f32 to vector<12x24xf32>
    %29 = arith.select %26, %27, %28 : vector<12x24xi1>, vector<12x24xf32>
    %30 = tpu.iota {dimensions = array<i32: 0>} : vector<12x24xi32>
    %31 = tpu.iota {dimensions = array<i32: 1>} : vector<12x24xi32>
    %c2_i32_8 = arith.constant 2 : i32
    %32 = vector.broadcast %c2_i32_8 : i32 to vector<12x24xi32>
    %33 = arith.muli %32, %30 : vector<12x24xi32>
    %c1_i32_9 = arith.constant 1 : i32
    %34 = vector.broadcast %c1_i32_9 : i32 to vector<12x24xi32>
    %35 = arith.addi %33, %34 : vector<12x24xi32>
    %36 = arith.cmpi eq, %31, %35 : vector<12x24xi32>
    %cst_10 = arith.constant 1.000000e+00 : f32
    %cst_11 = arith.constant 0.000000e+00 : f32
    %37 = vector.broadcast %cst_10 : f32 to vector<12x24xf32>
    %38 = vector.broadcast %cst_11 : f32 to vector<12x24xf32>
    %39 = arith.select %36, %37, %38 : vector<12x24xi1>, vector<12x24xf32>
    %c0 = arith.constant 0 : index
    %c0_12 = arith.constant 0 : index
    %c0_13 = arith.constant 0 : index
    %c0_14 = arith.constant 0 : index
    %40 = vector.load %arg1[%c0, %c0_12, %c0_13, %c0_14] : memref<1x6x28x46xf32, #tpu.memory_space<vmem>>, vector<1x1x24x42xf32>
    %41 = vector.shape_cast %40 : vector<1x1x24x42xf32> to vector<24x42xf32>
    %c0_15 = arith.constant 0 : index
    %c0_16 = arith.constant 0 : index
    %c0_17 = arith.constant 0 : index
    %c1 = arith.constant 1 : index
    %42 = vector.load %arg1[%c0_15, %c0_16, %c0_17, %c1] : memref<1x6x28x46xf32, #tpu.memory_space<vmem>>, vector<1x1x24x42xf32>
    %43 = vector.shape_cast %42 : vector<1x1x24x42xf32> to vector<24x42xf32>
    %c0_18 = arith.constant 0 : index
    %c0_19 = arith.constant 0 : index
    %c0_20 = arith.constant 0 : index
    %c2 = arith.constant 2 : index
    %44 = vector.load %arg1[%c0_18, %c0_19, %c0_20, %c2] : memref<1x6x28x46xf32, #tpu.memory_space<vmem>>, vector<1x1x24x42xf32>
    %45 = vector.shape_cast %44 : vector<1x1x24x42xf32> to vector<24x42xf32>
    %c0_21 = arith.constant 0 : index
    %c0_22 = arith.constant 0 : index
    %c0_23 = arith.constant 0 : index
    %c3 = arith.constant 3 : index
    %46 = vector.load %arg1[%c0_21, %c0_22, %c0_23, %c3] : memref<1x6x28x46xf32, #tpu.memory_space<vmem>>, vector<1x1x24x42xf32>
    %47 = vector.shape_cast %46 : vector<1x1x24x42xf32> to vector<24x42xf32>
    %c0_24 = arith.constant 0 : index
    %c0_25 = arith.constant 0 : index
    %c0_26 = arith.constant 0 : index
    %c4 = arith.constant 4 : index
    %48 = vector.load %arg1[%c0_24, %c0_25, %c0_26, %c4] : memref<1x6x28x46xf32, #tpu.memory_space<vmem>>, vector<1x1x24x42xf32>
    %49 = vector.shape_cast %48 : vector<1x1x24x42xf32> to vector<24x42xf32>
    %c0_27 = arith.constant 0 : index
    %c0_28 = arith.constant 0 : index
    %c1_29 = arith.constant 1 : index
    %c0_30 = arith.constant 0 : index
    %50 = vector.load %arg1[%c0_27, %c0_28, %c1_29, %c0_30] : memref<1x6x28x46xf32, #tpu.memory_space<vmem>>, vector<1x1x24x42xf32>
    %51 = vector.shape_cast %50 : vector<1x1x24x42xf32> to vector<24x42xf32>
    %c0_31 = arith.constant 0 : index
    %c0_32 = arith.constant 0 : index
    %c1_33 = arith.constant 1 : index
    %c1_34 = arith.constant 1 : index
    %52 = vector.load %arg1[%c0_31, %c0_32, %c1_33, %c1_34] : memref<1x6x28x46xf32, #tpu.memory_space<vmem>>, vector<1x1x24x42xf32>
    %53 = vector.shape_cast %52 : vector<1x1x24x42xf32> to vector<24x42xf32>
    %c0_35 = arith.constant 0 : index
    %c0_36 = arith.constant 0 : index
    %c1_37 = arith.constant 1 : index
    %c2_38 = arith.constant 2 : index
    %54 = vector.load %arg1[%c0_35, %c0_36, %c1_37, %c2_38] : memref<1x6x28x46xf32, #tpu.memory_space<vmem>>, vector<1x1x24x42xf32>
    %55 = vector.shape_cast %54 : vector<1x1x24x42xf32> to vector<24x42xf32>
    %c0_39 = arith.constant 0 : index
    %c0_40 = arith.constant 0 : index
    %c1_41 = arith.constant 1 : index
    %c3_42 = arith.constant 3 : index
    %56 = vector.load %arg1[%c0_39, %c0_40, %c1_41, %c3_42] : memref<1x6x28x46xf32, #tpu.memory_space<vmem>>, vector<1x1x24x42xf32>
    %57 = vector.shape_cast %56 : vector<1x1x24x42xf32> to vector<24x42xf32>
    %c0_43 = arith.constant 0 : index
    %c0_44 = arith.constant 0 : index
    %c1_45 = arith.constant 1 : index
    %c4_46 = arith.constant 4 : index
    %58 = vector.load %arg1[%c0_43, %c0_44, %c1_45, %c4_46] : memref<1x6x28x46xf32, #tpu.memory_space<vmem>>, vector<1x1x24x42xf32>
    %59 = vector.shape_cast %58 : vector<1x1x24x42xf32> to vector<24x42xf32>
    %c0_47 = arith.constant 0 : index
    %c0_48 = arith.constant 0 : index
    %c2_49 = arith.constant 2 : index
    %c0_50 = arith.constant 0 : index
    %60 = vector.load %arg1[%c0_47, %c0_48, %c2_49, %c0_50] : memref<1x6x28x46xf32, #tpu.memory_space<vmem>>, vector<1x1x24x42xf32>
    %61 = vector.shape_cast %60 : vector<1x1x24x42xf32> to vector<24x42xf32>
    %c0_51 = arith.constant 0 : index
    %c0_52 = arith.constant 0 : index
    %c2_53 = arith.constant 2 : index
    %c1_54 = arith.constant 1 : index
    %62 = vector.load %arg1[%c0_51, %c0_52, %c2_53, %c1_54] : memref<1x6x28x46xf32, #tpu.memory_space<vmem>>, vector<1x1x24x42xf32>
    %63 = vector.shape_cast %62 : vector<1x1x24x42xf32> to vector<24x42xf32>
    %c0_55 = arith.constant 0 : index
    %c0_56 = arith.constant 0 : index
    %c2_57 = arith.constant 2 : index
    %c2_58 = arith.constant 2 : index
    %64 = vector.load %arg1[%c0_55, %c0_56, %c2_57, %c2_58] : memref<1x6x28x46xf32, #tpu.memory_space<vmem>>, vector<1x1x24x42xf32>
    %65 = vector.shape_cast %64 : vector<1x1x24x42xf32> to vector<24x42xf32>
    %c0_59 = arith.constant 0 : index
    %c0_60 = arith.constant 0 : index
    %c2_61 = arith.constant 2 : index
    %c3_62 = arith.constant 3 : index
    %66 = vector.load %arg1[%c0_59, %c0_60, %c2_61, %c3_62] : memref<1x6x28x46xf32, #tpu.memory_space<vmem>>, vector<1x1x24x42xf32>
    %67 = vector.shape_cast %66 : vector<1x1x24x42xf32> to vector<24x42xf32>
    %c0_63 = arith.constant 0 : index
    %c0_64 = arith.constant 0 : index
    %c2_65 = arith.constant 2 : index
    %c4_66 = arith.constant 4 : index
    %68 = vector.load %arg1[%c0_63, %c0_64, %c2_65, %c4_66] : memref<1x6x28x46xf32, #tpu.memory_space<vmem>>, vector<1x1x24x42xf32>
    %69 = vector.shape_cast %68 : vector<1x1x24x42xf32> to vector<24x42xf32>
    %c0_67 = arith.constant 0 : index
    %c0_68 = arith.constant 0 : index
    %c3_69 = arith.constant 3 : index
    %c0_70 = arith.constant 0 : index
    %70 = vector.load %arg1[%c0_67, %c0_68, %c3_69, %c0_70] : memref<1x6x28x46xf32, #tpu.memory_space<vmem>>, vector<1x1x24x42xf32>
    %71 = vector.shape_cast %70 : vector<1x1x24x42xf32> to vector<24x42xf32>
    %c0_71 = arith.constant 0 : index
    %c0_72 = arith.constant 0 : index
    %c3_73 = arith.constant 3 : index
    %c1_74 = arith.constant 1 : index
    %72 = vector.load %arg1[%c0_71, %c0_72, %c3_73, %c1_74] : memref<1x6x28x46xf32, #tpu.memory_space<vmem>>, vector<1x1x24x42xf32>
    %73 = vector.shape_cast %72 : vector<1x1x24x42xf32> to vector<24x42xf32>
    %c0_75 = arith.constant 0 : index
    %c0_76 = arith.constant 0 : index
    %c3_77 = arith.constant 3 : index
    %c2_78 = arith.constant 2 : index
    %74 = vector.load %arg1[%c0_75, %c0_76, %c3_77, %c2_78] : memref<1x6x28x46xf32, #tpu.memory_space<vmem>>, vector<1x1x24x42xf32>
    %75 = vector.shape_cast %74 : vector<1x1x24x42xf32> to vector<24x42xf32>
    %c0_79 = arith.constant 0 : index
    %c0_80 = arith.constant 0 : index
    %c3_81 = arith.constant 3 : index
    %c3_82 = arith.constant 3 : index
    %76 = vector.load %arg1[%c0_79, %c0_80, %c3_81, %c3_82] : memref<1x6x28x46xf32, #tpu.memory_space<vmem>>, vector<1x1x24x42xf32>
    %77 = vector.shape_cast %76 : vector<1x1x24x42xf32> to vector<24x42xf32>
    %c0_83 = arith.constant 0 : index
    %c0_84 = arith.constant 0 : index
    %c3_85 = arith.constant 3 : index
    %c4_86 = arith.constant 4 : index
    %78 = vector.load %arg1[%c0_83, %c0_84, %c3_85, %c4_86] : memref<1x6x28x46xf32, #tpu.memory_space<vmem>>, vector<1x1x24x42xf32>
    %79 = vector.shape_cast %78 : vector<1x1x24x42xf32> to vector<24x42xf32>
    %c0_87 = arith.constant 0 : index
    %c0_88 = arith.constant 0 : index
    %c4_89 = arith.constant 4 : index
    %c0_90 = arith.constant 0 : index
    %80 = vector.load %arg1[%c0_87, %c0_88, %c4_89, %c0_90] : memref<1x6x28x46xf32, #tpu.memory_space<vmem>>, vector<1x1x24x42xf32>
    %81 = vector.shape_cast %80 : vector<1x1x24x42xf32> to vector<24x42xf32>
    %c0_91 = arith.constant 0 : index
    %c0_92 = arith.constant 0 : index
    %c4_93 = arith.constant 4 : index
    %c1_94 = arith.constant 1 : index
    %82 = vector.load %arg1[%c0_91, %c0_92, %c4_93, %c1_94] : memref<1x6x28x46xf32, #tpu.memory_space<vmem>>, vector<1x1x24x42xf32>
    %83 = vector.shape_cast %82 : vector<1x1x24x42xf32> to vector<24x42xf32>
    %c0_95 = arith.constant 0 : index
    %c0_96 = arith.constant 0 : index
    %c4_97 = arith.constant 4 : index
    %c2_98 = arith.constant 2 : index
    %84 = vector.load %arg1[%c0_95, %c0_96, %c4_97, %c2_98] : memref<1x6x28x46xf32, #tpu.memory_space<vmem>>, vector<1x1x24x42xf32>
    %85 = vector.shape_cast %84 : vector<1x1x24x42xf32> to vector<24x42xf32>
    %c0_99 = arith.constant 0 : index
    %c0_100 = arith.constant 0 : index
    %c4_101 = arith.constant 4 : index
    %c3_102 = arith.constant 3 : index
    %86 = vector.load %arg1[%c0_99, %c0_100, %c4_101, %c3_102] : memref<1x6x28x46xf32, #tpu.memory_space<vmem>>, vector<1x1x24x42xf32>
    %87 = vector.shape_cast %86 : vector<1x1x24x42xf32> to vector<24x42xf32>
    %c0_103 = arith.constant 0 : index
    %c0_104 = arith.constant 0 : index
    %c4_105 = arith.constant 4 : index
    %c4_106 = arith.constant 4 : index
    %88 = vector.load %arg1[%c0_103, %c0_104, %c4_105, %c4_106] : memref<1x6x28x46xf32, #tpu.memory_space<vmem>>, vector<1x1x24x42xf32>
    %89 = vector.shape_cast %88 : vector<1x1x24x42xf32> to vector<24x42xf32>
    %c0_107 = arith.constant 0 : index
    %c1_108 = arith.constant 1 : index
    %c0_109 = arith.constant 0 : index
    %c0_110 = arith.constant 0 : index
    %90 = vector.load %arg1[%c0_107, %c1_108, %c0_109, %c0_110] : memref<1x6x28x46xf32, #tpu.memory_space<vmem>>, vector<1x1x24x42xf32>
    %91 = vector.shape_cast %90 : vector<1x1x24x42xf32> to vector<24x42xf32>
    %c0_111 = arith.constant 0 : index
    %c1_112 = arith.constant 1 : index
    %c0_113 = arith.constant 0 : index
    %c1_114 = arith.constant 1 : index
    %92 = vector.load %arg1[%c0_111, %c1_112, %c0_113, %c1_114] : memref<1x6x28x46xf32, #tpu.memory_space<vmem>>, vector<1x1x24x42xf32>
    %93 = vector.shape_cast %92 : vector<1x1x24x42xf32> to vector<24x42xf32>
    %c0_115 = arith.constant 0 : index
    %c1_116 = arith.constant 1 : index
    %c0_117 = arith.constant 0 : index
    %c2_118 = arith.constant 2 : index
    %94 = vector.load %arg1[%c0_115, %c1_116, %c0_117, %c2_118] : memref<1x6x28x46xf32, #tpu.memory_space<vmem>>, vector<1x1x24x42xf32>
    %95 = vector.shape_cast %94 : vector<1x1x24x42xf32> to vector<24x42xf32>
    %c0_119 = arith.constant 0 : index
    %c1_120 = arith.constant 1 : index
    %c0_121 = arith.constant 0 : index
    %c3_122 = arith.constant 3 : index
    %96 = vector.load %arg1[%c0_119, %c1_120, %c0_121, %c3_122] : memref<1x6x28x46xf32, #tpu.memory_space<vmem>>, vector<1x1x24x42xf32>
    %97 = vector.shape_cast %96 : vector<1x1x24x42xf32> to vector<24x42xf32>
    %c0_123 = arith.constant 0 : index
    %c1_124 = arith.constant 1 : index
    %c0_125 = arith.constant 0 : index
    %c4_126 = arith.constant 4 : index
    %98 = vector.load %arg1[%c0_123, %c1_124, %c0_125, %c4_126] : memref<1x6x28x46xf32, #tpu.memory_space<vmem>>, vector<1x1x24x42xf32>
    %99 = vector.shape_cast %98 : vector<1x1x24x42xf32> to vector<24x42xf32>
    %c0_127 = arith.constant 0 : index
    %c1_128 = arith.constant 1 : index
    %c1_129 = arith.constant 1 : index
    %c0_130 = arith.constant 0 : index
    %100 = vector.load %arg1[%c0_127, %c1_128, %c1_129, %c0_130] : memref<1x6x28x46xf32, #tpu.memory_space<vmem>>, vector<1x1x24x42xf32>
    %101 = vector.shape_cast %100 : vector<1x1x24x42xf32> to vector<24x42xf32>
    %c0_131 = arith.constant 0 : index
    %c1_132 = arith.constant 1 : index
    %c1_133 = arith.constant 1 : index
    %c1_134 = arith.constant 1 : index
    %102 = vector.load %arg1[%c0_131, %c1_132, %c1_133, %c1_134] : memref<1x6x28x46xf32, #tpu.memory_space<vmem>>, vector<1x1x24x42xf32>
    %103 = vector.shape_cast %102 : vector<1x1x24x42xf32> to vector<24x42xf32>
    %c0_135 = arith.constant 0 : index
    %c1_136 = arith.constant 1 : index
    %c1_137 = arith.constant 1 : index
    %c2_138 = arith.constant 2 : index
    %104 = vector.load %arg1[%c0_135, %c1_136, %c1_137, %c2_138] : memref<1x6x28x46xf32, #tpu.memory_space<vmem>>, vector<1x1x24x42xf32>
    %105 = vector.shape_cast %104 : vector<1x1x24x42xf32> to vector<24x42xf32>
    %c0_139 = arith.constant 0 : index
    %c1_140 = arith.constant 1 : index
    %c1_141 = arith.constant 1 : index
    %c3_142 = arith.constant 3 : index
    %106 = vector.load %arg1[%c0_139, %c1_140, %c1_141, %c3_142] : memref<1x6x28x46xf32, #tpu.memory_space<vmem>>, vector<1x1x24x42xf32>
    %107 = vector.shape_cast %106 : vector<1x1x24x42xf32> to vector<24x42xf32>
    %c0_143 = arith.constant 0 : index
    %c1_144 = arith.constant 1 : index
    %c1_145 = arith.constant 1 : index
    %c4_146 = arith.constant 4 : index
    %108 = vector.load %arg1[%c0_143, %c1_144, %c1_145, %c4_146] : memref<1x6x28x46xf32, #tpu.memory_space<vmem>>, vector<1x1x24x42xf32>
    %109 = vector.shape_cast %108 : vector<1x1x24x42xf32> to vector<24x42xf32>
    %c0_147 = arith.constant 0 : index
    %c1_148 = arith.constant 1 : index
    %c2_149 = arith.constant 2 : index
    %c0_150 = arith.constant 0 : index
    %110 = vector.load %arg1[%c0_147, %c1_148, %c2_149, %c0_150] : memref<1x6x28x46xf32, #tpu.memory_space<vmem>>, vector<1x1x24x42xf32>
    %111 = vector.shape_cast %110 : vector<1x1x24x42xf32> to vector<24x42xf32>
    %c0_151 = arith.constant 0 : index
    %c1_152 = arith.constant 1 : index
    %c2_153 = arith.constant 2 : index
    %c1_154 = arith.constant 1 : index
    %112 = vector.load %arg1[%c0_151, %c1_152, %c2_153, %c1_154] : memref<1x6x28x46xf32, #tpu.memory_space<vmem>>, vector<1x1x24x42xf32>
    %113 = vector.shape_cast %112 : vector<1x1x24x42xf32> to vector<24x42xf32>
    %c0_155 = arith.constant 0 : index
    %c1_156 = arith.constant 1 : index
    %c2_157 = arith.constant 2 : index
    %c2_158 = arith.constant 2 : index
    %114 = vector.load %arg1[%c0_155, %c1_156, %c2_157, %c2_158] : memref<1x6x28x46xf32, #tpu.memory_space<vmem>>, vector<1x1x24x42xf32>
    %115 = vector.shape_cast %114 : vector<1x1x24x42xf32> to vector<24x42xf32>
    %c0_159 = arith.constant 0 : index
    %c1_160 = arith.constant 1 : index
    %c2_161 = arith.constant 2 : index
    %c3_162 = arith.constant 3 : index
    %116 = vector.load %arg1[%c0_159, %c1_160, %c2_161, %c3_162] : memref<1x6x28x46xf32, #tpu.memory_space<vmem>>, vector<1x1x24x42xf32>
    %117 = vector.shape_cast %116 : vector<1x1x24x42xf32> to vector<24x42xf32>
    %c0_163 = arith.constant 0 : index
    %c1_164 = arith.constant 1 : index
    %c2_165 = arith.constant 2 : index
    %c4_166 = arith.constant 4 : index
    %118 = vector.load %arg1[%c0_163, %c1_164, %c2_165, %c4_166] : memref<1x6x28x46xf32, #tpu.memory_space<vmem>>, vector<1x1x24x42xf32>
    %119 = vector.shape_cast %118 : vector<1x1x24x42xf32> to vector<24x42xf32>
    %c0_167 = arith.constant 0 : index
    %c1_168 = arith.constant 1 : index
    %c3_169 = arith.constant 3 : index
    %c0_170 = arith.constant 0 : index
    %120 = vector.load %arg1[%c0_167, %c1_168, %c3_169, %c0_170] : memref<1x6x28x46xf32, #tpu.memory_space<vmem>>, vector<1x1x24x42xf32>
    %121 = vector.shape_cast %120 : vector<1x1x24x42xf32> to vector<24x42xf32>
    %c0_171 = arith.constant 0 : index
    %c1_172 = arith.constant 1 : index
    %c3_173 = arith.constant 3 : index
    %c1_174 = arith.constant 1 : index
    %122 = vector.load %arg1[%c0_171, %c1_172, %c3_173, %c1_174] : memref<1x6x28x46xf32, #tpu.memory_space<vmem>>, vector<1x1x24x42xf32>
    %123 = vector.shape_cast %122 : vector<1x1x24x42xf32> to vector<24x42xf32>
    %c0_175 = arith.constant 0 : index
    %c1_176 = arith.constant 1 : index
    %c3_177 = arith.constant 3 : index
    %c2_178 = arith.constant 2 : index
    %124 = vector.load %arg1[%c0_175, %c1_176, %c3_177, %c2_178] : memref<1x6x28x46xf32, #tpu.memory_space<vmem>>, vector<1x1x24x42xf32>
    %125 = vector.shape_cast %124 : vector<1x1x24x42xf32> to vector<24x42xf32>
    %c0_179 = arith.constant 0 : index
    %c1_180 = arith.constant 1 : index
    %c3_181 = arith.constant 3 : index
    %c3_182 = arith.constant 3 : index
    %126 = vector.load %arg1[%c0_179, %c1_180, %c3_181, %c3_182] : memref<1x6x28x46xf32, #tpu.memory_space<vmem>>, vector<1x1x24x42xf32>
    %127 = vector.shape_cast %126 : vector<1x1x24x42xf32> to vector<24x42xf32>
    %c0_183 = arith.constant 0 : index
    %c1_184 = arith.constant 1 : index
    %c3_185 = arith.constant 3 : index
    %c4_186 = arith.constant 4 : index
    %128 = vector.load %arg1[%c0_183, %c1_184, %c3_185, %c4_186] : memref<1x6x28x46xf32, #tpu.memory_space<vmem>>, vector<1x1x24x42xf32>
    %129 = vector.shape_cast %128 : vector<1x1x24x42xf32> to vector<24x42xf32>
    %c0_187 = arith.constant 0 : index
    %c1_188 = arith.constant 1 : index
    %c4_189 = arith.constant 4 : index
    %c0_190 = arith.constant 0 : index
    %130 = vector.load %arg1[%c0_187, %c1_188, %c4_189, %c0_190] : memref<1x6x28x46xf32, #tpu.memory_space<vmem>>, vector<1x1x24x42xf32>
    %131 = vector.shape_cast %130 : vector<1x1x24x42xf32> to vector<24x42xf32>
    %c0_191 = arith.constant 0 : index
    %c1_192 = arith.constant 1 : index
    %c4_193 = arith.constant 4 : index
    %c1_194 = arith.constant 1 : index
    %132 = vector.load %arg1[%c0_191, %c1_192, %c4_193, %c1_194] : memref<1x6x28x46xf32, #tpu.memory_space<vmem>>, vector<1x1x24x42xf32>
    %133 = vector.shape_cast %132 : vector<1x1x24x42xf32> to vector<24x42xf32>
    %c0_195 = arith.constant 0 : index
    %c1_196 = arith.constant 1 : index
    %c4_197 = arith.constant 4 : index
    %c2_198 = arith.constant 2 : index
    %134 = vector.load %arg1[%c0_195, %c1_196, %c4_197, %c2_198] : memref<1x6x28x46xf32, #tpu.memory_space<vmem>>, vector<1x1x24x42xf32>
    %135 = vector.shape_cast %134 : vector<1x1x24x42xf32> to vector<24x42xf32>
    %c0_199 = arith.constant 0 : index
    %c1_200 = arith.constant 1 : index
    %c4_201 = arith.constant 4 : index
    %c3_202 = arith.constant 3 : index
    %136 = vector.load %arg1[%c0_199, %c1_200, %c4_201, %c3_202] : memref<1x6x28x46xf32, #tpu.memory_space<vmem>>, vector<1x1x24x42xf32>
    %137 = vector.shape_cast %136 : vector<1x1x24x42xf32> to vector<24x42xf32>
    %c0_203 = arith.constant 0 : index
    %c1_204 = arith.constant 1 : index
    %c4_205 = arith.constant 4 : index
    %c4_206 = arith.constant 4 : index
    %138 = vector.load %arg1[%c0_203, %c1_204, %c4_205, %c4_206] : memref<1x6x28x46xf32, #tpu.memory_space<vmem>>, vector<1x1x24x42xf32>
    %139 = vector.shape_cast %138 : vector<1x1x24x42xf32> to vector<24x42xf32>
    %c0_207 = arith.constant 0 : index
    %c2_208 = arith.constant 2 : index
    %c0_209 = arith.constant 0 : index
    %c0_210 = arith.constant 0 : index
    %140 = vector.load %arg1[%c0_207, %c2_208, %c0_209, %c0_210] : memref<1x6x28x46xf32, #tpu.memory_space<vmem>>, vector<1x1x24x42xf32>
    %141 = vector.shape_cast %140 : vector<1x1x24x42xf32> to vector<24x42xf32>
    %c0_211 = arith.constant 0 : index
    %c2_212 = arith.constant 2 : index
    %c0_213 = arith.constant 0 : index
    %c1_214 = arith.constant 1 : index
    %142 = vector.load %arg1[%c0_211, %c2_212, %c0_213, %c1_214] : memref<1x6x28x46xf32, #tpu.memory_space<vmem>>, vector<1x1x24x42xf32>
    %143 = vector.shape_cast %142 : vector<1x1x24x42xf32> to vector<24x42xf32>
    %c0_215 = arith.constant 0 : index
    %c2_216 = arith.constant 2 : index
    %c0_217 = arith.constant 0 : index
    %c2_218 = arith.constant 2 : index
    %144 = vector.load %arg1[%c0_215, %c2_216, %c0_217, %c2_218] : memref<1x6x28x46xf32, #tpu.memory_space<vmem>>, vector<1x1x24x42xf32>
    %145 = vector.shape_cast %144 : vector<1x1x24x42xf32> to vector<24x42xf32>
    %c0_219 = arith.constant 0 : index
    %c2_220 = arith.constant 2 : index
    %c0_221 = arith.constant 0 : index
    %c3_222 = arith.constant 3 : index
    %146 = vector.load %arg1[%c0_219, %c2_220, %c0_221, %c3_222] : memref<1x6x28x46xf32, #tpu.memory_space<vmem>>, vector<1x1x24x42xf32>
    %147 = vector.shape_cast %146 : vector<1x1x24x42xf32> to vector<24x42xf32>
    %c0_223 = arith.constant 0 : index
    %c2_224 = arith.constant 2 : index
    %c0_225 = arith.constant 0 : index
    %c4_226 = arith.constant 4 : index
    %148 = vector.load %arg1[%c0_223, %c2_224, %c0_225, %c4_226] : memref<1x6x28x46xf32, #tpu.memory_space<vmem>>, vector<1x1x24x42xf32>
    %149 = vector.shape_cast %148 : vector<1x1x24x42xf32> to vector<24x42xf32>
    %c0_227 = arith.constant 0 : index
    %c2_228 = arith.constant 2 : index
    %c1_229 = arith.constant 1 : index
    %c0_230 = arith.constant 0 : index
    %150 = vector.load %arg1[%c0_227, %c2_228, %c1_229, %c0_230] : memref<1x6x28x46xf32, #tpu.memory_space<vmem>>, vector<1x1x24x42xf32>
    %151 = vector.shape_cast %150 : vector<1x1x24x42xf32> to vector<24x42xf32>
    %c0_231 = arith.constant 0 : index
    %c2_232 = arith.constant 2 : index
    %c1_233 = arith.constant 1 : index
    %c1_234 = arith.constant 1 : index
    %152 = vector.load %arg1[%c0_231, %c2_232, %c1_233, %c1_234] : memref<1x6x28x46xf32, #tpu.memory_space<vmem>>, vector<1x1x24x42xf32>
    %153 = vector.shape_cast %152 : vector<1x1x24x42xf32> to vector<24x42xf32>
    %c0_235 = arith.constant 0 : index
    %c2_236 = arith.constant 2 : index
    %c1_237 = arith.constant 1 : index
    %c2_238 = arith.constant 2 : index
    %154 = vector.load %arg1[%c0_235, %c2_236, %c1_237, %c2_238] : memref<1x6x28x46xf32, #tpu.memory_space<vmem>>, vector<1x1x24x42xf32>
    %155 = vector.shape_cast %154 : vector<1x1x24x42xf32> to vector<24x42xf32>
    %c0_239 = arith.constant 0 : index
    %c2_240 = arith.constant 2 : index
    %c1_241 = arith.constant 1 : index
    %c3_242 = arith.constant 3 : index
    %156 = vector.load %arg1[%c0_239, %c2_240, %c1_241, %c3_242] : memref<1x6x28x46xf32, #tpu.memory_space<vmem>>, vector<1x1x24x42xf32>
    %157 = vector.shape_cast %156 : vector<1x1x24x42xf32> to vector<24x42xf32>
    %c0_243 = arith.constant 0 : index
    %c2_244 = arith.constant 2 : index
    %c1_245 = arith.constant 1 : index
    %c4_246 = arith.constant 4 : index
    %158 = vector.load %arg1[%c0_243, %c2_244, %c1_245, %c4_246] : memref<1x6x28x46xf32, #tpu.memory_space<vmem>>, vector<1x1x24x42xf32>
    %159 = vector.shape_cast %158 : vector<1x1x24x42xf32> to vector<24x42xf32>
    %c0_247 = arith.constant 0 : index
    %c2_248 = arith.constant 2 : index
    %c2_249 = arith.constant 2 : index
    %c0_250 = arith.constant 0 : index
    %160 = vector.load %arg1[%c0_247, %c2_248, %c2_249, %c0_250] : memref<1x6x28x46xf32, #tpu.memory_space<vmem>>, vector<1x1x24x42xf32>
    %161 = vector.shape_cast %160 : vector<1x1x24x42xf32> to vector<24x42xf32>
    %c0_251 = arith.constant 0 : index
    %c2_252 = arith.constant 2 : index
    %c2_253 = arith.constant 2 : index
    %c1_254 = arith.constant 1 : index
    %162 = vector.load %arg1[%c0_251, %c2_252, %c2_253, %c1_254] : memref<1x6x28x46xf32, #tpu.memory_space<vmem>>, vector<1x1x24x42xf32>
    %163 = vector.shape_cast %162 : vector<1x1x24x42xf32> to vector<24x42xf32>
    %c0_255 = arith.constant 0 : index
    %c2_256 = arith.constant 2 : index
    %c2_257 = arith.constant 2 : index
    %c2_258 = arith.constant 2 : index
    %164 = vector.load %arg1[%c0_255, %c2_256, %c2_257, %c2_258] : memref<1x6x28x46xf32, #tpu.memory_space<vmem>>, vector<1x1x24x42xf32>
    %165 = vector.shape_cast %164 : vector<1x1x24x42xf32> to vector<24x42xf32>
    %c0_259 = arith.constant 0 : index
    %c2_260 = arith.constant 2 : index
    %c2_261 = arith.constant 2 : index
    %c3_262 = arith.constant 3 : index
    %166 = vector.load %arg1[%c0_259, %c2_260, %c2_261, %c3_262] : memref<1x6x28x46xf32, #tpu.memory_space<vmem>>, vector<1x1x24x42xf32>
    %167 = vector.shape_cast %166 : vector<1x1x24x42xf32> to vector<24x42xf32>
    %c0_263 = arith.constant 0 : index
    %c2_264 = arith.constant 2 : index
    %c2_265 = arith.constant 2 : index
    %c4_266 = arith.constant 4 : index
    %168 = vector.load %arg1[%c0_263, %c2_264, %c2_265, %c4_266] : memref<1x6x28x46xf32, #tpu.memory_space<vmem>>, vector<1x1x24x42xf32>
    %169 = vector.shape_cast %168 : vector<1x1x24x42xf32> to vector<24x42xf32>
    %c0_267 = arith.constant 0 : index
    %c2_268 = arith.constant 2 : index
    %c3_269 = arith.constant 3 : index
    %c0_270 = arith.constant 0 : index
    %170 = vector.load %arg1[%c0_267, %c2_268, %c3_269, %c0_270] : memref<1x6x28x46xf32, #tpu.memory_space<vmem>>, vector<1x1x24x42xf32>
    %171 = vector.shape_cast %170 : vector<1x1x24x42xf32> to vector<24x42xf32>
    %c0_271 = arith.constant 0 : index
    %c2_272 = arith.constant 2 : index
    %c3_273 = arith.constant 3 : index
    %c1_274 = arith.constant 1 : index
    %172 = vector.load %arg1[%c0_271, %c2_272, %c3_273, %c1_274] : memref<1x6x28x46xf32, #tpu.memory_space<vmem>>, vector<1x1x24x42xf32>
    %173 = vector.shape_cast %172 : vector<1x1x24x42xf32> to vector<24x42xf32>
    %c0_275 = arith.constant 0 : index
    %c2_276 = arith.constant 2 : index
    %c3_277 = arith.constant 3 : index
    %c2_278 = arith.constant 2 : index
    %174 = vector.load %arg1[%c0_275, %c2_276, %c3_277, %c2_278] : memref<1x6x28x46xf32, #tpu.memory_space<vmem>>, vector<1x1x24x42xf32>
    %175 = vector.shape_cast %174 : vector<1x1x24x42xf32> to vector<24x42xf32>
    %c0_279 = arith.constant 0 : index
    %c2_280 = arith.constant 2 : index
    %c3_281 = arith.constant 3 : index
    %c3_282 = arith.constant 3 : index
    %176 = vector.load %arg1[%c0_279, %c2_280, %c3_281, %c3_282] : memref<1x6x28x46xf32, #tpu.memory_space<vmem>>, vector<1x1x24x42xf32>
    %177 = vector.shape_cast %176 : vector<1x1x24x42xf32> to vector<24x42xf32>
    %c0_283 = arith.constant 0 : index
    %c2_284 = arith.constant 2 : index
    %c3_285 = arith.constant 3 : index
    %c4_286 = arith.constant 4 : index
    %178 = vector.load %arg1[%c0_283, %c2_284, %c3_285, %c4_286] : memref<1x6x28x46xf32, #tpu.memory_space<vmem>>, vector<1x1x24x42xf32>
    %179 = vector.shape_cast %178 : vector<1x1x24x42xf32> to vector<24x42xf32>
    %c0_287 = arith.constant 0 : index
    %c2_288 = arith.constant 2 : index
    %c4_289 = arith.constant 4 : index
    %c0_290 = arith.constant 0 : index
    %180 = vector.load %arg1[%c0_287, %c2_288, %c4_289, %c0_290] : memref<1x6x28x46xf32, #tpu.memory_space<vmem>>, vector<1x1x24x42xf32>
    %181 = vector.shape_cast %180 : vector<1x1x24x42xf32> to vector<24x42xf32>
    %c0_291 = arith.constant 0 : index
    %c2_292 = arith.constant 2 : index
    %c4_293 = arith.constant 4 : index
    %c1_294 = arith.constant 1 : index
    %182 = vector.load %arg1[%c0_291, %c2_292, %c4_293, %c1_294] : memref<1x6x28x46xf32, #tpu.memory_space<vmem>>, vector<1x1x24x42xf32>
    %183 = vector.shape_cast %182 : vector<1x1x24x42xf32> to vector<24x42xf32>
    %c0_295 = arith.constant 0 : index
    %c2_296 = arith.constant 2 : index
    %c4_297 = arith.constant 4 : index
    %c2_298 = arith.constant 2 : index
    %184 = vector.load %arg1[%c0_295, %c2_296, %c4_297, %c2_298] : memref<1x6x28x46xf32, #tpu.memory_space<vmem>>, vector<1x1x24x42xf32>
    %185 = vector.shape_cast %184 : vector<1x1x24x42xf32> to vector<24x42xf32>
    %c0_299 = arith.constant 0 : index
    %c2_300 = arith.constant 2 : index
    %c4_301 = arith.constant 4 : index
    %c3_302 = arith.constant 3 : index
    %186 = vector.load %arg1[%c0_299, %c2_300, %c4_301, %c3_302] : memref<1x6x28x46xf32, #tpu.memory_space<vmem>>, vector<1x1x24x42xf32>
    %187 = vector.shape_cast %186 : vector<1x1x24x42xf32> to vector<24x42xf32>
    %c0_303 = arith.constant 0 : index
    %c2_304 = arith.constant 2 : index
    %c4_305 = arith.constant 4 : index
    %c4_306 = arith.constant 4 : index
    %188 = vector.load %arg1[%c0_303, %c2_304, %c4_305, %c4_306] : memref<1x6x28x46xf32, #tpu.memory_space<vmem>>, vector<1x1x24x42xf32>
    %189 = vector.shape_cast %188 : vector<1x1x24x42xf32> to vector<24x42xf32>
    %c0_307 = arith.constant 0 : index
    %c3_308 = arith.constant 3 : index
    %c0_309 = arith.constant 0 : index
    %c0_310 = arith.constant 0 : index
    %190 = vector.load %arg1[%c0_307, %c3_308, %c0_309, %c0_310] : memref<1x6x28x46xf32, #tpu.memory_space<vmem>>, vector<1x1x24x42xf32>
    %191 = vector.shape_cast %190 : vector<1x1x24x42xf32> to vector<24x42xf32>
    %c0_311 = arith.constant 0 : index
    %c3_312 = arith.constant 3 : index
    %c0_313 = arith.constant 0 : index
    %c1_314 = arith.constant 1 : index
    %192 = vector.load %arg1[%c0_311, %c3_312, %c0_313, %c1_314] : memref<1x6x28x46xf32, #tpu.memory_space<vmem>>, vector<1x1x24x42xf32>
    %193 = vector.shape_cast %192 : vector<1x1x24x42xf32> to vector<24x42xf32>
    %c0_315 = arith.constant 0 : index
    %c3_316 = arith.constant 3 : index
    %c0_317 = arith.constant 0 : index
    %c2_318 = arith.constant 2 : index
    %194 = vector.load %arg1[%c0_315, %c3_316, %c0_317, %c2_318] : memref<1x6x28x46xf32, #tpu.memory_space<vmem>>, vector<1x1x24x42xf32>
    %195 = vector.shape_cast %194 : vector<1x1x24x42xf32> to vector<24x42xf32>
    %c0_319 = arith.constant 0 : index
    %c3_320 = arith.constant 3 : index
    %c0_321 = arith.constant 0 : index
    %c3_322 = arith.constant 3 : index
    %196 = vector.load %arg1[%c0_319, %c3_320, %c0_321, %c3_322] : memref<1x6x28x46xf32, #tpu.memory_space<vmem>>, vector<1x1x24x42xf32>
    %197 = vector.shape_cast %196 : vector<1x1x24x42xf32> to vector<24x42xf32>
    %c0_323 = arith.constant 0 : index
    %c3_324 = arith.constant 3 : index
    %c0_325 = arith.constant 0 : index
    %c4_326 = arith.constant 4 : index
    %198 = vector.load %arg1[%c0_323, %c3_324, %c0_325, %c4_326] : memref<1x6x28x46xf32, #tpu.memory_space<vmem>>, vector<1x1x24x42xf32>
    %199 = vector.shape_cast %198 : vector<1x1x24x42xf32> to vector<24x42xf32>
    %c0_327 = arith.constant 0 : index
    %c3_328 = arith.constant 3 : index
    %c1_329 = arith.constant 1 : index
    %c0_330 = arith.constant 0 : index
    %200 = vector.load %arg1[%c0_327, %c3_328, %c1_329, %c0_330] : memref<1x6x28x46xf32, #tpu.memory_space<vmem>>, vector<1x1x24x42xf32>
    %201 = vector.shape_cast %200 : vector<1x1x24x42xf32> to vector<24x42xf32>
    %c0_331 = arith.constant 0 : index
    %c3_332 = arith.constant 3 : index
    %c1_333 = arith.constant 1 : index
    %c1_334 = arith.constant 1 : index
    %202 = vector.load %arg1[%c0_331, %c3_332, %c1_333, %c1_334] : memref<1x6x28x46xf32, #tpu.memory_space<vmem>>, vector<1x1x24x42xf32>
    %203 = vector.shape_cast %202 : vector<1x1x24x42xf32> to vector<24x42xf32>
    %c0_335 = arith.constant 0 : index
    %c3_336 = arith.constant 3 : index
    %c1_337 = arith.constant 1 : index
    %c2_338 = arith.constant 2 : index
    %204 = vector.load %arg1[%c0_335, %c3_336, %c1_337, %c2_338] : memref<1x6x28x46xf32, #tpu.memory_space<vmem>>, vector<1x1x24x42xf32>
    %205 = vector.shape_cast %204 : vector<1x1x24x42xf32> to vector<24x42xf32>
    %c0_339 = arith.constant 0 : index
    %c3_340 = arith.constant 3 : index
    %c1_341 = arith.constant 1 : index
    %c3_342 = arith.constant 3 : index
    %206 = vector.load %arg1[%c0_339, %c3_340, %c1_341, %c3_342] : memref<1x6x28x46xf32, #tpu.memory_space<vmem>>, vector<1x1x24x42xf32>
    %207 = vector.shape_cast %206 : vector<1x1x24x42xf32> to vector<24x42xf32>
    %c0_343 = arith.constant 0 : index
    %c3_344 = arith.constant 3 : index
    %c1_345 = arith.constant 1 : index
    %c4_346 = arith.constant 4 : index
    %208 = vector.load %arg1[%c0_343, %c3_344, %c1_345, %c4_346] : memref<1x6x28x46xf32, #tpu.memory_space<vmem>>, vector<1x1x24x42xf32>
    %209 = vector.shape_cast %208 : vector<1x1x24x42xf32> to vector<24x42xf32>
    %c0_347 = arith.constant 0 : index
    %c3_348 = arith.constant 3 : index
    %c2_349 = arith.constant 2 : index
    %c0_350 = arith.constant 0 : index
    %210 = vector.load %arg1[%c0_347, %c3_348, %c2_349, %c0_350] : memref<1x6x28x46xf32, #tpu.memory_space<vmem>>, vector<1x1x24x42xf32>
    %211 = vector.shape_cast %210 : vector<1x1x24x42xf32> to vector<24x42xf32>
    %c0_351 = arith.constant 0 : index
    %c3_352 = arith.constant 3 : index
    %c2_353 = arith.constant 2 : index
    %c1_354 = arith.constant 1 : index
    %212 = vector.load %arg1[%c0_351, %c3_352, %c2_353, %c1_354] : memref<1x6x28x46xf32, #tpu.memory_space<vmem>>, vector<1x1x24x42xf32>
    %213 = vector.shape_cast %212 : vector<1x1x24x42xf32> to vector<24x42xf32>
    %c0_355 = arith.constant 0 : index
    %c3_356 = arith.constant 3 : index
    %c2_357 = arith.constant 2 : index
    %c2_358 = arith.constant 2 : index
    %214 = vector.load %arg1[%c0_355, %c3_356, %c2_357, %c2_358] : memref<1x6x28x46xf32, #tpu.memory_space<vmem>>, vector<1x1x24x42xf32>
    %215 = vector.shape_cast %214 : vector<1x1x24x42xf32> to vector<24x42xf32>
    %c0_359 = arith.constant 0 : index
    %c3_360 = arith.constant 3 : index
    %c2_361 = arith.constant 2 : index
    %c3_362 = arith.constant 3 : index
    %216 = vector.load %arg1[%c0_359, %c3_360, %c2_361, %c3_362] : memref<1x6x28x46xf32, #tpu.memory_space<vmem>>, vector<1x1x24x42xf32>
    %217 = vector.shape_cast %216 : vector<1x1x24x42xf32> to vector<24x42xf32>
    %c0_363 = arith.constant 0 : index
    %c3_364 = arith.constant 3 : index
    %c2_365 = arith.constant 2 : index
    %c4_366 = arith.constant 4 : index
    %218 = vector.load %arg1[%c0_363, %c3_364, %c2_365, %c4_366] : memref<1x6x28x46xf32, #tpu.memory_space<vmem>>, vector<1x1x24x42xf32>
    %219 = vector.shape_cast %218 : vector<1x1x24x42xf32> to vector<24x42xf32>
    %c0_367 = arith.constant 0 : index
    %c3_368 = arith.constant 3 : index
    %c3_369 = arith.constant 3 : index
    %c0_370 = arith.constant 0 : index
    %220 = vector.load %arg1[%c0_367, %c3_368, %c3_369, %c0_370] : memref<1x6x28x46xf32, #tpu.memory_space<vmem>>, vector<1x1x24x42xf32>
    %221 = vector.shape_cast %220 : vector<1x1x24x42xf32> to vector<24x42xf32>
    %c0_371 = arith.constant 0 : index
    %c3_372 = arith.constant 3 : index
    %c3_373 = arith.constant 3 : index
    %c1_374 = arith.constant 1 : index
    %222 = vector.load %arg1[%c0_371, %c3_372, %c3_373, %c1_374] : memref<1x6x28x46xf32, #tpu.memory_space<vmem>>, vector<1x1x24x42xf32>
    %223 = vector.shape_cast %222 : vector<1x1x24x42xf32> to vector<24x42xf32>
    %c0_375 = arith.constant 0 : index
    %c3_376 = arith.constant 3 : index
    %c3_377 = arith.constant 3 : index
    %c2_378 = arith.constant 2 : index
    %224 = vector.load %arg1[%c0_375, %c3_376, %c3_377, %c2_378] : memref<1x6x28x46xf32, #tpu.memory_space<vmem>>, vector<1x1x24x42xf32>
    %225 = vector.shape_cast %224 : vector<1x1x24x42xf32> to vector<24x42xf32>
    %c0_379 = arith.constant 0 : index
    %c3_380 = arith.constant 3 : index
    %c3_381 = arith.constant 3 : index
    %c3_382 = arith.constant 3 : index
    %226 = vector.load %arg1[%c0_379, %c3_380, %c3_381, %c3_382] : memref<1x6x28x46xf32, #tpu.memory_space<vmem>>, vector<1x1x24x42xf32>
    %227 = vector.shape_cast %226 : vector<1x1x24x42xf32> to vector<24x42xf32>
    %c0_383 = arith.constant 0 : index
    %c3_384 = arith.constant 3 : index
    %c3_385 = arith.constant 3 : index
    %c4_386 = arith.constant 4 : index
    %228 = vector.load %arg1[%c0_383, %c3_384, %c3_385, %c4_386] : memref<1x6x28x46xf32, #tpu.memory_space<vmem>>, vector<1x1x24x42xf32>
    %229 = vector.shape_cast %228 : vector<1x1x24x42xf32> to vector<24x42xf32>
    %c0_387 = arith.constant 0 : index
    %c3_388 = arith.constant 3 : index
    %c4_389 = arith.constant 4 : index
    %c0_390 = arith.constant 0 : index
    %230 = vector.load %arg1[%c0_387, %c3_388, %c4_389, %c0_390] : memref<1x6x28x46xf32, #tpu.memory_space<vmem>>, vector<1x1x24x42xf32>
    %231 = vector.shape_cast %230 : vector<1x1x24x42xf32> to vector<24x42xf32>
    %c0_391 = arith.constant 0 : index
    %c3_392 = arith.constant 3 : index
    %c4_393 = arith.constant 4 : index
    %c1_394 = arith.constant 1 : index
    %232 = vector.load %arg1[%c0_391, %c3_392, %c4_393, %c1_394] : memref<1x6x28x46xf32, #tpu.memory_space<vmem>>, vector<1x1x24x42xf32>
    %233 = vector.shape_cast %232 : vector<1x1x24x42xf32> to vector<24x42xf32>
    %c0_395 = arith.constant 0 : index
    %c3_396 = arith.constant 3 : index
    %c4_397 = arith.constant 4 : index
    %c2_398 = arith.constant 2 : index
    %234 = vector.load %arg1[%c0_395, %c3_396, %c4_397, %c2_398] : memref<1x6x28x46xf32, #tpu.memory_space<vmem>>, vector<1x1x24x42xf32>
    %235 = vector.shape_cast %234 : vector<1x1x24x42xf32> to vector<24x42xf32>
    %c0_399 = arith.constant 0 : index
    %c3_400 = arith.constant 3 : index
    %c4_401 = arith.constant 4 : index
    %c3_402 = arith.constant 3 : index
    %236 = vector.load %arg1[%c0_399, %c3_400, %c4_401, %c3_402] : memref<1x6x28x46xf32, #tpu.memory_space<vmem>>, vector<1x1x24x42xf32>
    %237 = vector.shape_cast %236 : vector<1x1x24x42xf32> to vector<24x42xf32>
    %c0_403 = arith.constant 0 : index
    %c3_404 = arith.constant 3 : index
    %c4_405 = arith.constant 4 : index
    %c4_406 = arith.constant 4 : index
    %238 = vector.load %arg1[%c0_403, %c3_404, %c4_405, %c4_406] : memref<1x6x28x46xf32, #tpu.memory_space<vmem>>, vector<1x1x24x42xf32>
    %239 = vector.shape_cast %238 : vector<1x1x24x42xf32> to vector<24x42xf32>
    %c0_407 = arith.constant 0 : index
    %c4_408 = arith.constant 4 : index
    %c0_409 = arith.constant 0 : index
    %c0_410 = arith.constant 0 : index
    %240 = vector.load %arg1[%c0_407, %c4_408, %c0_409, %c0_410] : memref<1x6x28x46xf32, #tpu.memory_space<vmem>>, vector<1x1x24x42xf32>
    %241 = vector.shape_cast %240 : vector<1x1x24x42xf32> to vector<24x42xf32>
    %c0_411 = arith.constant 0 : index
    %c4_412 = arith.constant 4 : index
    %c0_413 = arith.constant 0 : index
    %c1_414 = arith.constant 1 : index
    %242 = vector.load %arg1[%c0_411, %c4_412, %c0_413, %c1_414] : memref<1x6x28x46xf32, #tpu.memory_space<vmem>>, vector<1x1x24x42xf32>
    %243 = vector.shape_cast %242 : vector<1x1x24x42xf32> to vector<24x42xf32>
    %c0_415 = arith.constant 0 : index
    %c4_416 = arith.constant 4 : index
    %c0_417 = arith.constant 0 : index
    %c2_418 = arith.constant 2 : index
    %244 = vector.load %arg1[%c0_415, %c4_416, %c0_417, %c2_418] : memref<1x6x28x46xf32, #tpu.memory_space<vmem>>, vector<1x1x24x42xf32>
    %245 = vector.shape_cast %244 : vector<1x1x24x42xf32> to vector<24x42xf32>
    %c0_419 = arith.constant 0 : index
    %c4_420 = arith.constant 4 : index
    %c0_421 = arith.constant 0 : index
    %c3_422 = arith.constant 3 : index
    %246 = vector.load %arg1[%c0_419, %c4_420, %c0_421, %c3_422] : memref<1x6x28x46xf32, #tpu.memory_space<vmem>>, vector<1x1x24x42xf32>
    %247 = vector.shape_cast %246 : vector<1x1x24x42xf32> to vector<24x42xf32>
    %c0_423 = arith.constant 0 : index
    %c4_424 = arith.constant 4 : index
    %c0_425 = arith.constant 0 : index
    %c4_426 = arith.constant 4 : index
    %248 = vector.load %arg1[%c0_423, %c4_424, %c0_425, %c4_426] : memref<1x6x28x46xf32, #tpu.memory_space<vmem>>, vector<1x1x24x42xf32>
    %249 = vector.shape_cast %248 : vector<1x1x24x42xf32> to vector<24x42xf32>
    %c0_427 = arith.constant 0 : index
    %c4_428 = arith.constant 4 : index
    %c1_429 = arith.constant 1 : index
    %c0_430 = arith.constant 0 : index
    %250 = vector.load %arg1[%c0_427, %c4_428, %c1_429, %c0_430] : memref<1x6x28x46xf32, #tpu.memory_space<vmem>>, vector<1x1x24x42xf32>
    %251 = vector.shape_cast %250 : vector<1x1x24x42xf32> to vector<24x42xf32>
    %c0_431 = arith.constant 0 : index
    %c4_432 = arith.constant 4 : index
    %c1_433 = arith.constant 1 : index
    %c1_434 = arith.constant 1 : index
    %252 = vector.load %arg1[%c0_431, %c4_432, %c1_433, %c1_434] : memref<1x6x28x46xf32, #tpu.memory_space<vmem>>, vector<1x1x24x42xf32>
    %253 = vector.shape_cast %252 : vector<1x1x24x42xf32> to vector<24x42xf32>
    %c0_435 = arith.constant 0 : index
    %c4_436 = arith.constant 4 : index
    %c1_437 = arith.constant 1 : index
    %c2_438 = arith.constant 2 : index
    %254 = vector.load %arg1[%c0_435, %c4_436, %c1_437, %c2_438] : memref<1x6x28x46xf32, #tpu.memory_space<vmem>>, vector<1x1x24x42xf32>
    %255 = vector.shape_cast %254 : vector<1x1x24x42xf32> to vector<24x42xf32>
    %c0_439 = arith.constant 0 : index
    %c4_440 = arith.constant 4 : index
    %c1_441 = arith.constant 1 : index
    %c3_442 = arith.constant 3 : index
    %256 = vector.load %arg1[%c0_439, %c4_440, %c1_441, %c3_442] : memref<1x6x28x46xf32, #tpu.memory_space<vmem>>, vector<1x1x24x42xf32>
    %257 = vector.shape_cast %256 : vector<1x1x24x42xf32> to vector<24x42xf32>
    %c0_443 = arith.constant 0 : index
    %c4_444 = arith.constant 4 : index
    %c1_445 = arith.constant 1 : index
    %c4_446 = arith.constant 4 : index
    %258 = vector.load %arg1[%c0_443, %c4_444, %c1_445, %c4_446] : memref<1x6x28x46xf32, #tpu.memory_space<vmem>>, vector<1x1x24x42xf32>
    %259 = vector.shape_cast %258 : vector<1x1x24x42xf32> to vector<24x42xf32>
    %c0_447 = arith.constant 0 : index
    %c4_448 = arith.constant 4 : index
    %c2_449 = arith.constant 2 : index
    %c0_450 = arith.constant 0 : index
    %260 = vector.load %arg1[%c0_447, %c4_448, %c2_449, %c0_450] : memref<1x6x28x46xf32, #tpu.memory_space<vmem>>, vector<1x1x24x42xf32>
    %261 = vector.shape_cast %260 : vector<1x1x24x42xf32> to vector<24x42xf32>
    %c0_451 = arith.constant 0 : index
    %c4_452 = arith.constant 4 : index
    %c2_453 = arith.constant 2 : index
    %c1_454 = arith.constant 1 : index
    %262 = vector.load %arg1[%c0_451, %c4_452, %c2_453, %c1_454] : memref<1x6x28x46xf32, #tpu.memory_space<vmem>>, vector<1x1x24x42xf32>
    %263 = vector.shape_cast %262 : vector<1x1x24x42xf32> to vector<24x42xf32>
    %c0_455 = arith.constant 0 : index
    %c4_456 = arith.constant 4 : index
    %c2_457 = arith.constant 2 : index
    %c2_458 = arith.constant 2 : index
    %264 = vector.load %arg1[%c0_455, %c4_456, %c2_457, %c2_458] : memref<1x6x28x46xf32, #tpu.memory_space<vmem>>, vector<1x1x24x42xf32>
    %265 = vector.shape_cast %264 : vector<1x1x24x42xf32> to vector<24x42xf32>
    %c0_459 = arith.constant 0 : index
    %c4_460 = arith.constant 4 : index
    %c2_461 = arith.constant 2 : index
    %c3_462 = arith.constant 3 : index
    %266 = vector.load %arg1[%c0_459, %c4_460, %c2_461, %c3_462] : memref<1x6x28x46xf32, #tpu.memory_space<vmem>>, vector<1x1x24x42xf32>
    %267 = vector.shape_cast %266 : vector<1x1x24x42xf32> to vector<24x42xf32>
    %c0_463 = arith.constant 0 : index
    %c4_464 = arith.constant 4 : index
    %c2_465 = arith.constant 2 : index
    %c4_466 = arith.constant 4 : index
    %268 = vector.load %arg1[%c0_463, %c4_464, %c2_465, %c4_466] : memref<1x6x28x46xf32, #tpu.memory_space<vmem>>, vector<1x1x24x42xf32>
    %269 = vector.shape_cast %268 : vector<1x1x24x42xf32> to vector<24x42xf32>
    %c0_467 = arith.constant 0 : index
    %c4_468 = arith.constant 4 : index
    %c3_469 = arith.constant 3 : index
    %c0_470 = arith.constant 0 : index
    %270 = vector.load %arg1[%c0_467, %c4_468, %c3_469, %c0_470] : memref<1x6x28x46xf32, #tpu.memory_space<vmem>>, vector<1x1x24x42xf32>
    %271 = vector.shape_cast %270 : vector<1x1x24x42xf32> to vector<24x42xf32>
    %c0_471 = arith.constant 0 : index
    %c4_472 = arith.constant 4 : index
    %c3_473 = arith.constant 3 : index
    %c1_474 = arith.constant 1 : index
    %272 = vector.load %arg1[%c0_471, %c4_472, %c3_473, %c1_474] : memref<1x6x28x46xf32, #tpu.memory_space<vmem>>, vector<1x1x24x42xf32>
    %273 = vector.shape_cast %272 : vector<1x1x24x42xf32> to vector<24x42xf32>
    %c0_475 = arith.constant 0 : index
    %c4_476 = arith.constant 4 : index
    %c3_477 = arith.constant 3 : index
    %c2_478 = arith.constant 2 : index
    %274 = vector.load %arg1[%c0_475, %c4_476, %c3_477, %c2_478] : memref<1x6x28x46xf32, #tpu.memory_space<vmem>>, vector<1x1x24x42xf32>
    %275 = vector.shape_cast %274 : vector<1x1x24x42xf32> to vector<24x42xf32>
    %c0_479 = arith.constant 0 : index
    %c4_480 = arith.constant 4 : index
    %c3_481 = arith.constant 3 : index
    %c3_482 = arith.constant 3 : index
    %276 = vector.load %arg1[%c0_479, %c4_480, %c3_481, %c3_482] : memref<1x6x28x46xf32, #tpu.memory_space<vmem>>, vector<1x1x24x42xf32>
    %277 = vector.shape_cast %276 : vector<1x1x24x42xf32> to vector<24x42xf32>
    %c0_483 = arith.constant 0 : index
    %c4_484 = arith.constant 4 : index
    %c3_485 = arith.constant 3 : index
    %c4_486 = arith.constant 4 : index
    %278 = vector.load %arg1[%c0_483, %c4_484, %c3_485, %c4_486] : memref<1x6x28x46xf32, #tpu.memory_space<vmem>>, vector<1x1x24x42xf32>
    %279 = vector.shape_cast %278 : vector<1x1x24x42xf32> to vector<24x42xf32>
    %c0_487 = arith.constant 0 : index
    %c4_488 = arith.constant 4 : index
    %c4_489 = arith.constant 4 : index
    %c0_490 = arith.constant 0 : index
    %280 = vector.load %arg1[%c0_487, %c4_488, %c4_489, %c0_490] : memref<1x6x28x46xf32, #tpu.memory_space<vmem>>, vector<1x1x24x42xf32>
    %281 = vector.shape_cast %280 : vector<1x1x24x42xf32> to vector<24x42xf32>
    %c0_491 = arith.constant 0 : index
    %c4_492 = arith.constant 4 : index
    %c4_493 = arith.constant 4 : index
    %c1_494 = arith.constant 1 : index
    %282 = vector.load %arg1[%c0_491, %c4_492, %c4_493, %c1_494] : memref<1x6x28x46xf32, #tpu.memory_space<vmem>>, vector<1x1x24x42xf32>
    %283 = vector.shape_cast %282 : vector<1x1x24x42xf32> to vector<24x42xf32>
    %c0_495 = arith.constant 0 : index
    %c4_496 = arith.constant 4 : index
    %c4_497 = arith.constant 4 : index
    %c2_498 = arith.constant 2 : index
    %284 = vector.load %arg1[%c0_495, %c4_496, %c4_497, %c2_498] : memref<1x6x28x46xf32, #tpu.memory_space<vmem>>, vector<1x1x24x42xf32>
    %285 = vector.shape_cast %284 : vector<1x1x24x42xf32> to vector<24x42xf32>
    %c0_499 = arith.constant 0 : index
    %c4_500 = arith.constant 4 : index
    %c4_501 = arith.constant 4 : index
    %c3_502 = arith.constant 3 : index
    %286 = vector.load %arg1[%c0_499, %c4_500, %c4_501, %c3_502] : memref<1x6x28x46xf32, #tpu.memory_space<vmem>>, vector<1x1x24x42xf32>
    %287 = vector.shape_cast %286 : vector<1x1x24x42xf32> to vector<24x42xf32>
    %c0_503 = arith.constant 0 : index
    %c4_504 = arith.constant 4 : index
    %c4_505 = arith.constant 4 : index
    %c4_506 = arith.constant 4 : index
    %288 = vector.load %arg1[%c0_503, %c4_504, %c4_505, %c4_506] : memref<1x6x28x46xf32, #tpu.memory_space<vmem>>, vector<1x1x24x42xf32>
    %289 = vector.shape_cast %288 : vector<1x1x24x42xf32> to vector<24x42xf32>
    %c0_507 = arith.constant 0 : index
    %c5 = arith.constant 5 : index
    %c0_508 = arith.constant 0 : index
    %c0_509 = arith.constant 0 : index
    %290 = vector.load %arg1[%c0_507, %c5, %c0_508, %c0_509] : memref<1x6x28x46xf32, #tpu.memory_space<vmem>>, vector<1x1x24x42xf32>
    %291 = vector.shape_cast %290 : vector<1x1x24x42xf32> to vector<24x42xf32>
    %c0_510 = arith.constant 0 : index
    %c5_511 = arith.constant 5 : index
    %c0_512 = arith.constant 0 : index
    %c1_513 = arith.constant 1 : index
    %292 = vector.load %arg1[%c0_510, %c5_511, %c0_512, %c1_513] : memref<1x6x28x46xf32, #tpu.memory_space<vmem>>, vector<1x1x24x42xf32>
    %293 = vector.shape_cast %292 : vector<1x1x24x42xf32> to vector<24x42xf32>
    %c0_514 = arith.constant 0 : index
    %c5_515 = arith.constant 5 : index
    %c0_516 = arith.constant 0 : index
    %c2_517 = arith.constant 2 : index
    %294 = vector.load %arg1[%c0_514, %c5_515, %c0_516, %c2_517] : memref<1x6x28x46xf32, #tpu.memory_space<vmem>>, vector<1x1x24x42xf32>
    %295 = vector.shape_cast %294 : vector<1x1x24x42xf32> to vector<24x42xf32>
    %c0_518 = arith.constant 0 : index
    %c5_519 = arith.constant 5 : index
    %c0_520 = arith.constant 0 : index
    %c3_521 = arith.constant 3 : index
    %296 = vector.load %arg1[%c0_518, %c5_519, %c0_520, %c3_521] : memref<1x6x28x46xf32, #tpu.memory_space<vmem>>, vector<1x1x24x42xf32>
    %297 = vector.shape_cast %296 : vector<1x1x24x42xf32> to vector<24x42xf32>
    %c0_522 = arith.constant 0 : index
    %c5_523 = arith.constant 5 : index
    %c0_524 = arith.constant 0 : index
    %c4_525 = arith.constant 4 : index
    %298 = vector.load %arg1[%c0_522, %c5_523, %c0_524, %c4_525] : memref<1x6x28x46xf32, #tpu.memory_space<vmem>>, vector<1x1x24x42xf32>
    %299 = vector.shape_cast %298 : vector<1x1x24x42xf32> to vector<24x42xf32>
    %c0_526 = arith.constant 0 : index
    %c5_527 = arith.constant 5 : index
    %c1_528 = arith.constant 1 : index
    %c0_529 = arith.constant 0 : index
    %300 = vector.load %arg1[%c0_526, %c5_527, %c1_528, %c0_529] : memref<1x6x28x46xf32, #tpu.memory_space<vmem>>, vector<1x1x24x42xf32>
    %301 = vector.shape_cast %300 : vector<1x1x24x42xf32> to vector<24x42xf32>
    %c0_530 = arith.constant 0 : index
    %c5_531 = arith.constant 5 : index
    %c1_532 = arith.constant 1 : index
    %c1_533 = arith.constant 1 : index
    %302 = vector.load %arg1[%c0_530, %c5_531, %c1_532, %c1_533] : memref<1x6x28x46xf32, #tpu.memory_space<vmem>>, vector<1x1x24x42xf32>
    %303 = vector.shape_cast %302 : vector<1x1x24x42xf32> to vector<24x42xf32>
    %c0_534 = arith.constant 0 : index
    %c5_535 = arith.constant 5 : index
    %c1_536 = arith.constant 1 : index
    %c2_537 = arith.constant 2 : index
    %304 = vector.load %arg1[%c0_534, %c5_535, %c1_536, %c2_537] : memref<1x6x28x46xf32, #tpu.memory_space<vmem>>, vector<1x1x24x42xf32>
    %305 = vector.shape_cast %304 : vector<1x1x24x42xf32> to vector<24x42xf32>
    %c0_538 = arith.constant 0 : index
    %c5_539 = arith.constant 5 : index
    %c1_540 = arith.constant 1 : index
    %c3_541 = arith.constant 3 : index
    %306 = vector.load %arg1[%c0_538, %c5_539, %c1_540, %c3_541] : memref<1x6x28x46xf32, #tpu.memory_space<vmem>>, vector<1x1x24x42xf32>
    %307 = vector.shape_cast %306 : vector<1x1x24x42xf32> to vector<24x42xf32>
    %c0_542 = arith.constant 0 : index
    %c5_543 = arith.constant 5 : index
    %c1_544 = arith.constant 1 : index
    %c4_545 = arith.constant 4 : index
    %308 = vector.load %arg1[%c0_542, %c5_543, %c1_544, %c4_545] : memref<1x6x28x46xf32, #tpu.memory_space<vmem>>, vector<1x1x24x42xf32>
    %309 = vector.shape_cast %308 : vector<1x1x24x42xf32> to vector<24x42xf32>
    %c0_546 = arith.constant 0 : index
    %c5_547 = arith.constant 5 : index
    %c2_548 = arith.constant 2 : index
    %c0_549 = arith.constant 0 : index
    %310 = vector.load %arg1[%c0_546, %c5_547, %c2_548, %c0_549] : memref<1x6x28x46xf32, #tpu.memory_space<vmem>>, vector<1x1x24x42xf32>
    %311 = vector.shape_cast %310 : vector<1x1x24x42xf32> to vector<24x42xf32>
    %c0_550 = arith.constant 0 : index
    %c5_551 = arith.constant 5 : index
    %c2_552 = arith.constant 2 : index
    %c1_553 = arith.constant 1 : index
    %312 = vector.load %arg1[%c0_550, %c5_551, %c2_552, %c1_553] : memref<1x6x28x46xf32, #tpu.memory_space<vmem>>, vector<1x1x24x42xf32>
    %313 = vector.shape_cast %312 : vector<1x1x24x42xf32> to vector<24x42xf32>
    %c0_554 = arith.constant 0 : index
    %c5_555 = arith.constant 5 : index
    %c2_556 = arith.constant 2 : index
    %c2_557 = arith.constant 2 : index
    %314 = vector.load %arg1[%c0_554, %c5_555, %c2_556, %c2_557] : memref<1x6x28x46xf32, #tpu.memory_space<vmem>>, vector<1x1x24x42xf32>
    %315 = vector.shape_cast %314 : vector<1x1x24x42xf32> to vector<24x42xf32>
    %c0_558 = arith.constant 0 : index
    %c5_559 = arith.constant 5 : index
    %c2_560 = arith.constant 2 : index
    %c3_561 = arith.constant 3 : index
    %316 = vector.load %arg1[%c0_558, %c5_559, %c2_560, %c3_561] : memref<1x6x28x46xf32, #tpu.memory_space<vmem>>, vector<1x1x24x42xf32>
    %317 = vector.shape_cast %316 : vector<1x1x24x42xf32> to vector<24x42xf32>
    %c0_562 = arith.constant 0 : index
    %c5_563 = arith.constant 5 : index
    %c2_564 = arith.constant 2 : index
    %c4_565 = arith.constant 4 : index
    %318 = vector.load %arg1[%c0_562, %c5_563, %c2_564, %c4_565] : memref<1x6x28x46xf32, #tpu.memory_space<vmem>>, vector<1x1x24x42xf32>
    %319 = vector.shape_cast %318 : vector<1x1x24x42xf32> to vector<24x42xf32>
    %c0_566 = arith.constant 0 : index
    %c5_567 = arith.constant 5 : index
    %c3_568 = arith.constant 3 : index
    %c0_569 = arith.constant 0 : index
    %320 = vector.load %arg1[%c0_566, %c5_567, %c3_568, %c0_569] : memref<1x6x28x46xf32, #tpu.memory_space<vmem>>, vector<1x1x24x42xf32>
    %321 = vector.shape_cast %320 : vector<1x1x24x42xf32> to vector<24x42xf32>
    %c0_570 = arith.constant 0 : index
    %c5_571 = arith.constant 5 : index
    %c3_572 = arith.constant 3 : index
    %c1_573 = arith.constant 1 : index
    %322 = vector.load %arg1[%c0_570, %c5_571, %c3_572, %c1_573] : memref<1x6x28x46xf32, #tpu.memory_space<vmem>>, vector<1x1x24x42xf32>
    %323 = vector.shape_cast %322 : vector<1x1x24x42xf32> to vector<24x42xf32>
    %c0_574 = arith.constant 0 : index
    %c5_575 = arith.constant 5 : index
    %c3_576 = arith.constant 3 : index
    %c2_577 = arith.constant 2 : index
    %324 = vector.load %arg1[%c0_574, %c5_575, %c3_576, %c2_577] : memref<1x6x28x46xf32, #tpu.memory_space<vmem>>, vector<1x1x24x42xf32>
    %325 = vector.shape_cast %324 : vector<1x1x24x42xf32> to vector<24x42xf32>
    %c0_578 = arith.constant 0 : index
    %c5_579 = arith.constant 5 : index
    %c3_580 = arith.constant 3 : index
    %c3_581 = arith.constant 3 : index
    %326 = vector.load %arg1[%c0_578, %c5_579, %c3_580, %c3_581] : memref<1x6x28x46xf32, #tpu.memory_space<vmem>>, vector<1x1x24x42xf32>
    %327 = vector.shape_cast %326 : vector<1x1x24x42xf32> to vector<24x42xf32>
    %c0_582 = arith.constant 0 : index
    %c5_583 = arith.constant 5 : index
    %c3_584 = arith.constant 3 : index
    %c4_585 = arith.constant 4 : index
    %328 = vector.load %arg1[%c0_582, %c5_583, %c3_584, %c4_585] : memref<1x6x28x46xf32, #tpu.memory_space<vmem>>, vector<1x1x24x42xf32>
    %329 = vector.shape_cast %328 : vector<1x1x24x42xf32> to vector<24x42xf32>
    %c0_586 = arith.constant 0 : index
    %c5_587 = arith.constant 5 : index
    %c4_588 = arith.constant 4 : index
    %c0_589 = arith.constant 0 : index
    %330 = vector.load %arg1[%c0_586, %c5_587, %c4_588, %c0_589] : memref<1x6x28x46xf32, #tpu.memory_space<vmem>>, vector<1x1x24x42xf32>
    %331 = vector.shape_cast %330 : vector<1x1x24x42xf32> to vector<24x42xf32>
    %c0_590 = arith.constant 0 : index
    %c5_591 = arith.constant 5 : index
    %c4_592 = arith.constant 4 : index
    %c1_593 = arith.constant 1 : index
    %332 = vector.load %arg1[%c0_590, %c5_591, %c4_592, %c1_593] : memref<1x6x28x46xf32, #tpu.memory_space<vmem>>, vector<1x1x24x42xf32>
    %333 = vector.shape_cast %332 : vector<1x1x24x42xf32> to vector<24x42xf32>
    %c0_594 = arith.constant 0 : index
    %c5_595 = arith.constant 5 : index
    %c4_596 = arith.constant 4 : index
    %c2_597 = arith.constant 2 : index
    %334 = vector.load %arg1[%c0_594, %c5_595, %c4_596, %c2_597] : memref<1x6x28x46xf32, #tpu.memory_space<vmem>>, vector<1x1x24x42xf32>
    %335 = vector.shape_cast %334 : vector<1x1x24x42xf32> to vector<24x42xf32>
    %c0_598 = arith.constant 0 : index
    %c5_599 = arith.constant 5 : index
    %c4_600 = arith.constant 4 : index
    %c3_601 = arith.constant 3 : index
    %336 = vector.load %arg1[%c0_598, %c5_599, %c4_600, %c3_601] : memref<1x6x28x46xf32, #tpu.memory_space<vmem>>, vector<1x1x24x42xf32>
    %337 = vector.shape_cast %336 : vector<1x1x24x42xf32> to vector<24x42xf32>
    %c0_602 = arith.constant 0 : index
    %c5_603 = arith.constant 5 : index
    %c4_604 = arith.constant 4 : index
    %c4_605 = arith.constant 4 : index
    %338 = vector.load %arg1[%c0_602, %c5_603, %c4_604, %c4_605] : memref<1x6x28x46xf32, #tpu.memory_space<vmem>>, vector<1x1x24x42xf32>
    %339 = vector.shape_cast %338 : vector<1x1x24x42xf32> to vector<24x42xf32>
    %c0_i32_606 = arith.constant 0 : i32
    %c16_i32 = arith.constant 16 : i32
    %340 = arith.addi %c0_i32_606, %c16_i32 : i32
    %c1_i32_607 = arith.constant 1 : i32
    scf.for %arg5 = %c0_i32_606 to %340 step %c1_i32_607  : i32 {
      %c150_i32 = arith.constant 150 : i32
      %341 = arith.muli %arg5, %c150_i32 : i32
      %342 = arith.index_cast %341 : i32 to index
      %343 = memref.load %arg2[%342] : memref<2400xf32, #tpu.memory_space<smem>>
      %344 = vector.broadcast %343 : f32 to vector<24x42xf32>
      %345 = arith.mulf %41, %344 : vector<24x42xf32>
      %c1_i32_609 = arith.constant 1 : i32
      %346 = arith.addi %341, %c1_i32_609 : i32
      %347 = arith.index_cast %346 : i32 to index
      %348 = memref.load %arg2[%347] : memref<2400xf32, #tpu.memory_space<smem>>
      %349 = vector.broadcast %348 : f32 to vector<24x42xf32>
      %350 = arith.mulf %43, %349 : vector<24x42xf32>
      %351 = arith.addf %345, %350 : vector<24x42xf32>
      %c2_i32_610 = arith.constant 2 : i32
      %352 = arith.addi %341, %c2_i32_610 : i32
      %353 = arith.index_cast %352 : i32 to index
      %354 = memref.load %arg2[%353] : memref<2400xf32, #tpu.memory_space<smem>>
      %355 = vector.broadcast %354 : f32 to vector<24x42xf32>
      %356 = arith.mulf %45, %355 : vector<24x42xf32>
      %357 = arith.addf %351, %356 : vector<24x42xf32>
      %c3_i32 = arith.constant 3 : i32
      %358 = arith.addi %341, %c3_i32 : i32
      %359 = arith.index_cast %358 : i32 to index
      %360 = memref.load %arg2[%359] : memref<2400xf32, #tpu.memory_space<smem>>
      %361 = vector.broadcast %360 : f32 to vector<24x42xf32>
      %362 = arith.mulf %47, %361 : vector<24x42xf32>
      %363 = arith.addf %357, %362 : vector<24x42xf32>
      %c4_i32 = arith.constant 4 : i32
      %364 = arith.addi %341, %c4_i32 : i32
      %365 = arith.index_cast %364 : i32 to index
      %366 = memref.load %arg2[%365] : memref<2400xf32, #tpu.memory_space<smem>>
      %367 = vector.broadcast %366 : f32 to vector<24x42xf32>
      %368 = arith.mulf %49, %367 : vector<24x42xf32>
      %369 = arith.addf %363, %368 : vector<24x42xf32>
      %c5_i32 = arith.constant 5 : i32
      %370 = arith.addi %341, %c5_i32 : i32
      %371 = arith.index_cast %370 : i32 to index
      %372 = memref.load %arg2[%371] : memref<2400xf32, #tpu.memory_space<smem>>
      %373 = vector.broadcast %372 : f32 to vector<24x42xf32>
      %374 = arith.mulf %51, %373 : vector<24x42xf32>
      %375 = arith.addf %369, %374 : vector<24x42xf32>
      %c6_i32 = arith.constant 6 : i32
      %376 = arith.addi %341, %c6_i32 : i32
      %377 = arith.index_cast %376 : i32 to index
      %378 = memref.load %arg2[%377] : memref<2400xf32, #tpu.memory_space<smem>>
      %379 = vector.broadcast %378 : f32 to vector<24x42xf32>
      %380 = arith.mulf %53, %379 : vector<24x42xf32>
      %381 = arith.addf %375, %380 : vector<24x42xf32>
      %c7_i32 = arith.constant 7 : i32
      %382 = arith.addi %341, %c7_i32 : i32
      %383 = arith.index_cast %382 : i32 to index
      %384 = memref.load %arg2[%383] : memref<2400xf32, #tpu.memory_space<smem>>
      %385 = vector.broadcast %384 : f32 to vector<24x42xf32>
      %386 = arith.mulf %55, %385 : vector<24x42xf32>
      %387 = arith.addf %381, %386 : vector<24x42xf32>
      %c8_i32 = arith.constant 8 : i32
      %388 = arith.addi %341, %c8_i32 : i32
      %389 = arith.index_cast %388 : i32 to index
      %390 = memref.load %arg2[%389] : memref<2400xf32, #tpu.memory_space<smem>>
      %391 = vector.broadcast %390 : f32 to vector<24x42xf32>
      %392 = arith.mulf %57, %391 : vector<24x42xf32>
      %393 = arith.addf %387, %392 : vector<24x42xf32>
      %c9_i32 = arith.constant 9 : i32
      %394 = arith.addi %341, %c9_i32 : i32
      %395 = arith.index_cast %394 : i32 to index
      %396 = memref.load %arg2[%395] : memref<2400xf32, #tpu.memory_space<smem>>
      %397 = vector.broadcast %396 : f32 to vector<24x42xf32>
      %398 = arith.mulf %59, %397 : vector<24x42xf32>
      %399 = arith.addf %393, %398 : vector<24x42xf32>
      %c10_i32 = arith.constant 10 : i32
      %400 = arith.addi %341, %c10_i32 : i32
      %401 = arith.index_cast %400 : i32 to index
      %402 = memref.load %arg2[%401] : memref<2400xf32, #tpu.memory_space<smem>>
      %403 = vector.broadcast %402 : f32 to vector<24x42xf32>
      %404 = arith.mulf %61, %403 : vector<24x42xf32>
      %405 = arith.addf %399, %404 : vector<24x42xf32>
      %c11_i32 = arith.constant 11 : i32
      %406 = arith.addi %341, %c11_i32 : i32
      %407 = arith.index_cast %406 : i32 to index
      %408 = memref.load %arg2[%407] : memref<2400xf32, #tpu.memory_space<smem>>
      %409 = vector.broadcast %408 : f32 to vector<24x42xf32>
      %410 = arith.mulf %63, %409 : vector<24x42xf32>
      %411 = arith.addf %405, %410 : vector<24x42xf32>
      %c12_i32 = arith.constant 12 : i32
      %412 = arith.addi %341, %c12_i32 : i32
      %413 = arith.index_cast %412 : i32 to index
      %414 = memref.load %arg2[%413] : memref<2400xf32, #tpu.memory_space<smem>>
      %415 = vector.broadcast %414 : f32 to vector<24x42xf32>
      %416 = arith.mulf %65, %415 : vector<24x42xf32>
      %417 = arith.addf %411, %416 : vector<24x42xf32>
      %c13_i32 = arith.constant 13 : i32
      %418 = arith.addi %341, %c13_i32 : i32
      %419 = arith.index_cast %418 : i32 to index
      %420 = memref.load %arg2[%419] : memref<2400xf32, #tpu.memory_space<smem>>
      %421 = vector.broadcast %420 : f32 to vector<24x42xf32>
      %422 = arith.mulf %67, %421 : vector<24x42xf32>
      %423 = arith.addf %417, %422 : vector<24x42xf32>
      %c14_i32 = arith.constant 14 : i32
      %424 = arith.addi %341, %c14_i32 : i32
      %425 = arith.index_cast %424 : i32 to index
      %426 = memref.load %arg2[%425] : memref<2400xf32, #tpu.memory_space<smem>>
      %427 = vector.broadcast %426 : f32 to vector<24x42xf32>
      %428 = arith.mulf %69, %427 : vector<24x42xf32>
      %429 = arith.addf %423, %428 : vector<24x42xf32>
      %c15_i32 = arith.constant 15 : i32
      %430 = arith.addi %341, %c15_i32 : i32
      %431 = arith.index_cast %430 : i32 to index
      %432 = memref.load %arg2[%431] : memref<2400xf32, #tpu.memory_space<smem>>
      %433 = vector.broadcast %432 : f32 to vector<24x42xf32>
      %434 = arith.mulf %71, %433 : vector<24x42xf32>
      %435 = arith.addf %429, %434 : vector<24x42xf32>
      %c16_i32_611 = arith.constant 16 : i32
      %436 = arith.addi %341, %c16_i32_611 : i32
      %437 = arith.index_cast %436 : i32 to index
      %438 = memref.load %arg2[%437] : memref<2400xf32, #tpu.memory_space<smem>>
      %439 = vector.broadcast %438 : f32 to vector<24x42xf32>
      %440 = arith.mulf %73, %439 : vector<24x42xf32>
      %441 = arith.addf %435, %440 : vector<24x42xf32>
      %c17_i32 = arith.constant 17 : i32
      %442 = arith.addi %341, %c17_i32 : i32
      %443 = arith.index_cast %442 : i32 to index
      %444 = memref.load %arg2[%443] : memref<2400xf32, #tpu.memory_space<smem>>
      %445 = vector.broadcast %444 : f32 to vector<24x42xf32>
      %446 = arith.mulf %75, %445 : vector<24x42xf32>
      %447 = arith.addf %441, %446 : vector<24x42xf32>
      %c18_i32 = arith.constant 18 : i32
      %448 = arith.addi %341, %c18_i32 : i32
      %449 = arith.index_cast %448 : i32 to index
      %450 = memref.load %arg2[%449] : memref<2400xf32, #tpu.memory_space<smem>>
      %451 = vector.broadcast %450 : f32 to vector<24x42xf32>
      %452 = arith.mulf %77, %451 : vector<24x42xf32>
      %453 = arith.addf %447, %452 : vector<24x42xf32>
      %c19_i32 = arith.constant 19 : i32
      %454 = arith.addi %341, %c19_i32 : i32
      %455 = arith.index_cast %454 : i32 to index
      %456 = memref.load %arg2[%455] : memref<2400xf32, #tpu.memory_space<smem>>
      %457 = vector.broadcast %456 : f32 to vector<24x42xf32>
      %458 = arith.mulf %79, %457 : vector<24x42xf32>
      %459 = arith.addf %453, %458 : vector<24x42xf32>
      %c20_i32 = arith.constant 20 : i32
      %460 = arith.addi %341, %c20_i32 : i32
      %461 = arith.index_cast %460 : i32 to index
      %462 = memref.load %arg2[%461] : memref<2400xf32, #tpu.memory_space<smem>>
      %463 = vector.broadcast %462 : f32 to vector<24x42xf32>
      %464 = arith.mulf %81, %463 : vector<24x42xf32>
      %465 = arith.addf %459, %464 : vector<24x42xf32>
      %c21_i32 = arith.constant 21 : i32
      %466 = arith.addi %341, %c21_i32 : i32
      %467 = arith.index_cast %466 : i32 to index
      %468 = memref.load %arg2[%467] : memref<2400xf32, #tpu.memory_space<smem>>
      %469 = vector.broadcast %468 : f32 to vector<24x42xf32>
      %470 = arith.mulf %83, %469 : vector<24x42xf32>
      %471 = arith.addf %465, %470 : vector<24x42xf32>
      %c22_i32 = arith.constant 22 : i32
      %472 = arith.addi %341, %c22_i32 : i32
      %473 = arith.index_cast %472 : i32 to index
      %474 = memref.load %arg2[%473] : memref<2400xf32, #tpu.memory_space<smem>>
      %475 = vector.broadcast %474 : f32 to vector<24x42xf32>
      %476 = arith.mulf %85, %475 : vector<24x42xf32>
      %477 = arith.addf %471, %476 : vector<24x42xf32>
      %c23_i32 = arith.constant 23 : i32
      %478 = arith.addi %341, %c23_i32 : i32
      %479 = arith.index_cast %478 : i32 to index
      %480 = memref.load %arg2[%479] : memref<2400xf32, #tpu.memory_space<smem>>
      %481 = vector.broadcast %480 : f32 to vector<24x42xf32>
      %482 = arith.mulf %87, %481 : vector<24x42xf32>
      %483 = arith.addf %477, %482 : vector<24x42xf32>
      %c24_i32 = arith.constant 24 : i32
      %484 = arith.addi %341, %c24_i32 : i32
      %485 = arith.index_cast %484 : i32 to index
      %486 = memref.load %arg2[%485] : memref<2400xf32, #tpu.memory_space<smem>>
      %487 = vector.broadcast %486 : f32 to vector<24x42xf32>
      %488 = arith.mulf %89, %487 : vector<24x42xf32>
      %489 = arith.addf %483, %488 : vector<24x42xf32>
      %c25_i32 = arith.constant 25 : i32
      %490 = arith.addi %341, %c25_i32 : i32
      %491 = arith.index_cast %490 : i32 to index
      %492 = memref.load %arg2[%491] : memref<2400xf32, #tpu.memory_space<smem>>
      %493 = vector.broadcast %492 : f32 to vector<24x42xf32>
      %494 = arith.mulf %91, %493 : vector<24x42xf32>
      %495 = arith.addf %489, %494 : vector<24x42xf32>
      %c26_i32 = arith.constant 26 : i32
      %496 = arith.addi %341, %c26_i32 : i32
      %497 = arith.index_cast %496 : i32 to index
      %498 = memref.load %arg2[%497] : memref<2400xf32, #tpu.memory_space<smem>>
      %499 = vector.broadcast %498 : f32 to vector<24x42xf32>
      %500 = arith.mulf %93, %499 : vector<24x42xf32>
      %501 = arith.addf %495, %500 : vector<24x42xf32>
      %c27_i32 = arith.constant 27 : i32
      %502 = arith.addi %341, %c27_i32 : i32
      %503 = arith.index_cast %502 : i32 to index
      %504 = memref.load %arg2[%503] : memref<2400xf32, #tpu.memory_space<smem>>
      %505 = vector.broadcast %504 : f32 to vector<24x42xf32>
      %506 = arith.mulf %95, %505 : vector<24x42xf32>
      %507 = arith.addf %501, %506 : vector<24x42xf32>
      %c28_i32 = arith.constant 28 : i32
      %508 = arith.addi %341, %c28_i32 : i32
      %509 = arith.index_cast %508 : i32 to index
      %510 = memref.load %arg2[%509] : memref<2400xf32, #tpu.memory_space<smem>>
      %511 = vector.broadcast %510 : f32 to vector<24x42xf32>
      %512 = arith.mulf %97, %511 : vector<24x42xf32>
      %513 = arith.addf %507, %512 : vector<24x42xf32>
      %c29_i32 = arith.constant 29 : i32
      %514 = arith.addi %341, %c29_i32 : i32
      %515 = arith.index_cast %514 : i32 to index
      %516 = memref.load %arg2[%515] : memref<2400xf32, #tpu.memory_space<smem>>
      %517 = vector.broadcast %516 : f32 to vector<24x42xf32>
      %518 = arith.mulf %99, %517 : vector<24x42xf32>
      %519 = arith.addf %513, %518 : vector<24x42xf32>
      %c30_i32 = arith.constant 30 : i32
      %520 = arith.addi %341, %c30_i32 : i32
      %521 = arith.index_cast %520 : i32 to index
      %522 = memref.load %arg2[%521] : memref<2400xf32, #tpu.memory_space<smem>>
      %523 = vector.broadcast %522 : f32 to vector<24x42xf32>
      %524 = arith.mulf %101, %523 : vector<24x42xf32>
      %525 = arith.addf %519, %524 : vector<24x42xf32>
      %c31_i32 = arith.constant 31 : i32
      %526 = arith.addi %341, %c31_i32 : i32
      %527 = arith.index_cast %526 : i32 to index
      %528 = memref.load %arg2[%527] : memref<2400xf32, #tpu.memory_space<smem>>
      %529 = vector.broadcast %528 : f32 to vector<24x42xf32>
      %530 = arith.mulf %103, %529 : vector<24x42xf32>
      %531 = arith.addf %525, %530 : vector<24x42xf32>
      %c32_i32 = arith.constant 32 : i32
      %532 = arith.addi %341, %c32_i32 : i32
      %533 = arith.index_cast %532 : i32 to index
      %534 = memref.load %arg2[%533] : memref<2400xf32, #tpu.memory_space<smem>>
      %535 = vector.broadcast %534 : f32 to vector<24x42xf32>
      %536 = arith.mulf %105, %535 : vector<24x42xf32>
      %537 = arith.addf %531, %536 : vector<24x42xf32>
      %c33_i32 = arith.constant 33 : i32
      %538 = arith.addi %341, %c33_i32 : i32
      %539 = arith.index_cast %538 : i32 to index
      %540 = memref.load %arg2[%539] : memref<2400xf32, #tpu.memory_space<smem>>
      %541 = vector.broadcast %540 : f32 to vector<24x42xf32>
      %542 = arith.mulf %107, %541 : vector<24x42xf32>
      %543 = arith.addf %537, %542 : vector<24x42xf32>
      %c34_i32 = arith.constant 34 : i32
      %544 = arith.addi %341, %c34_i32 : i32
      %545 = arith.index_cast %544 : i32 to index
      %546 = memref.load %arg2[%545] : memref<2400xf32, #tpu.memory_space<smem>>
      %547 = vector.broadcast %546 : f32 to vector<24x42xf32>
      %548 = arith.mulf %109, %547 : vector<24x42xf32>
      %549 = arith.addf %543, %548 : vector<24x42xf32>
      %c35_i32 = arith.constant 35 : i32
      %550 = arith.addi %341, %c35_i32 : i32
      %551 = arith.index_cast %550 : i32 to index
      %552 = memref.load %arg2[%551] : memref<2400xf32, #tpu.memory_space<smem>>
      %553 = vector.broadcast %552 : f32 to vector<24x42xf32>
      %554 = arith.mulf %111, %553 : vector<24x42xf32>
      %555 = arith.addf %549, %554 : vector<24x42xf32>
      %c36_i32 = arith.constant 36 : i32
      %556 = arith.addi %341, %c36_i32 : i32
      %557 = arith.index_cast %556 : i32 to index
      %558 = memref.load %arg2[%557] : memref<2400xf32, #tpu.memory_space<smem>>
      %559 = vector.broadcast %558 : f32 to vector<24x42xf32>
      %560 = arith.mulf %113, %559 : vector<24x42xf32>
      %561 = arith.addf %555, %560 : vector<24x42xf32>
      %c37_i32 = arith.constant 37 : i32
      %562 = arith.addi %341, %c37_i32 : i32
      %563 = arith.index_cast %562 : i32 to index
      %564 = memref.load %arg2[%563] : memref<2400xf32, #tpu.memory_space<smem>>
      %565 = vector.broadcast %564 : f32 to vector<24x42xf32>
      %566 = arith.mulf %115, %565 : vector<24x42xf32>
      %567 = arith.addf %561, %566 : vector<24x42xf32>
      %c38_i32 = arith.constant 38 : i32
      %568 = arith.addi %341, %c38_i32 : i32
      %569 = arith.index_cast %568 : i32 to index
      %570 = memref.load %arg2[%569] : memref<2400xf32, #tpu.memory_space<smem>>
      %571 = vector.broadcast %570 : f32 to vector<24x42xf32>
      %572 = arith.mulf %117, %571 : vector<24x42xf32>
      %573 = arith.addf %567, %572 : vector<24x42xf32>
      %c39_i32 = arith.constant 39 : i32
      %574 = arith.addi %341, %c39_i32 : i32
      %575 = arith.index_cast %574 : i32 to index
      %576 = memref.load %arg2[%575] : memref<2400xf32, #tpu.memory_space<smem>>
      %577 = vector.broadcast %576 : f32 to vector<24x42xf32>
      %578 = arith.mulf %119, %577 : vector<24x42xf32>
      %579 = arith.addf %573, %578 : vector<24x42xf32>
      %c40_i32 = arith.constant 40 : i32
      %580 = arith.addi %341, %c40_i32 : i32
      %581 = arith.index_cast %580 : i32 to index
      %582 = memref.load %arg2[%581] : memref<2400xf32, #tpu.memory_space<smem>>
      %583 = vector.broadcast %582 : f32 to vector<24x42xf32>
      %584 = arith.mulf %121, %583 : vector<24x42xf32>
      %585 = arith.addf %579, %584 : vector<24x42xf32>
      %c41_i32 = arith.constant 41 : i32
      %586 = arith.addi %341, %c41_i32 : i32
      %587 = arith.index_cast %586 : i32 to index
      %588 = memref.load %arg2[%587] : memref<2400xf32, #tpu.memory_space<smem>>
      %589 = vector.broadcast %588 : f32 to vector<24x42xf32>
      %590 = arith.mulf %123, %589 : vector<24x42xf32>
      %591 = arith.addf %585, %590 : vector<24x42xf32>
      %c42_i32 = arith.constant 42 : i32
      %592 = arith.addi %341, %c42_i32 : i32
      %593 = arith.index_cast %592 : i32 to index
      %594 = memref.load %arg2[%593] : memref<2400xf32, #tpu.memory_space<smem>>
      %595 = vector.broadcast %594 : f32 to vector<24x42xf32>
      %596 = arith.mulf %125, %595 : vector<24x42xf32>
      %597 = arith.addf %591, %596 : vector<24x42xf32>
      %c43_i32 = arith.constant 43 : i32
      %598 = arith.addi %341, %c43_i32 : i32
      %599 = arith.index_cast %598 : i32 to index
      %600 = memref.load %arg2[%599] : memref<2400xf32, #tpu.memory_space<smem>>
      %601 = vector.broadcast %600 : f32 to vector<24x42xf32>
      %602 = arith.mulf %127, %601 : vector<24x42xf32>
      %603 = arith.addf %597, %602 : vector<24x42xf32>
      %c44_i32 = arith.constant 44 : i32
      %604 = arith.addi %341, %c44_i32 : i32
      %605 = arith.index_cast %604 : i32 to index
      %606 = memref.load %arg2[%605] : memref<2400xf32, #tpu.memory_space<smem>>
      %607 = vector.broadcast %606 : f32 to vector<24x42xf32>
      %608 = arith.mulf %129, %607 : vector<24x42xf32>
      %609 = arith.addf %603, %608 : vector<24x42xf32>
      %c45_i32 = arith.constant 45 : i32
      %610 = arith.addi %341, %c45_i32 : i32
      %611 = arith.index_cast %610 : i32 to index
      %612 = memref.load %arg2[%611] : memref<2400xf32, #tpu.memory_space<smem>>
      %613 = vector.broadcast %612 : f32 to vector<24x42xf32>
      %614 = arith.mulf %131, %613 : vector<24x42xf32>
      %615 = arith.addf %609, %614 : vector<24x42xf32>
      %c46_i32 = arith.constant 46 : i32
      %616 = arith.addi %341, %c46_i32 : i32
      %617 = arith.index_cast %616 : i32 to index
      %618 = memref.load %arg2[%617] : memref<2400xf32, #tpu.memory_space<smem>>
      %619 = vector.broadcast %618 : f32 to vector<24x42xf32>
      %620 = arith.mulf %133, %619 : vector<24x42xf32>
      %621 = arith.addf %615, %620 : vector<24x42xf32>
      %c47_i32 = arith.constant 47 : i32
      %622 = arith.addi %341, %c47_i32 : i32
      %623 = arith.index_cast %622 : i32 to index
      %624 = memref.load %arg2[%623] : memref<2400xf32, #tpu.memory_space<smem>>
      %625 = vector.broadcast %624 : f32 to vector<24x42xf32>
      %626 = arith.mulf %135, %625 : vector<24x42xf32>
      %627 = arith.addf %621, %626 : vector<24x42xf32>
      %c48_i32 = arith.constant 48 : i32
      %628 = arith.addi %341, %c48_i32 : i32
      %629 = arith.index_cast %628 : i32 to index
      %630 = memref.load %arg2[%629] : memref<2400xf32, #tpu.memory_space<smem>>
      %631 = vector.broadcast %630 : f32 to vector<24x42xf32>
      %632 = arith.mulf %137, %631 : vector<24x42xf32>
      %633 = arith.addf %627, %632 : vector<24x42xf32>
      %c49_i32 = arith.constant 49 : i32
      %634 = arith.addi %341, %c49_i32 : i32
      %635 = arith.index_cast %634 : i32 to index
      %636 = memref.load %arg2[%635] : memref<2400xf32, #tpu.memory_space<smem>>
      %637 = vector.broadcast %636 : f32 to vector<24x42xf32>
      %638 = arith.mulf %139, %637 : vector<24x42xf32>
      %639 = arith.addf %633, %638 : vector<24x42xf32>
      %c50_i32 = arith.constant 50 : i32
      %640 = arith.addi %341, %c50_i32 : i32
      %641 = arith.index_cast %640 : i32 to index
      %642 = memref.load %arg2[%641] : memref<2400xf32, #tpu.memory_space<smem>>
      %643 = vector.broadcast %642 : f32 to vector<24x42xf32>
      %644 = arith.mulf %141, %643 : vector<24x42xf32>
      %645 = arith.addf %639, %644 : vector<24x42xf32>
      %c51_i32 = arith.constant 51 : i32
      %646 = arith.addi %341, %c51_i32 : i32
      %647 = arith.index_cast %646 : i32 to index
      %648 = memref.load %arg2[%647] : memref<2400xf32, #tpu.memory_space<smem>>
      %649 = vector.broadcast %648 : f32 to vector<24x42xf32>
      %650 = arith.mulf %143, %649 : vector<24x42xf32>
      %651 = arith.addf %645, %650 : vector<24x42xf32>
      %c52_i32 = arith.constant 52 : i32
      %652 = arith.addi %341, %c52_i32 : i32
      %653 = arith.index_cast %652 : i32 to index
      %654 = memref.load %arg2[%653] : memref<2400xf32, #tpu.memory_space<smem>>
      %655 = vector.broadcast %654 : f32 to vector<24x42xf32>
      %656 = arith.mulf %145, %655 : vector<24x42xf32>
      %657 = arith.addf %651, %656 : vector<24x42xf32>
      %c53_i32 = arith.constant 53 : i32
      %658 = arith.addi %341, %c53_i32 : i32
      %659 = arith.index_cast %658 : i32 to index
      %660 = memref.load %arg2[%659] : memref<2400xf32, #tpu.memory_space<smem>>
      %661 = vector.broadcast %660 : f32 to vector<24x42xf32>
      %662 = arith.mulf %147, %661 : vector<24x42xf32>
      %663 = arith.addf %657, %662 : vector<24x42xf32>
      %c54_i32 = arith.constant 54 : i32
      %664 = arith.addi %341, %c54_i32 : i32
      %665 = arith.index_cast %664 : i32 to index
      %666 = memref.load %arg2[%665] : memref<2400xf32, #tpu.memory_space<smem>>
      %667 = vector.broadcast %666 : f32 to vector<24x42xf32>
      %668 = arith.mulf %149, %667 : vector<24x42xf32>
      %669 = arith.addf %663, %668 : vector<24x42xf32>
      %c55_i32 = arith.constant 55 : i32
      %670 = arith.addi %341, %c55_i32 : i32
      %671 = arith.index_cast %670 : i32 to index
      %672 = memref.load %arg2[%671] : memref<2400xf32, #tpu.memory_space<smem>>
      %673 = vector.broadcast %672 : f32 to vector<24x42xf32>
      %674 = arith.mulf %151, %673 : vector<24x42xf32>
      %675 = arith.addf %669, %674 : vector<24x42xf32>
      %c56_i32 = arith.constant 56 : i32
      %676 = arith.addi %341, %c56_i32 : i32
      %677 = arith.index_cast %676 : i32 to index
      %678 = memref.load %arg2[%677] : memref<2400xf32, #tpu.memory_space<smem>>
      %679 = vector.broadcast %678 : f32 to vector<24x42xf32>
      %680 = arith.mulf %153, %679 : vector<24x42xf32>
      %681 = arith.addf %675, %680 : vector<24x42xf32>
      %c57_i32 = arith.constant 57 : i32
      %682 = arith.addi %341, %c57_i32 : i32
      %683 = arith.index_cast %682 : i32 to index
      %684 = memref.load %arg2[%683] : memref<2400xf32, #tpu.memory_space<smem>>
      %685 = vector.broadcast %684 : f32 to vector<24x42xf32>
      %686 = arith.mulf %155, %685 : vector<24x42xf32>
      %687 = arith.addf %681, %686 : vector<24x42xf32>
      %c58_i32 = arith.constant 58 : i32
      %688 = arith.addi %341, %c58_i32 : i32
      %689 = arith.index_cast %688 : i32 to index
      %690 = memref.load %arg2[%689] : memref<2400xf32, #tpu.memory_space<smem>>
      %691 = vector.broadcast %690 : f32 to vector<24x42xf32>
      %692 = arith.mulf %157, %691 : vector<24x42xf32>
      %693 = arith.addf %687, %692 : vector<24x42xf32>
      %c59_i32 = arith.constant 59 : i32
      %694 = arith.addi %341, %c59_i32 : i32
      %695 = arith.index_cast %694 : i32 to index
      %696 = memref.load %arg2[%695] : memref<2400xf32, #tpu.memory_space<smem>>
      %697 = vector.broadcast %696 : f32 to vector<24x42xf32>
      %698 = arith.mulf %159, %697 : vector<24x42xf32>
      %699 = arith.addf %693, %698 : vector<24x42xf32>
      %c60_i32 = arith.constant 60 : i32
      %700 = arith.addi %341, %c60_i32 : i32
      %701 = arith.index_cast %700 : i32 to index
      %702 = memref.load %arg2[%701] : memref<2400xf32, #tpu.memory_space<smem>>
      %703 = vector.broadcast %702 : f32 to vector<24x42xf32>
      %704 = arith.mulf %161, %703 : vector<24x42xf32>
      %705 = arith.addf %699, %704 : vector<24x42xf32>
      %c61_i32 = arith.constant 61 : i32
      %706 = arith.addi %341, %c61_i32 : i32
      %707 = arith.index_cast %706 : i32 to index
      %708 = memref.load %arg2[%707] : memref<2400xf32, #tpu.memory_space<smem>>
      %709 = vector.broadcast %708 : f32 to vector<24x42xf32>
      %710 = arith.mulf %163, %709 : vector<24x42xf32>
      %711 = arith.addf %705, %710 : vector<24x42xf32>
      %c62_i32 = arith.constant 62 : i32
      %712 = arith.addi %341, %c62_i32 : i32
      %713 = arith.index_cast %712 : i32 to index
      %714 = memref.load %arg2[%713] : memref<2400xf32, #tpu.memory_space<smem>>
      %715 = vector.broadcast %714 : f32 to vector<24x42xf32>
      %716 = arith.mulf %165, %715 : vector<24x42xf32>
      %717 = arith.addf %711, %716 : vector<24x42xf32>
      %c63_i32 = arith.constant 63 : i32
      %718 = arith.addi %341, %c63_i32 : i32
      %719 = arith.index_cast %718 : i32 to index
      %720 = memref.load %arg2[%719] : memref<2400xf32, #tpu.memory_space<smem>>
      %721 = vector.broadcast %720 : f32 to vector<24x42xf32>
      %722 = arith.mulf %167, %721 : vector<24x42xf32>
      %723 = arith.addf %717, %722 : vector<24x42xf32>
      %c64_i32 = arith.constant 64 : i32
      %724 = arith.addi %341, %c64_i32 : i32
      %725 = arith.index_cast %724 : i32 to index
      %726 = memref.load %arg2[%725] : memref<2400xf32, #tpu.memory_space<smem>>
      %727 = vector.broadcast %726 : f32 to vector<24x42xf32>
      %728 = arith.mulf %169, %727 : vector<24x42xf32>
      %729 = arith.addf %723, %728 : vector<24x42xf32>
      %c65_i32 = arith.constant 65 : i32
      %730 = arith.addi %341, %c65_i32 : i32
      %731 = arith.index_cast %730 : i32 to index
      %732 = memref.load %arg2[%731] : memref<2400xf32, #tpu.memory_space<smem>>
      %733 = vector.broadcast %732 : f32 to vector<24x42xf32>
      %734 = arith.mulf %171, %733 : vector<24x42xf32>
      %735 = arith.addf %729, %734 : vector<24x42xf32>
      %c66_i32 = arith.constant 66 : i32
      %736 = arith.addi %341, %c66_i32 : i32
      %737 = arith.index_cast %736 : i32 to index
      %738 = memref.load %arg2[%737] : memref<2400xf32, #tpu.memory_space<smem>>
      %739 = vector.broadcast %738 : f32 to vector<24x42xf32>
      %740 = arith.mulf %173, %739 : vector<24x42xf32>
      %741 = arith.addf %735, %740 : vector<24x42xf32>
      %c67_i32 = arith.constant 67 : i32
      %742 = arith.addi %341, %c67_i32 : i32
      %743 = arith.index_cast %742 : i32 to index
      %744 = memref.load %arg2[%743] : memref<2400xf32, #tpu.memory_space<smem>>
      %745 = vector.broadcast %744 : f32 to vector<24x42xf32>
      %746 = arith.mulf %175, %745 : vector<24x42xf32>
      %747 = arith.addf %741, %746 : vector<24x42xf32>
      %c68_i32 = arith.constant 68 : i32
      %748 = arith.addi %341, %c68_i32 : i32
      %749 = arith.index_cast %748 : i32 to index
      %750 = memref.load %arg2[%749] : memref<2400xf32, #tpu.memory_space<smem>>
      %751 = vector.broadcast %750 : f32 to vector<24x42xf32>
      %752 = arith.mulf %177, %751 : vector<24x42xf32>
      %753 = arith.addf %747, %752 : vector<24x42xf32>
      %c69_i32 = arith.constant 69 : i32
      %754 = arith.addi %341, %c69_i32 : i32
      %755 = arith.index_cast %754 : i32 to index
      %756 = memref.load %arg2[%755] : memref<2400xf32, #tpu.memory_space<smem>>
      %757 = vector.broadcast %756 : f32 to vector<24x42xf32>
      %758 = arith.mulf %179, %757 : vector<24x42xf32>
      %759 = arith.addf %753, %758 : vector<24x42xf32>
      %c70_i32 = arith.constant 70 : i32
      %760 = arith.addi %341, %c70_i32 : i32
      %761 = arith.index_cast %760 : i32 to index
      %762 = memref.load %arg2[%761] : memref<2400xf32, #tpu.memory_space<smem>>
      %763 = vector.broadcast %762 : f32 to vector<24x42xf32>
      %764 = arith.mulf %181, %763 : vector<24x42xf32>
      %765 = arith.addf %759, %764 : vector<24x42xf32>
      %c71_i32 = arith.constant 71 : i32
      %766 = arith.addi %341, %c71_i32 : i32
      %767 = arith.index_cast %766 : i32 to index
      %768 = memref.load %arg2[%767] : memref<2400xf32, #tpu.memory_space<smem>>
      %769 = vector.broadcast %768 : f32 to vector<24x42xf32>
      %770 = arith.mulf %183, %769 : vector<24x42xf32>
      %771 = arith.addf %765, %770 : vector<24x42xf32>
      %c72_i32 = arith.constant 72 : i32
      %772 = arith.addi %341, %c72_i32 : i32
      %773 = arith.index_cast %772 : i32 to index
      %774 = memref.load %arg2[%773] : memref<2400xf32, #tpu.memory_space<smem>>
      %775 = vector.broadcast %774 : f32 to vector<24x42xf32>
      %776 = arith.mulf %185, %775 : vector<24x42xf32>
      %777 = arith.addf %771, %776 : vector<24x42xf32>
      %c73_i32 = arith.constant 73 : i32
      %778 = arith.addi %341, %c73_i32 : i32
      %779 = arith.index_cast %778 : i32 to index
      %780 = memref.load %arg2[%779] : memref<2400xf32, #tpu.memory_space<smem>>
      %781 = vector.broadcast %780 : f32 to vector<24x42xf32>
      %782 = arith.mulf %187, %781 : vector<24x42xf32>
      %783 = arith.addf %777, %782 : vector<24x42xf32>
      %c74_i32 = arith.constant 74 : i32
      %784 = arith.addi %341, %c74_i32 : i32
      %785 = arith.index_cast %784 : i32 to index
      %786 = memref.load %arg2[%785] : memref<2400xf32, #tpu.memory_space<smem>>
      %787 = vector.broadcast %786 : f32 to vector<24x42xf32>
      %788 = arith.mulf %189, %787 : vector<24x42xf32>
      %789 = arith.addf %783, %788 : vector<24x42xf32>
      %c75_i32 = arith.constant 75 : i32
      %790 = arith.addi %341, %c75_i32 : i32
      %791 = arith.index_cast %790 : i32 to index
      %792 = memref.load %arg2[%791] : memref<2400xf32, #tpu.memory_space<smem>>
      %793 = vector.broadcast %792 : f32 to vector<24x42xf32>
      %794 = arith.mulf %191, %793 : vector<24x42xf32>
      %795 = arith.addf %789, %794 : vector<24x42xf32>
      %c76_i32 = arith.constant 76 : i32
      %796 = arith.addi %341, %c76_i32 : i32
      %797 = arith.index_cast %796 : i32 to index
      %798 = memref.load %arg2[%797] : memref<2400xf32, #tpu.memory_space<smem>>
      %799 = vector.broadcast %798 : f32 to vector<24x42xf32>
      %800 = arith.mulf %193, %799 : vector<24x42xf32>
      %801 = arith.addf %795, %800 : vector<24x42xf32>
      %c77_i32 = arith.constant 77 : i32
      %802 = arith.addi %341, %c77_i32 : i32
      %803 = arith.index_cast %802 : i32 to index
      %804 = memref.load %arg2[%803] : memref<2400xf32, #tpu.memory_space<smem>>
      %805 = vector.broadcast %804 : f32 to vector<24x42xf32>
      %806 = arith.mulf %195, %805 : vector<24x42xf32>
      %807 = arith.addf %801, %806 : vector<24x42xf32>
      %c78_i32 = arith.constant 78 : i32
      %808 = arith.addi %341, %c78_i32 : i32
      %809 = arith.index_cast %808 : i32 to index
      %810 = memref.load %arg2[%809] : memref<2400xf32, #tpu.memory_space<smem>>
      %811 = vector.broadcast %810 : f32 to vector<24x42xf32>
      %812 = arith.mulf %197, %811 : vector<24x42xf32>
      %813 = arith.addf %807, %812 : vector<24x42xf32>
      %c79_i32 = arith.constant 79 : i32
      %814 = arith.addi %341, %c79_i32 : i32
      %815 = arith.index_cast %814 : i32 to index
      %816 = memref.load %arg2[%815] : memref<2400xf32, #tpu.memory_space<smem>>
      %817 = vector.broadcast %816 : f32 to vector<24x42xf32>
      %818 = arith.mulf %199, %817 : vector<24x42xf32>
      %819 = arith.addf %813, %818 : vector<24x42xf32>
      %c80_i32 = arith.constant 80 : i32
      %820 = arith.addi %341, %c80_i32 : i32
      %821 = arith.index_cast %820 : i32 to index
      %822 = memref.load %arg2[%821] : memref<2400xf32, #tpu.memory_space<smem>>
      %823 = vector.broadcast %822 : f32 to vector<24x42xf32>
      %824 = arith.mulf %201, %823 : vector<24x42xf32>
      %825 = arith.addf %819, %824 : vector<24x42xf32>
      %c81_i32 = arith.constant 81 : i32
      %826 = arith.addi %341, %c81_i32 : i32
      %827 = arith.index_cast %826 : i32 to index
      %828 = memref.load %arg2[%827] : memref<2400xf32, #tpu.memory_space<smem>>
      %829 = vector.broadcast %828 : f32 to vector<24x42xf32>
      %830 = arith.mulf %203, %829 : vector<24x42xf32>
      %831 = arith.addf %825, %830 : vector<24x42xf32>
      %c82_i32 = arith.constant 82 : i32
      %832 = arith.addi %341, %c82_i32 : i32
      %833 = arith.index_cast %832 : i32 to index
      %834 = memref.load %arg2[%833] : memref<2400xf32, #tpu.memory_space<smem>>
      %835 = vector.broadcast %834 : f32 to vector<24x42xf32>
      %836 = arith.mulf %205, %835 : vector<24x42xf32>
      %837 = arith.addf %831, %836 : vector<24x42xf32>
      %c83_i32 = arith.constant 83 : i32
      %838 = arith.addi %341, %c83_i32 : i32
      %839 = arith.index_cast %838 : i32 to index
      %840 = memref.load %arg2[%839] : memref<2400xf32, #tpu.memory_space<smem>>
      %841 = vector.broadcast %840 : f32 to vector<24x42xf32>
      %842 = arith.mulf %207, %841 : vector<24x42xf32>
      %843 = arith.addf %837, %842 : vector<24x42xf32>
      %c84_i32 = arith.constant 84 : i32
      %844 = arith.addi %341, %c84_i32 : i32
      %845 = arith.index_cast %844 : i32 to index
      %846 = memref.load %arg2[%845] : memref<2400xf32, #tpu.memory_space<smem>>
      %847 = vector.broadcast %846 : f32 to vector<24x42xf32>
      %848 = arith.mulf %209, %847 : vector<24x42xf32>
      %849 = arith.addf %843, %848 : vector<24x42xf32>
      %c85_i32 = arith.constant 85 : i32
      %850 = arith.addi %341, %c85_i32 : i32
      %851 = arith.index_cast %850 : i32 to index
      %852 = memref.load %arg2[%851] : memref<2400xf32, #tpu.memory_space<smem>>
      %853 = vector.broadcast %852 : f32 to vector<24x42xf32>
      %854 = arith.mulf %211, %853 : vector<24x42xf32>
      %855 = arith.addf %849, %854 : vector<24x42xf32>
      %c86_i32 = arith.constant 86 : i32
      %856 = arith.addi %341, %c86_i32 : i32
      %857 = arith.index_cast %856 : i32 to index
      %858 = memref.load %arg2[%857] : memref<2400xf32, #tpu.memory_space<smem>>
      %859 = vector.broadcast %858 : f32 to vector<24x42xf32>
      %860 = arith.mulf %213, %859 : vector<24x42xf32>
      %861 = arith.addf %855, %860 : vector<24x42xf32>
      %c87_i32 = arith.constant 87 : i32
      %862 = arith.addi %341, %c87_i32 : i32
      %863 = arith.index_cast %862 : i32 to index
      %864 = memref.load %arg2[%863] : memref<2400xf32, #tpu.memory_space<smem>>
      %865 = vector.broadcast %864 : f32 to vector<24x42xf32>
      %866 = arith.mulf %215, %865 : vector<24x42xf32>
      %867 = arith.addf %861, %866 : vector<24x42xf32>
      %c88_i32 = arith.constant 88 : i32
      %868 = arith.addi %341, %c88_i32 : i32
      %869 = arith.index_cast %868 : i32 to index
      %870 = memref.load %arg2[%869] : memref<2400xf32, #tpu.memory_space<smem>>
      %871 = vector.broadcast %870 : f32 to vector<24x42xf32>
      %872 = arith.mulf %217, %871 : vector<24x42xf32>
      %873 = arith.addf %867, %872 : vector<24x42xf32>
      %c89_i32 = arith.constant 89 : i32
      %874 = arith.addi %341, %c89_i32 : i32
      %875 = arith.index_cast %874 : i32 to index
      %876 = memref.load %arg2[%875] : memref<2400xf32, #tpu.memory_space<smem>>
      %877 = vector.broadcast %876 : f32 to vector<24x42xf32>
      %878 = arith.mulf %219, %877 : vector<24x42xf32>
      %879 = arith.addf %873, %878 : vector<24x42xf32>
      %c90_i32 = arith.constant 90 : i32
      %880 = arith.addi %341, %c90_i32 : i32
      %881 = arith.index_cast %880 : i32 to index
      %882 = memref.load %arg2[%881] : memref<2400xf32, #tpu.memory_space<smem>>
      %883 = vector.broadcast %882 : f32 to vector<24x42xf32>
      %884 = arith.mulf %221, %883 : vector<24x42xf32>
      %885 = arith.addf %879, %884 : vector<24x42xf32>
      %c91_i32 = arith.constant 91 : i32
      %886 = arith.addi %341, %c91_i32 : i32
      %887 = arith.index_cast %886 : i32 to index
      %888 = memref.load %arg2[%887] : memref<2400xf32, #tpu.memory_space<smem>>
      %889 = vector.broadcast %888 : f32 to vector<24x42xf32>
      %890 = arith.mulf %223, %889 : vector<24x42xf32>
      %891 = arith.addf %885, %890 : vector<24x42xf32>
      %c92_i32 = arith.constant 92 : i32
      %892 = arith.addi %341, %c92_i32 : i32
      %893 = arith.index_cast %892 : i32 to index
      %894 = memref.load %arg2[%893] : memref<2400xf32, #tpu.memory_space<smem>>
      %895 = vector.broadcast %894 : f32 to vector<24x42xf32>
      %896 = arith.mulf %225, %895 : vector<24x42xf32>
      %897 = arith.addf %891, %896 : vector<24x42xf32>
      %c93_i32 = arith.constant 93 : i32
      %898 = arith.addi %341, %c93_i32 : i32
      %899 = arith.index_cast %898 : i32 to index
      %900 = memref.load %arg2[%899] : memref<2400xf32, #tpu.memory_space<smem>>
      %901 = vector.broadcast %900 : f32 to vector<24x42xf32>
      %902 = arith.mulf %227, %901 : vector<24x42xf32>
      %903 = arith.addf %897, %902 : vector<24x42xf32>
      %c94_i32 = arith.constant 94 : i32
      %904 = arith.addi %341, %c94_i32 : i32
      %905 = arith.index_cast %904 : i32 to index
      %906 = memref.load %arg2[%905] : memref<2400xf32, #tpu.memory_space<smem>>
      %907 = vector.broadcast %906 : f32 to vector<24x42xf32>
      %908 = arith.mulf %229, %907 : vector<24x42xf32>
      %909 = arith.addf %903, %908 : vector<24x42xf32>
      %c95_i32 = arith.constant 95 : i32
      %910 = arith.addi %341, %c95_i32 : i32
      %911 = arith.index_cast %910 : i32 to index
      %912 = memref.load %arg2[%911] : memref<2400xf32, #tpu.memory_space<smem>>
      %913 = vector.broadcast %912 : f32 to vector<24x42xf32>
      %914 = arith.mulf %231, %913 : vector<24x42xf32>
      %915 = arith.addf %909, %914 : vector<24x42xf32>
      %c96_i32 = arith.constant 96 : i32
      %916 = arith.addi %341, %c96_i32 : i32
      %917 = arith.index_cast %916 : i32 to index
      %918 = memref.load %arg2[%917] : memref<2400xf32, #tpu.memory_space<smem>>
      %919 = vector.broadcast %918 : f32 to vector<24x42xf32>
      %920 = arith.mulf %233, %919 : vector<24x42xf32>
      %921 = arith.addf %915, %920 : vector<24x42xf32>
      %c97_i32 = arith.constant 97 : i32
      %922 = arith.addi %341, %c97_i32 : i32
      %923 = arith.index_cast %922 : i32 to index
      %924 = memref.load %arg2[%923] : memref<2400xf32, #tpu.memory_space<smem>>
      %925 = vector.broadcast %924 : f32 to vector<24x42xf32>
      %926 = arith.mulf %235, %925 : vector<24x42xf32>
      %927 = arith.addf %921, %926 : vector<24x42xf32>
      %c98_i32 = arith.constant 98 : i32
      %928 = arith.addi %341, %c98_i32 : i32
      %929 = arith.index_cast %928 : i32 to index
      %930 = memref.load %arg2[%929] : memref<2400xf32, #tpu.memory_space<smem>>
      %931 = vector.broadcast %930 : f32 to vector<24x42xf32>
      %932 = arith.mulf %237, %931 : vector<24x42xf32>
      %933 = arith.addf %927, %932 : vector<24x42xf32>
      %c99_i32 = arith.constant 99 : i32
      %934 = arith.addi %341, %c99_i32 : i32
      %935 = arith.index_cast %934 : i32 to index
      %936 = memref.load %arg2[%935] : memref<2400xf32, #tpu.memory_space<smem>>
      %937 = vector.broadcast %936 : f32 to vector<24x42xf32>
      %938 = arith.mulf %239, %937 : vector<24x42xf32>
      %939 = arith.addf %933, %938 : vector<24x42xf32>
      %c100_i32 = arith.constant 100 : i32
      %940 = arith.addi %341, %c100_i32 : i32
      %941 = arith.index_cast %940 : i32 to index
      %942 = memref.load %arg2[%941] : memref<2400xf32, #tpu.memory_space<smem>>
      %943 = vector.broadcast %942 : f32 to vector<24x42xf32>
      %944 = arith.mulf %241, %943 : vector<24x42xf32>
      %945 = arith.addf %939, %944 : vector<24x42xf32>
      %c101_i32 = arith.constant 101 : i32
      %946 = arith.addi %341, %c101_i32 : i32
      %947 = arith.index_cast %946 : i32 to index
      %948 = memref.load %arg2[%947] : memref<2400xf32, #tpu.memory_space<smem>>
      %949 = vector.broadcast %948 : f32 to vector<24x42xf32>
      %950 = arith.mulf %243, %949 : vector<24x42xf32>
      %951 = arith.addf %945, %950 : vector<24x42xf32>
      %c102_i32 = arith.constant 102 : i32
      %952 = arith.addi %341, %c102_i32 : i32
      %953 = arith.index_cast %952 : i32 to index
      %954 = memref.load %arg2[%953] : memref<2400xf32, #tpu.memory_space<smem>>
      %955 = vector.broadcast %954 : f32 to vector<24x42xf32>
      %956 = arith.mulf %245, %955 : vector<24x42xf32>
      %957 = arith.addf %951, %956 : vector<24x42xf32>
      %c103_i32 = arith.constant 103 : i32
      %958 = arith.addi %341, %c103_i32 : i32
      %959 = arith.index_cast %958 : i32 to index
      %960 = memref.load %arg2[%959] : memref<2400xf32, #tpu.memory_space<smem>>
      %961 = vector.broadcast %960 : f32 to vector<24x42xf32>
      %962 = arith.mulf %247, %961 : vector<24x42xf32>
      %963 = arith.addf %957, %962 : vector<24x42xf32>
      %c104_i32 = arith.constant 104 : i32
      %964 = arith.addi %341, %c104_i32 : i32
      %965 = arith.index_cast %964 : i32 to index
      %966 = memref.load %arg2[%965] : memref<2400xf32, #tpu.memory_space<smem>>
      %967 = vector.broadcast %966 : f32 to vector<24x42xf32>
      %968 = arith.mulf %249, %967 : vector<24x42xf32>
      %969 = arith.addf %963, %968 : vector<24x42xf32>
      %c105_i32 = arith.constant 105 : i32
      %970 = arith.addi %341, %c105_i32 : i32
      %971 = arith.index_cast %970 : i32 to index
      %972 = memref.load %arg2[%971] : memref<2400xf32, #tpu.memory_space<smem>>
      %973 = vector.broadcast %972 : f32 to vector<24x42xf32>
      %974 = arith.mulf %251, %973 : vector<24x42xf32>
      %975 = arith.addf %969, %974 : vector<24x42xf32>
      %c106_i32 = arith.constant 106 : i32
      %976 = arith.addi %341, %c106_i32 : i32
      %977 = arith.index_cast %976 : i32 to index
      %978 = memref.load %arg2[%977] : memref<2400xf32, #tpu.memory_space<smem>>
      %979 = vector.broadcast %978 : f32 to vector<24x42xf32>
      %980 = arith.mulf %253, %979 : vector<24x42xf32>
      %981 = arith.addf %975, %980 : vector<24x42xf32>
      %c107_i32 = arith.constant 107 : i32
      %982 = arith.addi %341, %c107_i32 : i32
      %983 = arith.index_cast %982 : i32 to index
      %984 = memref.load %arg2[%983] : memref<2400xf32, #tpu.memory_space<smem>>
      %985 = vector.broadcast %984 : f32 to vector<24x42xf32>
      %986 = arith.mulf %255, %985 : vector<24x42xf32>
      %987 = arith.addf %981, %986 : vector<24x42xf32>
      %c108_i32 = arith.constant 108 : i32
      %988 = arith.addi %341, %c108_i32 : i32
      %989 = arith.index_cast %988 : i32 to index
      %990 = memref.load %arg2[%989] : memref<2400xf32, #tpu.memory_space<smem>>
      %991 = vector.broadcast %990 : f32 to vector<24x42xf32>
      %992 = arith.mulf %257, %991 : vector<24x42xf32>
      %993 = arith.addf %987, %992 : vector<24x42xf32>
      %c109_i32 = arith.constant 109 : i32
      %994 = arith.addi %341, %c109_i32 : i32
      %995 = arith.index_cast %994 : i32 to index
      %996 = memref.load %arg2[%995] : memref<2400xf32, #tpu.memory_space<smem>>
      %997 = vector.broadcast %996 : f32 to vector<24x42xf32>
      %998 = arith.mulf %259, %997 : vector<24x42xf32>
      %999 = arith.addf %993, %998 : vector<24x42xf32>
      %c110_i32 = arith.constant 110 : i32
      %1000 = arith.addi %341, %c110_i32 : i32
      %1001 = arith.index_cast %1000 : i32 to index
      %1002 = memref.load %arg2[%1001] : memref<2400xf32, #tpu.memory_space<smem>>
      %1003 = vector.broadcast %1002 : f32 to vector<24x42xf32>
      %1004 = arith.mulf %261, %1003 : vector<24x42xf32>
      %1005 = arith.addf %999, %1004 : vector<24x42xf32>
      %c111_i32 = arith.constant 111 : i32
      %1006 = arith.addi %341, %c111_i32 : i32
      %1007 = arith.index_cast %1006 : i32 to index
      %1008 = memref.load %arg2[%1007] : memref<2400xf32, #tpu.memory_space<smem>>
      %1009 = vector.broadcast %1008 : f32 to vector<24x42xf32>
      %1010 = arith.mulf %263, %1009 : vector<24x42xf32>
      %1011 = arith.addf %1005, %1010 : vector<24x42xf32>
      %c112_i32 = arith.constant 112 : i32
      %1012 = arith.addi %341, %c112_i32 : i32
      %1013 = arith.index_cast %1012 : i32 to index
      %1014 = memref.load %arg2[%1013] : memref<2400xf32, #tpu.memory_space<smem>>
      %1015 = vector.broadcast %1014 : f32 to vector<24x42xf32>
      %1016 = arith.mulf %265, %1015 : vector<24x42xf32>
      %1017 = arith.addf %1011, %1016 : vector<24x42xf32>
      %c113_i32 = arith.constant 113 : i32
      %1018 = arith.addi %341, %c113_i32 : i32
      %1019 = arith.index_cast %1018 : i32 to index
      %1020 = memref.load %arg2[%1019] : memref<2400xf32, #tpu.memory_space<smem>>
      %1021 = vector.broadcast %1020 : f32 to vector<24x42xf32>
      %1022 = arith.mulf %267, %1021 : vector<24x42xf32>
      %1023 = arith.addf %1017, %1022 : vector<24x42xf32>
      %c114_i32 = arith.constant 114 : i32
      %1024 = arith.addi %341, %c114_i32 : i32
      %1025 = arith.index_cast %1024 : i32 to index
      %1026 = memref.load %arg2[%1025] : memref<2400xf32, #tpu.memory_space<smem>>
      %1027 = vector.broadcast %1026 : f32 to vector<24x42xf32>
      %1028 = arith.mulf %269, %1027 : vector<24x42xf32>
      %1029 = arith.addf %1023, %1028 : vector<24x42xf32>
      %c115_i32 = arith.constant 115 : i32
      %1030 = arith.addi %341, %c115_i32 : i32
      %1031 = arith.index_cast %1030 : i32 to index
      %1032 = memref.load %arg2[%1031] : memref<2400xf32, #tpu.memory_space<smem>>
      %1033 = vector.broadcast %1032 : f32 to vector<24x42xf32>
      %1034 = arith.mulf %271, %1033 : vector<24x42xf32>
      %1035 = arith.addf %1029, %1034 : vector<24x42xf32>
      %c116_i32 = arith.constant 116 : i32
      %1036 = arith.addi %341, %c116_i32 : i32
      %1037 = arith.index_cast %1036 : i32 to index
      %1038 = memref.load %arg2[%1037] : memref<2400xf32, #tpu.memory_space<smem>>
      %1039 = vector.broadcast %1038 : f32 to vector<24x42xf32>
      %1040 = arith.mulf %273, %1039 : vector<24x42xf32>
      %1041 = arith.addf %1035, %1040 : vector<24x42xf32>
      %c117_i32 = arith.constant 117 : i32
      %1042 = arith.addi %341, %c117_i32 : i32
      %1043 = arith.index_cast %1042 : i32 to index
      %1044 = memref.load %arg2[%1043] : memref<2400xf32, #tpu.memory_space<smem>>
      %1045 = vector.broadcast %1044 : f32 to vector<24x42xf32>
      %1046 = arith.mulf %275, %1045 : vector<24x42xf32>
      %1047 = arith.addf %1041, %1046 : vector<24x42xf32>
      %c118_i32 = arith.constant 118 : i32
      %1048 = arith.addi %341, %c118_i32 : i32
      %1049 = arith.index_cast %1048 : i32 to index
      %1050 = memref.load %arg2[%1049] : memref<2400xf32, #tpu.memory_space<smem>>
      %1051 = vector.broadcast %1050 : f32 to vector<24x42xf32>
      %1052 = arith.mulf %277, %1051 : vector<24x42xf32>
      %1053 = arith.addf %1047, %1052 : vector<24x42xf32>
      %c119_i32 = arith.constant 119 : i32
      %1054 = arith.addi %341, %c119_i32 : i32
      %1055 = arith.index_cast %1054 : i32 to index
      %1056 = memref.load %arg2[%1055] : memref<2400xf32, #tpu.memory_space<smem>>
      %1057 = vector.broadcast %1056 : f32 to vector<24x42xf32>
      %1058 = arith.mulf %279, %1057 : vector<24x42xf32>
      %1059 = arith.addf %1053, %1058 : vector<24x42xf32>
      %c120_i32 = arith.constant 120 : i32
      %1060 = arith.addi %341, %c120_i32 : i32
      %1061 = arith.index_cast %1060 : i32 to index
      %1062 = memref.load %arg2[%1061] : memref<2400xf32, #tpu.memory_space<smem>>
      %1063 = vector.broadcast %1062 : f32 to vector<24x42xf32>
      %1064 = arith.mulf %281, %1063 : vector<24x42xf32>
      %1065 = arith.addf %1059, %1064 : vector<24x42xf32>
      %c121_i32 = arith.constant 121 : i32
      %1066 = arith.addi %341, %c121_i32 : i32
      %1067 = arith.index_cast %1066 : i32 to index
      %1068 = memref.load %arg2[%1067] : memref<2400xf32, #tpu.memory_space<smem>>
      %1069 = vector.broadcast %1068 : f32 to vector<24x42xf32>
      %1070 = arith.mulf %283, %1069 : vector<24x42xf32>
      %1071 = arith.addf %1065, %1070 : vector<24x42xf32>
      %c122_i32 = arith.constant 122 : i32
      %1072 = arith.addi %341, %c122_i32 : i32
      %1073 = arith.index_cast %1072 : i32 to index
      %1074 = memref.load %arg2[%1073] : memref<2400xf32, #tpu.memory_space<smem>>
      %1075 = vector.broadcast %1074 : f32 to vector<24x42xf32>
      %1076 = arith.mulf %285, %1075 : vector<24x42xf32>
      %1077 = arith.addf %1071, %1076 : vector<24x42xf32>
      %c123_i32 = arith.constant 123 : i32
      %1078 = arith.addi %341, %c123_i32 : i32
      %1079 = arith.index_cast %1078 : i32 to index
      %1080 = memref.load %arg2[%1079] : memref<2400xf32, #tpu.memory_space<smem>>
      %1081 = vector.broadcast %1080 : f32 to vector<24x42xf32>
      %1082 = arith.mulf %287, %1081 : vector<24x42xf32>
      %1083 = arith.addf %1077, %1082 : vector<24x42xf32>
      %c124_i32 = arith.constant 124 : i32
      %1084 = arith.addi %341, %c124_i32 : i32
      %1085 = arith.index_cast %1084 : i32 to index
      %1086 = memref.load %arg2[%1085] : memref<2400xf32, #tpu.memory_space<smem>>
      %1087 = vector.broadcast %1086 : f32 to vector<24x42xf32>
      %1088 = arith.mulf %289, %1087 : vector<24x42xf32>
      %1089 = arith.addf %1083, %1088 : vector<24x42xf32>
      %c125_i32 = arith.constant 125 : i32
      %1090 = arith.addi %341, %c125_i32 : i32
      %1091 = arith.index_cast %1090 : i32 to index
      %1092 = memref.load %arg2[%1091] : memref<2400xf32, #tpu.memory_space<smem>>
      %1093 = vector.broadcast %1092 : f32 to vector<24x42xf32>
      %1094 = arith.mulf %291, %1093 : vector<24x42xf32>
      %1095 = arith.addf %1089, %1094 : vector<24x42xf32>
      %c126_i32 = arith.constant 126 : i32
      %1096 = arith.addi %341, %c126_i32 : i32
      %1097 = arith.index_cast %1096 : i32 to index
      %1098 = memref.load %arg2[%1097] : memref<2400xf32, #tpu.memory_space<smem>>
      %1099 = vector.broadcast %1098 : f32 to vector<24x42xf32>
      %1100 = arith.mulf %293, %1099 : vector<24x42xf32>
      %1101 = arith.addf %1095, %1100 : vector<24x42xf32>
      %c127_i32 = arith.constant 127 : i32
      %1102 = arith.addi %341, %c127_i32 : i32
      %1103 = arith.index_cast %1102 : i32 to index
      %1104 = memref.load %arg2[%1103] : memref<2400xf32, #tpu.memory_space<smem>>
      %1105 = vector.broadcast %1104 : f32 to vector<24x42xf32>
      %1106 = arith.mulf %295, %1105 : vector<24x42xf32>
      %1107 = arith.addf %1101, %1106 : vector<24x42xf32>
      %c128_i32 = arith.constant 128 : i32
      %1108 = arith.addi %341, %c128_i32 : i32
      %1109 = arith.index_cast %1108 : i32 to index
      %1110 = memref.load %arg2[%1109] : memref<2400xf32, #tpu.memory_space<smem>>
      %1111 = vector.broadcast %1110 : f32 to vector<24x42xf32>
      %1112 = arith.mulf %297, %1111 : vector<24x42xf32>
      %1113 = arith.addf %1107, %1112 : vector<24x42xf32>
      %c129_i32 = arith.constant 129 : i32
      %1114 = arith.addi %341, %c129_i32 : i32
      %1115 = arith.index_cast %1114 : i32 to index
      %1116 = memref.load %arg2[%1115] : memref<2400xf32, #tpu.memory_space<smem>>
      %1117 = vector.broadcast %1116 : f32 to vector<24x42xf32>
      %1118 = arith.mulf %299, %1117 : vector<24x42xf32>
      %1119 = arith.addf %1113, %1118 : vector<24x42xf32>
      %c130_i32 = arith.constant 130 : i32
      %1120 = arith.addi %341, %c130_i32 : i32
      %1121 = arith.index_cast %1120 : i32 to index
      %1122 = memref.load %arg2[%1121] : memref<2400xf32, #tpu.memory_space<smem>>
      %1123 = vector.broadcast %1122 : f32 to vector<24x42xf32>
      %1124 = arith.mulf %301, %1123 : vector<24x42xf32>
      %1125 = arith.addf %1119, %1124 : vector<24x42xf32>
      %c131_i32 = arith.constant 131 : i32
      %1126 = arith.addi %341, %c131_i32 : i32
      %1127 = arith.index_cast %1126 : i32 to index
      %1128 = memref.load %arg2[%1127] : memref<2400xf32, #tpu.memory_space<smem>>
      %1129 = vector.broadcast %1128 : f32 to vector<24x42xf32>
      %1130 = arith.mulf %303, %1129 : vector<24x42xf32>
      %1131 = arith.addf %1125, %1130 : vector<24x42xf32>
      %c132_i32 = arith.constant 132 : i32
      %1132 = arith.addi %341, %c132_i32 : i32
      %1133 = arith.index_cast %1132 : i32 to index
      %1134 = memref.load %arg2[%1133] : memref<2400xf32, #tpu.memory_space<smem>>
      %1135 = vector.broadcast %1134 : f32 to vector<24x42xf32>
      %1136 = arith.mulf %305, %1135 : vector<24x42xf32>
      %1137 = arith.addf %1131, %1136 : vector<24x42xf32>
      %c133_i32 = arith.constant 133 : i32
      %1138 = arith.addi %341, %c133_i32 : i32
      %1139 = arith.index_cast %1138 : i32 to index
      %1140 = memref.load %arg2[%1139] : memref<2400xf32, #tpu.memory_space<smem>>
      %1141 = vector.broadcast %1140 : f32 to vector<24x42xf32>
      %1142 = arith.mulf %307, %1141 : vector<24x42xf32>
      %1143 = arith.addf %1137, %1142 : vector<24x42xf32>
      %c134_i32 = arith.constant 134 : i32
      %1144 = arith.addi %341, %c134_i32 : i32
      %1145 = arith.index_cast %1144 : i32 to index
      %1146 = memref.load %arg2[%1145] : memref<2400xf32, #tpu.memory_space<smem>>
      %1147 = vector.broadcast %1146 : f32 to vector<24x42xf32>
      %1148 = arith.mulf %309, %1147 : vector<24x42xf32>
      %1149 = arith.addf %1143, %1148 : vector<24x42xf32>
      %c135_i32 = arith.constant 135 : i32
      %1150 = arith.addi %341, %c135_i32 : i32
      %1151 = arith.index_cast %1150 : i32 to index
      %1152 = memref.load %arg2[%1151] : memref<2400xf32, #tpu.memory_space<smem>>
      %1153 = vector.broadcast %1152 : f32 to vector<24x42xf32>
      %1154 = arith.mulf %311, %1153 : vector<24x42xf32>
      %1155 = arith.addf %1149, %1154 : vector<24x42xf32>
      %c136_i32 = arith.constant 136 : i32
      %1156 = arith.addi %341, %c136_i32 : i32
      %1157 = arith.index_cast %1156 : i32 to index
      %1158 = memref.load %arg2[%1157] : memref<2400xf32, #tpu.memory_space<smem>>
      %1159 = vector.broadcast %1158 : f32 to vector<24x42xf32>
      %1160 = arith.mulf %313, %1159 : vector<24x42xf32>
      %1161 = arith.addf %1155, %1160 : vector<24x42xf32>
      %c137_i32 = arith.constant 137 : i32
      %1162 = arith.addi %341, %c137_i32 : i32
      %1163 = arith.index_cast %1162 : i32 to index
      %1164 = memref.load %arg2[%1163] : memref<2400xf32, #tpu.memory_space<smem>>
      %1165 = vector.broadcast %1164 : f32 to vector<24x42xf32>
      %1166 = arith.mulf %315, %1165 : vector<24x42xf32>
      %1167 = arith.addf %1161, %1166 : vector<24x42xf32>
      %c138_i32 = arith.constant 138 : i32
      %1168 = arith.addi %341, %c138_i32 : i32
      %1169 = arith.index_cast %1168 : i32 to index
      %1170 = memref.load %arg2[%1169] : memref<2400xf32, #tpu.memory_space<smem>>
      %1171 = vector.broadcast %1170 : f32 to vector<24x42xf32>
      %1172 = arith.mulf %317, %1171 : vector<24x42xf32>
      %1173 = arith.addf %1167, %1172 : vector<24x42xf32>
      %c139_i32 = arith.constant 139 : i32
      %1174 = arith.addi %341, %c139_i32 : i32
      %1175 = arith.index_cast %1174 : i32 to index
      %1176 = memref.load %arg2[%1175] : memref<2400xf32, #tpu.memory_space<smem>>
      %1177 = vector.broadcast %1176 : f32 to vector<24x42xf32>
      %1178 = arith.mulf %319, %1177 : vector<24x42xf32>
      %1179 = arith.addf %1173, %1178 : vector<24x42xf32>
      %c140_i32 = arith.constant 140 : i32
      %1180 = arith.addi %341, %c140_i32 : i32
      %1181 = arith.index_cast %1180 : i32 to index
      %1182 = memref.load %arg2[%1181] : memref<2400xf32, #tpu.memory_space<smem>>
      %1183 = vector.broadcast %1182 : f32 to vector<24x42xf32>
      %1184 = arith.mulf %321, %1183 : vector<24x42xf32>
      %1185 = arith.addf %1179, %1184 : vector<24x42xf32>
      %c141_i32 = arith.constant 141 : i32
      %1186 = arith.addi %341, %c141_i32 : i32
      %1187 = arith.index_cast %1186 : i32 to index
      %1188 = memref.load %arg2[%1187] : memref<2400xf32, #tpu.memory_space<smem>>
      %1189 = vector.broadcast %1188 : f32 to vector<24x42xf32>
      %1190 = arith.mulf %323, %1189 : vector<24x42xf32>
      %1191 = arith.addf %1185, %1190 : vector<24x42xf32>
      %c142_i32 = arith.constant 142 : i32
      %1192 = arith.addi %341, %c142_i32 : i32
      %1193 = arith.index_cast %1192 : i32 to index
      %1194 = memref.load %arg2[%1193] : memref<2400xf32, #tpu.memory_space<smem>>
      %1195 = vector.broadcast %1194 : f32 to vector<24x42xf32>
      %1196 = arith.mulf %325, %1195 : vector<24x42xf32>
      %1197 = arith.addf %1191, %1196 : vector<24x42xf32>
      %c143_i32 = arith.constant 143 : i32
      %1198 = arith.addi %341, %c143_i32 : i32
      %1199 = arith.index_cast %1198 : i32 to index
      %1200 = memref.load %arg2[%1199] : memref<2400xf32, #tpu.memory_space<smem>>
      %1201 = vector.broadcast %1200 : f32 to vector<24x42xf32>
      %1202 = arith.mulf %327, %1201 : vector<24x42xf32>
      %1203 = arith.addf %1197, %1202 : vector<24x42xf32>
      %c144_i32 = arith.constant 144 : i32
      %1204 = arith.addi %341, %c144_i32 : i32
      %1205 = arith.index_cast %1204 : i32 to index
      %1206 = memref.load %arg2[%1205] : memref<2400xf32, #tpu.memory_space<smem>>
      %1207 = vector.broadcast %1206 : f32 to vector<24x42xf32>
      %1208 = arith.mulf %329, %1207 : vector<24x42xf32>
      %1209 = arith.addf %1203, %1208 : vector<24x42xf32>
      %c145_i32 = arith.constant 145 : i32
      %1210 = arith.addi %341, %c145_i32 : i32
      %1211 = arith.index_cast %1210 : i32 to index
      %1212 = memref.load %arg2[%1211] : memref<2400xf32, #tpu.memory_space<smem>>
      %1213 = vector.broadcast %1212 : f32 to vector<24x42xf32>
      %1214 = arith.mulf %331, %1213 : vector<24x42xf32>
      %1215 = arith.addf %1209, %1214 : vector<24x42xf32>
      %c146_i32 = arith.constant 146 : i32
      %1216 = arith.addi %341, %c146_i32 : i32
      %1217 = arith.index_cast %1216 : i32 to index
      %1218 = memref.load %arg2[%1217] : memref<2400xf32, #tpu.memory_space<smem>>
      %1219 = vector.broadcast %1218 : f32 to vector<24x42xf32>
      %1220 = arith.mulf %333, %1219 : vector<24x42xf32>
      %1221 = arith.addf %1215, %1220 : vector<24x42xf32>
      %c147_i32 = arith.constant 147 : i32
      %1222 = arith.addi %341, %c147_i32 : i32
      %1223 = arith.index_cast %1222 : i32 to index
      %1224 = memref.load %arg2[%1223] : memref<2400xf32, #tpu.memory_space<smem>>
      %1225 = vector.broadcast %1224 : f32 to vector<24x42xf32>
      %1226 = arith.mulf %335, %1225 : vector<24x42xf32>
      %1227 = arith.addf %1221, %1226 : vector<24x42xf32>
      %c148_i32 = arith.constant 148 : i32
      %1228 = arith.addi %341, %c148_i32 : i32
      %1229 = arith.index_cast %1228 : i32 to index
      %1230 = memref.load %arg2[%1229] : memref<2400xf32, #tpu.memory_space<smem>>
      %1231 = vector.broadcast %1230 : f32 to vector<24x42xf32>
      %1232 = arith.mulf %337, %1231 : vector<24x42xf32>
      %1233 = arith.addf %1227, %1232 : vector<24x42xf32>
      %c149_i32 = arith.constant 149 : i32
      %1234 = arith.addi %341, %c149_i32 : i32
      %1235 = arith.index_cast %1234 : i32 to index
      %1236 = memref.load %arg2[%1235] : memref<2400xf32, #tpu.memory_space<smem>>
      %1237 = vector.broadcast %1236 : f32 to vector<24x42xf32>
      %1238 = arith.mulf %339, %1237 : vector<24x42xf32>
      %1239 = arith.addf %1233, %1238 : vector<24x42xf32>
      %1240 = arith.index_cast %arg5 : i32 to index
      %1241 = memref.load %arg3[%1240] : memref<16xf32, #tpu.memory_space<smem>>
      %1242 = vector.broadcast %1241 : f32 to vector<24x42xf32>
      %1243 = arith.addf %1239, %1242 : vector<24x42xf32>
      %cst_612 = arith.constant 0.000000e+00 : f32
      %1244 = vector.broadcast %cst_612 : f32 to vector<24x42xf32>
      %1245 = arith.maximumf %1243, %1244 : vector<24x42xf32>
      %cst_613 = arith.constant dense<0.000000e+00> : vector<24x21xf32>
      %1246 = tpu.matmul %1245, %9, %cst_613 {dimension_numbers = #tpu.dot_dimension_numbers<[1], [0], [0], [1], [0, 0, 1, 1], [], []>} : vector<24x42xf32>, vector<42x21xf32>, vector<24x21xf32> -> vector<24x21xf32>
      %cst_614 = arith.constant dense<0.000000e+00> : vector<24x21xf32>
      %1247 = tpu.matmul %1245, %19, %cst_614 {dimension_numbers = #tpu.dot_dimension_numbers<[1], [0], [0], [1], [0, 0, 1, 1], [], []>} : vector<24x42xf32>, vector<42x21xf32>, vector<24x21xf32> -> vector<24x21xf32>
      %1248 = arith.maximumf %1246, %1247 : vector<24x21xf32>
      %cst_615 = arith.constant dense<0.000000e+00> : vector<12x21xf32>
      %1249 = tpu.matmul %29, %1248, %cst_615 {dimension_numbers = #tpu.dot_dimension_numbers<[1], [0], [0], [1], [0, 0, 1, 1], [], []>} : vector<12x24xf32>, vector<24x21xf32>, vector<12x21xf32> -> vector<12x21xf32>
      %cst_616 = arith.constant dense<0.000000e+00> : vector<12x21xf32>
      %1250 = tpu.matmul %39, %1248, %cst_616 {dimension_numbers = #tpu.dot_dimension_numbers<[1], [0], [0], [1], [0, 0, 1, 1], [], []>} : vector<12x24xf32>, vector<24x21xf32>, vector<12x21xf32> -> vector<12x21xf32>
      %1251 = arith.maximumf %1249, %1250 : vector<12x21xf32>
      %c0_617 = arith.constant 0 : index
      %1252 = arith.index_cast %arg5 : i32 to index
      %c0_618 = arith.constant 0 : index
      %c0_619 = arith.constant 0 : index
      %1253 = vector.load %arg4[%c0_617, %1252, %c0_618, %c0_619] : memref<1x16x12x21xf32, #tpu.memory_space<vmem>>, vector<1x1x12x21xf32>
      %1254 = vector.shape_cast %1253 : vector<1x1x12x21xf32> to vector<12x21xf32>
      %1255 = vector.shape_cast %1251 : vector<12x21xf32> to vector<1x1x12x21xf32>
      tpu.vector_store %arg4[%c0_617, %1252, %c0_618, %c0_619], %1255 {strides = array<i32>} : memref<1x16x12x21xf32, #tpu.memory_space<vmem>>, vector<1x1x12x21xf32>,
    }
    %c16_i32_608 = arith.constant 16 : i32
    return
  }
  func.func @transform_0(%arg0: i32) -> (i32, i32, i32, i32) {
    %c0_i32 = arith.constant 0 : i32
    %c0_i32_0 = arith.constant 0 : i32
    %c0_i32_1 = arith.constant 0 : i32
    %c0_i32_2 = arith.constant 0 : i32
    return %arg0, %c0_i32, %c0_i32_0, %c0_i32_1 : i32, i32, i32, i32
  }
  func.func @transform_1(%arg0: i32) -> i32 {
    %c0_i32 = arith.constant 0 : i32
    %c0_i32_0 = arith.constant 0 : i32
    return %c0_i32 : i32
  }
  func.func @transform_2(%arg0: i32) -> i32 {
    %c0_i32 = arith.constant 0 : i32
    %c0_i32_0 = arith.constant 0 : i32
    return %c0_i32 : i32
  }
  func.func @transform_3(%arg0: i32) -> (i32, i32, i32, i32) {
    %c0_i32 = arith.constant 0 : i32
    %c0_i32_0 = arith.constant 0 : i32
    %c0_i32_1 = arith.constant 0 : i32
    %c0_i32_2 = arith.constant 0 : i32
    return %arg0, %c0_i32, %c0_i32_0, %c0_i32_1 : i32, i32, i32, i32
  }
}

module attributes {stable_mosaic.version = 11 : i64} {
  func.func @_fc_head_kernel(%arg0: memref<2x4032xf32, #tpu.memory_space<vmem>>, %arg1: memref<4032x24xf32, #tpu.memory_space<vmem>>, %arg2: memref<1x24xf32, #tpu.memory_space<vmem>>, %arg3: memref<24x20xf32, #tpu.memory_space<vmem>>, %arg4: memref<1x20xf32, #tpu.memory_space<vmem>>, %arg5: memref<20x1xf32, #tpu.memory_space<vmem>>, %arg6: memref<1x1xf32, #tpu.memory_space<vmem>>, %arg7: memref<2x1xf32, #tpu.memory_space<vmem>>) attributes {dimension_semantics = [], scalar_prefetch = 0 : i64, scratch_operands = 0 : i64, tpu.core_type = #tpu.core_type<tc>} {
    %c0 = arith.constant 0 : index
    %c0_0 = arith.constant 0 : index
    %0 = vector.load %arg0[%c0, %c0_0] : memref<2x4032xf32, #tpu.memory_space<vmem>>, vector<2x4032xf32>
    %c0_1 = arith.constant 0 : index
    %c0_2 = arith.constant 0 : index
    %1 = vector.load %arg1[%c0_1, %c0_2] : memref<4032x24xf32, #tpu.memory_space<vmem>>, vector<4032x24xf32>
    %cst = arith.constant dense<0.000000e+00> : vector<2x24xf32>
    %2 = tpu.matmul %0, %1, %cst {dimension_numbers = #tpu.dot_dimension_numbers<[1], [0], [0], [1], [0, 0, 1, 1], [], []>} : vector<2x4032xf32>, vector<4032x24xf32>, vector<2x24xf32> -> vector<2x24xf32>
    %c0_3 = arith.constant 0 : index
    %c0_4 = arith.constant 0 : index
    %3 = vector.load %arg2[%c0_3, %c0_4] : memref<1x24xf32, #tpu.memory_space<vmem>>, vector<1x24xf32>
    %4 = vector.broadcast %3 : vector<1x24xf32> to vector<2x24xf32>
    %5 = arith.addf %2, %4 : vector<2x24xf32>
    %cst_5 = arith.constant 0.000000e+00 : f32
    %6 = vector.broadcast %cst_5 : f32 to vector<2x24xf32>
    %7 = arith.maximumf %5, %6 : vector<2x24xf32>
    %c0_6 = arith.constant 0 : index
    %c0_7 = arith.constant 0 : index
    %8 = vector.load %arg3[%c0_6, %c0_7] : memref<24x20xf32, #tpu.memory_space<vmem>>, vector<24x20xf32>
    %cst_8 = arith.constant dense<0.000000e+00> : vector<2x20xf32>
    %9 = tpu.matmul %7, %8, %cst_8 {dimension_numbers = #tpu.dot_dimension_numbers<[1], [0], [0], [1], [0, 0, 1, 1], [], []>} : vector<2x24xf32>, vector<24x20xf32>, vector<2x20xf32> -> vector<2x20xf32>
    %c0_9 = arith.constant 0 : index
    %c0_10 = arith.constant 0 : index
    %10 = vector.load %arg4[%c0_9, %c0_10] : memref<1x20xf32, #tpu.memory_space<vmem>>, vector<1x20xf32>
    %11 = vector.broadcast %10 : vector<1x20xf32> to vector<2x20xf32>
    %12 = arith.addf %9, %11 : vector<2x20xf32>
    %cst_11 = arith.constant 0.000000e+00 : f32
    %13 = vector.broadcast %cst_11 : f32 to vector<2x20xf32>
    %14 = arith.maximumf %12, %13 : vector<2x20xf32>
    %c0_12 = arith.constant 0 : index
    %c0_13 = arith.constant 0 : index
    %15 = vector.load %arg5[%c0_12, %c0_13] : memref<20x1xf32, #tpu.memory_space<vmem>>, vector<20x1xf32>
    %cst_14 = arith.constant dense<0.000000e+00> : vector<2x1xf32>
    %16 = tpu.matmul %14, %15, %cst_14 {dimension_numbers = #tpu.dot_dimension_numbers<[1], [0], [0], [1], [0, 0, 1, 1], [], []>} : vector<2x20xf32>, vector<20x1xf32>, vector<2x1xf32> -> vector<2x1xf32>
    %c0_15 = arith.constant 0 : index
    %c0_16 = arith.constant 0 : index
    %17 = vector.load %arg6[%c0_15, %c0_16] : memref<1x1xf32, #tpu.memory_space<vmem>>, vector<1x1xf32>
    %18 = vector.broadcast %17 : vector<1x1xf32> to vector<2x1xf32>
    %19 = arith.addf %16, %18 : vector<2x1xf32>
    %c0_17 = arith.constant 0 : index
    %c0_18 = arith.constant 0 : index
    %20 = vector.load %arg7[%c0_17, %c0_18] : memref<2x1xf32, #tpu.memory_space<vmem>>, vector<2x1xf32>
    tpu.vector_store %arg7[%c0_17, %c0_18], %19 {strides = array<i32>} : memref<2x1xf32, #tpu.memory_space<vmem>>, vector<2x1xf32>,
    return
  }
}

</mosaic_0001>

<llo_original>
// kernel: cnn_forward.3
$region0: #{cnn_forward.3}
  #allocation0 [shape = 'u32[]', space=smem, size = 0x4, offset = 0x4, fixed_abs, tag = 'smem constant byte address 0x4 - core index']
  #allocation1 [shape = 'u32[144,128]{1,0:T(1,128)}', space=vmem, size = 0x12000, scoped, tag = 'internal scratch']
  %s0 = inlined_call_operand.vmem [shape: f32[2,1,58,94], index: 0, kind: input, shape index: {}]
  %s1 = inlined_call_operand.vmem [shape: f32[54], index: 1, kind: input, shape index: {}]
  %s2 = inlined_call_operand.hbm [shape: f32[6], index: 2, kind: input, shape index: {}]
  %s3 = inlined_call_operand.vmem [shape: f32[2,6,28,46], index: 3, kind: output, shape index: {}]
  %s4 = sld [smem:[#allocation0]]
  $region60: #{cnn_forward.3} parent=0
    _
  %s6 = ssub.s32 1, %s4
  %s7 = scalar_select 0, %s6, %s4
  $region1: #{cnn_forward.3} parent=0
    #allocation2 [shape = 'u8[512]{0}', space=smem, size = 0x200, scoped, tag = 'input window, operand 1, single buffered']
    #allocation3 [shape = 's32[2]{0}', space=sflag, size = 0x8, scoped, tag = 'scoped memory for cnn_forward.3']
    #allocation4 [shape = 's32[2]{0}', space=sflag, size = 0x8, scoped, tag = 'scoped memory for cnn_forward.3']
    #allocation5 [shape = 'u8[512]{0}', space=smem, size = 0x200, scoped, tag = 'input window, operand 2, single buffered']
    %8 = vsyncpa [#allocation4], 0
    %9 = vsyncpa [#allocation3], 0
    loop: start=0, step=1, limit=4
    $region2: #{cnn_forward.3} parent=1 // loop_pre_header
      _
    $region3: #{cnn_forward.3} parent=1 // loop_header
      %s11 = sphi 0, %s15
      %p12 = scmp.ge.s32.totalorder %s11, 4
      %s21 = sphi 0, %s23
      %s24 = sphi 0, %s21
      %s25 = sphi 0, %s24
      %s41 = sphi 0, %s25
      %s45 = sphi 0, %s45
      %s47 = sphi 0, %s45
      %s48 = sphi 0, %s47
      %s62 = sphi 0, %s48
      %s66 = sphi 0, %s66
      %s68 = sphi 0, %s66
      %s69 = sphi 0, %s68
      %s83 = sphi 0, %s69
      %s89 = sphi 0, %s91
      %s92 = sphi 0, %s89
      %s93 = sphi 0, %s92
      %s109 = sphi 0, %s93
    $region4: #{cnn_forward.3} parent=1 // loop_header_branch
      %14 = sbr.rel (%p12) target = $region8
    $region5: #{cnn_forward.3} parent=1 // loop_body
      %s16 = ssub.s32 %s11, 1
      %s17 = ssub.s32 %s11, 2
      %s18 = sadd.s32 %s11, 1
      %s19 = ssub.s32 %s11, %s18
      %p20 = scmp.eq.s32.totalorder %s19, 0
      %s22 = sadd.s32 %s21, 1
      %s23 = scalar_select %p20, %s21, %s22
      %p26 = pneg %p20
      %p27 = scmp.eq.s32.totalorder %s11, 1
      %p28 = por %p26, %p27
      %p29 = scmp.ne.s32.totalorder %s21, %s24
      %p30 = scmp.eq.s32.totalorder %s11, 0
      %p31 = por %p29, %p30
      %p32 = scmp.ne.s32.totalorder %s21, %s24
      %p33 = scmp.eq.s32.totalorder %s16, 1
      %p34 = por %p32, %p33
      %p35 = scmp.ne.s32.totalorder %s24, %s25
      %p36 = scmp.eq.s32.totalorder %s16, 0
      %p37 = por %p35, %p36
      %p38 = scmp.ne.s32.totalorder %s24, %s25
      %p39 = scmp.eq.s32.totalorder %s17, 1
      %p40 = por %p38, %p39
      %p42 = scmp.ne.s32.totalorder %s25, %s41
      %p43 = scmp.eq.s32.totalorder %s17, 0
      %p44 = por %p42, %p43
      %s46 = sadd.s32 %s45, 1
      %p49 = scmp.eq.s32.totalorder %s11, 1
      %p50 = scmp.ne.s32.totalorder %s45, %s47
      %p51 = scmp.eq.s32.totalorder %s11, 0
      %p52 = por %p50, %p51
      %p53 = scmp.ne.s32.totalorder %s45, %s47
      %p54 = scmp.eq.s32.totalorder %s16, 1
      %p55 = por %p53, %p54
      %p56 = scmp.ne.s32.totalorder %s47, %s48
      %p57 = scmp.eq.s32.totalorder %s16, 0
      %p58 = por %p56, %p57
      %p59 = scmp.ne.s32.totalorder %s47, %s48
      %p60 = scmp.eq.s32.totalorder %s17, 1
      %p61 = por %p59, %p60
      %p63 = scmp.ne.s32.totalorder %s48, %s62
      %p64 = scmp.eq.s32.totalorder %s17, 0
      %p65 = por %p63, %p64
      %s67 = sadd.s32 %s66, 1
      %p70 = scmp.eq.s32.totalorder %s11, 1
      %p71 = scmp.ne.s32.totalorder %s66, %s68
      %p72 = scmp.eq.s32.totalorder %s11, 0
      %p73 = por %p71, %p72
      %p74 = scmp.ne.s32.totalorder %s66, %s68
      %p75 = scmp.eq.s32.totalorder %s16, 1
      %p76 = por %p74, %p75
      %p77 = scmp.ne.s32.totalorder %s68, %s69
      %p78 = scmp.eq.s32.totalorder %s16, 0
      %p79 = por %p77, %p78
      %p80 = scmp.ne.s32.totalorder %s68, %s69
      %p81 = scmp.eq.s32.totalorder %s17, 1
      %p82 = por %p80, %p81
      %p84 = scmp.ne.s32.totalorder %s69, %s83
      %p85 = scmp.eq.s32.totalorder %s17, 0
      %p86 = por %p84, %p85
      %s87 = ssub.s32 %s11, %s18
      %p88 = scmp.eq.s32.totalorder %s87, 0
      %s90 = sadd.s32 %s89, 1
      %s91 = scalar_select %p88, %s89, %s90
      %p94 = pneg %p88
      %p95 = scmp.eq.s32.totalorder %s11, 1
      %p96 = por %p94, %p95
      %p97 = scmp.ne.s32.totalorder %s89, %s92
      %p98 = scmp.eq.s32.totalorder %s11, 0
      %p99 = por %p97, %p98
      %p100 = scmp.ne.s32.totalorder %s89, %s92
      %p101 = scmp.eq.s32.totalorder %s16, 1
      %p102 = por %p100, %p101
      %p103 = scmp.ne.s32.totalorder %s92, %s93
      %p104 = scmp.eq.s32.totalorder %s16, 0
      %p105 = por %p103, %p104
      %p106 = scmp.ne.s32.totalorder %s92, %s93
      %p107 = scmp.eq.s32.totalorder %s17, 1
      %p108 = por %p106, %p107
      %p110 = scmp.ne.s32.totalorder %s93, %s109
      %p111 = scmp.eq.s32.totalorder %s17, 0
      %p112 = por %p110, %p111
      %p113 = scmp.le.s32.totalorder 1, %s11
      %p114 = scmp.lt.s32.totalorder %s11, 3
      %p115 = pnand %p113, %p114
      %p116 = pneg %p115
      // Predicated region
      $region9: #{cnn_forward.3} parent=5 // pred_check
        _
      $region10: #{cnn_forward.3} parent=5 // pred_check_branch
        %118 = sbr.rel (%p115) target = $region12
      $region11: #{cnn_forward.3} parent=5 // pred_region
        %s119 = ssub.s32 %s11, 1
        // Predicated region
        $region13: #{cnn_forward.3} parent=11 // pred_check
          %p120 = pneg %p58
        $region14: #{cnn_forward.3} parent=11 // pred_check_branch
          %122 = sbr.rel (%p120) target = $region16
        $region15: #{cnn_forward.3} parent=11 // pred_region
          %s124 = ssub.s32 16, 16
          %125 = vsyncadd [#allocation4], %s124
          %s127 = sshll.u32 %s1, 4
          %s128 = int_to_ptr.vmem [resolvable:$true] %s127
          %130 = dma.vmem_to_smem %s128, 16, [#allocation2], [#allocation4]
        $region16: #{cnn_forward.3} parent=11 // pred_fallthru
          _
        // Predicated region
        $region17: #{cnn_forward.3} parent=11 // pred_check
          %p131 = pneg %p79
        $region18: #{cnn_forward.3} parent=11 // pred_check_branch
          %133 = sbr.rel (%p131) target = $region20
        $region19: #{cnn_forward.3} parent=11 // pred_region
          %s135 = ssub.s32 16, 16
          %136 = vsyncadd [#allocation3], %s135
          %139 = dma.hbm_to_smem %s2, 16, [#allocation5], [#allocation3]
        $region20: #{cnn_forward.3} parent=11 // pred_fallthru
          _
      $region12: #{cnn_forward.3} parent=5 // pred_fallthru
        _
      %p140 = scmp.lt.s32.totalorder %s11, 2
      // Predicated region
      $region21: #{cnn_forward.3} parent=5 // pred_check
        %p141 = pneg %p140
      $region22: #{cnn_forward.3} parent=5 // pred_check_branch
        %143 = sbr.rel (%p141) target = $region24
      $region23: #{cnn_forward.3} parent=5 // pred_region
        // Predicated region
        $region25: #{cnn_forward.3} parent=23 // pred_check
          %p144 = pneg %p31
        $region26: #{cnn_forward.3} parent=23 // pred_check_branch
          %146 = sbr.rel (%p144) target = $region28
        $region27: #{cnn_forward.3} parent=23 // pred_region
          %p147 = scmp.lt.s32.totalorder %s11, 1
          %s148 = scalar_select %p147, %s11, 1
          %s149 = smul.addr %s148, 8
          %s150 = smul.addr %s149, 8
          %s151 = scalar_lea.vmem %s0, %s150
        $region28: #{cnn_forward.3} parent=23 // pred_fallthru
          _
      $region24: #{cnn_forward.3} parent=5 // pred_fallthru
        _
      %p152 = scmp.le.s32.totalorder 1, %s11
      %p153 = scmp.lt.s32.totalorder %s11, 3
      %p154 = pnand %p152, %p153
      %p155 = pneg %p154
      // Predicated region
      $region29: #{cnn_forward.3} parent=5 // pred_check
        _
      $region30: #{cnn_forward.3} parent=5 // pred_check_branch
        %157 = sbr.rel (%p154) target = $region32
      $region31: #{cnn_forward.3} parent=5 // pred_region
        %s158 = ssub.s32 %s11, 1
        // Predicated region
        $region33: #{cnn_forward.3} parent=31 // pred_check
          %p159 = pneg %p58
        $region34: #{cnn_forward.3} parent=31 // pred_check_branch
          %161 = sbr.rel (%p159) target = $region36
        $region35: #{cnn_forward.3} parent=31 // pred_region
          %162 = dma.done [#allocation4], 16
        $region36: #{cnn_forward.3} parent=31 // pred_fallthru
          _
        // Predicated region
        $region37: #{cnn_forward.3} parent=31 // pred_check
          %p163 = pneg %p79
        $region38: #{cnn_forward.3} parent=31 // pred_check_branch
          %165 = sbr.rel (%p163) target = $region40
        $region39: #{cnn_forward.3} parent=31 // pred_region
          %166 = dma.done [#allocation3], 16
        $region40: #{cnn_forward.3} parent=31 // pred_fallthru
          _
        %167 = sfence
        %p168 = scmp.lt.s32.totalorder %s16, 1
        %s169 = scalar_select %p168, %s16, 1
        %s170 = smul.addr %s169, 8
        %s171 = smul.addr %s170, 8
        %s172 = scalar_lea.vmem %s0, %s171
        %p173 = pneg %p37
        %p174 = pneg %p34
        %p175 = pneg %p58
        %p176 = pneg %p55
        %p177 = pneg %p79
        %p178 = pneg %p76
        %p179 = pneg %p105
        %p180 = pneg %p102
        %p181 = scmp.lt.s32.totalorder %s16, 1
        %s182 = scalar_select %p181, %s16, 1
        %s183 = smul.addr %s182, 24
        %s184 = smul.addr %s183, 8
        %s185 = scalar_lea.vmem %s3, %s184
        %p186 = scmp.lt.s32.totalorder %s16, 1
        %s187 = scalar_select %p186, %s16, 1
        %s188 = smul.addr %s187, 8
        %s189 = smul.addr %s188, 8
        %s190 = scalar_lea.vmem %s0, %s189
        %p191 = scmp.lt.s32.totalorder %s16, 1
        %s192 = scalar_select %p191, %s16, 1
        %s193 = smul.addr %s192, 24
        %s194 = smul.addr %s193, 8
        %s195 = scalar_lea.vmem %s3, %s194
        %v196 = vlaneseq
        %v197 = vshrl.u32 %v196, 7
        %v198 = vadd.s32 %v197, 8
        %v199 = vadd.s32 %v197, 16
        %v200 = vadd.s32 %v197, 24
        %v201 = vadd.s32 %v197, 32
        %v202 = vadd.s32 %v197, 40
        %v203 = vadd.s32 %v197, 48
        %v204 = vadd.s32 %v197, 56
        %v205 = vadd.s32 %v197, 64
        %v206 = vadd.s32 %v197, 72
        %v207 = vadd.s32 %v197, 80
        %v208 = vadd.s32 %v197, 88
        %v209 = vlaneseq
        %v210 = vand.u32 %v209, 127
        %v211 = vmul.u32 %v210, 2
        %vm212 = vcmp.eq.s32.totalorder %v197, %v211
        %vm213 = vcmp.eq.s32.totalorder %v198, %v211
        %vm214 = vcmp.eq.s32.totalorder %v199, %v211
        %vm215 = vcmp.eq.s32.totalorder %v200, %v211
        %vm216 = vcmp.eq.s32.totalorder %v201, %v211
        %vm217 = vcmp.eq.s32.totalorder %v202, %v211
        %vm218 = vcmp.eq.s32.totalorder %v203, %v211
        %vm219 = vcmp.eq.s32.totalorder %v204, %v211
        %vm220 = vcmp.eq.s32.totalorder %v205, %v211
        %vm221 = vcmp.eq.s32.totalorder %v206, %v211
        %vm222 = vcmp.eq.s32.totalorder %v207, %v211
        %vm223 = vcmp.eq.s32.totalorder %v208, %v211
        %v224 = vsel %vm212, 1.0, 0.0
        %v225 = vsel %vm213, 1.0, 0.0
        %v226 = vsel %vm214, 1.0, 0.0
        %v227 = vsel %vm215, 1.0, 0.0
        %v228 = vsel %vm216, 1.0, 0.0
        %v229 = vsel %vm217, 1.0, 0.0
        %v230 = vsel %vm218, 1.0, 0.0
        %v231 = vsel %vm219, 1.0, 0.0
        %v232 = vsel %vm220, 1.0, 0.0
        %v233 = vsel %vm221, 1.0, 0.0
        %v234 = vsel %vm222, 1.0, 0.0
        %v235 = vsel %vm223, 1.0, 0.0
        %v236 = vadd.s32 %v211, 1
        %vm237 = vcmp.eq.s32.totalorder %v197, %v236
        %vm238 = vcmp.eq.s32.totalorder %v198, %v236
        %vm239 = vcmp.eq.s32.totalorder %v199, %v236
        %vm240 = vcmp.eq.s32.totalorder %v200, %v236
        %vm241 = vcmp.eq.s32.totalorder %v201, %v236
        %vm242 = vcmp.eq.s32.totalorder %v202, %v236
        %vm243 = vcmp.eq.s32.totalorder %v203, %v236
        %vm244 = vcmp.eq.s32.totalorder %v204, %v236
        %vm245 = vcmp.eq.s32.totalorder %v205, %v236
        %vm246 = vcmp.eq.s32.totalorder %v206, %v236
        %vm247 = vcmp.eq.s32.totalorder %v207, %v236
        %vm248 = vcmp.eq.s32.totalorder %v208, %v236
        %v249 = vsel %vm237, 1.0, 0.0
        %v250 = vsel %vm238, 1.0, 0.0
        %v251 = vsel %vm239, 1.0, 0.0
        %v252 = vsel %vm240, 1.0, 0.0
        %v253 = vsel %vm241, 1.0, 0.0
        %v254 = vsel %vm242, 1.0, 0.0
        %v255 = vsel %vm243, 1.0, 0.0
        %v256 = vsel %vm244, 1.0, 0.0
        %v257 = vsel %vm245, 1.0, 0.0
        %v258 = vsel %vm246, 1.0, 0.0
        %v259 = vsel %vm247, 1.0, 0.0
        %v260 = vsel %vm248, 1.0, 0.0
        %v261 = vmul.u32 %v197, 2
        %v262 = vmul.u32 %v198, 2
        %v263 = vmul.u32 %v199, 2
        %v264 = vmul.u32 %v200, 2
        %vm265 = vcmp.eq.s32.totalorder %v210, %v261
        %vm266 = vcmp.eq.s32.totalorder %v210, %v262
        %vm267 = vcmp.eq.s32.totalorder %v210, %v263
        %vm268 = vcmp.eq.s32.totalorder %v210, %v264
        %v269 = vsel %vm265, 1.0, 0.0
        %v270 = vsel %vm266, 1.0, 0.0
        %v271 = vsel %vm267, 1.0, 0.0
        %v272 = vsel %vm268, 1.0, 0.0
        %v273 = vadd.s32 %v261, 1
        %v274 = vadd.s32 %v262, 1
        %v275 = vadd.s32 %v263, 1
        %v276 = vadd.s32 %v264, 1
        %vm277 = vcmp.eq.s32.totalorder %v210, %v273
        %vm278 = vcmp.eq.s32.totalorder %v210, %v274
        %vm279 = vcmp.eq.s32.totalorder %v210, %v275
        %vm280 = vcmp.eq.s32.totalorder %v210, %v276
        %v281 = vsel %vm277, 1.0, 0.0
        %v282 = vsel %vm278, 1.0, 0.0
        %v283 = vsel %vm279, 1.0, 0.0
        %v284 = vsel %vm280, 1.0, 0.0
        %v285 = vld [vmem:[%s190] sm:$0xff]
        %v286 = vld [vmem:[%s190 + $0x8] sm:$0xff]
        %v287 = vld [vmem:[%s190 + $0x10] sm:$0xff]
        %v288 = vld [vmem:[%s190 + $0x18] sm:$0xff]
        %v289 = vld [vmem:[%s190 + $0x20] sm:$0xff]
        %v290 = vld [vmem:[%s190 + $0x28] sm:$0xff]
        %v291 = vld [vmem:[%s190 + $0x30] sm:$0xff]
        %v292 = vld [vmem:[%s190 + $0x1] sm:$0xff]
        %v293 = vld [vmem:[%s190 + $0x9] sm:$0xff]
        %v294 = vld [vmem:[%s190 + $0x11] sm:$0xff]
        %v295 = vld [vmem:[%s190 + $0x19] sm:$0xff]
        %v296 = vld [vmem:[%s190 + $0x21] sm:$0xff]
        %v297 = vld [vmem:[%s190 + $0x29] sm:$0xff]
        %v298 = vld [vmem:[%s190 + $0x31] sm:$0xff]
        %v299 = vld [vmem:[%s190 + $0x2] sm:$0xff]
        %v300 = vld [vmem:[%s190 + $0xa] sm:$0xff]
        %v301 = vld [vmem:[%s190 + $0x12] sm:$0xff]
        %v302 = vld [vmem:[%s190 + $0x1a] sm:$0xff]
        %v303 = vld [vmem:[%s190 + $0x22] sm:$0xff]
        %v304 = vld [vmem:[%s190 + $0x2a] sm:$0xff]
        %v305 = vld [vmem:[%s190 + $0x32] sm:$0xff]
        loop: start=0, step=1, limit=6
        $region41: #{cnn_forward.3} parent=31 // loop_pre_header
          _
        $region42: #{cnn_forward.3} parent=31 // loop_header
          %s307 = sphi 0, %s311
          %p308 = scmp.ge.s32.totalorder %s307, 6
        $region43: #{cnn_forward.3} parent=31 // loop_header_branch
          %310 = sbr.rel (%p308) target = $region47
        $region44: #{cnn_forward.3} parent=31 // loop_body
          %s312 = smul.u32 %s307, 9
          %s313 = sld [smem:[#allocation2 + %s312]]
          %v314 = vstv %s313
          %v315 = vmul.f32 %v285, %v314
          %v316 = vmul.f32 %v286, %v314
          %v317 = vmul.f32 %v287, %v314
          %v318 = vmul.f32 %v288, %v314
          %v319 = vmul.f32 %v289, %v314
          %v320 = vmul.f32 %v290, %v314
          %v321 = vmul.f32 %v291, %v314
          %s322 = sadd.s32 %s312, 1
          %s323 = sld [smem:[#allocation2 + %s322]]
          %v324 = vstv %s323
          %v325 = vmul.f32 %v285, %v324
          %v326 = vmul.f32 %v286, %v324
          %v327 = vmul.f32 %v287, %v324
          %v328 = vmul.f32 %v288, %v324
          %v329 = vmul.f32 %v289, %v324
          %v330 = vmul.f32 %v290, %v324
          %v331 = vmul.f32 %v291, %v324
          %339 = vrot.lane.b32.xlu0 %v325, 127
          %v340 = vpop.permute.xlu0 %339
          %341 = vrot.lane.b32.xlu0 %v326, 127
          %v342 = vpop.permute.xlu0 %341
          %343 = vrot.lane.b32.xlu0 %v327, 127
          %v344 = vpop.permute.xlu0 %343
          %345 = vrot.lane.b32.xlu0 %v328, 127
          %v346 = vpop.permute.xlu0 %345
          %347 = vrot.lane.b32.xlu0 %v329, 127
          %v348 = vpop.permute.xlu0 %347
          %349 = vrot.lane.b32.xlu0 %v330, 127
          %v350 = vpop.permute.xlu0 %349
          %351 = vrot.lane.b32.xlu0 %v331, 127
          %v352 = vpop.permute.xlu0 %351
          %v360 = vadd.f32 %v315, %v340
          %v361 = vadd.f32 %v316, %v342
          %v362 = vadd.f32 %v317, %v344
          %v363 = vadd.f32 %v318, %v346
          %v364 = vadd.f32 %v319, %v348
          %v365 = vadd.f32 %v320, %v350
          %v366 = vadd.f32 %v321, %v352
          %s367 = sadd.s32 %s312, 2
          %s368 = sld [smem:[#allocation2 + %s367]]
          %v369 = vstv %s368
          %v370 = vmul.f32 %v285, %v369
          %v371 = vmul.f32 %v286, %v369
          %v372 = vmul.f32 %v287, %v369
          %v373 = vmul.f32 %v288, %v369
          %v374 = vmul.f32 %v289, %v369
          %v375 = vmul.f32 %v290, %v369
          %v376 = vmul.f32 %v291, %v369
          %384 = vrot.lane.b32.xlu0 %v370, 126
          %v385 = vpop.permute.xlu0 %384
          %386 = vrot.lane.b32.xlu0 %v371, 126
          %v387 = vpop.permute.xlu0 %386
          %388 = vrot.lane.b32.xlu0 %v372, 126
          %v389 = vpop.permute.xlu0 %388
          %390 = vrot.lane.b32.xlu0 %v373, 126
          %v391 = vpop.permute.xlu0 %390
          %392 = vrot.lane.b32.xlu0 %v374, 126
          %v393 = vpop.permute.xlu0 %392
          %394 = vrot.lane.b32.xlu0 %v375, 126
          %v395 = vpop.permute.xlu0 %394
          %396 = vrot.lane.b32.xlu0 %v376, 126
          %v397 = vpop.permute.xlu0 %396
          %v405 = vadd.f32 %v360, %v385
          %v406 = vadd.f32 %v361, %v387
          %v407 = vadd.f32 %v362, %v389
          %v408 = vadd.f32 %v363, %v391
          %v409 = vadd.f32 %v364, %v393
          %v410 = vadd.f32 %v365, %v395
          %v411 = vadd.f32 %v366, %v397
          %s412 = sadd.s32 %s312, 3
          %s413 = sld [smem:[#allocation2 + %s412]]
          %v414 = vstv %s413
          %v415 = vmul.f32 %v292, %v414
          %v416 = vmul.f32 %v293, %v414
          %v417 = vmul.f32 %v294, %v414
          %v418 = vmul.f32 %v295, %v414
          %v419 = vmul.f32 %v296, %v414
          %v420 = vmul.f32 %v297, %v414
          %v421 = vmul.f32 %v298, %v414
          %v422 = vadd.f32 %v405, %v415
          %v423 = vadd.f32 %v406, %v416
          %v424 = vadd.f32 %v407, %v417
          %v425 = vadd.f32 %v408, %v418
          %v426 = vadd.f32 %v409, %v419
          %v427 = vadd.f32 %v410, %v420
          %v428 = vadd.f32 %v411, %v421
          %s429 = sadd.s32 %s312, 4
          %s430 = sld [smem:[#allocation2 + %s429]]
          %v431 = vstv %s430
          %v432 = vmul.f32 %v292, %v431
          %v433 = vmul.f32 %v293, %v431
          %v434 = vmul.f32 %v294, %v431
          %v435 = vmul.f32 %v295, %v431
          %v436 = vmul.f32 %v296, %v431
          %v437 = vmul.f32 %v297, %v431
          %v438 = vmul.f32 %v298, %v431
          %446 = vrot.lane.b32.xlu0 %v432, 127
          %v447 = vpop.permute.xlu0 %446
          %448 = vrot.lane.b32.xlu0 %v433, 127
          %v449 = vpop.permute.xlu0 %448
          %450 = vrot.lane.b32.xlu0 %v434, 127
          %v451 = vpop.permute.xlu0 %450
          %452 = vrot.lane.b32.xlu0 %v435, 127
          %v453 = vpop.permute.xlu0 %452
          %454 = vrot.lane.b32.xlu0 %v436, 127
          %v455 = vpop.permute.xlu0 %454
          %456 = vrot.lane.b32.xlu0 %v437, 127
          %v457 = vpop.permute.xlu0 %456
          %458 = vrot.lane.b32.xlu0 %v438, 127
          %v459 = vpop.permute.xlu0 %458
          %v467 = vadd.f32 %v422, %v447
          %v468 = vadd.f32 %v423, %v449
          %v469 = vadd.f32 %v424, %v451
          %v470 = vadd.f32 %v425, %v453
          %v471 = vadd.f32 %v426, %v455
          %v472 = vadd.f32 %v427, %v457
          %v473 = vadd.f32 %v428, %v459
          %s474 = sadd.s32 %s312, 5
          %s475 = sld [smem:[#allocation2 + %s474]]
          %v476 = vstv %s475
          %v477 = vmul.f32 %v292, %v476
          %v478 = vmul.f32 %v293, %v476
          %v479 = vmul.f32 %v294, %v476
          %v480 = vmul.f32 %v295, %v476
          %v481 = vmul.f32 %v296, %v476
          %v482 = vmul.f32 %v297, %v476
          %v483 = vmul.f32 %v298, %v476
          %491 = vrot.lane.b32.xlu0 %v477, 126
          %v492 = vpop.permute.xlu0 %491
          %493 = vrot.lane.b32.xlu0 %v478, 126
          %v494 = vpop.permute.xlu0 %493
          %495 = vrot.lane.b32.xlu0 %v479, 126
          %v496 = vpop.permute.xlu0 %495
          %497 = vrot.lane.b32.xlu0 %v480, 126
          %v498 = vpop.permute.xlu0 %497
          %499 = vrot.lane.b32.xlu0 %v481, 126
          %v500 = vpop.permute.xlu0 %499
          %501 = vrot.lane.b32.xlu0 %v482, 126
          %v502 = vpop.permute.xlu0 %501
          %503 = vrot.lane.b32.xlu0 %v483, 126
          %v504 = vpop.permute.xlu0 %503
          %v512 = vadd.f32 %v467, %v492
          %v513 = vadd.f32 %v468, %v494
          %v514 = vadd.f32 %v469, %v496
          %v515 = vadd.f32 %v470, %v498
          %v516 = vadd.f32 %v471, %v500
          %v517 = vadd.f32 %v472, %v502
          %v518 = vadd.f32 %v473, %v504
          %s519 = sadd.s32 %s312, 6
          %s520 = sld [smem:[#allocation2 + %s519]]
          %v521 = vstv %s520
          %v522 = vmul.f32 %v299, %v521
          %v523 = vmul.f32 %v300, %v521
          %v524 = vmul.f32 %v301, %v521
          %v525 = vmul.f32 %v302, %v521
          %v526 = vmul.f32 %v303, %v521
          %v527 = vmul.f32 %v304, %v521
          %v528 = vmul.f32 %v305, %v521
          %v529 = vadd.f32 %v512, %v522
          %v530 = vadd.f32 %v513, %v523
          %v531 = vadd.f32 %v514, %v524
          %v532 = vadd.f32 %v515, %v525
          %v533 = vadd.f32 %v516, %v526
          %v534 = vadd.f32 %v517, %v527
          %v535 = vadd.f32 %v518, %v528
          %s536 = sadd.s32 %s312, 7
          %s537 = sld [smem:[#allocation2 + %s536]]
          %v538 = vstv %s537
          %v539 = vmul.f32 %v299, %v538
          %v540 = vmul.f32 %v300, %v538
          %v541 = vmul.f32 %v301, %v538
          %v542 = vmul.f32 %v302, %v538
          %v543 = vmul.f32 %v303, %v538
          %v544 = vmul.f32 %v304, %v538
          %v545 = vmul.f32 %v305, %v538
          %553 = vrot.lane.b32.xlu0 %v539, 127
          %v554 = vpop.permute.xlu0 %553
          %555 = vrot.lane.b32.xlu0 %v540, 127
          %v556 = vpop.permute.xlu0 %555
          %557 = vrot.lane.b32.xlu0 %v541, 127
          %v558 = vpop.permute.xlu0 %557
          %559 = vrot.lane.b32.xlu0 %v542, 127
          %v560 = vpop.permute.xlu0 %559
          %561 = vrot.lane.b32.xlu0 %v543, 127
          %v562 = vpop.permute.xlu0 %561
          %563 = vrot.lane.b32.xlu0 %v544, 127
          %v564 = vpop.permute.xlu0 %563
          %565 = vrot.lane.b32.xlu0 %v545, 127
          %v566 = vpop.permute.xlu0 %565
          %v574 = vadd.f32 %v529, %v554
          %v575 = vadd.f32 %v530, %v556
          %v576 = vadd.f32 %v531, %v558
          %v577 = vadd.f32 %v532, %v560
          %v578 = vadd.f32 %v533, %v562
          %v579 = vadd.f32 %v534, %v564
          %v580 = vadd.f32 %v535, %v566
          %s581 = sadd.s32 %s312, 8
          %s582 = sld [smem:[#allocation2 + %s581]]
          %v583 = vstv %s582
          %v584 = vmul.f32 %v299, %v583
          %v585 = vmul.f32 %v300, %v583
          %v586 = vmul.f32 %v301, %v583
          %v587 = vmul.f32 %v302, %v583
          %v588 = vmul.f32 %v303, %v583
          %v589 = vmul.f32 %v304, %v583
          %v590 = vmul.f32 %v305, %v583
          %598 = vrot.lane.b32.xlu0 %v584, 126
          %v599 = vpop.permute.xlu0 %598
          %600 = vrot.lane.b32.xlu0 %v585, 126
          %v601 = vpop.permute.xlu0 %600
          %602 = vrot.lane.b32.xlu0 %v586, 126
          %v603 = vpop.permute.xlu0 %602
          %604 = vrot.lane.b32.xlu0 %v587, 126
          %v605 = vpop.permute.xlu0 %604
          %606 = vrot.lane.b32.xlu0 %v588, 126
          %v607 = vpop.permute.xlu0 %606
          %608 = vrot.lane.b32.xlu0 %v589, 126
          %v609 = vpop.permute.xlu0 %608
          %610 = vrot.lane.b32.xlu0 %v590, 126
          %v611 = vpop.permute.xlu0 %610
          %v619 = vadd.f32 %v574, %v599
          %v620 = vadd.f32 %v575, %v601
          %v621 = vadd.f32 %v576, %v603
          %v622 = vadd.f32 %v577, %v605
          %v623 = vadd.f32 %v578, %v607
          %v624 = vadd.f32 %v579, %v609
          %v625 = vadd.f32 %v580, %v611
          %s626 = sld [smem:[#allocation5 + %s307]]
          %v627 = vstv %s626
          %v628 = vadd.f32 %v619, %v627
          %v629 = vadd.f32 %v620, %v627
          %v630 = vadd.f32 %v621, %v627
          %v631 = vadd.f32 %v622, %v627
          %v632 = vadd.f32 %v623, %v627
          %v633 = vadd.f32 %v624, %v627
          %v634 = vadd.f32 %v625, %v627
          %v635 = vmax.f32 %v628, 0.0
          %v636 = vmax.f32 %v629, 0.0
          %v637 = vmax.f32 %v630, 0.0
          %v638 = vmax.f32 %v631, 0.0
          %v639 = vmax.f32 %v632, 0.0
          %v640 = vmax.f32 %v633, 0.0
          %v641 = vmax.f32 %v634, 0.0
          %vm642 = vcmask 752640
          %v644 = vsel %vm642, %v635, 0
          %v647 = vsel %vm642, %v636, 0
          %v650 = vsel %vm642, %v637, 0
          %v653 = vsel %vm642, %v638, 0
          %v656 = vsel %vm642, %v639, 0
          %v659 = vsel %vm642, %v640, 0
          %v662 = vsel %vm642, %v641, 0
          %vm664 = vcmask 1043456
          %v666 = vsel %vm664, %v235, 0
          %668 = vmatprep.subr.mxu0 0.0
          %669 = vmatpush1.msra.mxu0 %v224
          %670 = vmatprep.subr.mxu0 0.0
          %671 = vmatpush1.msra.mxu0 %v225
          %672 = vmatprep.subr.mxu0 0.0
          %673 = vmatpush1.msra.mxu0 %v226
          %674 = vmatprep.subr.mxu0 0.0
          %675 = vmatpush1.msra.mxu0 %v227
          %676 = vmatprep.subr.mxu0 0.0
          %677 = vmatpush1.msra.mxu0 %v228
          %678 = vmatprep.subr.mxu0 0.0
          %679 = vmatpush1.msra.mxu0 %v229
          %680 = vmatprep.subr.mxu0 0.0
          %681 = vmatpush1.msra.mxu0 %v230
          %682 = vmatprep.subr.mxu0 0.0
          %683 = vmatpush1.msra.mxu0 %v231
          %684 = vmatprep.subr.mxu0 0.0
          %685 = vmatpush1.msra.mxu0 %v232
          %686 = vmatprep.subr.mxu0 0.0
          %687 = vmatpush1.msra.mxu0 %v233
          %688 = vmatprep.subr.mxu0 0.0
          %689 = vmatpush1.msra.mxu0 %v234
          %690 = vmatprep.subr.mxu0 0.0
          %691 = vmatpush1.msra.mxu0 %v666
          %692 = vmatprep.subr.mxu0 0.0
          %693 = vmatpush1.msra.mxu0 0.0
          %694 = vmatprep.subr.mxu0 0.0
          %695 = vmatpush1.msra.mxu0 0.0
          %696 = vmatprep.subr.mxu0 0.0
          %697 = vmatpush1.msra.mxu0 0.0
          %698 = vmatprep.subr.mxu0 0.0
          %699 = vmatpush1.msra.mxu0 0.0
          %700 = vmatprep.subr.mxu0 0.0
          %701 = vmatpush1.msra.mxu0 0.0
          %702 = vmatprep.subr.mxu0 0.0
          %703 = vmatpush1.msra.mxu0 0.0
          %704 = vmatprep.subr.mxu0 0.0
          %705 = vmatpush1.msra.mxu0 0.0
          %706 = vmatprep.subr.mxu0 0.0
          %707 = vmatpush1.msra.mxu0 0.0
          %708 = vmatprep.subr.mxu0 0.0
          %709 = vmatpush1.msra.mxu0 0.0
          %710 = vmatprep.subr.mxu0 0.0
          %711 = vmatpush1.msra.mxu0 0.0
          %712 = vmatprep.subr.mxu0 0.0
          %713 = vmatpush1.msra.mxu0 0.0
          %714 = vmatprep.subr.mxu0 0.0
          %715 = vmatpush1.msra.mxu0 0.0
          %716 = vmatprep.subr.mxu0 0.0
          %717 = vmatpush1.msra.mxu0 0.0
          %718 = vmatprep.subr.mxu0 0.0
          %719 = vmatpush1.msra.mxu0 0.0
          %720 = vmatprep.subr.mxu0 0.0
          %721 = vmatpush1.msra.mxu0 0.0
          %722 = vmatprep.subr.mxu0 0.0
          %723 = vmatpush1.msra.mxu0 0.0
          %724 = vmatprep.subr.mxu0 0.0
          %725 = vmatpush1.msra.mxu0 0.0
          %726 = vmatprep.subr.mxu0 0.0
          %727 = vmatpush1.msra.mxu0 0.0
          %728 = vmatprep.subr.mxu0 0.0
          %729 = vmatpush1.msra.mxu0 0.0
          %730 = vmatprep.subr.mxu0 0.0
          %731 = vmatpush1.msra.mxu0 0.0
          %732 = vmatprep.mubr.f32.mxu0 0.0
          %733 = vmatmul.mubr.f32.gmra.mrb[0].mxu0 %v644
          %v734 = vpop.f32.mrb[0].mxu0
          %v735 = vadd.f32 0.0, %v734
          %v736 = vpop.f32.mrb[0].mxu0
          %737 = vmatprep.mubr.f32.mxu0 0.0
          %738 = vmatmul.mubr.f32.gmra.mrb[0].mxu0 %v647
          %v739 = vpop.f32.mrb[0].mxu0
          %v740 = vadd.f32 0.0, %v739
          %v741 = vpop.f32.mrb[0].mxu0
          %742 = vmatprep.mubr.f32.mxu0 0.0
          %743 = vmatmul.mubr.f32.gmra.mrb[0].mxu0 %v650
          %v744 = vpop.f32.mrb[0].mxu0
          %v745 = vadd.f32 0.0, %v744
          %v746 = vpop.f32.mrb[0].mxu0
          %747 = vmatprep.mubr.f32.mxu0 0.0
          %748 = vmatmul.mubr.f32.gmra.mrb[0].mxu0 %v653
          %v749 = vpop.f32.mrb[0].mxu0
          %v750 = vadd.f32 0.0, %v749
          %v751 = vpop.f32.mrb[0].mxu0
          %752 = vmatprep.mubr.f32.mxu0 0.0
          %753 = vmatmul.mubr.f32.gmra.mrb[0].mxu0 %v656
          %v754 = vpop.f32.mrb[0].mxu0
          %v755 = vadd.f32 0.0, %v754
          %v756 = vpop.f32.mrb[0].mxu0
          %757 = vmatprep.mubr.f32.mxu0 0.0
          %758 = vmatmul.mubr.f32.gmra.mrb[0].mxu0 %v659
          %v759 = vpop.f32.mrb[0].mxu0
          %v760 = vadd.f32 0.0, %v759
          %v761 = vpop.f32.mrb[0].mxu0
          %762 = vmatprep.mubr.f32.mxu0 0.0
          %763 = vmatmul.mubr.f32.gmra.mrb[0].mxu0 %v662
          %v764 = vpop.f32.mrb[0].mxu0
          %v765 = vadd.f32 0.0, %v764
          %v766 = vpop.f32.mrb[0].mxu0
          %767 = vdwg.mxu0
          %v769 = vsel %vm664, %v260, 0
          %771 = vmatprep.subr.mxu0 0.0
          %772 = vmatpush1.msra.mxu0 %v249
          %773 = vmatprep.subr.mxu0 0.0
          %774 = vmatpush1.msra.mxu0 %v250
          %775 = vmatprep.subr.mxu0 0.0
          %776 = vmatpush1.msra.mxu0 %v251
          %777 = vmatprep.subr.mxu0 0.0
          %778 = vmatpush1.msra.mxu0 %v252
          %779 = vmatprep.subr.mxu0 0.0
          %780 = vmatpush1.msra.mxu0 %v253
          %781 = vmatprep.subr.mxu0 0.0
          %782 = vmatpush1.msra.mxu0 %v254
          %783 = vmatprep.subr.mxu0 0.0
          %784 = vmatpush1.msra.mxu0 %v255
          %785 = vmatprep.subr.mxu0 0.0
          %786 = vmatpush1.msra.mxu0 %v256
          %787 = vmatprep.subr.mxu0 0.0
          %788 = vmatpush1.msra.mxu0 %v257
          %789 = vmatprep.subr.mxu0 0.0
          %790 = vmatpush1.msra.mxu0 %v258
          %791 = vmatprep.subr.mxu0 0.0
          %792 = vmatpush1.msra.mxu0 %v259
          %793 = vmatprep.subr.mxu0 0.0
          %794 = vmatpush1.msra.mxu0 %v769
          %795 = vmatprep.subr.mxu0 0.0
          %796 = vmatpush1.msra.mxu0 0.0
          %797 = vmatprep.subr.mxu0 0.0
          %798 = vmatpush1.msra.mxu0 0.0
          %799 = vmatprep.subr.mxu0 0.0
          %800 = vmatpush1.msra.mxu0 0.0
          %801 = vmatprep.subr.mxu0 0.0
          %802 = vmatpush1.msra.mxu0 0.0
          %803 = vmatprep.subr.mxu0 0.0
          %804 = vmatpush1.msra.mxu0 0.0
          %805 = vmatprep.subr.mxu0 0.0
          %806 = vmatpush1.msra.mxu0 0.0
          %807 = vmatprep.subr.mxu0 0.0
          %808 = vmatpush1.msra.mxu0 0.0
          %809 = vmatprep.subr.mxu0 0.0
          %810 = vmatpush1.msra.mxu0 0.0
          %811 = vmatprep.subr.mxu0 0.0
          %812 = vmatpush1.msra.mxu0 0.0
          %813 = vmatprep.subr.mxu0 0.0
          %814 = vmatpush1.msra.mxu0 0.0
          %815 = vmatprep.subr.mxu0 0.0
          %816 = vmatpush1.msra.mxu0 0.0
          %817 = vmatprep.subr.mxu0 0.0
          %818 = vmatpush1.msra.mxu0 0.0
          %819 = vmatprep.subr.mxu0 0.0
          %820 = vmatpush1.msra.mxu0 0.0
          %821 = vmatprep.subr.mxu0 0.0
          %822 = vmatpush1.msra.mxu0 0.0
          %823 = vmatprep.subr.mxu0 0.0
          %824 = vmatpush1.msra.mxu0 0.0
          %825 = vmatprep.subr.mxu0 0.0
          %826 = vmatpush1.msra.mxu0 0.0
          %827 = vmatprep.subr.mxu0 0.0
          %828 = vmatpush1.msra.mxu0 0.0
          %829 = vmatprep.subr.mxu0 0.0
          %830 = vmatpush1.msra.mxu0 0.0
          %831 = vmatprep.subr.mxu0 0.0
          %832 = vmatpush1.msra.mxu0 0.0
          %833 = vmatprep.subr.mxu0 0.0
          %834 = vmatpush1.msra.mxu0 0.0
          %835 = vmatprep.mubr.f32.mxu0 0.0
          %836 = vmatmul.mubr.f32.gmra.mrb[0].mxu0 %v644
          %v837 = vpop.f32.mrb[0].mxu0
          %v838 = vadd.f32 0.0, %v837
          %v839 = vpop.f32.mrb[0].mxu0
          %840 = vmatprep.mubr.f32.mxu0 0.0
          %841 = vmatmul.mubr.f32.gmra.mrb[0].mxu0 %v647
          %v842 = vpop.f32.mrb[0].mxu0
          %v843 = vadd.f32 0.0, %v842
          %v844 = vpop.f32.mrb[0].mxu0
          %845 = vmatprep.mubr.f32.mxu0 0.0
          %846 = vmatmul.mubr.f32.gmra.mrb[0].mxu0 %v650
          %v847 = vpop.f32.mrb[0].mxu0
          %v848 = vadd.f32 0.0, %v847
          %v849 = vpop.f32.mrb[0].mxu0
          %850 = vmatprep.mubr.f32.mxu0 0.0
          %851 = vmatmul.mubr.f32.gmra.mrb[0].mxu0 %v653
          %v852 = vpop.f32.mrb[0].mxu0
          %v853 = vadd.f32 0.0, %v852
          %v854 = vpop.f32.mrb[0].mxu0
          %855 = vmatprep.mubr.f32.mxu0 0.0
          %856 = vmatmul.mubr.f32.gmra.mrb[0].mxu0 %v656
          %v857 = vpop.f32.mrb[0].mxu0
          %v858 = vadd.f32 0.0, %v857
          %v859 = vpop.f32.mrb[0].mxu0
          %860 = vmatprep.mubr.f32.mxu0 0.0
          %861 = vmatmul.mubr.f32.gmra.mrb[0].mxu0 %v659
          %v862 = vpop.f32.mrb[0].mxu0
          %v863 = vadd.f32 0.0, %v862
          %v864 = vpop.f32.mrb[0].mxu0
          %865 = vmatprep.mubr.f32.mxu0 0.0
          %866 = vmatmul.mubr.f32.gmra.mrb[0].mxu0 %v662
          %v867 = vpop.f32.mrb[0].mxu0
          %v868 = vadd.f32 0.0, %v867
          %v869 = vpop.f32.mrb[0].mxu0
          %870 = vdwg.mxu0
          %v871 = vmax.f32 %v735, %v838
          %v872 = vmax.f32 %v740, %v843
          %v873 = vmax.f32 %v745, %v848
          %v874 = vmax.f32 %v750, %v853
          %v875 = vmax.f32 %v755, %v858
          %v876 = vmax.f32 %v760, %v863
          %v877 = vmax.f32 %v765, %v868
          %vm878 = vcmask 457728
          %v880 = vsel %vm878, %v269, 0
          %v883 = vsel %vm878, %v270, 0
          %v886 = vsel %vm878, %v271, 0
          %v889 = vsel %vm878, %v272, 0
          %891 = vmatprep.subr.mxu0 0.0
          %892 = vmatpush1.msra.mxu0 %v871
          %893 = vmatprep.subr.mxu0 0.0
          %894 = vmatpush1.msra.mxu0 %v872
          %895 = vmatprep.subr.mxu0 0.0
          %896 = vmatpush1.msra.mxu0 %v873
          %897 = vmatprep.subr.mxu0 0.0
          %898 = vmatpush1.msra.mxu0 %v874
          %899 = vmatprep.subr.mxu0 0.0
          %900 = vmatpush1.msra.mxu0 %v875
          %901 = vmatprep.subr.mxu0 0.0
          %902 = vmatpush1.msra.mxu0 %v876
          %903 = vmatprep.subr.mxu0 0.0
          %904 = vmatpush1.msra.mxu0 %v877
          %905 = vmatprep.subr.mxu0 0.0
          %906 = vmatpush1.msra.mxu0 0.0
          %907 = vmatprep.subr.mxu0 0.0
          %908 = vmatpush1.msra.mxu0 0.0
          %909 = vmatprep.subr.mxu0 0.0
          %910 = vmatpush1.msra.mxu0 0.0
          %911 = vmatprep.subr.mxu0 0.0
          %912 = vmatpush1.msra.mxu0 0.0
          %913 = vmatprep.subr.mxu0 0.0
          %914 = vmatpush1.msra.mxu0 0.0
          %915 = vmatprep.subr.mxu0 0.0
          %916 = vmatpush1.msra.mxu0 0.0
          %917 = vmatprep.subr.mxu0 0.0
          %918 = vmatpush1.msra.mxu0 0.0
          %919 = vmatprep.subr.mxu0 0.0
          %920 = vmatpush1.msra.mxu0 0.0
          %921 = vmatprep.subr.mxu0 0.0
          %922 = vmatpush1.msra.mxu0 0.0
          %923 = vmatprep.subr.mxu0 0.0
          %924 = vmatpush1.msra.mxu0 0.0
          %925 = vmatprep.subr.mxu0 0.0
          %926 = vmatpush1.msra.mxu0 0.0
          %927 = vmatprep.subr.mxu0 0.0
          %928 = vmatpush1.msra.mxu0 0.0
          %929 = vmatprep.subr.mxu0 0.0
          %930 = vmatpush1.msra.mxu0 0.0
          %931 = vmatprep.subr.mxu0 0.0
          %932 = vmatpush1.msra.mxu0 0.0
          %933 = vmatprep.subr.mxu0 0.0
          %934 = vmatpush1.msra.mxu0 0.0
          %935 = vmatprep.subr.mxu0 0.0
          %936 = vmatpush1.msra.mxu0 0.0
          %937 = vmatprep.subr.mxu0 0.0
          %938 = vmatpush1.msra.mxu0 0.0
          %939 = vmatprep.subr.mxu0 0.0
          %940 = vmatpush1.msra.mxu0 0.0
          %941 = vmatprep.subr.mxu0 0.0
          %942 = vmatpush1.msra.mxu0 0.0
          %943 = vmatprep.subr.mxu0 0.0
          %944 = vmatpush1.msra.mxu0 0.0
          %945 = vmatprep.subr.mxu0 0.0
          %946 = vmatpush1.msra.mxu0 0.0
          %947 = vmatprep.subr.mxu0 0.0
          %948 = vmatpush1.msra.mxu0 0.0
          %949 = vmatprep.subr.mxu0 0.0
          %950 = vmatpush1.msra.mxu0 0.0
          %951 = vmatprep.subr.mxu0 0.0
          %952 = vmatpush1.msra.mxu0 0.0
          %953 = vmatprep.subr.mxu0 0.0
          %954 = vmatpush1.msra.mxu0 0.0
          %955 = vmatprep.mubr.f32.mxu0 0.0
          %956 = vmatmul.mubr.f32.gmra.mrb[0].mxu0 %v880
          %v957 = vpop.f32.mrb[0].mxu0
          %v958 = vadd.f32 0.0, %v957
          %v959 = vpop.f32.mrb[0].mxu0
          %960 = vmatprep.mubr.f32.mxu0 0.0
          %961 = vmatmul.mubr.f32.gmra.mrb[0].mxu0 %v883
          %v962 = vpop.f32.mrb[0].mxu0
          %v963 = vadd.f32 0.0, %v962
          %v964 = vpop.f32.mrb[0].mxu0
          %965 = vmatprep.mubr.f32.mxu0 0.0
          %966 = vmatmul.mubr.f32.gmra.mrb[0].mxu0 %v886
          %v967 = vpop.f32.mrb[0].mxu0
          %v968 = vadd.f32 0.0, %v967
          %v969 = vpop.f32.mrb[0].mxu0
          %970 = vmatprep.mubr.f32.mxu0 0.0
          %971 = vmatmul.mubr.f32.gmra.mrb[0].mxu0 %v889
          %v972 = vpop.f32.mrb[0].mxu0
          %v973 = vadd.f32 0.0, %v972
          %v974 = vpop.f32.mrb[0].mxu0
          %975 = vdwg.mxu0
          %v977 = vsel %vm878, %v281, 0
          %v980 = vsel %vm878, %v282, 0
          %v983 = vsel %vm878, %v283, 0
          %v986 = vsel %vm878, %v284, 0
          %988 = vmatprep.subr.mxu0 0.0
          %989 = vmatpush1.msra.mxu0 %v871
          %990 = vmatprep.subr.mxu0 0.0
          %991 = vmatpush1.msra.mxu0 %v872
          %992 = vmatprep.subr.mxu0 0.0
          %993 = vmatpush1.msra.mxu0 %v873
          %994 = vmatprep.subr.mxu0 0.0
          %995 = vmatpush1.msra.mxu0 %v874
          %996 = vmatprep.subr.mxu0 0.0
          %997 = vmatpush1.msra.mxu0 %v875
          %998 = vmatprep.subr.mxu0 0.0
          %999 = vmatpush1.msra.mxu0 %v876
          %1000 = vmatprep.subr.mxu0 0.0
          %1001 = vmatpush1.msra.mxu0 %v877
          %1002 = vmatprep.subr.mxu0 0.0
          %1003 = vmatpush1.msra.mxu0 0.0
          %1004 = vmatprep.subr.mxu0 0.0
          %1005 = vmatpush1.msra.mxu0 0.0
          %1006 = vmatprep.subr.mxu0 0.0
          %1007 = vmatpush1.msra.mxu0 0.0
          %1008 = vmatprep.subr.mxu0 0.0
          %1009 = vmatpush1.msra.mxu0 0.0
          %1010 = vmatprep.subr.mxu0 0.0
          %1011 = vmatpush1.msra.mxu0 0.0
          %1012 = vmatprep.subr.mxu0 0.0
          %1013 = vmatpush1.msra.mxu0 0.0
          %1014 = vmatprep.subr.mxu0 0.0
          %1015 = vmatpush1.msra.mxu0 0.0
          %1016 = vmatprep.subr.mxu0 0.0
          %1017 = vmatpush1.msra.mxu0 0.0
          %1018 = vmatprep.subr.mxu0 0.0
          %1019 = vmatpush1.msra.mxu0 0.0
          %1020 = vmatprep.subr.mxu0 0.0
          %1021 = vmatpush1.msra.mxu0 0.0
          %1022 = vmatprep.subr.mxu0 0.0
          %1023 = vmatpush1.msra.mxu0 0.0
          %1024 = vmatprep.subr.mxu0 0.0
          %1025 = vmatpush1.msra.mxu0 0.0
          %1026 = vmatprep.subr.mxu0 0.0
          %1027 = vmatpush1.msra.mxu0 0.0
          %1028 = vmatprep.subr.mxu0 0.0
          %1029 = vmatpush1.msra.mxu0 0.0
          %1030 = vmatprep.subr.mxu0 0.0
          %1031 = vmatpush1.msra.mxu0 0.0
          %1032 = vmatprep.subr.mxu0 0.0
          %1033 = vmatpush1.msra.mxu0 0.0
          %1034 = vmatprep.subr.mxu0 0.0
          %1035 = vmatpush1.msra.mxu0 0.0
          %1036 = vmatprep.subr.mxu0 0.0
          %1037 = vmatpush1.msra.mxu0 0.0
          %1038 = vmatprep.subr.mxu0 0.0
          %1039 = vmatpush1.msra.mxu0 0.0
          %1040 = vmatprep.subr.mxu0 0.0
          %1041 = vmatpush1.msra.mxu0 0.0
          %1042 = vmatprep.subr.mxu0 0.0
          %1043 = vmatpush1.msra.mxu0 0.0
          %1044 = vmatprep.subr.mxu0 0.0
          %1045 = vmatpush1.msra.mxu0 0.0
          %1046 = vmatprep.subr.mxu0 0.0
          %1047 = vmatpush1.msra.mxu0 0.0
          %1048 = vmatprep.subr.mxu0 0.0
          %1049 = vmatpush1.msra.mxu0 0.0
          %1050 = vmatprep.subr.mxu0 0.0
          %1051 = vmatpush1.msra.mxu0 0.0
          %1052 = vmatprep.mubr.f32.mxu0 0.0
          %1053 = vmatmul.mubr.f32.gmra.mrb[0].mxu0 %v977
          %v1054 = vpop.f32.mrb[0].mxu0
          %v1055 = vadd.f32 0.0, %v1054
          %v1056 = vpop.f32.mrb[0].mxu0
          %1057 = vmatprep.mubr.f32.mxu0 0.0
          %1058 = vmatmul.mubr.f32.gmra.mrb[0].mxu0 %v980
          %v1059 = vpop.f32.mrb[0].mxu0
          %v1060 = vadd.f32 0.0, %v1059
          %v1061 = vpop.f32.mrb[0].mxu0
          %1062 = vmatprep.mubr.f32.mxu0 0.0
          %1063 = vmatmul.mubr.f32.gmra.mrb[0].mxu0 %v983
          %v1064 = vpop.f32.mrb[0].mxu0
          %v1065 = vadd.f32 0.0, %v1064
          %v1066 = vpop.f32.mrb[0].mxu0
          %1067 = vmatprep.mubr.f32.mxu0 0.0
          %1068 = vmatmul.mubr.f32.gmra.mrb[0].mxu0 %v986
          %v1069 = vpop.f32.mrb[0].mxu0
          %v1070 = vadd.f32 0.0, %v1069
          %v1071 = vpop.f32.mrb[0].mxu0
          %1072 = vdwg.mxu0
          %v1073 = vmax.f32 %v958, %v1055
          %v1074 = vmax.f32 %v963, %v1060
          %v1075 = vmax.f32 %v968, %v1065
          %v1076 = vmax.f32 %v973, %v1070
          %s1077 = smul.u32 %s307, 32
          %s1078 = scalar_lea.vmem %s195, %s1077
          %vm1079 = vcmask 375808
          %1080 = vst.msk [vmem:[%s1078] sm:$0xff] %vm1079, %v1073
          %1081 = vst.msk [vmem:[%s1078 + $0x8] sm:$0xff] %vm1079, %v1074
          %1082 = vst.msk [vmem:[%s1078 + $0x10] sm:$0xff] %vm1079, %v1075
          %vm1083 = vcmask 371712
          %1084 = vst.msk [vmem:[%s1078 + $0x18] sm:$0xf] %vm1083, %v1076
        $region45: #{cnn_forward.3} parent=31 // loop_footer
          %s311 = sadd.s32 1, %s307
        $region46: #{cnn_forward.3} parent=31 // loop_footer_branch
          %306 = sbr.rel target = $region42
        $region47: #{cnn_forward.3} parent=31 // loop_exit
          _
        %p1085 = scmp.lt.s32.totalorder %s16, 1
        %s1086 = scalar_select %p1085, %s16, 1
        %s1087 = smul.addr %s1086, 24
        %s1088 = smul.addr %s1087, 8
        %s1089 = scalar_lea.vmem %s3, %s1088
        // Predicated region
        $region48: #{cnn_forward.3} parent=31 // pred_check
          %p1090 = pneg %p102
        $region49: #{cnn_forward.3} parent=31 // pred_check_branch
          %1092 = sbr.rel (%p1090) target = $region51
        $region50: #{cnn_forward.3} parent=31 // pred_region
          _
        $region51: #{cnn_forward.3} parent=31 // pred_fallthru
          _
      $region32: #{cnn_forward.3} parent=5 // pred_fallthru
        _
      %p1093 = scmp.le.s32.totalorder 2, %s11
      // Predicated region
      $region52: #{cnn_forward.3} parent=5 // pred_check
        %p1094 = pneg %p1093
      $region53: #{cnn_forward.3} parent=5 // pred_check_branch
        %1096 = sbr.rel (%p1094) target = $region55
      $region54: #{cnn_forward.3} parent=5 // pred_region
        %s1097 = ssub.s32 %s11, 2
        // Predicated region
        $region56: #{cnn_forward.3} parent=54 // pred_check
          %p1098 = pneg %p108
        $region57: #{cnn_forward.3} parent=54 // pred_check_branch
          %1100 = sbr.rel (%p1098) target = $region59
        $region58: #{cnn_forward.3} parent=54 // pred_region
          %p1101 = scmp.lt.s32.totalorder %s17, 1
          %s1102 = scalar_select %p1101, %s17, 1
          %s1103 = smul.addr %s1102, 24
          %s1104 = smul.addr %s1103, 8
          %s1105 = scalar_lea.vmem %s3, %s1104
        $region59: #{cnn_forward.3} parent=54 // pred_fallthru
          _
      $region55: #{cnn_forward.3} parent=5 // pred_fallthru
        _
    $region6: #{cnn_forward.3} parent=1 // loop_footer
      %s15 = sadd.s32 1, %s11
    $region7: #{cnn_forward.3} parent=1 // loop_footer_branch
      %10 = sbr.rel target = $region3
    $region8: #{cnn_forward.3} parent=1 // loop_exit
      _
    %1106 = vsyncpa [#allocation3], 1
    %s1107 = scalar_lea.sflag [#allocation3], 1
    %1108 = vsyncpa %s1107, 1
    %1109 = vsyncpa [#allocation4], 1
    %s1110 = scalar_lea.sflag [#allocation4], 1
    %1111 = vsyncpa %s1110, 1

// kernel: cnn_forward.4
$region0: #{cnn_forward.4}
  #allocation0 [shape = 'u32[]', space=smem, size = 0x4, offset = 0x4, fixed_abs, tag = 'smem constant byte address 0x4 - core index']
  #allocation1 [shape = 'u32[144,128]{1,0:T(1,128)}', space=vmem, size = 0x12000, scoped, tag = 'internal scratch']
  %s0 = inlined_call_operand.vmem [shape: f32[2,6,28,46], index: 0, kind: input, shape index: {}]
  %s1 = inlined_call_operand.vmem [shape: f32[2400], index: 1, kind: input, shape index: {}]
  %s2 = inlined_call_operand.hbm [shape: f32[16], index: 2, kind: input, shape index: {}]
  %s3 = inlined_call_operand.vmem [shape: f32[2,16,12,21], index: 3, kind: output, shape index: {}]
  %s4 = sld [smem:[#allocation0]]
  $region60: #{cnn_forward.4} parent=0
    _
  %s6 = ssub.s32 1, %s4
  %s7 = scalar_select 0, %s6, %s4
  $region1: #{cnn_forward.4} parent=0
    #allocation2 [shape = 'u8[9728]{0}', space=smem, size = 0x2600, scoped, tag = 'input window, operand 1, single buffered']
    #allocation3 [shape = 's32[2]{0}', space=sflag, size = 0x8, scoped, tag = 'scoped memory for cnn_forward.4']
    #allocation4 [shape = 's32[2]{0}', space=sflag, size = 0x8, scoped, tag = 'scoped memory for cnn_forward.4']
    #allocation5 [shape = 'u8[512]{0}', space=smem, size = 0x200, scoped, tag = 'input window, operand 2, single buffered']
    %8 = vsyncpa [#allocation4], 0
    %9 = vsyncpa [#allocation3], 0
    loop: start=0, step=1, limit=4
    $region2: #{cnn_forward.4} parent=1 // loop_pre_header
      _
    $region3: #{cnn_forward.4} parent=1 // loop_header
      %s11 = sphi 0, %s15
      %p12 = scmp.ge.s32.totalorder %s11, 4
      %s21 = sphi 0, %s23
      %s24 = sphi 0, %s21
      %s25 = sphi 0, %s24
      %s41 = sphi 0, %s25
      %s45 = sphi 0, %s45
      %s47 = sphi 0, %s45
      %s48 = sphi 0, %s47
      %s62 = sphi 0, %s48
      %s66 = sphi 0, %s66
      %s68 = sphi 0, %s66
      %s69 = sphi 0, %s68
      %s83 = sphi 0, %s69
      %s89 = sphi 0, %s91
      %s92 = sphi 0, %s89
      %s93 = sphi 0, %s92
      %s109 = sphi 0, %s93
    $region4: #{cnn_forward.4} parent=1 // loop_header_branch
      %14 = sbr.rel (%p12) target = $region8
    $region5: #{cnn_forward.4} parent=1 // loop_body
      %s16 = ssub.s32 %s11, 1
      %s17 = ssub.s32 %s11, 2
      %s18 = sadd.s32 %s11, 1
      %s19 = ssub.s32 %s11, %s18
      %p20 = scmp.eq.s32.totalorder %s19, 0
      %s22 = sadd.s32 %s21, 1
      %s23 = scalar_select %p20, %s21, %s22
      %p26 = pneg %p20
      %p27 = scmp.eq.s32.totalorder %s11, 1
      %p28 = por %p26, %p27
      %p29 = scmp.ne.s32.totalorder %s21, %s24
      %p30 = scmp.eq.s32.totalorder %s11, 0
      %p31 = por %p29, %p30
      %p32 = scmp.ne.s32.totalorder %s21, %s24
      %p33 = scmp.eq.s32.totalorder %s16, 1
      %p34 = por %p32, %p33
      %p35 = scmp.ne.s32.totalorder %s24, %s25
      %p36 = scmp.eq.s32.totalorder %s16, 0
      %p37 = por %p35, %p36
      %p38 = scmp.ne.s32.totalorder %s24, %s25
      %p39 = scmp.eq.s32.totalorder %s17, 1
      %p40 = por %p38, %p39
      %p42 = scmp.ne.s32.totalorder %s25, %s41
      %p43 = scmp.eq.s32.totalorder %s17, 0
      %p44 = por %p42, %p43
      %s46 = sadd.s32 %s45, 1
      %p49 = scmp.eq.s32.totalorder %s11, 1
      %p50 = scmp.ne.s32.totalorder %s45, %s47
      %p51 = scmp.eq.s32.totalorder %s11, 0
      %p52 = por %p50, %p51
      %p53 = scmp.ne.s32.totalorder %s45, %s47
      %p54 = scmp.eq.s32.totalorder %s16, 1
      %p55 = por %p53, %p54
      %p56 = scmp.ne.s32.totalorder %s47, %s48
      %p57 = scmp.eq.s32.totalorder %s16, 0
      %p58 = por %p56, %p57
      %p59 = scmp.ne.s32.totalorder %s47, %s48
      %p60 = scmp.eq.s32.totalorder %s17, 1
      %p61 = por %p59, %p60
      %p63 = scmp.ne.s32.totalorder %s48, %s62
      %p64 = scmp.eq.s32.totalorder %s17, 0
      %p65 = por %p63, %p64
      %s67 = sadd.s32 %s66, 1
      %p70 = scmp.eq.s32.totalorder %s11, 1
      %p71 = scmp.ne.s32.totalorder %s66, %s68
      %p72 = scmp.eq.s32.totalorder %s11, 0
      %p73 = por %p71, %p72
      %p74 = scmp.ne.s32.totalorder %s66, %s68
      %p75 = scmp.eq.s32.totalorder %s16, 1
      %p76 = por %p74, %p75
      %p77 = scmp.ne.s32.totalorder %s68, %s69
      %p78 = scmp.eq.s32.totalorder %s16, 0
      %p79 = por %p77, %p78
      %p80 = scmp.ne.s32.totalorder %s68, %s69
      %p81 = scmp.eq.s32.totalorder %s17, 1
      %p82 = por %p80, %p81
      %p84 = scmp.ne.s32.totalorder %s69, %s83
      %p85 = scmp.eq.s32.totalorder %s17, 0
      %p86 = por %p84, %p85
      %s87 = ssub.s32 %s11, %s18
      %p88 = scmp.eq.s32.totalorder %s87, 0
      %s90 = sadd.s32 %s89, 1
      %s91 = scalar_select %p88, %s89, %s90
      %p94 = pneg %p88
      %p95 = scmp.eq.s32.totalorder %s11, 1
      %p96 = por %p94, %p95
      %p97 = scmp.ne.s32.totalorder %s89, %s92
      %p98 = scmp.eq.s32.totalorder %s11, 0
      %p99 = por %p97, %p98
      %p100 = scmp.ne.s32.totalorder %s89, %s92
      %p101 = scmp.eq.s32.totalorder %s16, 1
      %p102 = por %p100, %p101
      %p103 = scmp.ne.s32.totalorder %s92, %s93
      %p104 = scmp.eq.s32.totalorder %s16, 0
      %p105 = por %p103, %p104
      %p106 = scmp.ne.s32.totalorder %s92, %s93
      %p107 = scmp.eq.s32.totalorder %s17, 1
      %p108 = por %p106, %p107
      %p110 = scmp.ne.s32.totalorder %s93, %s109
      %p111 = scmp.eq.s32.totalorder %s17, 0
      %p112 = por %p110, %p111
      %p113 = scmp.le.s32.totalorder 1, %s11
      %p114 = scmp.lt.s32.totalorder %s11, 3
      %p115 = pnand %p113, %p114
      %p116 = pneg %p115
      // Predicated region
      $region9: #{cnn_forward.4} parent=5 // pred_check
        _
      $region10: #{cnn_forward.4} parent=5 // pred_check_branch
        %118 = sbr.rel (%p115) target = $region12
      $region11: #{cnn_forward.4} parent=5 // pred_region
        %s119 = ssub.s32 %s11, 1
        // Predicated region
        $region13: #{cnn_forward.4} parent=11 // pred_check
          %p120 = pneg %p58
        $region14: #{cnn_forward.4} parent=11 // pred_check_branch
          %122 = sbr.rel (%p120) target = $region16
        $region15: #{cnn_forward.4} parent=11 // pred_region
          %s124 = ssub.s32 304, 304
          %125 = vsyncadd [#allocation4], %s124
          %s127 = sshll.u32 %s1, 4
          %s128 = int_to_ptr.vmem [resolvable:$true] %s127
          %130 = dma.vmem_to_smem %s128, 304, [#allocation2], [#allocation4]
        $region16: #{cnn_forward.4} parent=11 // pred_fallthru
          _
        // Predicated region
        $region17: #{cnn_forward.4} parent=11 // pred_check
          %p131 = pneg %p79
        $region18: #{cnn_forward.4} parent=11 // pred_check_branch
          %133 = sbr.rel (%p131) target = $region20
        $region19: #{cnn_forward.4} parent=11 // pred_region
          %s135 = ssub.s32 16, 16
          %136 = vsyncadd [#allocation3], %s135
          %139 = dma.hbm_to_smem %s2, 16, [#allocation5], [#allocation3]
        $region20: #{cnn_forward.4} parent=11 // pred_fallthru
          _
      $region12: #{cnn_forward.4} parent=5 // pred_fallthru
        _
      %p140 = scmp.lt.s32.totalorder %s11, 2
      // Predicated region
      $region21: #{cnn_forward.4} parent=5 // pred_check
        %p141 = pneg %p140
      $region22: #{cnn_forward.4} parent=5 // pred_check_branch
        %143 = sbr.rel (%p141) target = $region24
      $region23: #{cnn_forward.4} parent=5 // pred_region
        // Predicated region
        $region25: #{cnn_forward.4} parent=23 // pred_check
          %p144 = pneg %p31
        $region26: #{cnn_forward.4} parent=23 // pred_check_branch
          %146 = sbr.rel (%p144) target = $region28
        $region27: #{cnn_forward.4} parent=23 // pred_region
          %p147 = scmp.lt.s32.totalorder %s11, 1
          %s148 = scalar_select %p147, %s11, 1
          %s149 = smul.addr %s148, 24
          %s150 = smul.addr %s149, 8
          %s151 = scalar_lea.vmem %s0, %s150
        $region28: #{cnn_forward.4} parent=23 // pred_fallthru
          _
      $region24: #{cnn_forward.4} parent=5 // pred_fallthru
        _
      %p152 = scmp.le.s32.totalorder 1, %s11
      %p153 = scmp.lt.s32.totalorder %s11, 3
      %p154 = pnand %p152, %p153
      %p155 = pneg %p154
      // Predicated region
      $region29: #{cnn_forward.4} parent=5 // pred_check
        _
      $region30: #{cnn_forward.4} parent=5 // pred_check_branch
        %157 = sbr.rel (%p154) target = $region32
      $region31: #{cnn_forward.4} parent=5 // pred_region
        %s158 = ssub.s32 %s11, 1
        // Predicated region
        $region33: #{cnn_forward.4} parent=31 // pred_check
          %p159 = pneg %p58
        $region34: #{cnn_forward.4} parent=31 // pred_check_branch
          %161 = sbr.rel (%p159) target = $region36
        $region35: #{cnn_forward.4} parent=31 // pred_region
          %162 = dma.done [#allocation4], 304
        $region36: #{cnn_forward.4} parent=31 // pred_fallthru
          _
        // Predicated region
        $region37: #{cnn_forward.4} parent=31 // pred_check
          %p163 = pneg %p79
        $region38: #{cnn_forward.4} parent=31 // pred_check_branch
          %165 = sbr.rel (%p163) target = $region40
        $region39: #{cnn_forward.4} parent=31 // pred_region
          %166 = dma.done [#allocation3], 16
        $region40: #{cnn_forward.4} parent=31 // pred_fallthru
          _
        %167 = sfence
        %p168 = scmp.lt.s32.totalorder %s16, 1
        %s169 = scalar_select %p168, %s16, 1
        %s170 = smul.addr %s169, 24
        %s171 = smul.addr %s170, 8
        %s172 = scalar_lea.vmem %s0, %s171
        %p173 = pneg %p37
        %p174 = pneg %p34
        %p175 = pneg %p58
        %p176 = pneg %p55
        %p177 = pneg %p79
        %p178 = pneg %p76
        %p179 = pneg %p105
        %p180 = pneg %p102
        %p181 = scmp.lt.s32.totalorder %s16, 1
        %s182 = scalar_select %p181, %s16, 1
        %s183 = smul.addr %s182, 32
        %s184 = smul.addr %s183, 8
        %s185 = scalar_lea.vmem %s3, %s184
        %p186 = scmp.lt.s32.totalorder %s16, 1
        %s187 = scalar_select %p186, %s16, 1
        %s188 = smul.addr %s187, 24
        %s189 = smul.addr %s188, 8
        %s190 = scalar_lea.vmem %s0, %s189
        %p191 = scmp.lt.s32.totalorder %s16, 1
        %s192 = scalar_select %p191, %s16, 1
        %s193 = smul.addr %s192, 32
        %s194 = smul.addr %s193, 8
        %s195 = scalar_lea.vmem %s3, %s194
        %v196 = vlaneseq
        %v197 = vshrl.u32 %v196, 7
        %v198 = vadd.s32 %v197, 8
        %v199 = vadd.s32 %v197, 16
        %v200 = vadd.s32 %v197, 24
        %v201 = vadd.s32 %v197, 32
        %v202 = vadd.s32 %v197, 40
        %v203 = vlaneseq
        %v204 = vand.u32 %v203, 127
        %v205 = vmul.u32 %v204, 2
        %vm206 = vcmp.eq.s32.totalorder %v197, %v205
        %vm207 = vcmp.eq.s32.totalorder %v198, %v205
        %vm208 = vcmp.eq.s32.totalorder %v199, %v205
        %vm209 = vcmp.eq.s32.totalorder %v200, %v205
        %vm210 = vcmp.eq.s32.totalorder %v201, %v205
        %vm211 = vcmp.eq.s32.totalorder %v202, %v205
        %v212 = vsel %vm206, 1.0, 0.0
        %v213 = vsel %vm207, 1.0, 0.0
        %v214 = vsel %vm208, 1.0, 0.0
        %v215 = vsel %vm209, 1.0, 0.0
        %v216 = vsel %vm210, 1.0, 0.0
        %v217 = vsel %vm211, 1.0, 0.0
        %v218 = vadd.s32 %v205, 1
        %vm219 = vcmp.eq.s32.totalorder %v197, %v218
        %vm220 = vcmp.eq.s32.totalorder %v198, %v218
        %vm221 = vcmp.eq.s32.totalorder %v199, %v218
        %vm222 = vcmp.eq.s32.totalorder %v200, %v218
        %vm223 = vcmp.eq.s32.totalorder %v201, %v218
        %vm224 = vcmp.eq.s32.totalorder %v202, %v218
        %v225 = vsel %vm219, 1.0, 0.0
        %v226 = vsel %vm220, 1.0, 0.0
        %v227 = vsel %vm221, 1.0, 0.0
        %v228 = vsel %vm222, 1.0, 0.0
        %v229 = vsel %vm223, 1.0, 0.0
        %v230 = vsel %vm224, 1.0, 0.0
        %v231 = vmul.u32 %v197, 2
        %v232 = vmul.u32 %v198, 2
        %vm233 = vcmp.eq.s32.totalorder %v204, %v231
        %vm234 = vcmp.eq.s32.totalorder %v204, %v232
        %v235 = vsel %vm233, 1.0, 0.0
        %v236 = vsel %vm234, 1.0, 0.0
        %v237 = vadd.s32 %v231, 1
        %v238 = vadd.s32 %v232, 1
        %vm239 = vcmp.eq.s32.totalorder %v204, %v237
        %vm240 = vcmp.eq.s32.totalorder %v204, %v238
        %v241 = vsel %vm239, 1.0, 0.0
        %v242 = vsel %vm240, 1.0, 0.0
        %v243 = vld [vmem:[%s190] sm:$0xff]
        %v244 = vld [vmem:[%s190 + $0x8] sm:$0xff]
        %v245 = vld [vmem:[%s190 + $0x10] sm:$0xff]
        %v246 = vld [vmem:[%s190 + $0x1] sm:$0xff]
        %v247 = vld [vmem:[%s190 + $0x9] sm:$0xff]
        %v248 = vld [vmem:[%s190 + $0x11] sm:$0xff]
        %v249 = vld [vmem:[%s190 + $0x2] sm:$0xff]
        %v250 = vld [vmem:[%s190 + $0xa] sm:$0xff]
        %v251 = vld [vmem:[%s190 + $0x12] sm:$0xff]
        %v252 = vld [vmem:[%s190 + $0x3] sm:$0xff]
        %v253 = vld [vmem:[%s190 + $0xb] sm:$0xff]
        %v254 = vld [vmem:[%s190 + $0x13] sm:$0xff]
        %v255 = vld [vmem:[%s190 + $0x4] sm:$0xff]
        %v256 = vld [vmem:[%s190 + $0xc] sm:$0xff]
        %v257 = vld [vmem:[%s190 + $0x14] sm:$0xff]
        %s258 = scalar_lea.vmem %s190, 32
        %v259 = vld [vmem:[%s258] sm:$0xff]
        %v260 = vld [vmem:[%s258 + $0x8] sm:$0xff]
        %v261 = vld [vmem:[%s258 + $0x10] sm:$0xff]
        %v262 = vld [vmem:[%s258 + $0x1] sm:$0xff]
        %v263 = vld [vmem:[%s258 + $0x9] sm:$0xff]
        %v264 = vld [vmem:[%s258 + $0x11] sm:$0xff]
        %v265 = vld [vmem:[%s258 + $0x2] sm:$0xff]
        %v266 = vld [vmem:[%s258 + $0xa] sm:$0xff]
        %v267 = vld [vmem:[%s258 + $0x12] sm:$0xff]
        %v268 = vld [vmem:[%s258 + $0x3] sm:$0xff]
        %v269 = vld [vmem:[%s258 + $0xb] sm:$0xff]
        %v270 = vld [vmem:[%s258 + $0x13] sm:$0xff]
        %v271 = vld [vmem:[%s258 + $0x4] sm:$0xff]
        %v272 = vld [vmem:[%s258 + $0xc] sm:$0xff]
        %v273 = vld [vmem:[%s258 + $0x14] sm:$0xff]
        %s274 = scalar_lea.vmem %s190, 64
        %v275 = vld [vmem:[%s274] sm:$0xff]
        %v276 = vld [vmem:[%s274 + $0x8] sm:$0xff]
        %v277 = vld [vmem:[%s274 + $0x10] sm:$0xff]
        %v278 = vld [vmem:[%s274 + $0x1] sm:$0xff]
        %v279 = vld [vmem:[%s274 + $0x9] sm:$0xff]
        %v280 = vld [vmem:[%s274 + $0x11] sm:$0xff]
        %v281 = vld [vmem:[%s274 + $0x2] sm:$0xff]
        %v282 = vld [vmem:[%s274 + $0xa] sm:$0xff]
        %v283 = vld [vmem:[%s274 + $0x12] sm:$0xff]
        %v284 = vld [vmem:[%s274 + $0x3] sm:$0xff]
        %v285 = vld [vmem:[%s274 + $0xb] sm:$0xff]
        %v286 = vld [vmem:[%s274 + $0x13] sm:$0xff]
        %v287 = vld [vmem:[%s274 + $0x4] sm:$0xff]
        %v288 = vld [vmem:[%s274 + $0xc] sm:$0xff]
        %v289 = vld [vmem:[%s274 + $0x14] sm:$0xff]
        %s290 = scalar_lea.vmem %s190, 96
        %v291 = vld [vmem:[%s290] sm:$0xff]
        %v292 = vld [vmem:[%s290 + $0x8] sm:$0xff]
        %v293 = vld [vmem:[%s290 + $0x10] sm:$0xff]
        %v294 = vld [vmem:[%s290 + $0x1] sm:$0xff]
        %v295 = vld [vmem:[%s290 + $0x9] sm:$0xff]
        %v296 = vld [vmem:[%s290 + $0x11] sm:$0xff]
        %v297 = vld [vmem:[%s290 + $0x2] sm:$0xff]
        %v298 = vld [vmem:[%s290 + $0xa] sm:$0xff]
        %v299 = vld [vmem:[%s290 + $0x12] sm:$0xff]
        %v300 = vld [vmem:[%s290 + $0x3] sm:$0xff]
        %v301 = vld [vmem:[%s290 + $0xb] sm:$0xff]
        %v302 = vld [vmem:[%s290 + $0x13] sm:$0xff]
        %v303 = vld [vmem:[%s290 + $0x4] sm:$0xff]
        %v304 = vld [vmem:[%s290 + $0xc] sm:$0xff]
        %v305 = vld [vmem:[%s290 + $0x14] sm:$0xff]
        %s306 = scalar_lea.vmem %s190, 128
        %v307 = vld [vmem:[%s306] sm:$0xff]
        %v308 = vld [vmem:[%s306 + $0x8] sm:$0xff]
        %v309 = vld [vmem:[%s306 + $0x10] sm:$0xff]
        %v310 = vld [vmem:[%s306 + $0x1] sm:$0xff]
        %v311 = vld [vmem:[%s306 + $0x9] sm:$0xff]
        %v312 = vld [vmem:[%s306 + $0x11] sm:$0xff]
        %v313 = vld [vmem:[%s306 + $0x2] sm:$0xff]
        %v314 = vld [vmem:[%s306 + $0xa] sm:$0xff]
        %v315 = vld [vmem:[%s306 + $0x12] sm:$0xff]
        %v316 = vld [vmem:[%s306 + $0x3] sm:$0xff]
        %v317 = vld [vmem:[%s306 + $0xb] sm:$0xff]
        %v318 = vld [vmem:[%s306 + $0x13] sm:$0xff]
        %v319 = vld [vmem:[%s306 + $0x4] sm:$0xff]
        %v320 = vld [vmem:[%s306 + $0xc] sm:$0xff]
        %v321 = vld [vmem:[%s306 + $0x14] sm:$0xff]
        %s322 = scalar_lea.vmem %s190, 160
        %v323 = vld [vmem:[%s322] sm:$0xff]
        %v324 = vld [vmem:[%s322 + $0x8] sm:$0xff]
        %v325 = vld [vmem:[%s322 + $0x10] sm:$0xff]
        %v326 = vld [vmem:[%s322 + $0x1] sm:$0xff]
        %v327 = vld [vmem:[%s322 + $0x9] sm:$0xff]
        %v328 = vld [vmem:[%s322 + $0x11] sm:$0xff]
        %v329 = vld [vmem:[%s322 + $0x2] sm:$0xff]
        %v330 = vld [vmem:[%s322 + $0xa] sm:$0xff]
        %v331 = vld [vmem:[%s322 + $0x12] sm:$0xff]
        %v332 = vld [vmem:[%s322 + $0x3] sm:$0xff]
        %v333 = vld [vmem:[%s322 + $0xb] sm:$0xff]
        %v334 = vld [vmem:[%s322 + $0x13] sm:$0xff]
        %v335 = vld [vmem:[%s322 + $0x4] sm:$0xff]
        %v336 = vld [vmem:[%s322 + $0xc] sm:$0xff]
        %v337 = vld [vmem:[%s322 + $0x14] sm:$0xff]
        loop: start=0, step=1, limit=16
        $region41: #{cnn_forward.4} parent=31 // loop_pre_header
          _
        $region42: #{cnn_forward.4} parent=31 // loop_header
          %s339 = sphi 0, %s343
          %p340 = scmp.ge.s32.totalorder %s339, 16
        $region43: #{cnn_forward.4} parent=31 // loop_header_branch
          %342 = sbr.rel (%p340) target = $region47
        $region44: #{cnn_forward.4} parent=31 // loop_body
          %s344 = smul.u32 %s339, 150
          %s345 = sld [smem:[#allocation2 + %s344]]
          %v346 = vstv %s345
          %v347 = vmul.f32 %v243, %v346
          %v348 = vmul.f32 %v244, %v346
          %v349 = vmul.f32 %v245, %v346
          %s350 = sadd.s32 %s344, 1
          %s351 = sld [smem:[#allocation2 + %s350]]
          %v352 = vstv %s351
          %v353 = vmul.f32 %v243, %v352
          %v354 = vmul.f32 %v244, %v352
          %v355 = vmul.f32 %v245, %v352
          %359 = vrot.lane.b32.xlu0 %v353, 127
          %v360 = vpop.permute.xlu0 %359
          %361 = vrot.lane.b32.xlu0 %v354, 127
          %v362 = vpop.permute.xlu0 %361
          %363 = vrot.lane.b32.xlu0 %v355, 127
          %v364 = vpop.permute.xlu0 %363
          %v368 = vadd.f32 %v347, %v360
          %v369 = vadd.f32 %v348, %v362
          %v370 = vadd.f32 %v349, %v364
          %s371 = sadd.s32 %s344, 2
          %s372 = sld [smem:[#allocation2 + %s371]]
          %v373 = vstv %s372
          %v374 = vmul.f32 %v243, %v373
          %v375 = vmul.f32 %v244, %v373
          %v376 = vmul.f32 %v245, %v373
          %380 = vrot.lane.b32.xlu0 %v374, 126
          %v381 = vpop.permute.xlu0 %380
          %382 = vrot.lane.b32.xlu0 %v375, 126
          %v383 = vpop.permute.xlu0 %382
          %384 = vrot.lane.b32.xlu0 %v376, 126
          %v385 = vpop.permute.xlu0 %384
          %v389 = vadd.f32 %v368, %v381
          %v390 = vadd.f32 %v369, %v383
          %v391 = vadd.f32 %v370, %v385
          %s392 = sadd.s32 %s344, 3
          %s393 = sld [smem:[#allocation2 + %s392]]
          %v394 = vstv %s393
          %v395 = vmul.f32 %v243, %v394
          %v396 = vmul.f32 %v244, %v394
          %v397 = vmul.f32 %v245, %v394
          %401 = vrot.lane.b32.xlu0 %v395, 125
          %v402 = vpop.permute.xlu0 %401
          %403 = vrot.lane.b32.xlu0 %v396, 125
          %v404 = vpop.permute.xlu0 %403
          %405 = vrot.lane.b32.xlu0 %v397, 125
          %v406 = vpop.permute.xlu0 %405
          %v410 = vadd.f32 %v389, %v402
          %v411 = vadd.f32 %v390, %v404
          %v412 = vadd.f32 %v391, %v406
          %s413 = sadd.s32 %s344, 4
          %s414 = sld [smem:[#allocation2 + %s413]]
          %v415 = vstv %s414
          %v416 = vmul.f32 %v243, %v415
          %v417 = vmul.f32 %v244, %v415
          %v418 = vmul.f32 %v245, %v415
          %422 = vrot.lane.b32.xlu0 %v416, 124
          %v423 = vpop.permute.xlu0 %422
          %424 = vrot.lane.b32.xlu0 %v417, 124
          %v425 = vpop.permute.xlu0 %424
          %426 = vrot.lane.b32.xlu0 %v418, 124
          %v427 = vpop.permute.xlu0 %426
          %v431 = vadd.f32 %v410, %v423
          %v432 = vadd.f32 %v411, %v425
          %v433 = vadd.f32 %v412, %v427
          %s434 = sadd.s32 %s344, 5
          %s435 = sld [smem:[#allocation2 + %s434]]
          %v436 = vstv %s435
          %v437 = vmul.f32 %v246, %v436
          %v438 = vmul.f32 %v247, %v436
          %v439 = vmul.f32 %v248, %v436
          %v440 = vadd.f32 %v431, %v437
          %v441 = vadd.f32 %v432, %v438
          %v442 = vadd.f32 %v433, %v439
          %s443 = sadd.s32 %s344, 6
          %s444 = sld [smem:[#allocation2 + %s443]]
          %v445 = vstv %s444
          %v446 = vmul.f32 %v246, %v445
          %v447 = vmul.f32 %v247, %v445
          %v448 = vmul.f32 %v248, %v445
          %452 = vrot.lane.b32.xlu0 %v446, 127
          %v453 = vpop.permute.xlu0 %452
          %454 = vrot.lane.b32.xlu0 %v447, 127
          %v455 = vpop.permute.xlu0 %454
          %456 = vrot.lane.b32.xlu0 %v448, 127
          %v457 = vpop.permute.xlu0 %456
          %v461 = vadd.f32 %v440, %v453
          %v462 = vadd.f32 %v441, %v455
          %v463 = vadd.f32 %v442, %v457
          %s464 = sadd.s32 %s344, 7
          %s465 = sld [smem:[#allocation2 + %s464]]
          %v466 = vstv %s465
          %v467 = vmul.f32 %v246, %v466
          %v468 = vmul.f32 %v247, %v466
          %v469 = vmul.f32 %v248, %v466
          %473 = vrot.lane.b32.xlu0 %v467, 126
          %v474 = vpop.permute.xlu0 %473
          %475 = vrot.lane.b32.xlu0 %v468, 126
          %v476 = vpop.permute.xlu0 %475
          %477 = vrot.lane.b32.xlu0 %v469, 126
          %v478 = vpop.permute.xlu0 %477
          %v482 = vadd.f32 %v461, %v474
          %v483 = vadd.f32 %v462, %v476
          %v484 = vadd.f32 %v463, %v478
          %s485 = sadd.s32 %s344, 8
          %s486 = sld [smem:[#allocation2 + %s485]]
          %v487 = vstv %s486
          %v488 = vmul.f32 %v246, %v487
          %v489 = vmul.f32 %v247, %v487
          %v490 = vmul.f32 %v248, %v487
          %494 = vrot.lane.b32.xlu0 %v488, 125
          %v495 = vpop.permute.xlu0 %494
          %496 = vrot.lane.b32.xlu0 %v489, 125
          %v497 = vpop.permute.xlu0 %496
          %498 = vrot.lane.b32.xlu0 %v490, 125
          %v499 = vpop.permute.xlu0 %498
          %v503 = vadd.f32 %v482, %v495
          %v504 = vadd.f32 %v483, %v497
          %v505 = vadd.f32 %v484, %v499
          %s506 = sadd.s32 %s344, 9
          %s507 = sld [smem:[#allocation2 + %s506]]
          %v508 = vstv %s507
          %v509 = vmul.f32 %v246, %v508
          %v510 = vmul.f32 %v247, %v508
          %v511 = vmul.f32 %v248, %v508
          %515 = vrot.lane.b32.xlu0 %v509, 124
          %v516 = vpop.permute.xlu0 %515
          %517 = vrot.lane.b32.xlu0 %v510, 124
          %v518 = vpop.permute.xlu0 %517
          %519 = vrot.lane.b32.xlu0 %v511, 124
          %v520 = vpop.permute.xlu0 %519
          %v524 = vadd.f32 %v503, %v516
          %v525 = vadd.f32 %v504, %v518
          %v526 = vadd.f32 %v505, %v520
          %s527 = sadd.s32 %s344, 10
          %s528 = sld [smem:[#allocation2 + %s527]]
          %v529 = vstv %s528
          %v530 = vmul.f32 %v249, %v529
          %v531 = vmul.f32 %v250, %v529
          %v532 = vmul.f32 %v251, %v529
          %v533 = vadd.f32 %v524, %v530
          %v534 = vadd.f32 %v525, %v531
          %v535 = vadd.f32 %v526, %v532
          %s536 = sadd.s32 %s344, 11
          %s537 = sld [smem:[#allocation2 + %s536]]
          %v538 = vstv %s537
          %v539 = vmul.f32 %v249, %v538
          %v540 = vmul.f32 %v250, %v538
          %v541 = vmul.f32 %v251, %v538
          %545 = vrot.lane.b32.xlu0 %v539, 127
          %v546 = vpop.permute.xlu0 %545
          %547 = vrot.lane.b32.xlu0 %v540, 127
          %v548 = vpop.permute.xlu0 %547
          %549 = vrot.lane.b32.xlu0 %v541, 127
          %v550 = vpop.permute.xlu0 %549
          %v554 = vadd.f32 %v533, %v546
          %v555 = vadd.f32 %v534, %v548
          %v556 = vadd.f32 %v535, %v550
          %s557 = sadd.s32 %s344, 12
          %s558 = sld [smem:[#allocation2 + %s557]]
          %v559 = vstv %s558
          %v560 = vmul.f32 %v249, %v559
          %v561 = vmul.f32 %v250, %v559
          %v562 = vmul.f32 %v251, %v559
          %566 = vrot.lane.b32.xlu0 %v560, 126
          %v567 = vpop.permute.xlu0 %566
          %568 = vrot.lane.b32.xlu0 %v561, 126
          %v569 = vpop.permute.xlu0 %568
          %570 = vrot.lane.b32.xlu0 %v562, 126
          %v571 = vpop.permute.xlu0 %570
          %v575 = vadd.f32 %v554, %v567
          %v576 = vadd.f32 %v555, %v569
          %v577 = vadd.f32 %v556, %v571
          %s578 = sadd.s32 %s344, 13
          %s579 = sld [smem:[#allocation2 + %s578]]
          %v580 = vstv %s579
          %v581 = vmul.f32 %v249, %v580
          %v582 = vmul.f32 %v250, %v580
          %v583 = vmul.f32 %v251, %v580
          %587 = vrot.lane.b32.xlu0 %v581, 125
          %v588 = vpop.permute.xlu0 %587
          %589 = vrot.lane.b32.xlu0 %v582, 125
          %v590 = vpop.permute.xlu0 %589
          %591 = vrot.lane.b32.xlu0 %v583, 125
          %v592 = vpop.permute.xlu0 %591
          %v596 = vadd.f32 %v575, %v588
          %v597 = vadd.f32 %v576, %v590
          %v598 = vadd.f32 %v577, %v592
          %s599 = sadd.s32 %s344, 14
          %s600 = sld [smem:[#allocation2 + %s599]]
          %v601 = vstv %s600
          %v602 = vmul.f32 %v249, %v601
          %v603 = vmul.f32 %v250, %v601
          %v604 = vmul.f32 %v251, %v601
          %608 = vrot.lane.b32.xlu0 %v602, 124
          %v609 = vpop.permute.xlu0 %608
          %610 = vrot.lane.b32.xlu0 %v603, 124
          %v611 = vpop.permute.xlu0 %610
          %612 = vrot.lane.b32.xlu0 %v604, 124
          %v613 = vpop.permute.xlu0 %612
          %v617 = vadd.f32 %v596, %v609
          %v618 = vadd.f32 %v597, %v611
          %v619 = vadd.f32 %v598, %v613
          %s620 = sadd.s32 %s344, 15
          %s621 = sld [smem:[#allocation2 + %s620]]
          %v622 = vstv %s621
          %v623 = vmul.f32 %v252, %v622
          %v624 = vmul.f32 %v253, %v622
          %v625 = vmul.f32 %v254, %v622
          %v626 = vadd.f32 %v617, %v623
          %v627 = vadd.f32 %v618, %v624
          %v628 = vadd.f32 %v619, %v625
          %s629 = sadd.s32 %s344, 16
          %s630 = sld [smem:[#allocation2 + %s629]]
          %v631 = vstv %s630
          %v632 = vmul.f32 %v252, %v631
          %v633 = vmul.f32 %v253, %v631
          %v634 = vmul.f32 %v254, %v631
          %638 = vrot.lane.b32.xlu0 %v632, 127
          %v639 = vpop.permute.xlu0 %638
          %640 = vrot.lane.b32.xlu0 %v633, 127
          %v641 = vpop.permute.xlu0 %640
          %642 = vrot.lane.b32.xlu0 %v634, 127
          %v643 = vpop.permute.xlu0 %642
          %v647 = vadd.f32 %v626, %v639
          %v648 = vadd.f32 %v627, %v641
          %v649 = vadd.f32 %v628, %v643
          %s650 = sadd.s32 %s344, 17
          %s651 = sld [smem:[#allocation2 + %s650]]
          %v652 = vstv %s651
          %v653 = vmul.f32 %v252, %v652
          %v654 = vmul.f32 %v253, %v652
          %v655 = vmul.f32 %v254, %v652
          %659 = vrot.lane.b32.xlu0 %v653, 126
          %v660 = vpop.permute.xlu0 %659
          %661 = vrot.lane.b32.xlu0 %v654, 126
          %v662 = vpop.permute.xlu0 %661
          %663 = vrot.lane.b32.xlu0 %v655, 126
          %v664 = vpop.permute.xlu0 %663
          %v668 = vadd.f32 %v647, %v660
          %v669 = vadd.f32 %v648, %v662
          %v670 = vadd.f32 %v649, %v664
          %s671 = sadd.s32 %s344, 18
          %s672 = sld [smem:[#allocation2 + %s671]]
          %v673 = vstv %s672
          %v674 = vmul.f32 %v252, %v673
          %v675 = vmul.f32 %v253, %v673
          %v676 = vmul.f32 %v254, %v673
          %680 = vrot.lane.b32.xlu0 %v674, 125
          %v681 = vpop.permute.xlu0 %680
          %682 = vrot.lane.b32.xlu0 %v675, 125
          %v683 = vpop.permute.xlu0 %682
          %684 = vrot.lane.b32.xlu0 %v676, 125
          %v685 = vpop.permute.xlu0 %684
          %v689 = vadd.f32 %v668, %v681
          %v690 = vadd.f32 %v669, %v683
          %v691 = vadd.f32 %v670, %v685
          %s692 = sadd.s32 %s344, 19
          %s693 = sld [smem:[#allocation2 + %s692]]
          %v694 = vstv %s693
          %v695 = vmul.f32 %v252, %v694
          %v696 = vmul.f32 %v253, %v694
          %v697 = vmul.f32 %v254, %v694
          %701 = vrot.lane.b32.xlu0 %v695, 124
          %v702 = vpop.permute.xlu0 %701
          %703 = vrot.lane.b32.xlu0 %v696, 124
          %v704 = vpop.permute.xlu0 %703
          %705 = vrot.lane.b32.xlu0 %v697, 124
          %v706 = vpop.permute.xlu0 %705
          %v710 = vadd.f32 %v689, %v702
          %v711 = vadd.f32 %v690, %v704
          %v712 = vadd.f32 %v691, %v706
          %s713 = sadd.s32 %s344, 20
          %s714 = sld [smem:[#allocation2 + %s713]]
          %v715 = vstv %s714
          %v716 = vmul.f32 %v255, %v715
          %v717 = vmul.f32 %v256, %v715
          %v718 = vmul.f32 %v257, %v715
          %v719 = vadd.f32 %v710, %v716
          %v720 = vadd.f32 %v711, %v717
          %v721 = vadd.f32 %v712, %v718
          %s722 = sadd.s32 %s344, 21
          %s723 = sld [smem:[#allocation2 + %s722]]
          %v724 = vstv %s723
          %v725 = vmul.f32 %v255, %v724
          %v726 = vmul.f32 %v256, %v724
          %v727 = vmul.f32 %v257, %v724
          %731 = vrot.lane.b32.xlu0 %v725, 127
          %v732 = vpop.permute.xlu0 %731
          %733 = vrot.lane.b32.xlu0 %v726, 127
          %v734 = vpop.permute.xlu0 %733
          %735 = vrot.lane.b32.xlu0 %v727, 127
          %v736 = vpop.permute.xlu0 %735
          %v740 = vadd.f32 %v719, %v732
          %v741 = vadd.f32 %v720, %v734
          %v742 = vadd.f32 %v721, %v736
          %s743 = sadd.s32 %s344, 22
          %s744 = sld [smem:[#allocation2 + %s743]]
          %v745 = vstv %s744
          %v746 = vmul.f32 %v255, %v745
          %v747 = vmul.f32 %v256, %v745
          %v748 = vmul.f32 %v257, %v745
          %752 = vrot.lane.b32.xlu0 %v746, 126
          %v753 = vpop.permute.xlu0 %752
          %754 = vrot.lane.b32.xlu0 %v747, 126
          %v755 = vpop.permute.xlu0 %754
          %756 = vrot.lane.b32.xlu0 %v748, 126
          %v757 = vpop.permute.xlu0 %756
          %v761 = vadd.f32 %v740, %v753
          %v762 = vadd.f32 %v741, %v755
          %v763 = vadd.f32 %v742, %v757
          %s764 = sadd.s32 %s344, 23
          %s765 = sld [smem:[#allocation2 + %s764]]
          %v766 = vstv %s765
          %v767 = vmul.f32 %v255, %v766
          %v768 = vmul.f32 %v256, %v766
          %v769 = vmul.f32 %v257, %v766
          %773 = vrot.lane.b32.xlu0 %v767, 125
          %v774 = vpop.permute.xlu0 %773
          %775 = vrot.lane.b32.xlu0 %v768, 125
          %v776 = vpop.permute.xlu0 %775
          %777 = vrot.lane.b32.xlu0 %v769, 125
          %v778 = vpop.permute.xlu0 %777
          %v782 = vadd.f32 %v761, %v774
          %v783 = vadd.f32 %v762, %v776
          %v784 = vadd.f32 %v763, %v778
          %s785 = sadd.s32 %s344, 24
          %s786 = sld [smem:[#allocation2 + %s785]]
          %v787 = vstv %s786
          %v788 = vmul.f32 %v255, %v787
          %v789 = vmul.f32 %v256, %v787
          %v790 = vmul.f32 %v257, %v787
          %794 = vrot.lane.b32.xlu0 %v788, 124
          %v795 = vpop.permute.xlu0 %794
          %796 = vrot.lane.b32.xlu0 %v789, 124
          %v797 = vpop.permute.xlu0 %796
          %798 = vrot.lane.b32.xlu0 %v790, 124
          %v799 = vpop.permute.xlu0 %798
          %v803 = vadd.f32 %v782, %v795
          %v804 = vadd.f32 %v783, %v797
          %v805 = vadd.f32 %v784, %v799
          %s806 = sadd.s32 %s344, 25
          %s807 = sld [smem:[#allocation2 + %s806]]
          %v808 = vstv %s807
          %v809 = vmul.f32 %v259, %v808
          %v810 = vmul.f32 %v260, %v808
          %v811 = vmul.f32 %v261, %v808
          %v812 = vadd.f32 %v803, %v809
          %v813 = vadd.f32 %v804, %v810
          %v814 = vadd.f32 %v805, %v811
          %s815 = sadd.s32 %s344, 26
          %s816 = sld [smem:[#allocation2 + %s815]]
          %v817 = vstv %s816
          %v818 = vmul.f32 %v259, %v817
          %v819 = vmul.f32 %v260, %v817
          %v820 = vmul.f32 %v261, %v817
          %824 = vrot.lane.b32.xlu0 %v818, 127
          %v825 = vpop.permute.xlu0 %824
          %826 = vrot.lane.b32.xlu0 %v819, 127
          %v827 = vpop.permute.xlu0 %826
          %828 = vrot.lane.b32.xlu0 %v820, 127
          %v829 = vpop.permute.xlu0 %828
          %v833 = vadd.f32 %v812, %v825
          %v834 = vadd.f32 %v813, %v827
          %v835 = vadd.f32 %v814, %v829
          %s836 = sadd.s32 %s344, 27
          %s837 = sld [smem:[#allocation2 + %s836]]
          %v838 = vstv %s837
          %v839 = vmul.f32 %v259, %v838
          %v840 = vmul.f32 %v260, %v838
          %v841 = vmul.f32 %v261, %v838
          %845 = vrot.lane.b32.xlu0 %v839, 126
          %v846 = vpop.permute.xlu0 %845
          %847 = vrot.lane.b32.xlu0 %v840, 126
          %v848 = vpop.permute.xlu0 %847
          %849 = vrot.lane.b32.xlu0 %v841, 126
          %v850 = vpop.permute.xlu0 %849
          %v854 = vadd.f32 %v833, %v846
          %v855 = vadd.f32 %v834, %v848
          %v856 = vadd.f32 %v835, %v850
          %s857 = sadd.s32 %s344, 28
          %s858 = sld [smem:[#allocation2 + %s857]]
          %v859 = vstv %s858
          %v860 = vmul.f32 %v259, %v859
          %v861 = vmul.f32 %v260, %v859
          %v862 = vmul.f32 %v261, %v859
          %866 = vrot.lane.b32.xlu0 %v860, 125
          %v867 = vpop.permute.xlu0 %866
          %868 = vrot.lane.b32.xlu0 %v861, 125
          %v869 = vpop.permute.xlu0 %868
          %870 = vrot.lane.b32.xlu0 %v862, 125
          %v871 = vpop.permute.xlu0 %870
          %v875 = vadd.f32 %v854, %v867
          %v876 = vadd.f32 %v855, %v869
          %v877 = vadd.f32 %v856, %v871
          %s878 = sadd.s32 %s344, 29
          %s879 = sld [smem:[#allocation2 + %s878]]
          %v880 = vstv %s879
          %v881 = vmul.f32 %v259, %v880
          %v882 = vmul.f32 %v260, %v880
          %v883 = vmul.f32 %v261, %v880
          %887 = vrot.lane.b32.xlu0 %v881, 124
          %v888 = vpop.permute.xlu0 %887
          %889 = vrot.lane.b32.xlu0 %v882, 124
          %v890 = vpop.permute.xlu0 %889
          %891 = vrot.lane.b32.xlu0 %v883, 124
          %v892 = vpop.permute.xlu0 %891
          %v896 = vadd.f32 %v875, %v888
          %v897 = vadd.f32 %v876, %v890
          %v898 = vadd.f32 %v877, %v892
          %s899 = sadd.s32 %s344, 30
          %s900 = sld [smem:[#allocation2 + %s899]]
          %v901 = vstv %s900
          %v902 = vmul.f32 %v262, %v901
          %v903 = vmul.f32 %v263, %v901
          %v904 = vmul.f32 %v264, %v901
          %v905 = vadd.f32 %v896, %v902
          %v906 = vadd.f32 %v897, %v903
          %v907 = vadd.f32 %v898, %v904
          %s908 = sadd.s32 %s344, 31
          %s909 = sld [smem:[#allocation2 + %s908]]
          %v910 = vstv %s909
          %v911 = vmul.f32 %v262, %v910
          %v912 = vmul.f32 %v263, %v910
          %v913 = vmul.f32 %v264, %v910
          %917 = vrot.lane.b32.xlu0 %v911, 127
          %v918 = vpop.permute.xlu0 %917
          %919 = vrot.lane.b32.xlu0 %v912, 127
          %v920 = vpop.permute.xlu0 %919
          %921 = vrot.lane.b32.xlu0 %v913, 127
          %v922 = vpop.permute.xlu0 %921
          %v926 = vadd.f32 %v905, %v918
          %v927 = vadd.f32 %v906, %v920
          %v928 = vadd.f32 %v907, %v922
          %s929 = sadd.s32 %s344, 32
          %s930 = sld [smem:[#allocation2 + %s929]]
          %v931 = vstv %s930
          %v932 = vmul.f32 %v262, %v931
          %v933 = vmul.f32 %v263, %v931
          %v934 = vmul.f32 %v264, %v931
          %938 = vrot.lane.b32.xlu0 %v932, 126
          %v939 = vpop.permute.xlu0 %938
          %940 = vrot.lane.b32.xlu0 %v933, 126
          %v941 = vpop.permute.xlu0 %940
          %942 = vrot.lane.b32.xlu0 %v934, 126
          %v943 = vpop.permute.xlu0 %942
          %v947 = vadd.f32 %v926, %v939
          %v948 = vadd.f32 %v927, %v941
          %v949 = vadd.f32 %v928, %v943
          %s950 = sadd.s32 %s344, 33
          %s951 = sld [smem:[#allocation2 + %s950]]
          %v952 = vstv %s951
          %v953 = vmul.f32 %v262, %v952
          %v954 = vmul.f32 %v263, %v952
          %v955 = vmul.f32 %v264, %v952
          %959 = vrot.lane.b32.xlu0 %v953, 125
          %v960 = vpop.permute.xlu0 %959
          %961 = vrot.lane.b32.xlu0 %v954, 125
          %v962 = vpop.permute.xlu0 %961
          %963 = vrot.lane.b32.xlu0 %v955, 125
          %v964 = vpop.permute.xlu0 %963
          %v968 = vadd.f32 %v947, %v960
          %v969 = vadd.f32 %v948, %v962
          %v970 = vadd.f32 %v949, %v964
          %s971 = sadd.s32 %s344, 34
          %s972 = sld [smem:[#allocation2 + %s971]]
          %v973 = vstv %s972
          %v974 = vmul.f32 %v262, %v973
          %v975 = vmul.f32 %v263, %v973
          %v976 = vmul.f32 %v264, %v973
          %980 = vrot.lane.b32.xlu0 %v974, 124
          %v981 = vpop.permute.xlu0 %980
          %982 = vrot.lane.b32.xlu0 %v975, 124
          %v983 = vpop.permute.xlu0 %982
          %984 = vrot.lane.b32.xlu0 %v976, 124
          %v985 = vpop.permute.xlu0 %984
          %v989 = vadd.f32 %v968, %v981
          %v990 = vadd.f32 %v969, %v983
          %v991 = vadd.f32 %v970, %v985
          %s992 = sadd.s32 %s344, 35
          %s993 = sld [smem:[#allocation2 + %s992]]
          %v994 = vstv %s993
          %v995 = vmul.f32 %v265, %v994
          %v996 = vmul.f32 %v266, %v994
          %v997 = vmul.f32 %v267, %v994
          %v998 = vadd.f32 %v989, %v995
          %v999 = vadd.f32 %v990, %v996
          %v1000 = vadd.f32 %v991, %v997
          %s1001 = sadd.s32 %s344, 36
          %s1002 = sld [smem:[#allocation2 + %s1001]]
          %v1003 = vstv %s1002
          %v1004 = vmul.f32 %v265, %v1003
          %v1005 = vmul.f32 %v266, %v1003
          %v1006 = vmul.f32 %v267, %v1003
          %1010 = vrot.lane.b32.xlu0 %v1004, 127
          %v1011 = vpop.permute.xlu0 %1010
          %1012 = vrot.lane.b32.xlu0 %v1005, 127
          %v1013 = vpop.permute.xlu0 %1012
          %1014 = vrot.lane.b32.xlu0 %v1006, 127
          %v1015 = vpop.permute.xlu0 %1014
          %v1019 = vadd.f32 %v998, %v1011
          %v1020 = vadd.f32 %v999, %v1013
          %v1021 = vadd.f32 %v1000, %v1015
          %s1022 = sadd.s32 %s344, 37
          %s1023 = sld [smem:[#allocation2 + %s1022]]
          %v1024 = vstv %s1023
          %v1025 = vmul.f32 %v265, %v1024
          %v1026 = vmul.f32 %v266, %v1024
          %v1027 = vmul.f32 %v267, %v1024
          %1031 = vrot.lane.b32.xlu0 %v1025, 126
          %v1032 = vpop.permute.xlu0 %1031
          %1033 = vrot.lane.b32.xlu0 %v1026, 126
          %v1034 = vpop.permute.xlu0 %1033
          %1035 = vrot.lane.b32.xlu0 %v1027, 126
          %v1036 = vpop.permute.xlu0 %1035
          %v1040 = vadd.f32 %v1019, %v1032
          %v1041 = vadd.f32 %v1020, %v1034
          %v1042 = vadd.f32 %v1021, %v1036
          %s1043 = sadd.s32 %s344, 38
          %s1044 = sld [smem:[#allocation2 + %s1043]]
          %v1045 = vstv %s1044
          %v1046 = vmul.f32 %v265, %v1045
          %v1047 = vmul.f32 %v266, %v1045
          %v1048 = vmul.f32 %v267, %v1045
          %1052 = vrot.lane.b32.xlu0 %v1046, 125
          %v1053 = vpop.permute.xlu0 %1052
          %1054 = vrot.lane.b32.xlu0 %v1047, 125
          %v1055 = vpop.permute.xlu0 %1054
          %1056 = vrot.lane.b32.xlu0 %v1048, 125
          %v1057 = vpop.permute.xlu0 %1056
          %v1061 = vadd.f32 %v1040, %v1053
          %v1062 = vadd.f32 %v1041, %v1055
          %v1063 = vadd.f32 %v1042, %v1057
          %s1064 = sadd.s32 %s344, 39
          %s1065 = sld [smem:[#allocation2 + %s1064]]
          %v1066 = vstv %s1065
          %v1067 = vmul.f32 %v265, %v1066
          %v1068 = vmul.f32 %v266, %v1066
          %v1069 = vmul.f32 %v267, %v1066
          %1073 = vrot.lane.b32.xlu0 %v1067, 124
          %v1074 = vpop.permute.xlu0 %1073
          %1075 = vrot.lane.b32.xlu0 %v1068, 124
          %v1076 = vpop.permute.xlu0 %1075
          %1077 = vrot.lane.b32.xlu0 %v1069, 124
          %v1078 = vpop.permute.xlu0 %1077
          %v1082 = vadd.f32 %v1061, %v1074
          %v1083 = vadd.f32 %v1062, %v1076
          %v1084 = vadd.f32 %v1063, %v1078
          %s1085 = sadd.s32 %s344, 40
          %s1086 = sld [smem:[#allocation2 + %s1085]]
          %v1087 = vstv %s1086
          %v1088 = vmul.f32 %v268, %v1087
          %v1089 = vmul.f32 %v269, %v1087
          %v1090 = vmul.f32 %v270, %v1087
          %v1091 = vadd.f32 %v1082, %v1088
          %v1092 = vadd.f32 %v1083, %v1089
          %v1093 = vadd.f32 %v1084, %v1090
          %s1094 = sadd.s32 %s344, 41
          %s1095 = sld [smem:[#allocation2 + %s1094]]
          %v1096 = vstv %s1095
          %v1097 = vmul.f32 %v268, %v1096
          %v1098 = vmul.f32 %v269, %v1096
          %v1099 = vmul.f32 %v270, %v1096
          %1103 = vrot.lane.b32.xlu0 %v1097, 127
          %v1104 = vpop.permute.xlu0 %1103
          %1105 = vrot.lane.b32.xlu0 %v1098, 127
          %v1106 = vpop.permute.xlu0 %1105
          %1107 = vrot.lane.b32.xlu0 %v1099, 127
          %v1108 = vpop.permute.xlu0 %1107
          %v1112 = vadd.f32 %v1091, %v1104
          %v1113 = vadd.f32 %v1092, %v1106
          %v1114 = vadd.f32 %v1093, %v1108
          %s1115 = sadd.s32 %s344, 42
          %s1116 = sld [smem:[#allocation2 + %s1115]]
          %v1117 = vstv %s1116
          %v1118 = vmul.f32 %v268, %v1117
          %v1119 = vmul.f32 %v269, %v1117
          %v1120 = vmul.f32 %v270, %v1117
          %1124 = vrot.lane.b32.xlu0 %v1118, 126
          %v1125 = vpop.permute.xlu0 %1124
          %1126 = vrot.lane.b32.xlu0 %v1119, 126
          %v1127 = vpop.permute.xlu0 %1126
          %1128 = vrot.lane.b32.xlu0 %v1120, 126
          %v1129 = vpop.permute.xlu0 %1128
          %v1133 = vadd.f32 %v1112, %v1125
          %v1134 = vadd.f32 %v1113, %v1127
          %v1135 = vadd.f32 %v1114, %v1129
          %s1136 = sadd.s32 %s344, 43
          %s1137 = sld [smem:[#allocation2 + %s1136]]
          %v1138 = vstv %s1137
          %v1139 = vmul.f32 %v268, %v1138
          %v1140 = vmul.f32 %v269, %v1138
          %v1141 = vmul.f32 %v270, %v1138
          %1145 = vrot.lane.b32.xlu0 %v1139, 125
          %v1146 = vpop.permute.xlu0 %1145
          %1147 = vrot.lane.b32.xlu0 %v1140, 125
          %v1148 = vpop.permute.xlu0 %1147
          %1149 = vrot.lane.b32.xlu0 %v1141, 125
          %v1150 = vpop.permute.xlu0 %1149
          %v1154 = vadd.f32 %v1133, %v1146
          %v1155 = vadd.f32 %v1134, %v1148
          %v1156 = vadd.f32 %v1135, %v1150
          %s1157 = sadd.s32 %s344, 44
          %s1158 = sld [smem:[#allocation2 + %s1157]]
          %v1159 = vstv %s1158
          %v1160 = vmul.f32 %v268, %v1159
          %v1161 = vmul.f32 %v269, %v1159
          %v1162 = vmul.f32 %v270, %v1159
          %1166 = vrot.lane.b32.xlu0 %v1160, 124
          %v1167 = vpop.permute.xlu0 %1166
          %1168 = vrot.lane.b32.xlu0 %v1161, 124
          %v1169 = vpop.permute.xlu0 %1168
          %1170 = vrot.lane.b32.xlu0 %v1162, 124
          %v1171 = vpop.permute.xlu0 %1170
          %v1175 = vadd.f32 %v1154, %v1167
          %v1176 = vadd.f32 %v1155, %v1169
          %v1177 = vadd.f32 %v1156, %v1171
          %s1178 = sadd.s32 %s344, 45
          %s1179 = sld [smem:[#allocation2 + %s1178]]
          %v1180 = vstv %s1179
          %v1181 = vmul.f32 %v271, %v1180
          %v1182 = vmul.f32 %v272, %v1180
          %v1183 = vmul.f32 %v273, %v1180
          %v1184 = vadd.f32 %v1175, %v1181
          %v1185 = vadd.f32 %v1176, %v1182
          %v1186 = vadd.f32 %v1177, %v1183
          %s1187 = sadd.s32 %s344, 46
          %s1188 = sld [smem:[#allocation2 + %s1187]]
          %v1189 = vstv %s1188
          %v1190 = vmul.f32 %v271, %v1189
          %v1191 = vmul.f32 %v272, %v1189
          %v1192 = vmul.f32 %v273, %v1189
          %1196 = vrot.lane.b32.xlu0 %v1190, 127
          %v1197 = vpop.permute.xlu0 %1196
          %1198 = vrot.lane.b32.xlu0 %v1191, 127
          %v1199 = vpop.permute.xlu0 %1198
          %1200 = vrot.lane.b32.xlu0 %v1192, 127
          %v1201 = vpop.permute.xlu0 %1200
          %v1205 = vadd.f32 %v1184, %v1197
          %v1206 = vadd.f32 %v1185, %v1199
          %v1207 = vadd.f32 %v1186, %v1201
          %s1208 = sadd.s32 %s344, 47
          %s1209 = sld [smem:[#allocation2 + %s1208]]
          %v1210 = vstv %s1209
          %v1211 = vmul.f32 %v271, %v1210
          %v1212 = vmul.f32 %v272, %v1210
          %v1213 = vmul.f32 %v273, %v1210
          %1217 = vrot.lane.b32.xlu0 %v1211, 126
          %v1218 = vpop.permute.xlu0 %1217
          %1219 = vrot.lane.b32.xlu0 %v1212, 126
          %v1220 = vpop.permute.xlu0 %1219
          %1221 = vrot.lane.b32.xlu0 %v1213, 126
          %v1222 = vpop.permute.xlu0 %1221
          %v1226 = vadd.f32 %v1205, %v1218
          %v1227 = vadd.f32 %v1206, %v1220
          %v1228 = vadd.f32 %v1207, %v1222
          %s1229 = sadd.s32 %s344, 48
          %s1230 = sld [smem:[#allocation2 + %s1229]]
          %v1231 = vstv %s1230
          %v1232 = vmul.f32 %v271, %v1231
          %v1233 = vmul.f32 %v272, %v1231
          %v1234 = vmul.f32 %v273, %v1231
          %1238 = vrot.lane.b32.xlu0 %v1232, 125
          %v1239 = vpop.permute.xlu0 %1238
          %1240 = vrot.lane.b32.xlu0 %v1233, 125
          %v1241 = vpop.permute.xlu0 %1240
          %1242 = vrot.lane.b32.xlu0 %v1234, 125
          %v1243 = vpop.permute.xlu0 %1242
          %v1247 = vadd.f32 %v1226, %v1239
          %v1248 = vadd.f32 %v1227, %v1241
          %v1249 = vadd.f32 %v1228, %v1243
          %s1250 = sadd.s32 %s344, 49
          %s1251 = sld [smem:[#allocation2 + %s1250]]
          %v1252 = vstv %s1251
          %v1253 = vmul.f32 %v271, %v1252
          %v1254 = vmul.f32 %v272, %v1252
          %v1255 = vmul.f32 %v273, %v1252
          %1259 = vrot.lane.b32.xlu0 %v1253, 124
          %v1260 = vpop.permute.xlu0 %1259
          %1261 = vrot.lane.b32.xlu0 %v1254, 124
          %v1262 = vpop.permute.xlu0 %1261
          %1263 = vrot.lane.b32.xlu0 %v1255, 124
          %v1264 = vpop.permute.xlu0 %1263
          %v1268 = vadd.f32 %v1247, %v1260
          %v1269 = vadd.f32 %v1248, %v1262
          %v1270 = vadd.f32 %v1249, %v1264
          %s1271 = sadd.s32 %s344, 50
          %s1272 = sld [smem:[#allocation2 + %s1271]]
          %v1273 = vstv %s1272
          %v1274 = vmul.f32 %v275, %v1273
          %v1275 = vmul.f32 %v276, %v1273
          %v1276 = vmul.f32 %v277, %v1273
          %v1277 = vadd.f32 %v1268, %v1274
          %v1278 = vadd.f32 %v1269, %v1275
          %v1279 = vadd.f32 %v1270, %v1276
          %s1280 = sadd.s32 %s344, 51
          %s1281 = sld [smem:[#allocation2 + %s1280]]
          %v1282 = vstv %s1281
          %v1283 = vmul.f32 %v275, %v1282
          %v1284 = vmul.f32 %v276, %v1282
          %v1285 = vmul.f32 %v277, %v1282
          %1289 = vrot.lane.b32.xlu0 %v1283, 127
          %v1290 = vpop.permute.xlu0 %1289
          %1291 = vrot.lane.b32.xlu0 %v1284, 127
          %v1292 = vpop.permute.xlu0 %1291
          %1293 = vrot.lane.b32.xlu0 %v1285, 127
          %v1294 = vpop.permute.xlu0 %1293
          %v1298 = vadd.f32 %v1277, %v1290
          %v1299 = vadd.f32 %v1278, %v1292
          %v1300 = vadd.f32 %v1279, %v1294
          %s1301 = sadd.s32 %s344, 52
          %s1302 = sld [smem:[#allocation2 + %s1301]]
          %v1303 = vstv %s1302
          %v1304 = vmul.f32 %v275, %v1303
          %v1305 = vmul.f32 %v276, %v1303
          %v1306 = vmul.f32 %v277, %v1303
          %1310 = vrot.lane.b32.xlu0 %v1304, 126
          %v1311 = vpop.permute.xlu0 %1310
          %1312 = vrot.lane.b32.xlu0 %v1305, 126
          %v1313 = vpop.permute.xlu0 %1312
          %1314 = vrot.lane.b32.xlu0 %v1306, 126
          %v1315 = vpop.permute.xlu0 %1314
          %v1319 = vadd.f32 %v1298, %v1311
          %v1320 = vadd.f32 %v1299, %v1313
          %v1321 = vadd.f32 %v1300, %v1315
          %s1322 = sadd.s32 %s344, 53
          %s1323 = sld [smem:[#allocation2 + %s1322]]
          %v1324 = vstv %s1323
          %v1325 = vmul.f32 %v275, %v1324
          %v1326 = vmul.f32 %v276, %v1324
          %v1327 = vmul.f32 %v277, %v1324
          %1331 = vrot.lane.b32.xlu0 %v1325, 125
          %v1332 = vpop.permute.xlu0 %1331
          %1333 = vrot.lane.b32.xlu0 %v1326, 125
          %v1334 = vpop.permute.xlu0 %1333
          %1335 = vrot.lane.b32.xlu0 %v1327, 125
          %v1336 = vpop.permute.xlu0 %1335
          %v1340 = vadd.f32 %v1319, %v1332
          %v1341 = vadd.f32 %v1320, %v1334
          %v1342 = vadd.f32 %v1321, %v1336
          %s1343 = sadd.s32 %s344, 54
          %s1344 = sld [smem:[#allocation2 + %s1343]]
          %v1345 = vstv %s1344
          %v1346 = vmul.f32 %v275, %v1345
          %v1347 = vmul.f32 %v276, %v1345
          %v1348 = vmul.f32 %v277, %v1345
          %1352 = vrot.lane.b32.xlu0 %v1346, 124
          %v1353 = vpop.permute.xlu0 %1352
          %1354 = vrot.lane.b32.xlu0 %v1347, 124
          %v1355 = vpop.permute.xlu0 %1354
          %1356 = vrot.lane.b32.xlu0 %v1348, 124
          %v1357 = vpop.permute.xlu0 %1356
          %v1361 = vadd.f32 %v1340, %v1353
          %v1362 = vadd.f32 %v1341, %v1355
          %v1363 = vadd.f32 %v1342, %v1357
          %s1364 = sadd.s32 %s344, 55
          %s1365 = sld [smem:[#allocation2 + %s1364]]
          %v1366 = vstv %s1365
          %v1367 = vmul.f32 %v278, %v1366
          %v1368 = vmul.f32 %v279, %v1366
          %v1369 = vmul.f32 %v280, %v1366
          %v1370 = vadd.f32 %v1361, %v1367
          %v1371 = vadd.f32 %v1362, %v1368
          %v1372 = vadd.f32 %v1363, %v1369
          %s1373 = sadd.s32 %s344, 56
          %s1374 = sld [smem:[#allocation2 + %s1373]]
          %v1375 = vstv %s1374
          %v1376 = vmul.f32 %v278, %v1375
          %v1377 = vmul.f32 %v279, %v1375
          %v1378 = vmul.f32 %v280, %v1375
          %1382 = vrot.lane.b32.xlu0 %v1376, 127
          %v1383 = vpop.permute.xlu0 %1382
          %1384 = vrot.lane.b32.xlu0 %v1377, 127
          %v1385 = vpop.permute.xlu0 %1384
          %1386 = vrot.lane.b32.xlu0 %v1378, 127
          %v1387 = vpop.permute.xlu0 %1386
          %v1391 = vadd.f32 %v1370, %v1383
          %v1392 = vadd.f32 %v1371, %v1385
          %v1393 = vadd.f32 %v1372, %v1387
          %s1394 = sadd.s32 %s344, 57
          %s1395 = sld [smem:[#allocation2 + %s1394]]
          %v1396 = vstv %s1395
          %v1397 = vmul.f32 %v278, %v1396
          %v1398 = vmul.f32 %v279, %v1396
          %v1399 = vmul.f32 %v280, %v1396
          %1403 = vrot.lane.b32.xlu0 %v1397, 126
          %v1404 = vpop.permute.xlu0 %1403
          %1405 = vrot.lane.b32.xlu0 %v1398, 126
          %v1406 = vpop.permute.xlu0 %1405
          %1407 = vrot.lane.b32.xlu0 %v1399, 126
          %v1408 = vpop.permute.xlu0 %1407
          %v1412 = vadd.f32 %v1391, %v1404
          %v1413 = vadd.f32 %v1392, %v1406
          %v1414 = vadd.f32 %v1393, %v1408
          %s1415 = sadd.s32 %s344, 58
          %s1416 = sld [smem:[#allocation2 + %s1415]]
          %v1417 = vstv %s1416
          %v1418 = vmul.f32 %v278, %v1417
          %v1419 = vmul.f32 %v279, %v1417
          %v1420 = vmul.f32 %v280, %v1417
          %1424 = vrot.lane.b32.xlu0 %v1418, 125
          %v1425 = vpop.permute.xlu0 %1424
          %1426 = vrot.lane.b32.xlu0 %v1419, 125
          %v1427 = vpop.permute.xlu0 %1426
          %1428 = vrot.lane.b32.xlu0 %v1420, 125
          %v1429 = vpop.permute.xlu0 %1428
          %v1433 = vadd.f32 %v1412, %v1425
          %v1434 = vadd.f32 %v1413, %v1427
          %v1435 = vadd.f32 %v1414, %v1429
          %s1436 = sadd.s32 %s344, 59
          %s1437 = sld [smem:[#allocation2 + %s1436]]
          %v1438 = vstv %s1437
          %v1439 = vmul.f32 %v278, %v1438
          %v1440 = vmul.f32 %v279, %v1438
          %v1441 = vmul.f32 %v280, %v1438
          %1445 = vrot.lane.b32.xlu0 %v1439, 124
          %v1446 = vpop.permute.xlu0 %1445
          %1447 = vrot.lane.b32.xlu0 %v1440, 124
          %v1448 = vpop.permute.xlu0 %1447
          %1449 = vrot.lane.b32.xlu0 %v1441, 124
          %v1450 = vpop.permute.xlu0 %1449
          %v1454 = vadd.f32 %v1433, %v1446
          %v1455 = vadd.f32 %v1434, %v1448
          %v1456 = vadd.f32 %v1435, %v1450
          %s1457 = sadd.s32 %s344, 60
          %s1458 = sld [smem:[#allocation2 + %s1457]]
          %v1459 = vstv %s1458
          %v1460 = vmul.f32 %v281, %v1459
          %v1461 = vmul.f32 %v282, %v1459
          %v1462 = vmul.f32 %v283, %v1459
          %v1463 = vadd.f32 %v1454, %v1460
          %v1464 = vadd.f32 %v1455, %v1461
          %v1465 = vadd.f32 %v1456, %v1462
          %s1466 = sadd.s32 %s344, 61
          %s1467 = sld [smem:[#allocation2 + %s1466]]
          %v1468 = vstv %s1467
          %v1469 = vmul.f32 %v281, %v1468
          %v1470 = vmul.f32 %v282, %v1468
          %v1471 = vmul.f32 %v283, %v1468
          %1475 = vrot.lane.b32.xlu0 %v1469, 127
          %v1476 = vpop.permute.xlu0 %1475
          %1477 = vrot.lane.b32.xlu0 %v1470, 127
          %v1478 = vpop.permute.xlu0 %1477
          %1479 = vrot.lane.b32.xlu0 %v1471, 127
          %v1480 = vpop.permute.xlu0 %1479
          %v1484 = vadd.f32 %v1463, %v1476
          %v1485 = vadd.f32 %v1464, %v1478
          %v1486 = vadd.f32 %v1465, %v1480
          %s1487 = sadd.s32 %s344, 62
          %s1488 = sld [smem:[#allocation2 + %s1487]]
          %v1489 = vstv %s1488
          %v1490 = vmul.f32 %v281, %v1489
          %v1491 = vmul.f32 %v282, %v1489
          %v1492 = vmul.f32 %v283, %v1489
          %1496 = vrot.lane.b32.xlu0 %v1490, 126
          %v1497 = vpop.permute.xlu0 %1496
          %1498 = vrot.lane.b32.xlu0 %v1491, 126
          %v1499 = vpop.permute.xlu0 %1498
          %1500 = vrot.lane.b32.xlu0 %v1492, 126
          %v1501 = vpop.permute.xlu0 %1500
          %v1505 = vadd.f32 %v1484, %v1497
          %v1506 = vadd.f32 %v1485, %v1499
          %v1507 = vadd.f32 %v1486, %v1501
          %s1508 = sadd.s32 %s344, 63
          %s1509 = sld [smem:[#allocation2 + %s1508]]
          %v1510 = vstv %s1509
          %v1511 = vmul.f32 %v281, %v1510
          %v1512 = vmul.f32 %v282, %v1510
          %v1513 = vmul.f32 %v283, %v1510
          %1517 = vrot.lane.b32.xlu0 %v1511, 125
          %v1518 = vpop.permute.xlu0 %1517
          %1519 = vrot.lane.b32.xlu0 %v1512, 125
          %v1520 = vpop.permute.xlu0 %1519
          %1521 = vrot.lane.b32.xlu0 %v1513, 125
          %v1522 = vpop.permute.xlu0 %1521
          %v1526 = vadd.f32 %v1505, %v1518
          %v1527 = vadd.f32 %v1506, %v1520
          %v1528 = vadd.f32 %v1507, %v1522
          %s1529 = sadd.s32 %s344, 64
          %s1530 = sld [smem:[#allocation2 + %s1529]]
          %v1531 = vstv %s1530
          %v1532 = vmul.f32 %v281, %v1531
          %v1533 = vmul.f32 %v282, %v1531
          %v1534 = vmul.f32 %v283, %v1531
          %1538 = vrot.lane.b32.xlu0 %v1532, 124
          %v1539 = vpop.permute.xlu0 %1538
          %1540 = vrot.lane.b32.xlu0 %v1533, 124
          %v1541 = vpop.permute.xlu0 %1540
          %1542 = vrot.lane.b32.xlu0 %v1534, 124
          %v1543 = vpop.permute.xlu0 %1542
          %v1547 = vadd.f32 %v1526, %v1539
          %v1548 = vadd.f32 %v1527, %v1541
          %v1549 = vadd.f32 %v1528, %v1543
          %s1550 = sadd.s32 %s344, 65
          %s1551 = sld [smem:[#allocation2 + %s1550]]
          %v1552 = vstv %s1551
          %v1553 = vmul.f32 %v284, %v1552
          %v1554 = vmul.f32 %v285, %v1552
          %v1555 = vmul.f32 %v286, %v1552
          %v1556 = vadd.f32 %v1547, %v1553
          %v1557 = vadd.f32 %v1548, %v1554
          %v1558 = vadd.f32 %v1549, %v1555
          %s1559 = sadd.s32 %s344, 66
          %s1560 = sld [smem:[#allocation2 + %s1559]]
          %v1561 = vstv %s1560
          %v1562 = vmul.f32 %v284, %v1561
          %v1563 = vmul.f32 %v285, %v1561
          %v1564 = vmul.f32 %v286, %v1561
          %1568 = vrot.lane.b32.xlu0 %v1562, 127
          %v1569 = vpop.permute.xlu0 %1568
          %1570 = vrot.lane.b32.xlu0 %v1563, 127
          %v1571 = vpop.permute.xlu0 %1570
          %1572 = vrot.lane.b32.xlu0 %v1564, 127
          %v1573 = vpop.permute.xlu0 %1572
          %v1577 = vadd.f32 %v1556, %v1569
          %v1578 = vadd.f32 %v1557, %v1571
          %v1579 = vadd.f32 %v1558, %v1573
          %s1580 = sadd.s32 %s344, 67
          %s1581 = sld [smem:[#allocation2 + %s1580]]
          %v1582 = vstv %s1581
          %v1583 = vmul.f32 %v284, %v1582
          %v1584 = vmul.f32 %v285, %v1582
          %v1585 = vmul.f32 %v286, %v1582
          %1589 = vrot.lane.b32.xlu0 %v1583, 126
          %v1590 = vpop.permute.xlu0 %1589
          %1591 = vrot.lane.b32.xlu0 %v1584, 126
          %v1592 = vpop.permute.xlu0 %1591
          %1593 = vrot.lane.b32.xlu0 %v1585, 126
          %v1594 = vpop.permute.xlu0 %1593
          %v1598 = vadd.f32 %v1577, %v1590
          %v1599 = vadd.f32 %v1578, %v1592
          %v1600 = vadd.f32 %v1579, %v1594
          %s1601 = sadd.s32 %s344, 68
          %s1602 = sld [smem:[#allocation2 + %s1601]]
          %v1603 = vstv %s1602
          %v1604 = vmul.f32 %v284, %v1603
          %v1605 = vmul.f32 %v285, %v1603
          %v1606 = vmul.f32 %v286, %v1603
          %1610 = vrot.lane.b32.xlu0 %v1604, 125
          %v1611 = vpop.permute.xlu0 %1610
          %1612 = vrot.lane.b32.xlu0 %v1605, 125
          %v1613 = vpop.permute.xlu0 %1612
          %1614 = vrot.lane.b32.xlu0 %v1606, 125
          %v1615 = vpop.permute.xlu0 %1614
          %v1619 = vadd.f32 %v1598, %v1611
          %v1620 = vadd.f32 %v1599, %v1613
          %v1621 = vadd.f32 %v1600, %v1615
          %s1622 = sadd.s32 %s344, 69
          %s1623 = sld [smem:[#allocation2 + %s1622]]
          %v1624 = vstv %s1623
          %v1625 = vmul.f32 %v284, %v1624
          %v1626 = vmul.f32 %v285, %v1624
          %v1627 = vmul.f32 %v286, %v1624
          %1631 = vrot.lane.b32.xlu0 %v1625, 124
          %v1632 = vpop.permute.xlu0 %1631
          %1633 = vrot.lane.b32.xlu0 %v1626, 124
          %v1634 = vpop.permute.xlu0 %1633
          %1635 = vrot.lane.b32.xlu0 %v1627, 124
          %v1636 = vpop.permute.xlu0 %1635
          %v1640 = vadd.f32 %v1619, %v1632
          %v1641 = vadd.f32 %v1620, %v1634
          %v1642 = vadd.f32 %v1621, %v1636
          %s1643 = sadd.s32 %s344, 70
          %s1644 = sld [smem:[#allocation2 + %s1643]]
          %v1645 = vstv %s1644
          %v1646 = vmul.f32 %v287, %v1645
          %v1647 = vmul.f32 %v288, %v1645
          %v1648 = vmul.f32 %v289, %v1645
          %v1649 = vadd.f32 %v1640, %v1646
          %v1650 = vadd.f32 %v1641, %v1647
          %v1651 = vadd.f32 %v1642, %v1648
          %s1652 = sadd.s32 %s344, 71
          %s1653 = sld [smem:[#allocation2 + %s1652]]
          %v1654 = vstv %s1653
          %v1655 = vmul.f32 %v287, %v1654
          %v1656 = vmul.f32 %v288, %v1654
          %v1657 = vmul.f32 %v289, %v1654
          %1661 = vrot.lane.b32.xlu0 %v1655, 127
          %v1662 = vpop.permute.xlu0 %1661
          %1663 = vrot.lane.b32.xlu0 %v1656, 127
          %v1664 = vpop.permute.xlu0 %1663
          %1665 = vrot.lane.b32.xlu0 %v1657, 127
          %v1666 = vpop.permute.xlu0 %1665
          %v1670 = vadd.f32 %v1649, %v1662
          %v1671 = vadd.f32 %v1650, %v1664
          %v1672 = vadd.f32 %v1651, %v1666
          %s1673 = sadd.s32 %s344, 72
          %s1674 = sld [smem:[#allocation2 + %s1673]]
          %v1675 = vstv %s1674
          %v1676 = vmul.f32 %v287, %v1675
          %v1677 = vmul.f32 %v288, %v1675
          %v1678 = vmul.f32 %v289, %v1675
          %1682 = vrot.lane.b32.xlu0 %v1676, 126
          %v1683 = vpop.permute.xlu0 %1682
          %1684 = vrot.lane.b32.xlu0 %v1677, 126
          %v1685 = vpop.permute.xlu0 %1684
          %1686 = vrot.lane.b32.xlu0 %v1678, 126
          %v1687 = vpop.permute.xlu0 %1686
          %v1691 = vadd.f32 %v1670, %v1683
          %v1692 = vadd.f32 %v1671, %v1685
          %v1693 = vadd.f32 %v1672, %v1687
          %s1694 = sadd.s32 %s344, 73
          %s1695 = sld [smem:[#allocation2 + %s1694]]
          %v1696 = vstv %s1695
          %v1697 = vmul.f32 %v287, %v1696
          %v1698 = vmul.f32 %v288, %v1696
          %v1699 = vmul.f32 %v289, %v1696
          %1703 = vrot.lane.b32.xlu0 %v1697, 125
          %v1704 = vpop.permute.xlu0 %1703
          %1705 = vrot.lane.b32.xlu0 %v1698, 125
          %v1706 = vpop.permute.xlu0 %1705
          %1707 = vrot.lane.b32.xlu0 %v1699, 125
          %v1708 = vpop.permute.xlu0 %1707
          %v1712 = vadd.f32 %v1691, %v1704
          %v1713 = vadd.f32 %v1692, %v1706
          %v1714 = vadd.f32 %v1693, %v1708
          %s1715 = sadd.s32 %s344, 74
          %s1716 = sld [smem:[#allocation2 + %s1715]]
          %v1717 = vstv %s1716
          %v1718 = vmul.f32 %v287, %v1717
          %v1719 = vmul.f32 %v288, %v1717
          %v1720 = vmul.f32 %v289, %v1717
          %1724 = vrot.lane.b32.xlu0 %v1718, 124
          %v1725 = vpop.permute.xlu0 %1724
          %1726 = vrot.lane.b32.xlu0 %v1719, 124
          %v1727 = vpop.permute.xlu0 %1726
          %1728 = vrot.lane.b32.xlu0 %v1720, 124
          %v1729 = vpop.permute.xlu0 %1728
          %v1733 = vadd.f32 %v1712, %v1725
          %v1734 = vadd.f32 %v1713, %v1727
          %v1735 = vadd.f32 %v1714, %v1729
          %s1736 = sadd.s32 %s344, 75
          %s1737 = sld [smem:[#allocation2 + %s1736]]
          %v1738 = vstv %s1737
          %v1739 = vmul.f32 %v291, %v1738
          %v1740 = vmul.f32 %v292, %v1738
          %v1741 = vmul.f32 %v293, %v1738
          %v1742 = vadd.f32 %v1733, %v1739
          %v1743 = vadd.f32 %v1734, %v1740
          %v1744 = vadd.f32 %v1735, %v1741
          %s1745 = sadd.s32 %s344, 76
          %s1746 = sld [smem:[#allocation2 + %s1745]]
          %v1747 = vstv %s1746
          %v1748 = vmul.f32 %v291, %v1747
          %v1749 = vmul.f32 %v292, %v1747
          %v1750 = vmul.f32 %v293, %v1747
          %1754 = vrot.lane.b32.xlu0 %v1748, 127
          %v1755 = vpop.permute.xlu0 %1754
          %1756 = vrot.lane.b32.xlu0 %v1749, 127
          %v1757 = vpop.permute.xlu0 %1756
          %1758 = vrot.lane.b32.xlu0 %v1750, 127
          %v1759 = vpop.permute.xlu0 %1758
          %v1763 = vadd.f32 %v1742, %v1755
          %v1764 = vadd.f32 %v1743, %v1757
          %v1765 = vadd.f32 %v1744, %v1759
          %s1766 = sadd.s32 %s344, 77
          %s1767 = sld [smem:[#allocation2 + %s1766]]
          %v1768 = vstv %s1767
          %v1769 = vmul.f32 %v291, %v1768
          %v1770 = vmul.f32 %v292, %v1768
          %v1771 = vmul.f32 %v293, %v1768
          %1775 = vrot.lane.b32.xlu0 %v1769, 126
          %v1776 = vpop.permute.xlu0 %1775
          %1777 = vrot.lane.b32.xlu0 %v1770, 126
          %v1778 = vpop.permute.xlu0 %1777
          %1779 = vrot.lane.b32.xlu0 %v1771, 126
          %v1780 = vpop.permute.xlu0 %1779
          %v1784 = vadd.f32 %v1763, %v1776
          %v1785 = vadd.f32 %v1764, %v1778
          %v1786 = vadd.f32 %v1765, %v1780
          %s1787 = sadd.s32 %s344, 78
          %s1788 = sld [smem:[#allocation2 + %s1787]]
          %v1789 = vstv %s1788
          %v1790 = vmul.f32 %v291, %v1789
          %v1791 = vmul.f32 %v292, %v1789
          %v1792 = vmul.f32 %v293, %v1789
          %1796 = vrot.lane.b32.xlu0 %v1790, 125
          %v1797 = vpop.permute.xlu0 %1796
          %1798 = vrot.lane.b32.xlu0 %v1791, 125
          %v1799 = vpop.permute.xlu0 %1798
          %1800 = vrot.lane.b32.xlu0 %v1792, 125
          %v1801 = vpop.permute.xlu0 %1800
          %v1805 = vadd.f32 %v1784, %v1797
          %v1806 = vadd.f32 %v1785, %v1799
          %v1807 = vadd.f32 %v1786, %v1801
          %s1808 = sadd.s32 %s344, 79
          %s1809 = sld [smem:[#allocation2 + %s1808]]
          %v1810 = vstv %s1809
          %v1811 = vmul.f32 %v291, %v1810
          %v1812 = vmul.f32 %v292, %v1810
          %v1813 = vmul.f32 %v293, %v1810
          %1817 = vrot.lane.b32.xlu0 %v1811, 124
          %v1818 = vpop.permute.xlu0 %1817
          %1819 = vrot.lane.b32.xlu0 %v1812, 124
          %v1820 = vpop.permute.xlu0 %1819
          %1821 = vrot.lane.b32.xlu0 %v1813, 124
          %v1822 = vpop.permute.xlu0 %1821
          %v1826 = vadd.f32 %v1805, %v1818
          %v1827 = vadd.f32 %v1806, %v1820
          %v1828 = vadd.f32 %v1807, %v1822
          %s1829 = sadd.s32 %s344, 80
          %s1830 = sld [smem:[#allocation2 + %s1829]]
          %v1831 = vstv %s1830
          %v1832 = vmul.f32 %v294, %v1831
          %v1833 = vmul.f32 %v295, %v1831
          %v1834 = vmul.f32 %v296, %v1831
          %v1835 = vadd.f32 %v1826, %v1832
          %v1836 = vadd.f32 %v1827, %v1833
          %v1837 = vadd.f32 %v1828, %v1834
          %s1838 = sadd.s32 %s344, 81
          %s1839 = sld [smem:[#allocation2 + %s1838]]
          %v1840 = vstv %s1839
          %v1841 = vmul.f32 %v294, %v1840
          %v1842 = vmul.f32 %v295, %v1840
          %v1843 = vmul.f32 %v296, %v1840
          %1847 = vrot.lane.b32.xlu0 %v1841, 127
          %v1848 = vpop.permute.xlu0 %1847
          %1849 = vrot.lane.b32.xlu0 %v1842, 127
          %v1850 = vpop.permute.xlu0 %1849
          %1851 = vrot.lane.b32.xlu0 %v1843, 127
          %v1852 = vpop.permute.xlu0 %1851
          %v1856 = vadd.f32 %v1835, %v1848
          %v1857 = vadd.f32 %v1836, %v1850
          %v1858 = vadd.f32 %v1837, %v1852
          %s1859 = sadd.s32 %s344, 82
          %s1860 = sld [smem:[#allocation2 + %s1859]]
          %v1861 = vstv %s1860
          %v1862 = vmul.f32 %v294, %v1861
          %v1863 = vmul.f32 %v295, %v1861
          %v1864 = vmul.f32 %v296, %v1861
          %1868 = vrot.lane.b32.xlu0 %v1862, 126
          %v1869 = vpop.permute.xlu0 %1868
          %1870 = vrot.lane.b32.xlu0 %v1863, 126
          %v1871 = vpop.permute.xlu0 %1870
          %1872 = vrot.lane.b32.xlu0 %v1864, 126
          %v1873 = vpop.permute.xlu0 %1872
          %v1877 = vadd.f32 %v1856, %v1869
          %v1878 = vadd.f32 %v1857, %v1871
          %v1879 = vadd.f32 %v1858, %v1873
          %s1880 = sadd.s32 %s344, 83
          %s1881 = sld [smem:[#allocation2 + %s1880]]
          %v1882 = vstv %s1881
          %v1883 = vmul.f32 %v294, %v1882
          %v1884 = vmul.f32 %v295, %v1882
          %v1885 = vmul.f32 %v296, %v1882
          %1889 = vrot.lane.b32.xlu0 %v1883, 125
          %v1890 = vpop.permute.xlu0 %1889
          %1891 = vrot.lane.b32.xlu0 %v1884, 125
          %v1892 = vpop.permute.xlu0 %1891
          %1893 = vrot.lane.b32.xlu0 %v1885, 125
          %v1894 = vpop.permute.xlu0 %1893
          %v1898 = vadd.f32 %v1877, %v1890
          %v1899 = vadd.f32 %v1878, %v1892
          %v1900 = vadd.f32 %v1879, %v1894
          %s1901 = sadd.s32 %s344, 84
          %s1902 = sld [smem:[#allocation2 + %s1901]]
          %v1903 = vstv %s1902
          %v1904 = vmul.f32 %v294, %v1903
          %v1905 = vmul.f32 %v295, %v1903
          %v1906 = vmul.f32 %v296, %v1903
          %1910 = vrot.lane.b32.xlu0 %v1904, 124
          %v1911 = vpop.permute.xlu0 %1910
          %1912 = vrot.lane.b32.xlu0 %v1905, 124
          %v1913 = vpop.permute.xlu0 %1912
          %1914 = vrot.lane.b32.xlu0 %v1906, 124
          %v1915 = vpop.permute.xlu0 %1914
          %v1919 = vadd.f32 %v1898, %v1911
          %v1920 = vadd.f32 %v1899, %v1913
          %v1921 = vadd.f32 %v1900, %v1915
          %s1922 = sadd.s32 %s344, 85
          %s1923 = sld [smem:[#allocation2 + %s1922]]
          %v1924 = vstv %s1923
          %v1925 = vmul.f32 %v297, %v1924
          %v1926 = vmul.f32 %v298, %v1924
          %v1927 = vmul.f32 %v299, %v1924
          %v1928 = vadd.f32 %v1919, %v1925
          %v1929 = vadd.f32 %v1920, %v1926
          %v1930 = vadd.f32 %v1921, %v1927
          %s1931 = sadd.s32 %s344, 86
          %s1932 = sld [smem:[#allocation2 + %s1931]]
          %v1933 = vstv %s1932
          %v1934 = vmul.f32 %v297, %v1933
          %v1935 = vmul.f32 %v298, %v1933
          %v1936 = vmul.f32 %v299, %v1933
          %1940 = vrot.lane.b32.xlu0 %v1934, 127
          %v1941 = vpop.permute.xlu0 %1940
          %1942 = vrot.lane.b32.xlu0 %v1935, 127
          %v1943 = vpop.permute.xlu0 %1942
          %1944 = vrot.lane.b32.xlu0 %v1936, 127
          %v1945 = vpop.permute.xlu0 %1944
          %v1949 = vadd.f32 %v1928, %v1941
          %v1950 = vadd.f32 %v1929, %v1943
          %v1951 = vadd.f32 %v1930, %v1945
          %s1952 = sadd.s32 %s344, 87
          %s1953 = sld [smem:[#allocation2 + %s1952]]
          %v1954 = vstv %s1953
          %v1955 = vmul.f32 %v297, %v1954
          %v1956 = vmul.f32 %v298, %v1954
          %v1957 = vmul.f32 %v299, %v1954
          %1961 = vrot.lane.b32.xlu0 %v1955, 126
          %v1962 = vpop.permute.xlu0 %1961
          %1963 = vrot.lane.b32.xlu0 %v1956, 126
          %v1964 = vpop.permute.xlu0 %1963
          %1965 = vrot.lane.b32.xlu0 %v1957, 126
          %v1966 = vpop.permute.xlu0 %1965
          %v1970 = vadd.f32 %v1949, %v1962
          %v1971 = vadd.f32 %v1950, %v1964
          %v1972 = vadd.f32 %v1951, %v1966
          %s1973 = sadd.s32 %s344, 88
          %s1974 = sld [smem:[#allocation2 + %s1973]]
          %v1975 = vstv %s1974
          %v1976 = vmul.f32 %v297, %v1975
          %v1977 = vmul.f32 %v298, %v1975
          %v1978 = vmul.f32 %v299, %v1975
          %1982 = vrot.lane.b32.xlu0 %v1976, 125
          %v1983 = vpop.permute.xlu0 %1982
          %1984 = vrot.lane.b32.xlu0 %v1977, 125
          %v1985 = vpop.permute.xlu0 %1984
          %1986 = vrot.lane.b32.xlu0 %v1978, 125
          %v1987 = vpop.permute.xlu0 %1986
          %v1991 = vadd.f32 %v1970, %v1983
          %v1992 = vadd.f32 %v1971, %v1985
          %v1993 = vadd.f32 %v1972, %v1987
          %s1994 = sadd.s32 %s344, 89
          %s1995 = sld [smem:[#allocation2 + %s1994]]
          %v1996 = vstv %s1995
          %v1997 = vmul.f32 %v297, %v1996
          %v1998 = vmul.f32 %v298, %v1996
          %v1999 = vmul.f32 %v299, %v1996
          %2003 = vrot.lane.b32.xlu0 %v1997, 124
          %v2004 = vpop.permute.xlu0 %2003
          %2005 = vrot.lane.b32.xlu0 %v1998, 124
          %v2006 = vpop.permute.xlu0 %2005
          %2007 = vrot.lane.b32.xlu0 %v1999, 124
          %v2008 = vpop.permute.xlu0 %2007
          %v2012 = vadd.f32 %v1991, %v2004
          %v2013 = vadd.f32 %v1992, %v2006
          %v2014 = vadd.f32 %v1993, %v2008
          %s2015 = sadd.s32 %s344, 90
          %s2016 = sld [smem:[#allocation2 + %s2015]]
          %v2017 = vstv %s2016
          %v2018 = vmul.f32 %v300, %v2017
          %v2019 = vmul.f32 %v301, %v2017
          %v2020 = vmul.f32 %v302, %v2017
          %v2021 = vadd.f32 %v2012, %v2018
          %v2022 = vadd.f32 %v2013, %v2019
          %v2023 = vadd.f32 %v2014, %v2020
          %s2024 = sadd.s32 %s344, 91
          %s2025 = sld [smem:[#allocation2 + %s2024]]
          %v2026 = vstv %s2025
          %v2027 = vmul.f32 %v300, %v2026
          %v2028 = vmul.f32 %v301, %v2026
          %v2029 = vmul.f32 %v302, %v2026
          %2033 = vrot.lane.b32.xlu0 %v2027, 127
          %v2034 = vpop.permute.xlu0 %2033
          %2035 = vrot.lane.b32.xlu0 %v2028, 127
          %v2036 = vpop.permute.xlu0 %2035
          %2037 = vrot.lane.b32.xlu0 %v2029, 127
          %v2038 = vpop.permute.xlu0 %2037
          %v2042 = vadd.f32 %v2021, %v2034
          %v2043 = vadd.f32 %v2022, %v2036
          %v2044 = vadd.f32 %v2023, %v2038
          %s2045 = sadd.s32 %s344, 92
          %s2046 = sld [smem:[#allocation2 + %s2045]]
          %v2047 = vstv %s2046
          %v2048 = vmul.f32 %v300, %v2047
          %v2049 = vmul.f32 %v301, %v2047
          %v2050 = vmul.f32 %v302, %v2047
          %2054 = vrot.lane.b32.xlu0 %v2048, 126
          %v2055 = vpop.permute.xlu0 %2054
          %2056 = vrot.lane.b32.xlu0 %v2049, 126
          %v2057 = vpop.permute.xlu0 %2056
          %2058 = vrot.lane.b32.xlu0 %v2050, 126
          %v2059 = vpop.permute.xlu0 %2058
          %v2063 = vadd.f32 %v2042, %v2055
          %v2064 = vadd.f32 %v2043, %v2057
          %v2065 = vadd.f32 %v2044, %v2059
          %s2066 = sadd.s32 %s344, 93
          %s2067 = sld [smem:[#allocation2 + %s2066]]
          %v2068 = vstv %s2067
          %v2069 = vmul.f32 %v300, %v2068
          %v2070 = vmul.f32 %v301, %v2068
          %v2071 = vmul.f32 %v302, %v2068
          %2075 = vrot.lane.b32.xlu0 %v2069, 125
          %v2076 = vpop.permute.xlu0 %2075
          %2077 = vrot.lane.b32.xlu0 %v2070, 125
          %v2078 = vpop.permute.xlu0 %2077
          %2079 = vrot.lane.b32.xlu0 %v2071, 125
          %v2080 = vpop.permute.xlu0 %2079
          %v2084 = vadd.f32 %v2063, %v2076
          %v2085 = vadd.f32 %v2064, %v2078
          %v2086 = vadd.f32 %v2065, %v2080
          %s2087 = sadd.s32 %s344, 94
          %s2088 = sld [smem:[#allocation2 + %s2087]]
          %v2089 = vstv %s2088
          %v2090 = vmul.f32 %v300, %v2089
          %v2091 = vmul.f32 %v301, %v2089
          %v2092 = vmul.f32 %v302, %v2089
          %2096 = vrot.lane.b32.xlu0 %v2090, 124
          %v2097 = vpop.permute.xlu0 %2096
          %2098 = vrot.lane.b32.xlu0 %v2091, 124
          %v2099 = vpop.permute.xlu0 %2098
          %2100 = vrot.lane.b32.xlu0 %v2092, 124
          %v2101 = vpop.permute.xlu0 %2100
          %v2105 = vadd.f32 %v2084, %v2097
          %v2106 = vadd.f32 %v2085, %v2099
          %v2107 = vadd.f32 %v2086, %v2101
          %s2108 = sadd.s32 %s344, 95
          %s2109 = sld [smem:[#allocation2 + %s2108]]
          %v2110 = vstv %s2109
          %v2111 = vmul.f32 %v303, %v2110
          %v2112 = vmul.f32 %v304, %v2110
          %v2113 = vmul.f32 %v305, %v2110
          %v2114 = vadd.f32 %v2105, %v2111
          %v2115 = vadd.f32 %v2106, %v2112
          %v2116 = vadd.f32 %v2107, %v2113
          %s2117 = sadd.s32 %s344, 96
          %s2118 = sld [smem:[#allocation2 + %s2117]]
          %v2119 = vstv %s2118
          %v2120 = vmul.f32 %v303, %v2119
          %v2121 = vmul.f32 %v304, %v2119
          %v2122 = vmul.f32 %v305, %v2119
          %2126 = vrot.lane.b32.xlu0 %v2120, 127
          %v2127 = vpop.permute.xlu0 %2126
          %2128 = vrot.lane.b32.xlu0 %v2121, 127
          %v2129 = vpop.permute.xlu0 %2128
          %2130 = vrot.lane.b32.xlu0 %v2122, 127
          %v2131 = vpop.permute.xlu0 %2130
          %v2135 = vadd.f32 %v2114, %v2127
          %v2136 = vadd.f32 %v2115, %v2129
          %v2137 = vadd.f32 %v2116, %v2131
          %s2138 = sadd.s32 %s344, 97
          %s2139 = sld [smem:[#allocation2 + %s2138]]
          %v2140 = vstv %s2139
          %v2141 = vmul.f32 %v303, %v2140
          %v2142 = vmul.f32 %v304, %v2140
          %v2143 = vmul.f32 %v305, %v2140
          %2147 = vrot.lane.b32.xlu0 %v2141, 126
          %v2148 = vpop.permute.xlu0 %2147
          %2149 = vrot.lane.b32.xlu0 %v2142, 126
          %v2150 = vpop.permute.xlu0 %2149
          %2151 = vrot.lane.b32.xlu0 %v2143, 126
          %v2152 = vpop.permute.xlu0 %2151
          %v2156 = vadd.f32 %v2135, %v2148
          %v2157 = vadd.f32 %v2136, %v2150
          %v2158 = vadd.f32 %v2137, %v2152
          %s2159 = sadd.s32 %s344, 98
          %s2160 = sld [smem:[#allocation2 + %s2159]]
          %v2161 = vstv %s2160
          %v2162 = vmul.f32 %v303, %v2161
          %v2163 = vmul.f32 %v304, %v2161
          %v2164 = vmul.f32 %v305, %v2161
          %2168 = vrot.lane.b32.xlu0 %v2162, 125
          %v2169 = vpop.permute.xlu0 %2168
          %2170 = vrot.lane.b32.xlu0 %v2163, 125
          %v2171 = vpop.permute.xlu0 %2170
          %2172 = vrot.lane.b32.xlu0 %v2164, 125
          %v2173 = vpop.permute.xlu0 %2172
          %v2177 = vadd.f32 %v2156, %v2169
          %v2178 = vadd.f32 %v2157, %v2171
          %v2179 = vadd.f32 %v2158, %v2173
          %s2180 = sadd.s32 %s344, 99
          %s2181 = sld [smem:[#allocation2 + %s2180]]
          %v2182 = vstv %s2181
          %v2183 = vmul.f32 %v303, %v2182
          %v2184 = vmul.f32 %v304, %v2182
          %v2185 = vmul.f32 %v305, %v2182
          %2189 = vrot.lane.b32.xlu0 %v2183, 124
          %v2190 = vpop.permute.xlu0 %2189
          %2191 = vrot.lane.b32.xlu0 %v2184, 124
          %v2192 = vpop.permute.xlu0 %2191
          %2193 = vrot.lane.b32.xlu0 %v2185, 124
          %v2194 = vpop.permute.xlu0 %2193
          %v2198 = vadd.f32 %v2177, %v2190
          %v2199 = vadd.f32 %v2178, %v2192
          %v2200 = vadd.f32 %v2179, %v2194
          %s2201 = sadd.s32 %s344, 100
          %s2202 = sld [smem:[#allocation2 + %s2201]]
          %v2203 = vstv %s2202
          %v2204 = vmul.f32 %v307, %v2203
          %v2205 = vmul.f32 %v308, %v2203
          %v2206 = vmul.f32 %v309, %v2203
          %v2207 = vadd.f32 %v2198, %v2204
          %v2208 = vadd.f32 %v2199, %v2205
          %v2209 = vadd.f32 %v2200, %v2206
          %s2210 = sadd.s32 %s344, 101
          %s2211 = sld [smem:[#allocation2 + %s2210]]
          %v2212 = vstv %s2211
          %v2213 = vmul.f32 %v307, %v2212
          %v2214 = vmul.f32 %v308, %v2212
          %v2215 = vmul.f32 %v309, %v2212
          %2219 = vrot.lane.b32.xlu0 %v2213, 127
          %v2220 = vpop.permute.xlu0 %2219
          %2221 = vrot.lane.b32.xlu0 %v2214, 127
          %v2222 = vpop.permute.xlu0 %2221
          %2223 = vrot.lane.b32.xlu0 %v2215, 127
          %v2224 = vpop.permute.xlu0 %2223
          %v2228 = vadd.f32 %v2207, %v2220
          %v2229 = vadd.f32 %v2208, %v2222
          %v2230 = vadd.f32 %v2209, %v2224
          %s2231 = sadd.s32 %s344, 102
          %s2232 = sld [smem:[#allocation2 + %s2231]]
          %v2233 = vstv %s2232
          %v2234 = vmul.f32 %v307, %v2233
          %v2235 = vmul.f32 %v308, %v2233
          %v2236 = vmul.f32 %v309, %v2233
          %2240 = vrot.lane.b32.xlu0 %v2234, 126
          %v2241 = vpop.permute.xlu0 %2240
          %2242 = vrot.lane.b32.xlu0 %v2235, 126
          %v2243 = vpop.permute.xlu0 %2242
          %2244 = vrot.lane.b32.xlu0 %v2236, 126
          %v2245 = vpop.permute.xlu0 %2244
          %v2249 = vadd.f32 %v2228, %v2241
          %v2250 = vadd.f32 %v2229, %v2243
          %v2251 = vadd.f32 %v2230, %v2245
          %s2252 = sadd.s32 %s344, 103
          %s2253 = sld [smem:[#allocation2 + %s2252]]
          %v2254 = vstv %s2253
          %v2255 = vmul.f32 %v307, %v2254
          %v2256 = vmul.f32 %v308, %v2254
          %v2257 = vmul.f32 %v309, %v2254
          %2261 = vrot.lane.b32.xlu0 %v2255, 125
          %v2262 = vpop.permute.xlu0 %2261
          %2263 = vrot.lane.b32.xlu0 %v2256, 125
          %v2264 = vpop.permute.xlu0 %2263
          %2265 = vrot.lane.b32.xlu0 %v2257, 125
          %v2266 = vpop.permute.xlu0 %2265
          %v2270 = vadd.f32 %v2249, %v2262
          %v2271 = vadd.f32 %v2250, %v2264
          %v2272 = vadd.f32 %v2251, %v2266
          %s2273 = sadd.s32 %s344, 104
          %s2274 = sld [smem:[#allocation2 + %s2273]]
          %v2275 = vstv %s2274
          %v2276 = vmul.f32 %v307, %v2275
          %v2277 = vmul.f32 %v308, %v2275
          %v2278 = vmul.f32 %v309, %v2275
          %2282 = vrot.lane.b32.xlu0 %v2276, 124
          %v2283 = vpop.permute.xlu0 %2282
          %2284 = vrot.lane.b32.xlu0 %v2277, 124
          %v2285 = vpop.permute.xlu0 %2284
          %2286 = vrot.lane.b32.xlu0 %v2278, 124
          %v2287 = vpop.permute.xlu0 %2286
          %v2291 = vadd.f32 %v2270, %v2283
          %v2292 = vadd.f32 %v2271, %v2285
          %v2293 = vadd.f32 %v2272, %v2287
          %s2294 = sadd.s32 %s344, 105
          %s2295 = sld [smem:[#allocation2 + %s2294]]
          %v2296 = vstv %s2295
          %v2297 = vmul.f32 %v310, %v2296
          %v2298 = vmul.f32 %v311, %v2296
          %v2299 = vmul.f32 %v312, %v2296
          %v2300 = vadd.f32 %v2291, %v2297
          %v2301 = vadd.f32 %v2292, %v2298
          %v2302 = vadd.f32 %v2293, %v2299
          %s2303 = sadd.s32 %s344, 106
          %s2304 = sld [smem:[#allocation2 + %s2303]]
          %v2305 = vstv %s2304
          %v2306 = vmul.f32 %v310, %v2305
          %v2307 = vmul.f32 %v311, %v2305
          %v2308 = vmul.f32 %v312, %v2305
          %2312 = vrot.lane.b32.xlu0 %v2306, 127
          %v2313 = vpop.permute.xlu0 %2312
          %2314 = vrot.lane.b32.xlu0 %v2307, 127
          %v2315 = vpop.permute.xlu0 %2314
          %2316 = vrot.lane.b32.xlu0 %v2308, 127
          %v2317 = vpop.permute.xlu0 %2316
          %v2321 = vadd.f32 %v2300, %v2313
          %v2322 = vadd.f32 %v2301, %v2315
          %v2323 = vadd.f32 %v2302, %v2317
          %s2324 = sadd.s32 %s344, 107
          %s2325 = sld [smem:[#allocation2 + %s2324]]
          %v2326 = vstv %s2325
          %v2327 = vmul.f32 %v310, %v2326
          %v2328 = vmul.f32 %v311, %v2326
          %v2329 = vmul.f32 %v312, %v2326
          %2333 = vrot.lane.b32.xlu0 %v2327, 126
          %v2334 = vpop.permute.xlu0 %2333
          %2335 = vrot.lane.b32.xlu0 %v2328, 126
          %v2336 = vpop.permute.xlu0 %2335
          %2337 = vrot.lane.b32.xlu0 %v2329, 126
          %v2338 = vpop.permute.xlu0 %2337
          %v2342 = vadd.f32 %v2321, %v2334
          %v2343 = vadd.f32 %v2322, %v2336
          %v2344 = vadd.f32 %v2323, %v2338
          %s2345 = sadd.s32 %s344, 108
          %s2346 = sld [smem:[#allocation2 + %s2345]]
          %v2347 = vstv %s2346
          %v2348 = vmul.f32 %v310, %v2347
          %v2349 = vmul.f32 %v311, %v2347
          %v2350 = vmul.f32 %v312, %v2347
          %2354 = vrot.lane.b32.xlu0 %v2348, 125
          %v2355 = vpop.permute.xlu0 %2354
          %2356 = vrot.lane.b32.xlu0 %v2349, 125
          %v2357 = vpop.permute.xlu0 %2356
          %2358 = vrot.lane.b32.xlu0 %v2350, 125
          %v2359 = vpop.permute.xlu0 %2358
          %v2363 = vadd.f32 %v2342, %v2355
          %v2364 = vadd.f32 %v2343, %v2357
          %v2365 = vadd.f32 %v2344, %v2359
          %s2366 = sadd.s32 %s344, 109
          %s2367 = sld [smem:[#allocation2 + %s2366]]
          %v2368 = vstv %s2367
          %v2369 = vmul.f32 %v310, %v2368
          %v2370 = vmul.f32 %v311, %v2368
          %v2371 = vmul.f32 %v312, %v2368
          %2375 = vrot.lane.b32.xlu0 %v2369, 124
          %v2376 = vpop.permute.xlu0 %2375
          %2377 = vrot.lane.b32.xlu0 %v2370, 124
          %v2378 = vpop.permute.xlu0 %2377
          %2379 = vrot.lane.b32.xlu0 %v2371, 124
          %v2380 = vpop.permute.xlu0 %2379
          %v2384 = vadd.f32 %v2363, %v2376
          %v2385 = vadd.f32 %v2364, %v2378
          %v2386 = vadd.f32 %v2365, %v2380
          %s2387 = sadd.s32 %s344, 110
          %s2388 = sld [smem:[#allocation2 + %s2387]]
          %v2389 = vstv %s2388
          %v2390 = vmul.f32 %v313, %v2389
          %v2391 = vmul.f32 %v314, %v2389
          %v2392 = vmul.f32 %v315, %v2389
          %v2393 = vadd.f32 %v2384, %v2390
          %v2394 = vadd.f32 %v2385, %v2391
          %v2395 = vadd.f32 %v2386, %v2392
          %s2396 = sadd.s32 %s344, 111
          %s2397 = sld [smem:[#allocation2 + %s2396]]
          %v2398 = vstv %s2397
          %v2399 = vmul.f32 %v313, %v2398
          %v2400 = vmul.f32 %v314, %v2398
          %v2401 = vmul.f32 %v315, %v2398
          %2405 = vrot.lane.b32.xlu0 %v2399, 127
          %v2406 = vpop.permute.xlu0 %2405
          %2407 = vrot.lane.b32.xlu0 %v2400, 127
          %v2408 = vpop.permute.xlu0 %2407
          %2409 = vrot.lane.b32.xlu0 %v2401, 127
          %v2410 = vpop.permute.xlu0 %2409
          %v2414 = vadd.f32 %v2393, %v2406
          %v2415 = vadd.f32 %v2394, %v2408
          %v2416 = vadd.f32 %v2395, %v2410
          %s2417 = sadd.s32 %s344, 112
          %s2418 = sld [smem:[#allocation2 + %s2417]]
          %v2419 = vstv %s2418
          %v2420 = vmul.f32 %v313, %v2419
          %v2421 = vmul.f32 %v314, %v2419
          %v2422 = vmul.f32 %v315, %v2419
          %2426 = vrot.lane.b32.xlu0 %v2420, 126
          %v2427 = vpop.permute.xlu0 %2426
          %2428 = vrot.lane.b32.xlu0 %v2421, 126
          %v2429 = vpop.permute.xlu0 %2428
          %2430 = vrot.lane.b32.xlu0 %v2422, 126
          %v2431 = vpop.permute.xlu0 %2430
          %v2435 = vadd.f32 %v2414, %v2427
          %v2436 = vadd.f32 %v2415, %v2429
          %v2437 = vadd.f32 %v2416, %v2431
          %s2438 = sadd.s32 %s344, 113
          %s2439 = sld [smem:[#allocation2 + %s2438]]
          %v2440 = vstv %s2439
          %v2441 = vmul.f32 %v313, %v2440
          %v2442 = vmul.f32 %v314, %v2440
          %v2443 = vmul.f32 %v315, %v2440
          %2447 = vrot.lane.b32.xlu0 %v2441, 125
          %v2448 = vpop.permute.xlu0 %2447
          %2449 = vrot.lane.b32.xlu0 %v2442, 125
          %v2450 = vpop.permute.xlu0 %2449
          %2451 = vrot.lane.b32.xlu0 %v2443, 125
          %v2452 = vpop.permute.xlu0 %2451
          %v2456 = vadd.f32 %v2435, %v2448
          %v2457 = vadd.f32 %v2436, %v2450
          %v2458 = vadd.f32 %v2437, %v2452
          %s2459 = sadd.s32 %s344, 114
          %s2460 = sld [smem:[#allocation2 + %s2459]]
          %v2461 = vstv %s2460
          %v2462 = vmul.f32 %v313, %v2461
          %v2463 = vmul.f32 %v314, %v2461
          %v2464 = vmul.f32 %v315, %v2461
          %2468 = vrot.lane.b32.xlu0 %v2462, 124
          %v2469 = vpop.permute.xlu0 %2468
          %2470 = vrot.lane.b32.xlu0 %v2463, 124
          %v2471 = vpop.permute.xlu0 %2470
          %2472 = vrot.lane.b32.xlu0 %v2464, 124
          %v2473 = vpop.permute.xlu0 %2472
          %v2477 = vadd.f32 %v2456, %v2469
          %v2478 = vadd.f32 %v2457, %v2471
          %v2479 = vadd.f32 %v2458, %v2473
          %s2480 = sadd.s32 %s344, 115
          %s2481 = sld [smem:[#allocation2 + %s2480]]
          %v2482 = vstv %s2481
          %v2483 = vmul.f32 %v316, %v2482
          %v2484 = vmul.f32 %v317, %v2482
          %v2485 = vmul.f32 %v318, %v2482
          %v2486 = vadd.f32 %v2477, %v2483
          %v2487 = vadd.f32 %v2478, %v2484
          %v2488 = vadd.f32 %v2479, %v2485
          %s2489 = sadd.s32 %s344, 116
          %s2490 = sld [smem:[#allocation2 + %s2489]]
          %v2491 = vstv %s2490
          %v2492 = vmul.f32 %v316, %v2491
          %v2493 = vmul.f32 %v317, %v2491
          %v2494 = vmul.f32 %v318, %v2491
          %2498 = vrot.lane.b32.xlu0 %v2492, 127
          %v2499 = vpop.permute.xlu0 %2498
          %2500 = vrot.lane.b32.xlu0 %v2493, 127
          %v2501 = vpop.permute.xlu0 %2500
          %2502 = vrot.lane.b32.xlu0 %v2494, 127
          %v2503 = vpop.permute.xlu0 %2502
          %v2507 = vadd.f32 %v2486, %v2499
          %v2508 = vadd.f32 %v2487, %v2501
          %v2509 = vadd.f32 %v2488, %v2503
          %s2510 = sadd.s32 %s344, 117
          %s2511 = sld [smem:[#allocation2 + %s2510]]
          %v2512 = vstv %s2511
          %v2513 = vmul.f32 %v316, %v2512
          %v2514 = vmul.f32 %v317, %v2512
          %v2515 = vmul.f32 %v318, %v2512
          %2519 = vrot.lane.b32.xlu0 %v2513, 126
          %v2520 = vpop.permute.xlu0 %2519
          %2521 = vrot.lane.b32.xlu0 %v2514, 126
          %v2522 = vpop.permute.xlu0 %2521
          %2523 = vrot.lane.b32.xlu0 %v2515, 126
          %v2524 = vpop.permute.xlu0 %2523
          %v2528 = vadd.f32 %v2507, %v2520
          %v2529 = vadd.f32 %v2508, %v2522
          %v2530 = vadd.f32 %v2509, %v2524
          %s2531 = sadd.s32 %s344, 118
          %s2532 = sld [smem:[#allocation2 + %s2531]]
          %v2533 = vstv %s2532
          %v2534 = vmul.f32 %v316, %v2533
          %v2535 = vmul.f32 %v317, %v2533
          %v2536 = vmul.f32 %v318, %v2533
          %2540 = vrot.lane.b32.xlu0 %v2534, 125
          %v2541 = vpop.permute.xlu0 %2540
          %2542 = vrot.lane.b32.xlu0 %v2535, 125
          %v2543 = vpop.permute.xlu0 %2542
          %2544 = vrot.lane.b32.xlu0 %v2536, 125
          %v2545 = vpop.permute.xlu0 %2544
          %v2549 = vadd.f32 %v2528, %v2541
          %v2550 = vadd.f32 %v2529, %v2543
          %v2551 = vadd.f32 %v2530, %v2545
          %s2552 = sadd.s32 %s344, 119
          %s2553 = sld [smem:[#allocation2 + %s2552]]
          %v2554 = vstv %s2553
          %v2555 = vmul.f32 %v316, %v2554
          %v2556 = vmul.f32 %v317, %v2554
          %v2557 = vmul.f32 %v318, %v2554
          %2561 = vrot.lane.b32.xlu0 %v2555, 124
          %v2562 = vpop.permute.xlu0 %2561
          %2563 = vrot.lane.b32.xlu0 %v2556, 124
          %v2564 = vpop.permute.xlu0 %2563
          %2565 = vrot.lane.b32.xlu0 %v2557, 124
          %v2566 = vpop.permute.xlu0 %2565
          %v2570 = vadd.f32 %v2549, %v2562
          %v2571 = vadd.f32 %v2550, %v2564
          %v2572 = vadd.f32 %v2551, %v2566
          %s2573 = sadd.s32 %s344, 120
          %s2574 = sld [smem:[#allocation2 + %s2573]]
          %v2575 = vstv %s2574
          %v2576 = vmul.f32 %v319, %v2575
          %v2577 = vmul.f32 %v320, %v2575
          %v2578 = vmul.f32 %v321, %v2575
          %v2579 = vadd.f32 %v2570, %v2576
          %v2580 = vadd.f32 %v2571, %v2577
          %v2581 = vadd.f32 %v2572, %v2578
          %s2582 = sadd.s32 %s344, 121
          %s2583 = sld [smem:[#allocation2 + %s2582]]
          %v2584 = vstv %s2583
          %v2585 = vmul.f32 %v319, %v2584
          %v2586 = vmul.f32 %v320, %v2584
          %v2587 = vmul.f32 %v321, %v2584
          %2591 = vrot.lane.b32.xlu0 %v2585, 127
          %v2592 = vpop.permute.xlu0 %2591
          %2593 = vrot.lane.b32.xlu0 %v2586, 127
          %v2594 = vpop.permute.xlu0 %2593
          %2595 = vrot.lane.b32.xlu0 %v2587, 127
          %v2596 = vpop.permute.xlu0 %2595
          %v2600 = vadd.f32 %v2579, %v2592
          %v2601 = vadd.f32 %v2580, %v2594
          %v2602 = vadd.f32 %v2581, %v2596
          %s2603 = sadd.s32 %s344, 122
          %s2604 = sld [smem:[#allocation2 + %s2603]]
          %v2605 = vstv %s2604
          %v2606 = vmul.f32 %v319, %v2605
          %v2607 = vmul.f32 %v320, %v2605
          %v2608 = vmul.f32 %v321, %v2605
          %2612 = vrot.lane.b32.xlu0 %v2606, 126
          %v2613 = vpop.permute.xlu0 %2612
          %2614 = vrot.lane.b32.xlu0 %v2607, 126
          %v2615 = vpop.permute.xlu0 %2614
          %2616 = vrot.lane.b32.xlu0 %v2608, 126
          %v2617 = vpop.permute.xlu0 %2616
          %v2621 = vadd.f32 %v2600, %v2613
          %v2622 = vadd.f32 %v2601, %v2615
          %v2623 = vadd.f32 %v2602, %v2617
          %s2624 = sadd.s32 %s344, 123
          %s2625 = sld [smem:[#allocation2 + %s2624]]
          %v2626 = vstv %s2625
          %v2627 = vmul.f32 %v319, %v2626
          %v2628 = vmul.f32 %v320, %v2626
          %v2629 = vmul.f32 %v321, %v2626
          %2633 = vrot.lane.b32.xlu0 %v2627, 125
          %v2634 = vpop.permute.xlu0 %2633
          %2635 = vrot.lane.b32.xlu0 %v2628, 125
          %v2636 = vpop.permute.xlu0 %2635
          %2637 = vrot.lane.b32.xlu0 %v2629, 125
          %v2638 = vpop.permute.xlu0 %2637
          %v2642 = vadd.f32 %v2621, %v2634
          %v2643 = vadd.f32 %v2622, %v2636
          %v2644 = vadd.f32 %v2623, %v2638
          %s2645 = sadd.s32 %s344, 124
          %s2646 = sld [smem:[#allocation2 + %s2645]]
          %v2647 = vstv %s2646
          %v2648 = vmul.f32 %v319, %v2647
          %v2649 = vmul.f32 %v320, %v2647
          %v2650 = vmul.f32 %v321, %v2647
          %2654 = vrot.lane.b32.xlu0 %v2648, 124
          %v2655 = vpop.permute.xlu0 %2654
          %2656 = vrot.lane.b32.xlu0 %v2649, 124
          %v2657 = vpop.permute.xlu0 %2656
          %2658 = vrot.lane.b32.xlu0 %v2650, 124
          %v2659 = vpop.permute.xlu0 %2658
          %v2663 = vadd.f32 %v2642, %v2655
          %v2664 = vadd.f32 %v2643, %v2657
          %v2665 = vadd.f32 %v2644, %v2659
          %s2666 = sadd.s32 %s344, 125
          %s2667 = sld [smem:[#allocation2 + %s2666]]
          %v2668 = vstv %s2667
          %v2669 = vmul.f32 %v323, %v2668
          %v2670 = vmul.f32 %v324, %v2668
          %v2671 = vmul.f32 %v325, %v2668
          %v2672 = vadd.f32 %v2663, %v2669
          %v2673 = vadd.f32 %v2664, %v2670
          %v2674 = vadd.f32 %v2665, %v2671
          %s2675 = sadd.s32 %s344, 126
          %s2676 = sld [smem:[#allocation2 + %s2675]]
          %v2677 = vstv %s2676
          %v2678 = vmul.f32 %v323, %v2677
          %v2679 = vmul.f32 %v324, %v2677
          %v2680 = vmul.f32 %v325, %v2677
          %2684 = vrot.lane.b32.xlu0 %v2678, 127
          %v2685 = vpop.permute.xlu0 %2684
          %2686 = vrot.lane.b32.xlu0 %v2679, 127
          %v2687 = vpop.permute.xlu0 %2686
          %2688 = vrot.lane.b32.xlu0 %v2680, 127
          %v2689 = vpop.permute.xlu0 %2688
          %v2693 = vadd.f32 %v2672, %v2685
          %v2694 = vadd.f32 %v2673, %v2687
          %v2695 = vadd.f32 %v2674, %v2689
          %s2696 = sadd.s32 %s344, 127
          %s2697 = sld [smem:[#allocation2 + %s2696]]
          %v2698 = vstv %s2697
          %v2699 = vmul.f32 %v323, %v2698
          %v2700 = vmul.f32 %v324, %v2698
          %v2701 = vmul.f32 %v325, %v2698
          %2705 = vrot.lane.b32.xlu0 %v2699, 126
          %v2706 = vpop.permute.xlu0 %2705
          %2707 = vrot.lane.b32.xlu0 %v2700, 126
          %v2708 = vpop.permute.xlu0 %2707
          %2709 = vrot.lane.b32.xlu0 %v2701, 126
          %v2710 = vpop.permute.xlu0 %2709
          %v2714 = vadd.f32 %v2693, %v2706
          %v2715 = vadd.f32 %v2694, %v2708
          %v2716 = vadd.f32 %v2695, %v2710
          %s2717 = sadd.s32 %s344, 128
          %s2718 = sld [smem:[#allocation2 + %s2717]]
          %v2719 = vstv %s2718
          %v2720 = vmul.f32 %v323, %v2719
          %v2721 = vmul.f32 %v324, %v2719
          %v2722 = vmul.f32 %v325, %v2719
          %2726 = vrot.lane.b32.xlu0 %v2720, 125
          %v2727 = vpop.permute.xlu0 %2726
          %2728 = vrot.lane.b32.xlu0 %v2721, 125
          %v2729 = vpop.permute.xlu0 %2728
          %2730 = vrot.lane.b32.xlu0 %v2722, 125
          %v2731 = vpop.permute.xlu0 %2730
          %v2735 = vadd.f32 %v2714, %v2727
          %v2736 = vadd.f32 %v2715, %v2729
          %v2737 = vadd.f32 %v2716, %v2731
          %s2738 = sadd.s32 %s344, 129
          %s2739 = sld [smem:[#allocation2 + %s2738]]
          %v2740 = vstv %s2739
          %v2741 = vmul.f32 %v323, %v2740
          %v2742 = vmul.f32 %v324, %v2740
          %v2743 = vmul.f32 %v325, %v2740
          %2747 = vrot.lane.b32.xlu0 %v2741, 124
          %v2748 = vpop.permute.xlu0 %2747
          %2749 = vrot.lane.b32.xlu0 %v2742, 124
          %v2750 = vpop.permute.xlu0 %2749
          %2751 = vrot.lane.b32.xlu0 %v2743, 124
          %v2752 = vpop.permute.xlu0 %2751
          %v2756 = vadd.f32 %v2735, %v2748
          %v2757 = vadd.f32 %v2736, %v2750
          %v2758 = vadd.f32 %v2737, %v2752
          %s2759 = sadd.s32 %s344, 130
          %s2760 = sld [smem:[#allocation2 + %s2759]]
          %v2761 = vstv %s2760
          %v2762 = vmul.f32 %v326, %v2761
          %v2763 = vmul.f32 %v327, %v2761
          %v2764 = vmul.f32 %v328, %v2761
          %v2765 = vadd.f32 %v2756, %v2762
          %v2766 = vadd.f32 %v2757, %v2763
          %v2767 = vadd.f32 %v2758, %v2764
          %s2768 = sadd.s32 %s344, 131
          %s2769 = sld [smem:[#allocation2 + %s2768]]
          %v2770 = vstv %s2769
          %v2771 = vmul.f32 %v326, %v2770
          %v2772 = vmul.f32 %v327, %v2770
          %v2773 = vmul.f32 %v328, %v2770
          %2777 = vrot.lane.b32.xlu0 %v2771, 127
          %v2778 = vpop.permute.xlu0 %2777
          %2779 = vrot.lane.b32.xlu0 %v2772, 127
          %v2780 = vpop.permute.xlu0 %2779
          %2781 = vrot.lane.b32.xlu0 %v2773, 127
          %v2782 = vpop.permute.xlu0 %2781
          %v2786 = vadd.f32 %v2765, %v2778
          %v2787 = vadd.f32 %v2766, %v2780
          %v2788 = vadd.f32 %v2767, %v2782
          %s2789 = sadd.s32 %s344, 132
          %s2790 = sld [smem:[#allocation2 + %s2789]]
          %v2791 = vstv %s2790
          %v2792 = vmul.f32 %v326, %v2791
          %v2793 = vmul.f32 %v327, %v2791
          %v2794 = vmul.f32 %v328, %v2791
          %2798 = vrot.lane.b32.xlu0 %v2792, 126
          %v2799 = vpop.permute.xlu0 %2798
          %2800 = vrot.lane.b32.xlu0 %v2793, 126
          %v2801 = vpop.permute.xlu0 %2800
          %2802 = vrot.lane.b32.xlu0 %v2794, 126
          %v2803 = vpop.permute.xlu0 %2802
          %v2807 = vadd.f32 %v2786, %v2799
          %v2808 = vadd.f32 %v2787, %v2801
          %v2809 = vadd.f32 %v2788, %v2803
          %s2810 = sadd.s32 %s344, 133
          %s2811 = sld [smem:[#allocation2 + %s2810]]
          %v2812 = vstv %s2811
          %v2813 = vmul.f32 %v326, %v2812
          %v2814 = vmul.f32 %v327, %v2812
          %v2815 = vmul.f32 %v328, %v2812
          %2819 = vrot.lane.b32.xlu0 %v2813, 125
          %v2820 = vpop.permute.xlu0 %2819
          %2821 = vrot.lane.b32.xlu0 %v2814, 125
          %v2822 = vpop.permute.xlu0 %2821
          %2823 = vrot.lane.b32.xlu0 %v2815, 125
          %v2824 = vpop.permute.xlu0 %2823
          %v2828 = vadd.f32 %v2807, %v2820
          %v2829 = vadd.f32 %v2808, %v2822
          %v2830 = vadd.f32 %v2809, %v2824
          %s2831 = sadd.s32 %s344, 134
          %s2832 = sld [smem:[#allocation2 + %s2831]]
          %v2833 = vstv %s2832
          %v2834 = vmul.f32 %v326, %v2833
          %v2835 = vmul.f32 %v327, %v2833
          %v2836 = vmul.f32 %v328, %v2833
          %2840 = vrot.lane.b32.xlu0 %v2834, 124
          %v2841 = vpop.permute.xlu0 %2840
          %2842 = vrot.lane.b32.xlu0 %v2835, 124
          %v2843 = vpop.permute.xlu0 %2842
          %2844 = vrot.lane.b32.xlu0 %v2836, 124
          %v2845 = vpop.permute.xlu0 %2844
          %v2849 = vadd.f32 %v2828, %v2841
          %v2850 = vadd.f32 %v2829, %v2843
          %v2851 = vadd.f32 %v2830, %v2845
          %s2852 = sadd.s32 %s344, 135
          %s2853 = sld [smem:[#allocation2 + %s2852]]
          %v2854 = vstv %s2853
          %v2855 = vmul.f32 %v329, %v2854
          %v2856 = vmul.f32 %v330, %v2854
          %v2857 = vmul.f32 %v331, %v2854
          %v2858 = vadd.f32 %v2849, %v2855
          %v2859 = vadd.f32 %v2850, %v2856
          %v2860 = vadd.f32 %v2851, %v2857
          %s2861 = sadd.s32 %s344, 136
          %s2862 = sld [smem:[#allocation2 + %s2861]]
          %v2863 = vstv %s2862
          %v2864 = vmul.f32 %v329, %v2863
          %v2865 = vmul.f32 %v330, %v2863
          %v2866 = vmul.f32 %v331, %v2863
          %2870 = vrot.lane.b32.xlu0 %v2864, 127
          %v2871 = vpop.permute.xlu0 %2870
          %2872 = vrot.lane.b32.xlu0 %v2865, 127
          %v2873 = vpop.permute.xlu0 %2872
          %2874 = vrot.lane.b32.xlu0 %v2866, 127
          %v2875 = vpop.permute.xlu0 %2874
          %v2879 = vadd.f32 %v2858, %v2871
          %v2880 = vadd.f32 %v2859, %v2873
          %v2881 = vadd.f32 %v2860, %v2875
          %s2882 = sadd.s32 %s344, 137
          %s2883 = sld [smem:[#allocation2 + %s2882]]
          %v2884 = vstv %s2883
          %v2885 = vmul.f32 %v329, %v2884
          %v2886 = vmul.f32 %v330, %v2884
          %v2887 = vmul.f32 %v331, %v2884
          %2891 = vrot.lane.b32.xlu0 %v2885, 126
          %v2892 = vpop.permute.xlu0 %2891
          %2893 = vrot.lane.b32.xlu0 %v2886, 126
          %v2894 = vpop.permute.xlu0 %2893
          %2895 = vrot.lane.b32.xlu0 %v2887, 126
          %v2896 = vpop.permute.xlu0 %2895
          %v2900 = vadd.f32 %v2879, %v2892
          %v2901 = vadd.f32 %v2880, %v2894
          %v2902 = vadd.f32 %v2881, %v2896
          %s2903 = sadd.s32 %s344, 138
          %s2904 = sld [smem:[#allocation2 + %s2903]]
          %v2905 = vstv %s2904
          %v2906 = vmul.f32 %v329, %v2905
          %v2907 = vmul.f32 %v330, %v2905
          %v2908 = vmul.f32 %v331, %v2905
          %2912 = vrot.lane.b32.xlu0 %v2906, 125
          %v2913 = vpop.permute.xlu0 %2912
          %2914 = vrot.lane.b32.xlu0 %v2907, 125
          %v2915 = vpop.permute.xlu0 %2914
          %2916 = vrot.lane.b32.xlu0 %v2908, 125
          %v2917 = vpop.permute.xlu0 %2916
          %v2921 = vadd.f32 %v2900, %v2913
          %v2922 = vadd.f32 %v2901, %v2915
          %v2923 = vadd.f32 %v2902, %v2917
          %s2924 = sadd.s32 %s344, 139
          %s2925 = sld [smem:[#allocation2 + %s2924]]
          %v2926 = vstv %s2925
          %v2927 = vmul.f32 %v329, %v2926
          %v2928 = vmul.f32 %v330, %v2926
          %v2929 = vmul.f32 %v331, %v2926
          %2933 = vrot.lane.b32.xlu0 %v2927, 124
          %v2934 = vpop.permute.xlu0 %2933
          %2935 = vrot.lane.b32.xlu0 %v2928, 124
          %v2936 = vpop.permute.xlu0 %2935
          %2937 = vrot.lane.b32.xlu0 %v2929, 124
          %v2938 = vpop.permute.xlu0 %2937
          %v2942 = vadd.f32 %v2921, %v2934
          %v2943 = vadd.f32 %v2922, %v2936
          %v2944 = vadd.f32 %v2923, %v2938
          %s2945 = sadd.s32 %s344, 140
          %s2946 = sld [smem:[#allocation2 + %s2945]]
          %v2947 = vstv %s2946
          %v2948 = vmul.f32 %v332, %v2947
          %v2949 = vmul.f32 %v333, %v2947
          %v2950 = vmul.f32 %v334, %v2947
          %v2951 = vadd.f32 %v2942, %v2948
          %v2952 = vadd.f32 %v2943, %v2949
          %v2953 = vadd.f32 %v2944, %v2950
          %s2954 = sadd.s32 %s344, 141
          %s2955 = sld [smem:[#allocation2 + %s2954]]
          %v2956 = vstv %s2955
          %v2957 = vmul.f32 %v332, %v2956
          %v2958 = vmul.f32 %v333, %v2956
          %v2959 = vmul.f32 %v334, %v2956
          %2963 = vrot.lane.b32.xlu0 %v2957, 127
          %v2964 = vpop.permute.xlu0 %2963
          %2965 = vrot.lane.b32.xlu0 %v2958, 127
          %v2966 = vpop.permute.xlu0 %2965
          %2967 = vrot.lane.b32.xlu0 %v2959, 127
          %v2968 = vpop.permute.xlu0 %2967
          %v2972 = vadd.f32 %v2951, %v2964
          %v2973 = vadd.f32 %v2952, %v2966
          %v2974 = vadd.f32 %v2953, %v2968
          %s2975 = sadd.s32 %s344, 142
          %s2976 = sld [smem:[#allocation2 + %s2975]]
          %v2977 = vstv %s2976
          %v2978 = vmul.f32 %v332, %v2977
          %v2979 = vmul.f32 %v333, %v2977
          %v2980 = vmul.f32 %v334, %v2977
          %2984 = vrot.lane.b32.xlu0 %v2978, 126
          %v2985 = vpop.permute.xlu0 %2984
          %2986 = vrot.lane.b32.xlu0 %v2979, 126
          %v2987 = vpop.permute.xlu0 %2986
          %2988 = vrot.lane.b32.xlu0 %v2980, 126
          %v2989 = vpop.permute.xlu0 %2988
          %v2993 = vadd.f32 %v2972, %v2985
          %v2994 = vadd.f32 %v2973, %v2987
          %v2995 = vadd.f32 %v2974, %v2989
          %s2996 = sadd.s32 %s344, 143
          %s2997 = sld [smem:[#allocation2 + %s2996]]
          %v2998 = vstv %s2997
          %v2999 = vmul.f32 %v332, %v2998
          %v3000 = vmul.f32 %v333, %v2998
          %v3001 = vmul.f32 %v334, %v2998
          %3005 = vrot.lane.b32.xlu0 %v2999, 125
          %v3006 = vpop.permute.xlu0 %3005
          %3007 = vrot.lane.b32.xlu0 %v3000, 125
          %v3008 = vpop.permute.xlu0 %3007
          %3009 = vrot.lane.b32.xlu0 %v3001, 125
          %v3010 = vpop.permute.xlu0 %3009
          %v3014 = vadd.f32 %v2993, %v3006
          %v3015 = vadd.f32 %v2994, %v3008
          %v3016 = vadd.f32 %v2995, %v3010
          %s3017 = sadd.s32 %s344, 144
          %s3018 = sld [smem:[#allocation2 + %s3017]]
          %v3019 = vstv %s3018
          %v3020 = vmul.f32 %v332, %v3019
          %v3021 = vmul.f32 %v333, %v3019
          %v3022 = vmul.f32 %v334, %v3019
          %3026 = vrot.lane.b32.xlu0 %v3020, 124
          %v3027 = vpop.permute.xlu0 %3026
          %3028 = vrot.lane.b32.xlu0 %v3021, 124
          %v3029 = vpop.permute.xlu0 %3028
          %3030 = vrot.lane.b32.xlu0 %v3022, 124
          %v3031 = vpop.permute.xlu0 %3030
          %v3035 = vadd.f32 %v3014, %v3027
          %v3036 = vadd.f32 %v3015, %v3029
          %v3037 = vadd.f32 %v3016, %v3031
          %s3038 = sadd.s32 %s344, 145
          %s3039 = sld [smem:[#allocation2 + %s3038]]
          %v3040 = vstv %s3039
          %v3041 = vmul.f32 %v335, %v3040
          %v3042 = vmul.f32 %v336, %v3040
          %v3043 = vmul.f32 %v337, %v3040
          %v3044 = vadd.f32 %v3035, %v3041
          %v3045 = vadd.f32 %v3036, %v3042
          %v3046 = vadd.f32 %v3037, %v3043
          %s3047 = sadd.s32 %s344, 146
          %s3048 = sld [smem:[#allocation2 + %s3047]]
          %v3049 = vstv %s3048
          %v3050 = vmul.f32 %v335, %v3049
          %v3051 = vmul.f32 %v336, %v3049
          %v3052 = vmul.f32 %v337, %v3049
          %3056 = vrot.lane.b32.xlu0 %v3050, 127
          %v3057 = vpop.permute.xlu0 %3056
          %3058 = vrot.lane.b32.xlu0 %v3051, 127
          %v3059 = vpop.permute.xlu0 %3058
          %3060 = vrot.lane.b32.xlu0 %v3052, 127
          %v3061 = vpop.permute.xlu0 %3060
          %v3065 = vadd.f32 %v3044, %v3057
          %v3066 = vadd.f32 %v3045, %v3059
          %v3067 = vadd.f32 %v3046, %v3061
          %s3068 = sadd.s32 %s344, 147
          %s3069 = sld [smem:[#allocation2 + %s3068]]
          %v3070 = vstv %s3069
          %v3071 = vmul.f32 %v335, %v3070
          %v3072 = vmul.f32 %v336, %v3070
          %v3073 = vmul.f32 %v337, %v3070
          %3077 = vrot.lane.b32.xlu0 %v3071, 126
          %v3078 = vpop.permute.xlu0 %3077
          %3079 = vrot.lane.b32.xlu0 %v3072, 126
          %v3080 = vpop.permute.xlu0 %3079
          %3081 = vrot.lane.b32.xlu0 %v3073, 126
          %v3082 = vpop.permute.xlu0 %3081
          %v3086 = vadd.f32 %v3065, %v3078
          %v3087 = vadd.f32 %v3066, %v3080
          %v3088 = vadd.f32 %v3067, %v3082
          %s3089 = sadd.s32 %s344, 148
          %s3090 = sld [smem:[#allocation2 + %s3089]]
          %v3091 = vstv %s3090
          %v3092 = vmul.f32 %v335, %v3091
          %v3093 = vmul.f32 %v336, %v3091
          %v3094 = vmul.f32 %v337, %v3091
          %3098 = vrot.lane.b32.xlu0 %v3092, 125
          %v3099 = vpop.permute.xlu0 %3098
          %3100 = vrot.lane.b32.xlu0 %v3093, 125
          %v3101 = vpop.permute.xlu0 %3100
          %3102 = vrot.lane.b32.xlu0 %v3094, 125
          %v3103 = vpop.permute.xlu0 %3102
          %v3107 = vadd.f32 %v3086, %v3099
          %v3108 = vadd.f32 %v3087, %v3101
          %v3109 = vadd.f32 %v3088, %v3103
          %s3110 = sadd.s32 %s344, 149
          %s3111 = sld [smem:[#allocation2 + %s3110]]
          %v3112 = vstv %s3111
          %v3113 = vmul.f32 %v335, %v3112
          %v3114 = vmul.f32 %v336, %v3112
          %v3115 = vmul.f32 %v337, %v3112
          %3119 = vrot.lane.b32.xlu0 %v3113, 124
          %v3120 = vpop.permute.xlu0 %3119
          %3121 = vrot.lane.b32.xlu0 %v3114, 124
          %v3122 = vpop.permute.xlu0 %3121
          %3123 = vrot.lane.b32.xlu0 %v3115, 124
          %v3124 = vpop.permute.xlu0 %3123
          %v3128 = vadd.f32 %v3107, %v3120
          %v3129 = vadd.f32 %v3108, %v3122
          %v3130 = vadd.f32 %v3109, %v3124
          %s3131 = sld [smem:[#allocation5 + %s339]]
          %v3132 = vstv %s3131
          %v3133 = vadd.f32 %v3128, %v3132
          %v3134 = vadd.f32 %v3129, %v3132
          %v3135 = vadd.f32 %v3130, %v3132
          %v3136 = vmax.f32 %v3133, 0.0
          %v3137 = vmax.f32 %v3134, 0.0
          %v3138 = vmax.f32 %v3135, 0.0
          %vm3139 = vcmask 343040
          %v3141 = vsel %vm3139, %v3136, 0
          %v3144 = vsel %vm3139, %v3137, 0
          %v3147 = vsel %vm3139, %v3138, 0
          %vm3149 = vcmask 1041408
          %v3151 = vsel %vm3149, %v217, 0
          %3153 = vmatprep.subr.mxu0 0.0
          %3154 = vmatpush1.msra.mxu0 %v212
          %3155 = vmatprep.subr.mxu0 0.0
          %3156 = vmatpush1.msra.mxu0 %v213
          %3157 = vmatprep.subr.mxu0 0.0
          %3158 = vmatpush1.msra.mxu0 %v214
          %3159 = vmatprep.subr.mxu0 0.0
          %3160 = vmatpush1.msra.mxu0 %v215
          %3161 = vmatprep.subr.mxu0 0.0
          %3162 = vmatpush1.msra.mxu0 %v216
          %3163 = vmatprep.subr.mxu0 0.0
          %3164 = vmatpush1.msra.mxu0 %v3151
          %3165 = vmatprep.subr.mxu0 0.0
          %3166 = vmatpush1.msra.mxu0 0.0
          %3167 = vmatprep.subr.mxu0 0.0
          %3168 = vmatpush1.msra.mxu0 0.0
          %3169 = vmatprep.subr.mxu0 0.0
          %3170 = vmatpush1.msra.mxu0 0.0
          %3171 = vmatprep.subr.mxu0 0.0
          %3172 = vmatpush1.msra.mxu0 0.0
          %3173 = vmatprep.subr.mxu0 0.0
          %3174 = vmatpush1.msra.mxu0 0.0
          %3175 = vmatprep.subr.mxu0 0.0
          %3176 = vmatpush1.msra.mxu0 0.0
          %3177 = vmatprep.subr.mxu0 0.0
          %3178 = vmatpush1.msra.mxu0 0.0
          %3179 = vmatprep.subr.mxu0 0.0
          %3180 = vmatpush1.msra.mxu0 0.0
          %3181 = vmatprep.subr.mxu0 0.0
          %3182 = vmatpush1.msra.mxu0 0.0
          %3183 = vmatprep.subr.mxu0 0.0
          %3184 = vmatpush1.msra.mxu0 0.0
          %3185 = vmatprep.subr.mxu0 0.0
          %3186 = vmatpush1.msra.mxu0 0.0
          %3187 = vmatprep.subr.mxu0 0.0
          %3188 = vmatpush1.msra.mxu0 0.0
          %3189 = vmatprep.subr.mxu0 0.0
          %3190 = vmatpush1.msra.mxu0 0.0
          %3191 = vmatprep.subr.mxu0 0.0
          %3192 = vmatpush1.msra.mxu0 0.0
          %3193 = vmatprep.subr.mxu0 0.0
          %3194 = vmatpush1.msra.mxu0 0.0
          %3195 = vmatprep.subr.mxu0 0.0
          %3196 = vmatpush1.msra.mxu0 0.0
          %3197 = vmatprep.subr.mxu0 0.0
          %3198 = vmatpush1.msra.mxu0 0.0
          %3199 = vmatprep.subr.mxu0 0.0
          %3200 = vmatpush1.msra.mxu0 0.0
          %3201 = vmatprep.subr.mxu0 0.0
          %3202 = vmatpush1.msra.mxu0 0.0
          %3203 = vmatprep.subr.mxu0 0.0
          %3204 = vmatpush1.msra.mxu0 0.0
          %3205 = vmatprep.subr.mxu0 0.0
          %3206 = vmatpush1.msra.mxu0 0.0
          %3207 = vmatprep.subr.mxu0 0.0
          %3208 = vmatpush1.msra.mxu0 0.0
          %3209 = vmatprep.subr.mxu0 0.0
          %3210 = vmatpush1.msra.mxu0 0.0
          %3211 = vmatprep.subr.mxu0 0.0
          %3212 = vmatpush1.msra.mxu0 0.0
          %3213 = vmatprep.subr.mxu0 0.0
          %3214 = vmatpush1.msra.mxu0 0.0
          %3215 = vmatprep.subr.mxu0 0.0
          %3216 = vmatpush1.msra.mxu0 0.0
          %3217 = vmatprep.mubr.f32.mxu0 0.0
          %3218 = vmatmul.mubr.f32.gmra.mrb[0].mxu0 %v3141
          %v3219 = vpop.f32.mrb[0].mxu0
          %v3220 = vadd.f32 0.0, %v3219
          %v3221 = vpop.f32.mrb[0].mxu0
          %3222 = vmatprep.mubr.f32.mxu0 0.0
          %3223 = vmatmul.mubr.f32.gmra.mrb[0].mxu0 %v3144
          %v3224 = vpop.f32.mrb[0].mxu0
          %v3225 = vadd.f32 0.0, %v3224
          %v3226 = vpop.f32.mrb[0].mxu0
          %3227 = vmatprep.mubr.f32.mxu0 0.0
          %3228 = vmatmul.mubr.f32.gmra.mrb[0].mxu0 %v3147
          %v3229 = vpop.f32.mrb[0].mxu0
          %v3230 = vadd.f32 0.0, %v3229
          %v3231 = vpop.f32.mrb[0].mxu0
          %3232 = vdwg.mxu0
          %v3234 = vsel %vm3149, %v230, 0
          %3236 = vmatprep.subr.mxu0 0.0
          %3237 = vmatpush1.msra.mxu0 %v225
          %3238 = vmatprep.subr.mxu0 0.0
          %3239 = vmatpush1.msra.mxu0 %v226
          %3240 = vmatprep.subr.mxu0 0.0
          %3241 = vmatpush1.msra.mxu0 %v227
          %3242 = vmatprep.subr.mxu0 0.0
          %3243 = vmatpush1.msra.mxu0 %v228
          %3244 = vmatprep.subr.mxu0 0.0
          %3245 = vmatpush1.msra.mxu0 %v229
          %3246 = vmatprep.subr.mxu0 0.0
          %3247 = vmatpush1.msra.mxu0 %v3234
          %3248 = vmatprep.subr.mxu0 0.0
          %3249 = vmatpush1.msra.mxu0 0.0
          %3250 = vmatprep.subr.mxu0 0.0
          %3251 = vmatpush1.msra.mxu0 0.0
          %3252 = vmatprep.subr.mxu0 0.0
          %3253 = vmatpush1.msra.mxu0 0.0
          %3254 = vmatprep.subr.mxu0 0.0
          %3255 = vmatpush1.msra.mxu0 0.0
          %3256 = vmatprep.subr.mxu0 0.0
          %3257 = vmatpush1.msra.mxu0 0.0
          %3258 = vmatprep.subr.mxu0 0.0
          %3259 = vmatpush1.msra.mxu0 0.0
          %3260 = vmatprep.subr.mxu0 0.0
          %3261 = vmatpush1.msra.mxu0 0.0
          %3262 = vmatprep.subr.mxu0 0.0
          %3263 = vmatpush1.msra.mxu0 0.0
          %3264 = vmatprep.subr.mxu0 0.0
          %3265 = vmatpush1.msra.mxu0 0.0
          %3266 = vmatprep.subr.mxu0 0.0
          %3267 = vmatpush1.msra.mxu0 0.0
          %3268 = vmatprep.subr.mxu0 0.0
          %3269 = vmatpush1.msra.mxu0 0.0
          %3270 = vmatprep.subr.mxu0 0.0
          %3271 = vmatpush1.msra.mxu0 0.0
          %3272 = vmatprep.subr.mxu0 0.0
          %3273 = vmatpush1.msra.mxu0 0.0
          %3274 = vmatprep.subr.mxu0 0.0
          %3275 = vmatpush1.msra.mxu0 0.0
          %3276 = vmatprep.subr.mxu0 0.0
          %3277 = vmatpush1.msra.mxu0 0.0
          %3278 = vmatprep.subr.mxu0 0.0
          %3279 = vmatpush1.msra.mxu0 0.0
          %3280 = vmatprep.subr.mxu0 0.0
          %3281 = vmatpush1.msra.mxu0 0.0
          %3282 = vmatprep.subr.mxu0 0.0
          %3283 = vmatpush1.msra.mxu0 0.0
          %3284 = vmatprep.subr.mxu0 0.0
          %3285 = vmatpush1.msra.mxu0 0.0
          %3286 = vmatprep.subr.mxu0 0.0
          %3287 = vmatpush1.msra.mxu0 0.0
          %3288 = vmatprep.subr.mxu0 0.0
          %3289 = vmatpush1.msra.mxu0 0.0
          %3290 = vmatprep.subr.mxu0 0.0
          %3291 = vmatpush1.msra.mxu0 0.0
          %3292 = vmatprep.subr.mxu0 0.0
          %3293 = vmatpush1.msra.mxu0 0.0
          %3294 = vmatprep.subr.mxu0 0.0
          %3295 = vmatpush1.msra.mxu0 0.0
          %3296 = vmatprep.subr.mxu0 0.0
          %3297 = vmatpush1.msra.mxu0 0.0
          %3298 = vmatprep.subr.mxu0 0.0
          %3299 = vmatpush1.msra.mxu0 0.0
          %3300 = vmatprep.mubr.f32.mxu0 0.0
          %3301 = vmatmul.mubr.f32.gmra.mrb[0].mxu0 %v3141
          %v3302 = vpop.f32.mrb[0].mxu0
          %v3303 = vadd.f32 0.0, %v3302
          %v3304 = vpop.f32.mrb[0].mxu0
          %3305 = vmatprep.mubr.f32.mxu0 0.0
          %3306 = vmatmul.mubr.f32.gmra.mrb[0].mxu0 %v3144
          %v3307 = vpop.f32.mrb[0].mxu0
          %v3308 = vadd.f32 0.0, %v3307
          %v3309 = vpop.f32.mrb[0].mxu0
          %3310 = vmatprep.mubr.f32.mxu0 0.0
          %3311 = vmatmul.mubr.f32.gmra.mrb[0].mxu0 %v3147
          %v3312 = vpop.f32.mrb[0].mxu0
          %v3313 = vadd.f32 0.0, %v3312
          %v3314 = vpop.f32.mrb[0].mxu0
          %3315 = vdwg.mxu0
          %v3316 = vmax.f32 %v3220, %v3303
          %v3317 = vmax.f32 %v3225, %v3308
          %v3318 = vmax.f32 %v3230, %v3313
          %vm3319 = vcmask 195584
          %v3321 = vsel %vm3319, %v235, 0
          %v3324 = vsel %vm3319, %v236, 0
          %3326 = vmatprep.subr.mxu0 0.0
          %3327 = vmatpush1.msra.mxu0 %v3316
          %3328 = vmatprep.subr.mxu0 0.0
          %3329 = vmatpush1.msra.mxu0 %v3317
          %3330 = vmatprep.subr.mxu0 0.0
          %3331 = vmatpush1.msra.mxu0 %v3318
          %3332 = vmatprep.subr.mxu0 0.0
          %3333 = vmatpush1.msra.mxu0 0.0
          %3334 = vmatprep.subr.mxu0 0.0
          %3335 = vmatpush1.msra.mxu0 0.0
          %3336 = vmatprep.subr.mxu0 0.0
          %3337 = vmatpush1.msra.mxu0 0.0
          %3338 = vmatprep.subr.mxu0 0.0
          %3339 = vmatpush1.msra.mxu0 0.0
          %3340 = vmatprep.subr.mxu0 0.0
          %3341 = vmatpush1.msra.mxu0 0.0
          %3342 = vmatprep.subr.mxu0 0.0
          %3343 = vmatpush1.msra.mxu0 0.0
          %3344 = vmatprep.subr.mxu0 0.0
          %3345 = vmatpush1.msra.mxu0 0.0
          %3346 = vmatprep.subr.mxu0 0.0
          %3347 = vmatpush1.msra.mxu0 0.0
          %3348 = vmatprep.subr.mxu0 0.0
          %3349 = vmatpush1.msra.mxu0 0.0
          %3350 = vmatprep.subr.mxu0 0.0
          %3351 = vmatpush1.msra.mxu0 0.0
          %3352 = vmatprep.subr.mxu0 0.0
          %3353 = vmatpush1.msra.mxu0 0.0
          %3354 = vmatprep.subr.mxu0 0.0
          %3355 = vmatpush1.msra.mxu0 0.0
          %3356 = vmatprep.subr.mxu0 0.0
          %3357 = vmatpush1.msra.mxu0 0.0
          %3358 = vmatprep.subr.mxu0 0.0
          %3359 = vmatpush1.msra.mxu0 0.0
          %3360 = vmatprep.subr.mxu0 0.0
          %3361 = vmatpush1.msra.mxu0 0.0
          %3362 = vmatprep.subr.mxu0 0.0
          %3363 = vmatpush1.msra.mxu0 0.0
          %3364 = vmatprep.subr.mxu0 0.0
          %3365 = vmatpush1.msra.mxu0 0.0
          %3366 = vmatprep.subr.mxu0 0.0
          %3367 = vmatpush1.msra.mxu0 0.0
          %3368 = vmatprep.subr.mxu0 0.0
          %3369 = vmatpush1.msra.mxu0 0.0
          %3370 = vmatprep.subr.mxu0 0.0
          %3371 = vmatpush1.msra.mxu0 0.0
          %3372 = vmatprep.subr.mxu0 0.0
          %3373 = vmatpush1.msra.mxu0 0.0
          %3374 = vmatprep.subr.mxu0 0.0
          %3375 = vmatpush1.msra.mxu0 0.0
          %3376 = vmatprep.subr.mxu0 0.0
          %3377 = vmatpush1.msra.mxu0 0.0
          %3378 = vmatprep.subr.mxu0 0.0
          %3379 = vmatpush1.msra.mxu0 0.0
          %3380 = vmatprep.subr.mxu0 0.0
          %3381 = vmatpush1.msra.mxu0 0.0
          %3382 = vmatprep.subr.mxu0 0.0
          %3383 = vmatpush1.msra.mxu0 0.0
          %3384 = vmatprep.subr.mxu0 0.0
          %3385 = vmatpush1.msra.mxu0 0.0
          %3386 = vmatprep.subr.mxu0 0.0
          %3387 = vmatpush1.msra.mxu0 0.0
          %3388 = vmatprep.subr.mxu0 0.0
          %3389 = vmatpush1.msra.mxu0 0.0
          %3390 = vmatprep.mubr.f32.mxu0 0.0
          %3391 = vmatmul.mubr.f32.gmra.mrb[0].mxu0 %v3321
          %v3392 = vpop.f32.mrb[0].mxu0
          %v3393 = vadd.f32 0.0, %v3392
          %v3394 = vpop.f32.mrb[0].mxu0
          %3395 = vmatprep.mubr.f32.mxu0 0.0
          %3396 = vmatmul.mubr.f32.gmra.mrb[0].mxu0 %v3324
          %v3397 = vpop.f32.mrb[0].mxu0
          %v3398 = vadd.f32 0.0, %v3397
          %v3399 = vpop.f32.mrb[0].mxu0
          %3400 = vdwg.mxu0
          %v3402 = vsel %vm3319, %v241, 0
          %v3405 = vsel %vm3319, %v242, 0
          %3407 = vmatprep.subr.mxu0 0.0
          %3408 = vmatpush1.msra.mxu0 %v3316
          %3409 = vmatprep.subr.mxu0 0.0
          %3410 = vmatpush1.msra.mxu0 %v3317
          %3411 = vmatprep.subr.mxu0 0.0
          %3412 = vmatpush1.msra.mxu0 %v3318
          %3413 = vmatprep.subr.mxu0 0.0
          %3414 = vmatpush1.msra.mxu0 0.0
          %3415 = vmatprep.subr.mxu0 0.0
          %3416 = vmatpush1.msra.mxu0 0.0
          %3417 = vmatprep.subr.mxu0 0.0
          %3418 = vmatpush1.msra.mxu0 0.0
          %3419 = vmatprep.subr.mxu0 0.0
          %3420 = vmatpush1.msra.mxu0 0.0
          %3421 = vmatprep.subr.mxu0 0.0
          %3422 = vmatpush1.msra.mxu0 0.0
          %3423 = vmatprep.subr.mxu0 0.0
          %3424 = vmatpush1.msra.mxu0 0.0
          %3425 = vmatprep.subr.mxu0 0.0
          %3426 = vmatpush1.msra.mxu0 0.0
          %3427 = vmatprep.subr.mxu0 0.0
          %3428 = vmatpush1.msra.mxu0 0.0
          %3429 = vmatprep.subr.mxu0 0.0
          %3430 = vmatpush1.msra.mxu0 0.0
          %3431 = vmatprep.subr.mxu0 0.0
          %3432 = vmatpush1.msra.mxu0 0.0
          %3433 = vmatprep.subr.mxu0 0.0
          %3434 = vmatpush1.msra.mxu0 0.0
          %3435 = vmatprep.subr.mxu0 0.0
          %3436 = vmatpush1.msra.mxu0 0.0
          %3437 = vmatprep.subr.mxu0 0.0
          %3438 = vmatpush1.msra.mxu0 0.0
          %3439 = vmatprep.subr.mxu0 0.0
          %3440 = vmatpush1.msra.mxu0 0.0
          %3441 = vmatprep.subr.mxu0 0.0
          %3442 = vmatpush1.msra.mxu0 0.0
          %3443 = vmatprep.subr.mxu0 0.0
          %3444 = vmatpush1.msra.mxu0 0.0
          %3445 = vmatprep.subr.mxu0 0.0
          %3446 = vmatpush1.msra.mxu0 0.0
          %3447 = vmatprep.subr.mxu0 0.0
          %3448 = vmatpush1.msra.mxu0 0.0
          %3449 = vmatprep.subr.mxu0 0.0
          %3450 = vmatpush1.msra.mxu0 0.0
          %3451 = vmatprep.subr.mxu0 0.0
          %3452 = vmatpush1.msra.mxu0 0.0
          %3453 = vmatprep.subr.mxu0 0.0
          %3454 = vmatpush1.msra.mxu0 0.0
          %3455 = vmatprep.subr.mxu0 0.0
          %3456 = vmatpush1.msra.mxu0 0.0
          %3457 = vmatprep.subr.mxu0 0.0
          %3458 = vmatpush1.msra.mxu0 0.0
          %3459 = vmatprep.subr.mxu0 0.0
          %3460 = vmatpush1.msra.mxu0 0.0
          %3461 = vmatprep.subr.mxu0 0.0
          %3462 = vmatpush1.msra.mxu0 0.0
          %3463 = vmatprep.subr.mxu0 0.0
          %3464 = vmatpush1.msra.mxu0 0.0
          %3465 = vmatprep.subr.mxu0 0.0
          %3466 = vmatpush1.msra.mxu0 0.0
          %3467 = vmatprep.subr.mxu0 0.0
          %3468 = vmatpush1.msra.mxu0 0.0
          %3469 = vmatprep.subr.mxu0 0.0
          %3470 = vmatpush1.msra.mxu0 0.0
          %3471 = vmatprep.mubr.f32.mxu0 0.0
          %3472 = vmatmul.mubr.f32.gmra.mrb[0].mxu0 %v3402
          %v3473 = vpop.f32.mrb[0].mxu0
          %v3474 = vadd.f32 0.0, %v3473
          %v3475 = vpop.f32.mrb[0].mxu0
          %3476 = vmatprep.mubr.f32.mxu0 0.0
          %3477 = vmatmul.mubr.f32.gmra.mrb[0].mxu0 %v3405
          %v3478 = vpop.f32.mrb[0].mxu0
          %v3479 = vadd.f32 0.0, %v3478
          %v3480 = vpop.f32.mrb[0].mxu0
          %3481 = vdwg.mxu0
          %v3482 = vmax.f32 %v3393, %v3474
          %v3483 = vmax.f32 %v3398, %v3479
          %s3484 = smul.u32 %s339, 16
          %s3485 = scalar_lea.vmem %s195, %s3484
          %vm3486 = vcmask 171008
          %3487 = vst.msk [vmem:[%s3485] sm:$0xff] %vm3486, %v3482
          %vm3488 = vcmask 166912
          %3489 = vst.msk [vmem:[%s3485 + $0x8] sm:$0xf] %vm3488, %v3483
        $region45: #{cnn_forward.4} parent=31 // loop_footer
          %s343 = sadd.s32 1, %s339
        $region46: #{cnn_forward.4} parent=31 // loop_footer_branch
          %338 = sbr.rel target = $region42
        $region47: #{cnn_forward.4} parent=31 // loop_exit
          _
        %p3490 = scmp.lt.s32.totalorder %s16, 1
        %s3491 = scalar_select %p3490, %s16, 1
        %s3492 = smul.addr %s3491, 32
        %s3493 = smul.addr %s3492, 8
        %s3494 = scalar_lea.vmem %s3, %s3493
        // Predicated region
        $region48: #{cnn_forward.4} parent=31 // pred_check
          %p3495 = pneg %p102
        $region49: #{cnn_forward.4} parent=31 // pred_check_branch
          %3497 = sbr.rel (%p3495) target = $region51
        $region50: #{cnn_forward.4} parent=31 // pred_region
          _
        $region51: #{cnn_forward.4} parent=31 // pred_fallthru
          _
      $region32: #{cnn_forward.4} parent=5 // pred_fallthru
        _
      %p3498 = scmp.le.s32.totalorder 2, %s11
      // Predicated region
      $region52: #{cnn_forward.4} parent=5 // pred_check
        %p3499 = pneg %p3498
      $region53: #{cnn_forward.4} parent=5 // pred_check_branch
        %3501 = sbr.rel (%p3499) target = $region55
      $region54: #{cnn_forward.4} parent=5 // pred_region
        %s3502 = ssub.s32 %s11, 2
        // Predicated region
        $region56: #{cnn_forward.4} parent=54 // pred_check
          %p3503 = pneg %p108
        $region57: #{cnn_forward.4} parent=54 // pred_check_branch
          %3505 = sbr.rel (%p3503) target = $region59
        $region58: #{cnn_forward.4} parent=54 // pred_region
          %p3506 = scmp.lt.s32.totalorder %s17, 1
          %s3507 = scalar_select %p3506, %s17, 1
          %s3508 = smul.addr %s3507, 32
          %s3509 = smul.addr %s3508, 8
          %s3510 = scalar_lea.vmem %s3, %s3509
        $region59: #{cnn_forward.4} parent=54 // pred_fallthru
          _
      $region55: #{cnn_forward.4} parent=5 // pred_fallthru
        _
    $region6: #{cnn_forward.4} parent=1 // loop_footer
      %s15 = sadd.s32 1, %s11
    $region7: #{cnn_forward.4} parent=1 // loop_footer_branch
      %10 = sbr.rel target = $region3
    $region8: #{cnn_forward.4} parent=1 // loop_exit
      _
    %3511 = vsyncpa [#allocation3], 1
    %s3512 = scalar_lea.sflag [#allocation3], 1
    %3513 = vsyncpa %s3512, 1
    %3514 = vsyncpa [#allocation4], 1
    %s3515 = scalar_lea.sflag [#allocation4], 1
    %3516 = vsyncpa %s3515, 1

// kernel: cnn_forward.5
$region0: #{cnn_forward.5}
  #allocation0 [shape = 'u32[]', space=smem, size = 0x4, offset = 0x4, fixed_abs, tag = 'smem constant byte address 0x4 - core index']
  #allocation1 [shape = 'u32[144,128]{1,0:T(1,128)}', space=vmem, size = 0x12000, scoped, tag = 'internal scratch']
  #allocation2 [shape = 'f32[1,1]{1,0:T(1,128)S(1)}', space=vmem, size = 0x200, scoped, tag = 'scoped memory for cnn_forward.5']
  %s0 = inlined_call_operand.vmem [shape: f32[2,4032], index: 0, kind: input, shape index: {}]
  %s1 = inlined_call_operand.vmem [shape: f32[4032,24], index: 1, kind: input, shape index: {}]
  %s2 = inlined_call_operand.vmem [shape: f32[1,24], index: 2, kind: input, shape index: {}]
  %s3 = inlined_call_operand.vmem [shape: f32[24,20], index: 3, kind: input, shape index: {}]
  %s4 = inlined_call_operand.vmem [shape: f32[1,20], index: 4, kind: input, shape index: {}]
  %s5 = inlined_call_operand.vmem [shape: f32[20,1], index: 5, kind: input, shape index: {}]
  %s6 = inlined_call_operand.<no memory space> [shape: f32[1,1], index: 6, kind: input, shape index: {}]
  %s7 = inlined_call_operand.vmem [shape: f32[2,1], index: 7, kind: output, shape index: {}]
  %s8 = sld [smem:[#allocation0]]
  $region38: #{cnn_forward.5} parent=0
    _
  %s10 = ssub.s32 1, %s8
  %s11 = scalar_select 0, %s10, %s8
  %v12 = vstv %s6
  %13 = vst [vmem:[#allocation2] sm:$0x1] %v12
  // Predicated region
  $region2: #{cnn_forward.5} parent=0 // pred_check
    _
  $region3: #{cnn_forward.5} parent=0 // pred_check_branch
    %15 = sbr.rel (0) target = $region5
  $region4: #{cnn_forward.5} parent=0 // pred_region
    _
  $region5: #{cnn_forward.5} parent=0 // pred_fallthru
    _
  // Predicated region
  $region6: #{cnn_forward.5} parent=0 // pred_check
    _
  $region7: #{cnn_forward.5} parent=0 // pred_check_branch
    %17 = sbr.rel (0) target = $region9
  $region8: #{cnn_forward.5} parent=0 // pred_region
    _
  $region9: #{cnn_forward.5} parent=0 // pred_fallthru
    _
  // Predicated region
  $region10: #{cnn_forward.5} parent=0 // pred_check
    _
  $region11: #{cnn_forward.5} parent=0 // pred_check_branch
    %19 = sbr.rel (0) target = $region13
  $region12: #{cnn_forward.5} parent=0 // pred_region
    _
  $region13: #{cnn_forward.5} parent=0 // pred_fallthru
    _
  // Predicated region
  $region14: #{cnn_forward.5} parent=0 // pred_check
    _
  $region15: #{cnn_forward.5} parent=0 // pred_check_branch
    %21 = sbr.rel (0) target = $region17
  $region16: #{cnn_forward.5} parent=0 // pred_region
    _
  $region17: #{cnn_forward.5} parent=0 // pred_fallthru
    _
  // Predicated region
  $region18: #{cnn_forward.5} parent=0 // pred_check
    _
  $region19: #{cnn_forward.5} parent=0 // pred_check_branch
    %23 = sbr.rel (0) target = $region21
  $region20: #{cnn_forward.5} parent=0 // pred_region
    _
  $region21: #{cnn_forward.5} parent=0 // pred_fallthru
    _
  // Predicated region
  $region22: #{cnn_forward.5} parent=0 // pred_check
    _
  $region23: #{cnn_forward.5} parent=0 // pred_check_branch
    %25 = sbr.rel (0) target = $region25
  $region24: #{cnn_forward.5} parent=0 // pred_region
    _
  $region25: #{cnn_forward.5} parent=0 // pred_fallthru
    _
  // Predicated region
  $region26: #{cnn_forward.5} parent=0 // pred_check
    _
  $region27: #{cnn_forward.5} parent=0 // pred_check_branch
    %27 = sbr.rel (0) target = $region29
  $region28: #{cnn_forward.5} parent=0 // pred_region
    _
  $region29: #{cnn_forward.5} parent=0 // pred_fallthru
    _
  %v28 = vld [vmem:[%s0] sm:$0xff]
  %v29 = vld [vmem:[%s0 + $0x8] sm:$0xff]
  %v30 = vld [vmem:[%s0 + $0x10] sm:$0xff]
  %v31 = vld [vmem:[%s0 + $0x18] sm:$0xff]
  %v32 = vld [vmem:[%s0 + $0x20] sm:$0xff]
  %v33 = vld [vmem:[%s0 + $0x28] sm:$0xff]
  %v34 = vld [vmem:[%s0 + $0x30] sm:$0xff]
  %v35 = vld [vmem:[%s0 + $0x38] sm:$0xff]
  %v36 = vld [vmem:[%s1] sm:$0xff]
  %v37 = vld [vmem:[%s1 + $0x8] sm:$0xff]
  %v38 = vld [vmem:[%s1 + $0x10] sm:$0xff]
  %v39 = vld [vmem:[%s1 + $0x18] sm:$0xff]
  %v40 = vld [vmem:[%s1 + $0x20] sm:$0xff]
  %v41 = vld [vmem:[%s1 + $0x28] sm:$0xff]
  %v42 = vld [vmem:[%s1 + $0x30] sm:$0xff]
  %v43 = vld [vmem:[%s1 + $0x38] sm:$0xff]
  %v44 = vld [vmem:[%s1 + $0x40] sm:$0xff]
  %v45 = vld [vmem:[%s1 + $0x48] sm:$0xff]
  %v46 = vld [vmem:[%s1 + $0x50] sm:$0xff]
  %v47 = vld [vmem:[%s1 + $0x58] sm:$0xff]
  %v48 = vld [vmem:[%s1 + $0x60] sm:$0xff]
  %v49 = vld [vmem:[%s1 + $0x68] sm:$0xff]
  %v50 = vld [vmem:[%s1 + $0x70] sm:$0xff]
  %v51 = vld [vmem:[%s1 + $0x78] sm:$0xff]
  %v52 = vld [vmem:[%s1 + $0x80] sm:$0xff]
  %v53 = vld [vmem:[%s1 + $0x88] sm:$0xff]
  %v54 = vld [vmem:[%s1 + $0x90] sm:$0xff]
  %v55 = vld [vmem:[%s1 + $0x98] sm:$0xff]
  %v56 = vld [vmem:[%s1 + $0xa0] sm:$0xff]
  %v57 = vld [vmem:[%s1 + $0xa8] sm:$0xff]
  %v58 = vld [vmem:[%s1 + $0xb0] sm:$0xff]
  %v59 = vld [vmem:[%s1 + $0xb8] sm:$0xff]
  %v60 = vld [vmem:[%s1 + $0xc0] sm:$0xff]
  %v61 = vld [vmem:[%s1 + $0xc8] sm:$0xff]
  %v62 = vld [vmem:[%s1 + $0xd0] sm:$0xff]
  %v63 = vld [vmem:[%s1 + $0xd8] sm:$0xff]
  %v64 = vld [vmem:[%s1 + $0xe0] sm:$0xff]
  %v65 = vld [vmem:[%s1 + $0xe8] sm:$0xff]
  %v66 = vld [vmem:[%s1 + $0xf0] sm:$0xff]
  %v67 = vld [vmem:[%s1 + $0xf8] sm:$0xff]
  %v68 = vld [vmem:[%s1 + $0x100] sm:$0xff]
  %v69 = vld [vmem:[%s1 + $0x108] sm:$0xff]
  %v70 = vld [vmem:[%s1 + $0x110] sm:$0xff]
  %v71 = vld [vmem:[%s1 + $0x118] sm:$0xff]
  %v72 = vld [vmem:[%s1 + $0x120] sm:$0xff]
  %v73 = vld [vmem:[%s1 + $0x128] sm:$0xff]
  %v74 = vld [vmem:[%s1 + $0x130] sm:$0xff]
  %v75 = vld [vmem:[%s1 + $0x138] sm:$0xff]
  %v76 = vld [vmem:[%s1 + $0x140] sm:$0xff]
  %v77 = vld [vmem:[%s1 + $0x148] sm:$0xff]
  %v78 = vld [vmem:[%s1 + $0x150] sm:$0xff]
  %v79 = vld [vmem:[%s1 + $0x158] sm:$0xff]
  %v80 = vld [vmem:[%s1 + $0x160] sm:$0xff]
  %v81 = vld [vmem:[%s1 + $0x168] sm:$0xff]
  %v82 = vld [vmem:[%s1 + $0x170] sm:$0xff]
  %v83 = vld [vmem:[%s1 + $0x178] sm:$0xff]
  %v84 = vld [vmem:[%s1 + $0x180] sm:$0xff]
  %v85 = vld [vmem:[%s1 + $0x188] sm:$0xff]
  %v86 = vld [vmem:[%s1 + $0x190] sm:$0xff]
  %v87 = vld [vmem:[%s1 + $0x198] sm:$0xff]
  %v88 = vld [vmem:[%s1 + $0x1a0] sm:$0xff]
  %v89 = vld [vmem:[%s1 + $0x1a8] sm:$0xff]
  %v90 = vld [vmem:[%s1 + $0x1b0] sm:$0xff]
  %v91 = vld [vmem:[%s1 + $0x1b8] sm:$0xff]
  %v92 = vld [vmem:[%s1 + $0x1c0] sm:$0xff]
  %v93 = vld [vmem:[%s1 + $0x1c8] sm:$0xff]
  %v94 = vld [vmem:[%s1 + $0x1d0] sm:$0xff]
  %v95 = vld [vmem:[%s1 + $0x1d8] sm:$0xff]
  %v96 = vld [vmem:[%s1 + $0x1e0] sm:$0xff]
  %v97 = vld [vmem:[%s1 + $0x1e8] sm:$0xff]
  %v98 = vld [vmem:[%s1 + $0x1f0] sm:$0xff]
  %v99 = vld [vmem:[%s1 + $0x1f8] sm:$0xff]
  %v100 = vld [vmem:[%s1 + $0x200] sm:$0xff]
  %v101 = vld [vmem:[%s1 + $0x208] sm:$0xff]
  %v102 = vld [vmem:[%s1 + $0x210] sm:$0xff]
  %v103 = vld [vmem:[%s1 + $0x218] sm:$0xff]
  %v104 = vld [vmem:[%s1 + $0x220] sm:$0xff]
  %v105 = vld [vmem:[%s1 + $0x228] sm:$0xff]
  %v106 = vld [vmem:[%s1 + $0x230] sm:$0xff]
  %v107 = vld [vmem:[%s1 + $0x238] sm:$0xff]
  %v108 = vld [vmem:[%s1 + $0x240] sm:$0xff]
  %v109 = vld [vmem:[%s1 + $0x248] sm:$0xff]
  %v110 = vld [vmem:[%s1 + $0x250] sm:$0xff]
  %v111 = vld [vmem:[%s1 + $0x258] sm:$0xff]
  %v112 = vld [vmem:[%s1 + $0x260] sm:$0xff]
  %v113 = vld [vmem:[%s1 + $0x268] sm:$0xff]
  %v114 = vld [vmem:[%s1 + $0x270] sm:$0xff]
  %v115 = vld [vmem:[%s1 + $0x278] sm:$0xff]
  %v116 = vld [vmem:[%s1 + $0x280] sm:$0xff]
  %v117 = vld [vmem:[%s1 + $0x288] sm:$0xff]
  %v118 = vld [vmem:[%s1 + $0x290] sm:$0xff]
  %v119 = vld [vmem:[%s1 + $0x298] sm:$0xff]
  %v120 = vld [vmem:[%s1 + $0x2a0] sm:$0xff]
  %v121 = vld [vmem:[%s1 + $0x2a8] sm:$0xff]
  %v122 = vld [vmem:[%s1 + $0x2b0] sm:$0xff]
  %v123 = vld [vmem:[%s1 + $0x2b8] sm:$0xff]
  %v124 = vld [vmem:[%s1 + $0x2c0] sm:$0xff]
  %v125 = vld [vmem:[%s1 + $0x2c8] sm:$0xff]
  %v126 = vld [vmem:[%s1 + $0x2d0] sm:$0xff]
  %v127 = vld [vmem:[%s1 + $0x2d8] sm:$0xff]
  %v128 = vld [vmem:[%s1 + $0x2e0] sm:$0xff]
  %v129 = vld [vmem:[%s1 + $0x2e8] sm:$0xff]
  %v130 = vld [vmem:[%s1 + $0x2f0] sm:$0xff]
  %v131 = vld [vmem:[%s1 + $0x2f8] sm:$0xff]
  %v132 = vld [vmem:[%s1 + $0x300] sm:$0xff]
  %v133 = vld [vmem:[%s1 + $0x308] sm:$0xff]
  %v134 = vld [vmem:[%s1 + $0x310] sm:$0xff]
  %v135 = vld [vmem:[%s1 + $0x318] sm:$0xff]
  %v136 = vld [vmem:[%s1 + $0x320] sm:$0xff]
  %v137 = vld [vmem:[%s1 + $0x328] sm:$0xff]
  %v138 = vld [vmem:[%s1 + $0x330] sm:$0xff]
  %v139 = vld [vmem:[%s1 + $0x338] sm:$0xff]
  %v140 = vld [vmem:[%s1 + $0x340] sm:$0xff]
  %v141 = vld [vmem:[%s1 + $0x348] sm:$0xff]
  %v142 = vld [vmem:[%s1 + $0x350] sm:$0xff]
  %v143 = vld [vmem:[%s1 + $0x358] sm:$0xff]
  %v144 = vld [vmem:[%s1 + $0x360] sm:$0xff]
  %v145 = vld [vmem:[%s1 + $0x368] sm:$0xff]
  %v146 = vld [vmem:[%s1 + $0x370] sm:$0xff]
  %v147 = vld [vmem:[%s1 + $0x378] sm:$0xff]
  %v148 = vld [vmem:[%s1 + $0x380] sm:$0xff]
  %v149 = vld [vmem:[%s1 + $0x388] sm:$0xff]
  %v150 = vld [vmem:[%s1 + $0x390] sm:$0xff]
  %v151 = vld [vmem:[%s1 + $0x398] sm:$0xff]
  %v152 = vld [vmem:[%s1 + $0x3a0] sm:$0xff]
  %v153 = vld [vmem:[%s1 + $0x3a8] sm:$0xff]
  %v154 = vld [vmem:[%s1 + $0x3b0] sm:$0xff]
  %v155 = vld [vmem:[%s1 + $0x3b8] sm:$0xff]
  %v156 = vld [vmem:[%s1 + $0x3c0] sm:$0xff]
  %v157 = vld [vmem:[%s1 + $0x3c8] sm:$0xff]
  %v158 = vld [vmem:[%s1 + $0x3d0] sm:$0xff]
  %v159 = vld [vmem:[%s1 + $0x3d8] sm:$0xff]
  %v160 = vld [vmem:[%s1 + $0x3e0] sm:$0xff]
  %v161 = vld [vmem:[%s1 + $0x3e8] sm:$0xff]
  %v162 = vld [vmem:[%s1 + $0x3f0] sm:$0xff]
  %v163 = vld [vmem:[%s1 + $0x3f8] sm:$0xff]
  %v164 = vld [vmem:[%s1 + $0x400] sm:$0xff]
  %v165 = vld [vmem:[%s1 + $0x408] sm:$0xff]
  %v166 = vld [vmem:[%s1 + $0x410] sm:$0xff]
  %v167 = vld [vmem:[%s1 + $0x418] sm:$0xff]
  %v168 = vld [vmem:[%s1 + $0x420] sm:$0xff]
  %v169 = vld [vmem:[%s1 + $0x428] sm:$0xff]
  %v170 = vld [vmem:[%s1 + $0x430] sm:$0xff]
  %v171 = vld [vmem:[%s1 + $0x438] sm:$0xff]
  %v172 = vld [vmem:[%s1 + $0x440] sm:$0xff]
  %v173 = vld [vmem:[%s1 + $0x448] sm:$0xff]
  %v174 = vld [vmem:[%s1 + $0x450] sm:$0xff]
  %v175 = vld [vmem:[%s1 + $0x458] sm:$0xff]
  %v176 = vld [vmem:[%s1 + $0x460] sm:$0xff]
  %v177 = vld [vmem:[%s1 + $0x468] sm:$0xff]
  %v178 = vld [vmem:[%s1 + $0x470] sm:$0xff]
  %v179 = vld [vmem:[%s1 + $0x478] sm:$0xff]
  %v180 = vld [vmem:[%s1 + $0x480] sm:$0xff]
  %v181 = vld [vmem:[%s1 + $0x488] sm:$0xff]
  %v182 = vld [vmem:[%s1 + $0x490] sm:$0xff]
  %v183 = vld [vmem:[%s1 + $0x498] sm:$0xff]
  %v184 = vld [vmem:[%s1 + $0x4a0] sm:$0xff]
  %v185 = vld [vmem:[%s1 + $0x4a8] sm:$0xff]
  %v186 = vld [vmem:[%s1 + $0x4b0] sm:$0xff]
  %v187 = vld [vmem:[%s1 + $0x4b8] sm:$0xff]
  %v188 = vld [vmem:[%s1 + $0x4c0] sm:$0xff]
  %v189 = vld [vmem:[%s1 + $0x4c8] sm:$0xff]
  %v190 = vld [vmem:[%s1 + $0x4d0] sm:$0xff]
  %v191 = vld [vmem:[%s1 + $0x4d8] sm:$0xff]
  %v192 = vld [vmem:[%s1 + $0x4e0] sm:$0xff]
  %v193 = vld [vmem:[%s1 + $0x4e8] sm:$0xff]
  %v194 = vld [vmem:[%s1 + $0x4f0] sm:$0xff]
  %v195 = vld [vmem:[%s1 + $0x4f8] sm:$0xff]
  %v196 = vld [vmem:[%s1 + $0x500] sm:$0xff]
  %v197 = vld [vmem:[%s1 + $0x508] sm:$0xff]
  %v198 = vld [vmem:[%s1 + $0x510] sm:$0xff]
  %v199 = vld [vmem:[%s1 + $0x518] sm:$0xff]
  %v200 = vld [vmem:[%s1 + $0x520] sm:$0xff]
  %v201 = vld [vmem:[%s1 + $0x528] sm:$0xff]
  %v202 = vld [vmem:[%s1 + $0x530] sm:$0xff]
  %v203 = vld [vmem:[%s1 + $0x538] sm:$0xff]
  %v204 = vld [vmem:[%s1 + $0x540] sm:$0xff]
  %v205 = vld [vmem:[%s1 + $0x548] sm:$0xff]
  %v206 = vld [vmem:[%s1 + $0x550] sm:$0xff]
  %v207 = vld [vmem:[%s1 + $0x558] sm:$0xff]
  %v208 = vld [vmem:[%s1 + $0x560] sm:$0xff]
  %v209 = vld [vmem:[%s1 + $0x568] sm:$0xff]
  %v210 = vld [vmem:[%s1 + $0x570] sm:$0xff]
  %v211 = vld [vmem:[%s1 + $0x578] sm:$0xff]
  %v212 = vld [vmem:[%s1 + $0x580] sm:$0xff]
  %v213 = vld [vmem:[%s1 + $0x588] sm:$0xff]
  %v214 = vld [vmem:[%s1 + $0x590] sm:$0xff]
  %v215 = vld [vmem:[%s1 + $0x598] sm:$0xff]
  %v216 = vld [vmem:[%s1 + $0x5a0] sm:$0xff]
  %v217 = vld [vmem:[%s1 + $0x5a8] sm:$0xff]
  %v218 = vld [vmem:[%s1 + $0x5b0] sm:$0xff]
  %v219 = vld [vmem:[%s1 + $0x5b8] sm:$0xff]
  %v220 = vld [vmem:[%s1 + $0x5c0] sm:$0xff]
  %v221 = vld [vmem:[%s1 + $0x5c8] sm:$0xff]
  %v222 = vld [vmem:[%s1 + $0x5d0] sm:$0xff]
  %v223 = vld [vmem:[%s1 + $0x5d8] sm:$0xff]
  %v224 = vld [vmem:[%s1 + $0x5e0] sm:$0xff]
  %v225 = vld [vmem:[%s1 + $0x5e8] sm:$0xff]
  %v226 = vld [vmem:[%s1 + $0x5f0] sm:$0xff]
  %v227 = vld [vmem:[%s1 + $0x5f8] sm:$0xff]
  %v228 = vld [vmem:[%s1 + $0x600] sm:$0xff]
  %v229 = vld [vmem:[%s1 + $0x608] sm:$0xff]
  %v230 = vld [vmem:[%s1 + $0x610] sm:$0xff]
  %v231 = vld [vmem:[%s1 + $0x618] sm:$0xff]
  %v232 = vld [vmem:[%s1 + $0x620] sm:$0xff]
  %v233 = vld [vmem:[%s1 + $0x628] sm:$0xff]
  %v234 = vld [vmem:[%s1 + $0x630] sm:$0xff]
  %v235 = vld [vmem:[%s1 + $0x638] sm:$0xff]
  %v236 = vld [vmem:[%s1 + $0x640] sm:$0xff]
  %v237 = vld [vmem:[%s1 + $0x648] sm:$0xff]
  %v238 = vld [vmem:[%s1 + $0x650] sm:$0xff]
  %v239 = vld [vmem:[%s1 + $0x658] sm:$0xff]
  %v240 = vld [vmem:[%s1 + $0x660] sm:$0xff]
  %v241 = vld [vmem:[%s1 + $0x668] sm:$0xff]
  %v242 = vld [vmem:[%s1 + $0x670] sm:$0xff]
  %v243 = vld [vmem:[%s1 + $0x678] sm:$0xff]
  %v244 = vld [vmem:[%s1 + $0x680] sm:$0xff]
  %v245 = vld [vmem:[%s1 + $0x688] sm:$0xff]
  %v246 = vld [vmem:[%s1 + $0x690] sm:$0xff]
  %v247 = vld [vmem:[%s1 + $0x698] sm:$0xff]
  %v248 = vld [vmem:[%s1 + $0x6a0] sm:$0xff]
  %v249 = vld [vmem:[%s1 + $0x6a8] sm:$0xff]
  %v250 = vld [vmem:[%s1 + $0x6b0] sm:$0xff]
  %v251 = vld [vmem:[%s1 + $0x6b8] sm:$0xff]
  %v252 = vld [vmem:[%s1 + $0x6c0] sm:$0xff]
  %v253 = vld [vmem:[%s1 + $0x6c8] sm:$0xff]
  %v254 = vld [vmem:[%s1 + $0x6d0] sm:$0xff]
  %v255 = vld [vmem:[%s1 + $0x6d8] sm:$0xff]
  %v256 = vld [vmem:[%s1 + $0x6e0] sm:$0xff]
  %v257 = vld [vmem:[%s1 + $0x6e8] sm:$0xff]
  %v258 = vld [vmem:[%s1 + $0x6f0] sm:$0xff]
  %v259 = vld [vmem:[%s1 + $0x6f8] sm:$0xff]
  %v260 = vld [vmem:[%s1 + $0x700] sm:$0xff]
  %v261 = vld [vmem:[%s1 + $0x708] sm:$0xff]
  %v262 = vld [vmem:[%s1 + $0x710] sm:$0xff]
  %v263 = vld [vmem:[%s1 + $0x718] sm:$0xff]
  %v264 = vld [vmem:[%s1 + $0x720] sm:$0xff]
  %v265 = vld [vmem:[%s1 + $0x728] sm:$0xff]
  %v266 = vld [vmem:[%s1 + $0x730] sm:$0xff]
  %v267 = vld [vmem:[%s1 + $0x738] sm:$0xff]
  %v268 = vld [vmem:[%s1 + $0x740] sm:$0xff]
  %v269 = vld [vmem:[%s1 + $0x748] sm:$0xff]
  %v270 = vld [vmem:[%s1 + $0x750] sm:$0xff]
  %v271 = vld [vmem:[%s1 + $0x758] sm:$0xff]
  %v272 = vld [vmem:[%s1 + $0x760] sm:$0xff]
  %v273 = vld [vmem:[%s1 + $0x768] sm:$0xff]
  %v274 = vld [vmem:[%s1 + $0x770] sm:$0xff]
  %v275 = vld [vmem:[%s1 + $0x778] sm:$0xff]
  %v276 = vld [vmem:[%s1 + $0x780] sm:$0xff]
  %v277 = vld [vmem:[%s1 + $0x788] sm:$0xff]
  %v278 = vld [vmem:[%s1 + $0x790] sm:$0xff]
  %v279 = vld [vmem:[%s1 + $0x798] sm:$0xff]
  %v280 = vld [vmem:[%s1 + $0x7a0] sm:$0xff]
  %v281 = vld [vmem:[%s1 + $0x7a8] sm:$0xff]
  %v282 = vld [vmem:[%s1 + $0x7b0] sm:$0xff]
  %v283 = vld [vmem:[%s1 + $0x7b8] sm:$0xff]
  %v284 = vld [vmem:[%s1 + $0x7c0] sm:$0xff]
  %v285 = vld [vmem:[%s1 + $0x7c8] sm:$0xff]
  %v286 = vld [vmem:[%s1 + $0x7d0] sm:$0xff]
  %v287 = vld [vmem:[%s1 + $0x7d8] sm:$0xff]
  %v288 = vld [vmem:[%s1 + $0x7e0] sm:$0xff]
  %v289 = vld [vmem:[%s1 + $0x7e8] sm:$0xff]
  %v290 = vld [vmem:[%s1 + $0x7f0] sm:$0xff]
  %v291 = vld [vmem:[%s1 + $0x7f8] sm:$0xff]
  %v292 = vld [vmem:[%s1 + $0x800] sm:$0xff]
  %v293 = vld [vmem:[%s1 + $0x808] sm:$0xff]
  %v294 = vld [vmem:[%s1 + $0x810] sm:$0xff]
  %v295 = vld [vmem:[%s1 + $0x818] sm:$0xff]
  %v296 = vld [vmem:[%s1 + $0x820] sm:$0xff]
  %v297 = vld [vmem:[%s1 + $0x828] sm:$0xff]
  %v298 = vld [vmem:[%s1 + $0x830] sm:$0xff]
  %v299 = vld [vmem:[%s1 + $0x838] sm:$0xff]
  %v300 = vld [vmem:[%s1 + $0x840] sm:$0xff]
  %v301 = vld [vmem:[%s1 + $0x848] sm:$0xff]
  %v302 = vld [vmem:[%s1 + $0x850] sm:$0xff]
  %v303 = vld [vmem:[%s1 + $0x858] sm:$0xff]
  %v304 = vld [vmem:[%s1 + $0x860] sm:$0xff]
  %v305 = vld [vmem:[%s1 + $0x868] sm:$0xff]
  %v306 = vld [vmem:[%s1 + $0x870] sm:$0xff]
  %v307 = vld [vmem:[%s1 + $0x878] sm:$0xff]
  %v308 = vld [vmem:[%s1 + $0x880] sm:$0xff]
  %v309 = vld [vmem:[%s1 + $0x888] sm:$0xff]
  %v310 = vld [vmem:[%s1 + $0x890] sm:$0xff]
  %v311 = vld [vmem:[%s1 + $0x898] sm:$0xff]
  %v312 = vld [vmem:[%s1 + $0x8a0] sm:$0xff]
  %v313 = vld [vmem:[%s1 + $0x8a8] sm:$0xff]
  %v314 = vld [vmem:[%s1 + $0x8b0] sm:$0xff]
  %v315 = vld [vmem:[%s1 + $0x8b8] sm:$0xff]
  %v316 = vld [vmem:[%s1 + $0x8c0] sm:$0xff]
  %v317 = vld [vmem:[%s1 + $0x8c8] sm:$0xff]
  %v318 = vld [vmem:[%s1 + $0x8d0] sm:$0xff]
  %v319 = vld [vmem:[%s1 + $0x8d8] sm:$0xff]
  %v320 = vld [vmem:[%s1 + $0x8e0] sm:$0xff]
  %v321 = vld [vmem:[%s1 + $0x8e8] sm:$0xff]
  %v322 = vld [vmem:[%s1 + $0x8f0] sm:$0xff]
  %v323 = vld [vmem:[%s1 + $0x8f8] sm:$0xff]
  %v324 = vld [vmem:[%s1 + $0x900] sm:$0xff]
  %v325 = vld [vmem:[%s1 + $0x908] sm:$0xff]
  %v326 = vld [vmem:[%s1 + $0x910] sm:$0xff]
  %v327 = vld [vmem:[%s1 + $0x918] sm:$0xff]
  %v328 = vld [vmem:[%s1 + $0x920] sm:$0xff]
  %v329 = vld [vmem:[%s1 + $0x928] sm:$0xff]
  %v330 = vld [vmem:[%s1 + $0x930] sm:$0xff]
  %v331 = vld [vmem:[%s1 + $0x938] sm:$0xff]
  %v332 = vld [vmem:[%s1 + $0x940] sm:$0xff]
  %v333 = vld [vmem:[%s1 + $0x948] sm:$0xff]
  %v334 = vld [vmem:[%s1 + $0x950] sm:$0xff]
  %v335 = vld [vmem:[%s1 + $0x958] sm:$0xff]
  %v336 = vld [vmem:[%s1 + $0x960] sm:$0xff]
  %v337 = vld [vmem:[%s1 + $0x968] sm:$0xff]
  %v338 = vld [vmem:[%s1 + $0x970] sm:$0xff]
  %v339 = vld [vmem:[%s1 + $0x978] sm:$0xff]
  %v340 = vld [vmem:[%s1 + $0x980] sm:$0xff]
  %v341 = vld [vmem:[%s1 + $0x988] sm:$0xff]
  %v342 = vld [vmem:[%s1 + $0x990] sm:$0xff]
  %v343 = vld [vmem:[%s1 + $0x998] sm:$0xff]
  %v344 = vld [vmem:[%s1 + $0x9a0] sm:$0xff]
  %v345 = vld [vmem:[%s1 + $0x9a8] sm:$0xff]
  %v346 = vld [vmem:[%s1 + $0x9b0] sm:$0xff]
  %v347 = vld [vmem:[%s1 + $0x9b8] sm:$0xff]
  %v348 = vld [vmem:[%s1 + $0x9c0] sm:$0xff]
  %v349 = vld [vmem:[%s1 + $0x9c8] sm:$0xff]
  %v350 = vld [vmem:[%s1 + $0x9d0] sm:$0xff]
  %v351 = vld [vmem:[%s1 + $0x9d8] sm:$0xff]
  %v352 = vld [vmem:[%s1 + $0x9e0] sm:$0xff]
  %v353 = vld [vmem:[%s1 + $0x9e8] sm:$0xff]
  %v354 = vld [vmem:[%s1 + $0x9f0] sm:$0xff]
  %v355 = vld [vmem:[%s1 + $0x9f8] sm:$0xff]
  %v356 = vld [vmem:[%s1 + $0xa00] sm:$0xff]
  %v357 = vld [vmem:[%s1 + $0xa08] sm:$0xff]
  %v358 = vld [vmem:[%s1 + $0xa10] sm:$0xff]
  %v359 = vld [vmem:[%s1 + $0xa18] sm:$0xff]
  %v360 = vld [vmem:[%s1 + $0xa20] sm:$0xff]
  %v361 = vld [vmem:[%s1 + $0xa28] sm:$0xff]
  %v362 = vld [vmem:[%s1 + $0xa30] sm:$0xff]
  %v363 = vld [vmem:[%s1 + $0xa38] sm:$0xff]
  %v364 = vld [vmem:[%s1 + $0xa40] sm:$0xff]
  %v365 = vld [vmem:[%s1 + $0xa48] sm:$0xff]
  %v366 = vld [vmem:[%s1 + $0xa50] sm:$0xff]
  %v367 = vld [vmem:[%s1 + $0xa58] sm:$0xff]
  %v368 = vld [vmem:[%s1 + $0xa60] sm:$0xff]
  %v369 = vld [vmem:[%s1 + $0xa68] sm:$0xff]
  %v370 = vld [vmem:[%s1 + $0xa70] sm:$0xff]
  %v371 = vld [vmem:[%s1 + $0xa78] sm:$0xff]
  %v372 = vld [vmem:[%s1 + $0xa80] sm:$0xff]
  %v373 = vld [vmem:[%s1 + $0xa88] sm:$0xff]
  %v374 = vld [vmem:[%s1 + $0xa90] sm:$0xff]
  %v375 = vld [vmem:[%s1 + $0xa98] sm:$0xff]
  %v376 = vld [vmem:[%s1 + $0xaa0] sm:$0xff]
  %v377 = vld [vmem:[%s1 + $0xaa8] sm:$0xff]
  %v378 = vld [vmem:[%s1 + $0xab0] sm:$0xff]
  %v379 = vld [vmem:[%s1 + $0xab8] sm:$0xff]
  %v380 = vld [vmem:[%s1 + $0xac0] sm:$0xff]
  %v381 = vld [vmem:[%s1 + $0xac8] sm:$0xff]
  %v382 = vld [vmem:[%s1 + $0xad0] sm:$0xff]
  %v383 = vld [vmem:[%s1 + $0xad8] sm:$0xff]
  %v384 = vld [vmem:[%s1 + $0xae0] sm:$0xff]
  %v385 = vld [vmem:[%s1 + $0xae8] sm:$0xff]
  %v386 = vld [vmem:[%s1 + $0xaf0] sm:$0xff]
  %v387 = vld [vmem:[%s1 + $0xaf8] sm:$0xff]
  %v388 = vld [vmem:[%s1 + $0xb00] sm:$0xff]
  %v389 = vld [vmem:[%s1 + $0xb08] sm:$0xff]
  %v390 = vld [vmem:[%s1 + $0xb10] sm:$0xff]
  %v391 = vld [vmem:[%s1 + $0xb18] sm:$0xff]
  %v392 = vld [vmem:[%s1 + $0xb20] sm:$0xff]
  %v393 = vld [vmem:[%s1 + $0xb28] sm:$0xff]
  %v394 = vld [vmem:[%s1 + $0xb30] sm:$0xff]
  %v395 = vld [vmem:[%s1 + $0xb38] sm:$0xff]
  %v396 = vld [vmem:[%s1 + $0xb40] sm:$0xff]
  %v397 = vld [vmem:[%s1 + $0xb48] sm:$0xff]
  %v398 = vld [vmem:[%s1 + $0xb50] sm:$0xff]
  %v399 = vld [vmem:[%s1 + $0xb58] sm:$0xff]
  %v400 = vld [vmem:[%s1 + $0xb60] sm:$0xff]
  %v401 = vld [vmem:[%s1 + $0xb68] sm:$0xff]
  %v402 = vld [vmem:[%s1 + $0xb70] sm:$0xff]
  %v403 = vld [vmem:[%s1 + $0xb78] sm:$0xff]
  %v404 = vld [vmem:[%s1 + $0xb80] sm:$0xff]
  %v405 = vld [vmem:[%s1 + $0xb88] sm:$0xff]
  %v406 = vld [vmem:[%s1 + $0xb90] sm:$0xff]
  %v407 = vld [vmem:[%s1 + $0xb98] sm:$0xff]
  %v408 = vld [vmem:[%s1 + $0xba0] sm:$0xff]
  %v409 = vld [vmem:[%s1 + $0xba8] sm:$0xff]
  %v410 = vld [vmem:[%s1 + $0xbb0] sm:$0xff]
  %v411 = vld [vmem:[%s1 + $0xbb8] sm:$0xff]
  %v412 = vld [vmem:[%s1 + $0xbc0] sm:$0xff]
  %v413 = vld [vmem:[%s1 + $0xbc8] sm:$0xff]
  %v414 = vld [vmem:[%s1 + $0xbd0] sm:$0xff]
  %v415 = vld [vmem:[%s1 + $0xbd8] sm:$0xff]
  %v416 = vld [vmem:[%s1 + $0xbe0] sm:$0xff]
  %v417 = vld [vmem:[%s1 + $0xbe8] sm:$0xff]
  %v418 = vld [vmem:[%s1 + $0xbf0] sm:$0xff]
  %v419 = vld [vmem:[%s1 + $0xbf8] sm:$0xff]
  %v420 = vld [vmem:[%s1 + $0xc00] sm:$0xff]
  %v421 = vld [vmem:[%s1 + $0xc08] sm:$0xff]
  %v422 = vld [vmem:[%s1 + $0xc10] sm:$0xff]
  %v423 = vld [vmem:[%s1 + $0xc18] sm:$0xff]
  %v424 = vld [vmem:[%s1 + $0xc20] sm:$0xff]
  %v425 = vld [vmem:[%s1 + $0xc28] sm:$0xff]
  %v426 = vld [vmem:[%s1 + $0xc30] sm:$0xff]
  %v427 = vld [vmem:[%s1 + $0xc38] sm:$0xff]
  %v428 = vld [vmem:[%s1 + $0xc40] sm:$0xff]
  %v429 = vld [vmem:[%s1 + $0xc48] sm:$0xff]
  %v430 = vld [vmem:[%s1 + $0xc50] sm:$0xff]
  %v431 = vld [vmem:[%s1 + $0xc58] sm:$0xff]
  %v432 = vld [vmem:[%s1 + $0xc60] sm:$0xff]
  %v433 = vld [vmem:[%s1 + $0xc68] sm:$0xff]
  %v434 = vld [vmem:[%s1 + $0xc70] sm:$0xff]
  %v435 = vld [vmem:[%s1 + $0xc78] sm:$0xff]
  %v436 = vld [vmem:[%s1 + $0xc80] sm:$0xff]
  %v437 = vld [vmem:[%s1 + $0xc88] sm:$0xff]
  %v438 = vld [vmem:[%s1 + $0xc90] sm:$0xff]
  %v439 = vld [vmem:[%s1 + $0xc98] sm:$0xff]
  %v440 = vld [vmem:[%s1 + $0xca0] sm:$0xff]
  %v441 = vld [vmem:[%s1 + $0xca8] sm:$0xff]
  %v442 = vld [vmem:[%s1 + $0xcb0] sm:$0xff]
  %v443 = vld [vmem:[%s1 + $0xcb8] sm:$0xff]
  %v444 = vld [vmem:[%s1 + $0xcc0] sm:$0xff]
  %v445 = vld [vmem:[%s1 + $0xcc8] sm:$0xff]
  %v446 = vld [vmem:[%s1 + $0xcd0] sm:$0xff]
  %v447 = vld [vmem:[%s1 + $0xcd8] sm:$0xff]
  %v448 = vld [vmem:[%s1 + $0xce0] sm:$0xff]
  %v449 = vld [vmem:[%s1 + $0xce8] sm:$0xff]
  %v450 = vld [vmem:[%s1 + $0xcf0] sm:$0xff]
  %v451 = vld [vmem:[%s1 + $0xcf8] sm:$0xff]
  %v452 = vld [vmem:[%s1 + $0xd00] sm:$0xff]
  %v453 = vld [vmem:[%s1 + $0xd08] sm:$0xff]
  %v454 = vld [vmem:[%s1 + $0xd10] sm:$0xff]
  %v455 = vld [vmem:[%s1 + $0xd18] sm:$0xff]
  %v456 = vld [vmem:[%s1 + $0xd20] sm:$0xff]
  %v457 = vld [vmem:[%s1 + $0xd28] sm:$0xff]
  %v458 = vld [vmem:[%s1 + $0xd30] sm:$0xff]
  %v459 = vld [vmem:[%s1 + $0xd38] sm:$0xff]
  %v460 = vld [vmem:[%s1 + $0xd40] sm:$0xff]
  %v461 = vld [vmem:[%s1 + $0xd48] sm:$0xff]
  %v462 = vld [vmem:[%s1 + $0xd50] sm:$0xff]
  %v463 = vld [vmem:[%s1 + $0xd58] sm:$0xff]
  %v464 = vld [vmem:[%s1 + $0xd60] sm:$0xff]
  %v465 = vld [vmem:[%s1 + $0xd68] sm:$0xff]
  %v466 = vld [vmem:[%s1 + $0xd70] sm:$0xff]
  %v467 = vld [vmem:[%s1 + $0xd78] sm:$0xff]
  %v468 = vld [vmem:[%s1 + $0xd80] sm:$0xff]
  %v469 = vld [vmem:[%s1 + $0xd88] sm:$0xff]
  %v470 = vld [vmem:[%s1 + $0xd90] sm:$0xff]
  %v471 = vld [vmem:[%s1 + $0xd98] sm:$0xff]
  %v472 = vld [vmem:[%s1 + $0xda0] sm:$0xff]
  %v473 = vld [vmem:[%s1 + $0xda8] sm:$0xff]
  %v474 = vld [vmem:[%s1 + $0xdb0] sm:$0xff]
  %v475 = vld [vmem:[%s1 + $0xdb8] sm:$0xff]
  %v476 = vld [vmem:[%s1 + $0xdc0] sm:$0xff]
  %v477 = vld [vmem:[%s1 + $0xdc8] sm:$0xff]
  %v478 = vld [vmem:[%s1 + $0xdd0] sm:$0xff]
  %v479 = vld [vmem:[%s1 + $0xdd8] sm:$0xff]
  %v480 = vld [vmem:[%s1 + $0xde0] sm:$0xff]
  %v481 = vld [vmem:[%s1 + $0xde8] sm:$0xff]
  %v482 = vld [vmem:[%s1 + $0xdf0] sm:$0xff]
  %v483 = vld [vmem:[%s1 + $0xdf8] sm:$0xff]
  %v484 = vld [vmem:[%s1 + $0xe00] sm:$0xff]
  %v485 = vld [vmem:[%s1 + $0xe08] sm:$0xff]
  %v486 = vld [vmem:[%s1 + $0xe10] sm:$0xff]
  %v487 = vld [vmem:[%s1 + $0xe18] sm:$0xff]
  %v488 = vld [vmem:[%s1 + $0xe20] sm:$0xff]
  %v489 = vld [vmem:[%s1 + $0xe28] sm:$0xff]
  %v490 = vld [vmem:[%s1 + $0xe30] sm:$0xff]
  %v491 = vld [vmem:[%s1 + $0xe38] sm:$0xff]
  %v492 = vld [vmem:[%s1 + $0xe40] sm:$0xff]
  %v493 = vld [vmem:[%s1 + $0xe48] sm:$0xff]
  %v494 = vld [vmem:[%s1 + $0xe50] sm:$0xff]
  %v495 = vld [vmem:[%s1 + $0xe58] sm:$0xff]
  %v496 = vld [vmem:[%s1 + $0xe60] sm:$0xff]
  %v497 = vld [vmem:[%s1 + $0xe68] sm:$0xff]
  %v498 = vld [vmem:[%s1 + $0xe70] sm:$0xff]
  %v499 = vld [vmem:[%s1 + $0xe78] sm:$0xff]
  %v500 = vld [vmem:[%s1 + $0xe80] sm:$0xff]
  %v501 = vld [vmem:[%s1 + $0xe88] sm:$0xff]
  %v502 = vld [vmem:[%s1 + $0xe90] sm:$0xff]
  %v503 = vld [vmem:[%s1 + $0xe98] sm:$0xff]
  %v504 = vld [vmem:[%s1 + $0xea0] sm:$0xff]
  %v505 = vld [vmem:[%s1 + $0xea8] sm:$0xff]
  %v506 = vld [vmem:[%s1 + $0xeb0] sm:$0xff]
  %v507 = vld [vmem:[%s1 + $0xeb8] sm:$0xff]
  %v508 = vld [vmem:[%s1 + $0xec0] sm:$0xff]
  %v509 = vld [vmem:[%s1 + $0xec8] sm:$0xff]
  %v510 = vld [vmem:[%s1 + $0xed0] sm:$0xff]
  %v511 = vld [vmem:[%s1 + $0xed8] sm:$0xff]
  %v512 = vld [vmem:[%s1 + $0xee0] sm:$0xff]
  %v513 = vld [vmem:[%s1 + $0xee8] sm:$0xff]
  %v514 = vld [vmem:[%s1 + $0xef0] sm:$0xff]
  %v515 = vld [vmem:[%s1 + $0xef8] sm:$0xff]
  %v516 = vld [vmem:[%s1 + $0xf00] sm:$0xff]
  %v517 = vld [vmem:[%s1 + $0xf08] sm:$0xff]
  %v518 = vld [vmem:[%s1 + $0xf10] sm:$0xff]
  %v519 = vld [vmem:[%s1 + $0xf18] sm:$0xff]
  %v520 = vld [vmem:[%s1 + $0xf20] sm:$0xff]
  %v521 = vld [vmem:[%s1 + $0xf28] sm:$0xff]
  %v522 = vld [vmem:[%s1 + $0xf30] sm:$0xff]
  %v523 = vld [vmem:[%s1 + $0xf38] sm:$0xff]
  %v524 = vld [vmem:[%s1 + $0xf40] sm:$0xff]
  %v525 = vld [vmem:[%s1 + $0xf48] sm:$0xff]
  %v526 = vld [vmem:[%s1 + $0xf50] sm:$0xff]
  %v527 = vld [vmem:[%s1 + $0xf58] sm:$0xff]
  %v528 = vld [vmem:[%s1 + $0xf60] sm:$0xff]
  %v529 = vld [vmem:[%s1 + $0xf68] sm:$0xff]
  %v530 = vld [vmem:[%s1 + $0xf70] sm:$0xff]
  %v531 = vld [vmem:[%s1 + $0xf78] sm:$0xff]
  %v532 = vld [vmem:[%s1 + $0xf80] sm:$0xff]
  %v533 = vld [vmem:[%s1 + $0xf88] sm:$0xff]
  %v534 = vld [vmem:[%s1 + $0xf90] sm:$0xff]
  %v535 = vld [vmem:[%s1 + $0xf98] sm:$0xff]
  %v536 = vld [vmem:[%s1 + $0xfa0] sm:$0xff]
  %v537 = vld [vmem:[%s1 + $0xfa8] sm:$0xff]
  %v538 = vld [vmem:[%s1 + $0xfb0] sm:$0xff]
  %v539 = vld [vmem:[%s1 + $0xfb8] sm:$0xff]
  %v540 = vld [vmem:[%s2] sm:$0x1]
  %v542 = vlaneseq
  %v543 = vshrl.u32 %v542, 7
  %v544 = vsub.s32 0, %v543
  %v545 = vrot.slane %v540, %v544
  %v555 = vcombine.high %v28, %v28
  %v557 = vunpack.c.l.s4 1983009808
  %v558 = vunpack.c.0.s8 %v557
  %v559 = vlaneseq
  %v560 = vshrl.u32 %v559, 7
  %v561 = vsub.s32 %v558, %v560
  %v562 = vrot.slane %v28, %v561
  %v564 = vunpack.c.l.s4 1983009808
  %v565 = vunpack.c.0.s8 %v564
  %v566 = vlaneseq
  %v567 = vshrl.u32 %v566, 7
  %v568 = vsub.s32 %v565, %v567
  %v569 = vrot.slane %v555, %v568
  %v570 = vcombine.high %v562, %v562
  %v571 = vcombine.high %v569, %v569
  %v572 = vcombine.high %v29, %v29
  %v574 = vunpack.c.l.s4 1983009808
  %v575 = vunpack.c.0.s8 %v574
  %v576 = vlaneseq
  %v577 = vshrl.u32 %v576, 7
  %v578 = vsub.s32 %v575, %v577
  %v579 = vrot.slane %v29, %v578
  %v581 = vunpack.c.l.s4 1983009808
  %v582 = vunpack.c.0.s8 %v581
  %v583 = vlaneseq
  %v584 = vshrl.u32 %v583, 7
  %v585 = vsub.s32 %v582, %v584
  %v586 = vrot.slane %v572, %v585
  %v587 = vcombine.high %v579, %v579
  %v588 = vcombine.high %v586, %v586
  %v589 = vcombine.high %v30, %v30
  %v591 = vunpack.c.l.s4 1983009808
  %v592 = vunpack.c.0.s8 %v591
  %v593 = vlaneseq
  %v594 = vshrl.u32 %v593, 7
  %v595 = vsub.s32 %v592, %v594
  %v596 = vrot.slane %v30, %v595
  %v598 = vunpack.c.l.s4 1983009808
  %v599 = vunpack.c.0.s8 %v598
  %v600 = vlaneseq
  %v601 = vshrl.u32 %v600, 7
  %v602 = vsub.s32 %v599, %v601
  %v603 = vrot.slane %v589, %v602
  %v604 = vcombine.high %v596, %v596
  %v605 = vcombine.high %v603, %v603
  %v606 = vcombine.high %v31, %v31
  %v608 = vunpack.c.l.s4 1983009808
  %v609 = vunpack.c.0.s8 %v608
  %v610 = vlaneseq
  %v611 = vshrl.u32 %v610, 7
  %v612 = vsub.s32 %v609, %v611
  %v613 = vrot.slane %v31, %v612
  %v615 = vunpack.c.l.s4 1983009808
  %v616 = vunpack.c.0.s8 %v615
  %v617 = vlaneseq
  %v618 = vshrl.u32 %v617, 7
  %v619 = vsub.s32 %v616, %v618
  %v620 = vrot.slane %v606, %v619
  %v621 = vcombine.high %v613, %v613
  %v622 = vcombine.high %v620, %v620
  %v623 = vcombine.high %v32, %v32
  %v625 = vunpack.c.l.s4 1983009808
  %v626 = vunpack.c.0.s8 %v625
  %v627 = vlaneseq
  %v628 = vshrl.u32 %v627, 7
  %v629 = vsub.s32 %v626, %v628
  %v630 = vrot.slane %v32, %v629
  %v632 = vunpack.c.l.s4 1983009808
  %v633 = vunpack.c.0.s8 %v632
  %v634 = vlaneseq
  %v635 = vshrl.u32 %v634, 7
  %v636 = vsub.s32 %v633, %v635
  %v637 = vrot.slane %v623, %v636
  %v638 = vcombine.high %v630, %v630
  %v639 = vcombine.high %v637, %v637
  %v640 = vcombine.high %v33, %v33
  %v642 = vunpack.c.l.s4 1983009808
  %v643 = vunpack.c.0.s8 %v642
  %v644 = vlaneseq
  %v645 = vshrl.u32 %v644, 7
  %v646 = vsub.s32 %v643, %v645
  %v647 = vrot.slane %v33, %v646
  %v649 = vunpack.c.l.s4 1983009808
  %v650 = vunpack.c.0.s8 %v649
  %v651 = vlaneseq
  %v652 = vshrl.u32 %v651, 7
  %v653 = vsub.s32 %v650, %v652
  %v654 = vrot.slane %v640, %v653
  %v655 = vcombine.high %v647, %v647
  %v656 = vcombine.high %v654, %v654
  %v657 = vcombine.high %v34, %v34
  %v659 = vunpack.c.l.s4 1983009808
  %v660 = vunpack.c.0.s8 %v659
  %v661 = vlaneseq
  %v662 = vshrl.u32 %v661, 7
  %v663 = vsub.s32 %v660, %v662
  %v664 = vrot.slane %v34, %v663
  %v666 = vunpack.c.l.s4 1983009808
  %v667 = vunpack.c.0.s8 %v666
  %v668 = vlaneseq
  %v669 = vshrl.u32 %v668, 7
  %v670 = vsub.s32 %v667, %v669
  %v671 = vrot.slane %v657, %v670
  %v672 = vcombine.high %v664, %v664
  %v673 = vcombine.high %v671, %v671
  %v674 = vcombine.high %v35, %v35
  %v676 = vunpack.c.l.s4 1983009808
  %v677 = vunpack.c.0.s8 %v676
  %v678 = vlaneseq
  %v679 = vshrl.u32 %v678, 7
  %v680 = vsub.s32 %v677, %v679
  %v681 = vrot.slane %v35, %v680
  %v683 = vunpack.c.l.s4 1983009808
  %v684 = vunpack.c.0.s8 %v683
  %v685 = vlaneseq
  %v686 = vshrl.u32 %v685, 7
  %v687 = vsub.s32 %v684, %v686
  %v688 = vrot.slane %v674, %v687
  %v689 = vcombine.high %v681, %v681
  %v690 = vcombine.high %v688, %v688
  %vm722 = vcmask 523264
  %v723 = vsel %vm722, %v690, 0
  %725 = vmatprep.subr.mxu0 0.0
  %726 = vmatpush1.msra.mxu0 %v36
  %727 = vmatprep.subr.mxu0 0.0
  %728 = vmatpush1.msra.mxu0 %v37
  %729 = vmatprep.subr.mxu0 0.0
  %730 = vmatpush1.msra.mxu0 %v38
  %731 = vmatprep.subr.mxu0 0.0
  %732 = vmatpush1.msra.mxu0 %v39
  %733 = vmatprep.subr.mxu0 0.0
  %734 = vmatpush1.msra.mxu0 %v40
  %735 = vmatprep.subr.mxu0 0.0
  %736 = vmatpush1.msra.mxu0 %v41
  %737 = vmatprep.subr.mxu0 0.0
  %738 = vmatpush1.msra.mxu0 %v42
  %739 = vmatprep.subr.mxu0 0.0
  %740 = vmatpush1.msra.mxu0 %v43
  %741 = vmatprep.subr.mxu0 0.0
  %742 = vmatpush1.msra.mxu0 %v44
  %743 = vmatprep.subr.mxu0 0.0
  %744 = vmatpush1.msra.mxu0 %v45
  %745 = vmatprep.subr.mxu0 0.0
  %746 = vmatpush1.msra.mxu0 %v46
  %747 = vmatprep.subr.mxu0 0.0
  %748 = vmatpush1.msra.mxu0 %v47
  %749 = vmatprep.subr.mxu0 0.0
  %750 = vmatpush1.msra.mxu0 %v48
  %751 = vmatprep.subr.mxu0 0.0
  %752 = vmatpush1.msra.mxu0 %v49
  %753 = vmatprep.subr.mxu0 0.0
  %754 = vmatpush1.msra.mxu0 %v50
  %755 = vmatprep.subr.mxu0 0.0
  %756 = vmatpush1.msra.mxu0 %v51
  %757 = vmatprep.subr.mxu0 0.0
  %758 = vmatpush1.msra.mxu0 %v52
  %759 = vmatprep.subr.mxu0 0.0
  %760 = vmatpush1.msra.mxu0 %v53
  %761 = vmatprep.subr.mxu0 0.0
  %762 = vmatpush1.msra.mxu0 %v54
  %763 = vmatprep.subr.mxu0 0.0
  %764 = vmatpush1.msra.mxu0 %v55
  %765 = vmatprep.subr.mxu0 0.0
  %766 = vmatpush1.msra.mxu0 %v56
  %767 = vmatprep.subr.mxu0 0.0
  %768 = vmatpush1.msra.mxu0 %v57
  %769 = vmatprep.subr.mxu0 0.0
  %770 = vmatpush1.msra.mxu0 %v58
  %771 = vmatprep.subr.mxu0 0.0
  %772 = vmatpush1.msra.mxu0 %v59
  %773 = vmatprep.subr.mxu0 0.0
  %774 = vmatpush1.msra.mxu0 %v60
  %775 = vmatprep.subr.mxu0 0.0
  %776 = vmatpush1.msra.mxu0 %v61
  %777 = vmatprep.subr.mxu0 0.0
  %778 = vmatpush1.msra.mxu0 %v62
  %779 = vmatprep.subr.mxu0 0.0
  %780 = vmatpush1.msra.mxu0 %v63
  %781 = vmatprep.subr.mxu0 0.0
  %782 = vmatpush1.msra.mxu0 %v64
  %783 = vmatprep.subr.mxu0 0.0
  %784 = vmatpush1.msra.mxu0 %v65
  %785 = vmatprep.subr.mxu0 0.0
  %786 = vmatpush1.msra.mxu0 %v66
  %787 = vmatprep.subr.mxu0 0.0
  %788 = vmatpush1.msra.mxu0 %v67
  %789 = vmatprep.mubr.f32.mxu0 %v570
  %790 = vmatmul.mubr.f32.gmra.mrb[0].mxu0 %v562
  %v791 = vpop.f32.mrb[0].mxu0
  %v792 = vadd.f32 %v545, %v791
  %v793 = vpop.f32.mrb[0].mxu0
  %794 = vdwg.mxu0
  %795 = vmatprep.subr.mxu0 0.0
  %796 = vmatpush1.msra.mxu0 %v68
  %797 = vmatprep.subr.mxu0 0.0
  %798 = vmatpush1.msra.mxu0 %v69
  %799 = vmatprep.subr.mxu0 0.0
  %800 = vmatpush1.msra.mxu0 %v70
  %801 = vmatprep.subr.mxu0 0.0
  %802 = vmatpush1.msra.mxu0 %v71
  %803 = vmatprep.subr.mxu0 0.0
  %804 = vmatpush1.msra.mxu0 %v72
  %805 = vmatprep.subr.mxu0 0.0
  %806 = vmatpush1.msra.mxu0 %v73
  %807 = vmatprep.subr.mxu0 0.0
  %808 = vmatpush1.msra.mxu0 %v74
  %809 = vmatprep.subr.mxu0 0.0
  %810 = vmatpush1.msra.mxu0 %v75
  %811 = vmatprep.subr.mxu0 0.0
  %812 = vmatpush1.msra.mxu0 %v76
  %813 = vmatprep.subr.mxu0 0.0
  %814 = vmatpush1.msra.mxu0 %v77
  %815 = vmatprep.subr.mxu0 0.0
  %816 = vmatpush1.msra.mxu0 %v78
  %817 = vmatprep.subr.mxu0 0.0
  %818 = vmatpush1.msra.mxu0 %v79
  %819 = vmatprep.subr.mxu0 0.0
  %820 = vmatpush1.msra.mxu0 %v80
  %821 = vmatprep.subr.mxu0 0.0
  %822 = vmatpush1.msra.mxu0 %v81
  %823 = vmatprep.subr.mxu0 0.0
  %824 = vmatpush1.msra.mxu0 %v82
  %825 = vmatprep.subr.mxu0 0.0
  %826 = vmatpush1.msra.mxu0 %v83
  %827 = vmatprep.subr.mxu0 0.0
  %828 = vmatpush1.msra.mxu0 %v84
  %829 = vmatprep.subr.mxu0 0.0
  %830 = vmatpush1.msra.mxu0 %v85
  %831 = vmatprep.subr.mxu0 0.0
  %832 = vmatpush1.msra.mxu0 %v86
  %833 = vmatprep.subr.mxu0 0.0
  %834 = vmatpush1.msra.mxu0 %v87
  %835 = vmatprep.subr.mxu0 0.0
  %836 = vmatpush1.msra.mxu0 %v88
  %837 = vmatprep.subr.mxu0 0.0
  %838 = vmatpush1.msra.mxu0 %v89
  %839 = vmatprep.subr.mxu0 0.0
  %840 = vmatpush1.msra.mxu0 %v90
  %841 = vmatprep.subr.mxu0 0.0
  %842 = vmatpush1.msra.mxu0 %v91
  %843 = vmatprep.subr.mxu0 0.0
  %844 = vmatpush1.msra.mxu0 %v92
  %845 = vmatprep.subr.mxu0 0.0
  %846 = vmatpush1.msra.mxu0 %v93
  %847 = vmatprep.subr.mxu0 0.0
  %848 = vmatpush1.msra.mxu0 %v94
  %849 = vmatprep.subr.mxu0 0.0
  %850 = vmatpush1.msra.mxu0 %v95
  %851 = vmatprep.subr.mxu0 0.0
  %852 = vmatpush1.msra.mxu0 %v96
  %853 = vmatprep.subr.mxu0 0.0
  %854 = vmatpush1.msra.mxu0 %v97
  %855 = vmatprep.subr.mxu0 0.0
  %856 = vmatpush1.msra.mxu0 %v98
  %857 = vmatprep.subr.mxu0 0.0
  %858 = vmatpush1.msra.mxu0 %v99
  %859 = vmatprep.mubr.f32.mxu0 %v571
  %860 = vmatmul.mubr.f32.gmra.mrb[0].mxu0 %v569
  %v861 = vpop.f32.mrb[0].mxu0
  %v862 = vadd.f32 %v792, %v861
  %v863 = vpop.f32.mrb[0].mxu0
  %864 = vdwg.mxu0
  %865 = vmatprep.subr.mxu0 0.0
  %866 = vmatpush1.msra.mxu0 %v100
  %867 = vmatprep.subr.mxu0 0.0
  %868 = vmatpush1.msra.mxu0 %v101
  %869 = vmatprep.subr.mxu0 0.0
  %870 = vmatpush1.msra.mxu0 %v102
  %871 = vmatprep.subr.mxu0 0.0
  %872 = vmatpush1.msra.mxu0 %v103
  %873 = vmatprep.subr.mxu0 0.0
  %874 = vmatpush1.msra.mxu0 %v104
  %875 = vmatprep.subr.mxu0 0.0
  %876 = vmatpush1.msra.mxu0 %v105
  %877 = vmatprep.subr.mxu0 0.0
  %878 = vmatpush1.msra.mxu0 %v106
  %879 = vmatprep.subr.mxu0 0.0
  %880 = vmatpush1.msra.mxu0 %v107
  %881 = vmatprep.subr.mxu0 0.0
  %882 = vmatpush1.msra.mxu0 %v108
  %883 = vmatprep.subr.mxu0 0.0
  %884 = vmatpush1.msra.mxu0 %v109
  %885 = vmatprep.subr.mxu0 0.0
  %886 = vmatpush1.msra.mxu0 %v110
  %887 = vmatprep.subr.mxu0 0.0
  %888 = vmatpush1.msra.mxu0 %v111
  %889 = vmatprep.subr.mxu0 0.0
  %890 = vmatpush1.msra.mxu0 %v112
  %891 = vmatprep.subr.mxu0 0.0
  %892 = vmatpush1.msra.mxu0 %v113
  %893 = vmatprep.subr.mxu0 0.0
  %894 = vmatpush1.msra.mxu0 %v114
  %895 = vmatprep.subr.mxu0 0.0
  %896 = vmatpush1.msra.mxu0 %v115
  %897 = vmatprep.subr.mxu0 0.0
  %898 = vmatpush1.msra.mxu0 %v116
  %899 = vmatprep.subr.mxu0 0.0
  %900 = vmatpush1.msra.mxu0 %v117
  %901 = vmatprep.subr.mxu0 0.0
  %902 = vmatpush1.msra.mxu0 %v118
  %903 = vmatprep.subr.mxu0 0.0
  %904 = vmatpush1.msra.mxu0 %v119
  %905 = vmatprep.subr.mxu0 0.0
  %906 = vmatpush1.msra.mxu0 %v120
  %907 = vmatprep.subr.mxu0 0.0
  %908 = vmatpush1.msra.mxu0 %v121
  %909 = vmatprep.subr.mxu0 0.0
  %910 = vmatpush1.msra.mxu0 %v122
  %911 = vmatprep.subr.mxu0 0.0
  %912 = vmatpush1.msra.mxu0 %v123
  %913 = vmatprep.subr.mxu0 0.0
  %914 = vmatpush1.msra.mxu0 %v124
  %915 = vmatprep.subr.mxu0 0.0
  %916 = vmatpush1.msra.mxu0 %v125
  %917 = vmatprep.subr.mxu0 0.0
  %918 = vmatpush1.msra.mxu0 %v126
  %919 = vmatprep.subr.mxu0 0.0
  %920 = vmatpush1.msra.mxu0 %v127
  %921 = vmatprep.subr.mxu0 0.0
  %922 = vmatpush1.msra.mxu0 %v128
  %923 = vmatprep.subr.mxu0 0.0
  %924 = vmatpush1.msra.mxu0 %v129
  %925 = vmatprep.subr.mxu0 0.0
  %926 = vmatpush1.msra.mxu0 %v130
  %927 = vmatprep.subr.mxu0 0.0
  %928 = vmatpush1.msra.mxu0 %v131
  %929 = vmatprep.mubr.f32.mxu0 %v587
  %930 = vmatmul.mubr.f32.gmra.mrb[0].mxu0 %v579
  %v931 = vpop.f32.mrb[0].mxu0
  %v932 = vadd.f32 %v862, %v931
  %v933 = vpop.f32.mrb[0].mxu0
  %934 = vdwg.mxu0
  %935 = vmatprep.subr.mxu0 0.0
  %936 = vmatpush1.msra.mxu0 %v132
  %937 = vmatprep.subr.mxu0 0.0
  %938 = vmatpush1.msra.mxu0 %v133
  %939 = vmatprep.subr.mxu0 0.0
  %940 = vmatpush1.msra.mxu0 %v134
  %941 = vmatprep.subr.mxu0 0.0
  %942 = vmatpush1.msra.mxu0 %v135
  %943 = vmatprep.subr.mxu0 0.0
  %944 = vmatpush1.msra.mxu0 %v136
  %945 = vmatprep.subr.mxu0 0.0
  %946 = vmatpush1.msra.mxu0 %v137
  %947 = vmatprep.subr.mxu0 0.0
  %948 = vmatpush1.msra.mxu0 %v138
  %949 = vmatprep.subr.mxu0 0.0
  %950 = vmatpush1.msra.mxu0 %v139
  %951 = vmatprep.subr.mxu0 0.0
  %952 = vmatpush1.msra.mxu0 %v140
  %953 = vmatprep.subr.mxu0 0.0
  %954 = vmatpush1.msra.mxu0 %v141
  %955 = vmatprep.subr.mxu0 0.0
  %956 = vmatpush1.msra.mxu0 %v142
  %957 = vmatprep.subr.mxu0 0.0
  %958 = vmatpush1.msra.mxu0 %v143
  %959 = vmatprep.subr.mxu0 0.0
  %960 = vmatpush1.msra.mxu0 %v144
  %961 = vmatprep.subr.mxu0 0.0
  %962 = vmatpush1.msra.mxu0 %v145
  %963 = vmatprep.subr.mxu0 0.0
  %964 = vmatpush1.msra.mxu0 %v146
  %965 = vmatprep.subr.mxu0 0.0
  %966 = vmatpush1.msra.mxu0 %v147
  %967 = vmatprep.subr.mxu0 0.0
  %968 = vmatpush1.msra.mxu0 %v148
  %969 = vmatprep.subr.mxu0 0.0
  %970 = vmatpush1.msra.mxu0 %v149
  %971 = vmatprep.subr.mxu0 0.0
  %972 = vmatpush1.msra.mxu0 %v150
  %973 = vmatprep.subr.mxu0 0.0
  %974 = vmatpush1.msra.mxu0 %v151
  %975 = vmatprep.subr.mxu0 0.0
  %976 = vmatpush1.msra.mxu0 %v152
  %977 = vmatprep.subr.mxu0 0.0
  %978 = vmatpush1.msra.mxu0 %v153
  %979 = vmatprep.subr.mxu0 0.0
  %980 = vmatpush1.msra.mxu0 %v154
  %981 = vmatprep.subr.mxu0 0.0
  %982 = vmatpush1.msra.mxu0 %v155
  %983 = vmatprep.subr.mxu0 0.0
  %984 = vmatpush1.msra.mxu0 %v156
  %985 = vmatprep.subr.mxu0 0.0
  %986 = vmatpush1.msra.mxu0 %v157
  %987 = vmatprep.subr.mxu0 0.0
  %988 = vmatpush1.msra.mxu0 %v158
  %989 = vmatprep.subr.mxu0 0.0
  %990 = vmatpush1.msra.mxu0 %v159
  %991 = vmatprep.subr.mxu0 0.0
  %992 = vmatpush1.msra.mxu0 %v160
  %993 = vmatprep.subr.mxu0 0.0
  %994 = vmatpush1.msra.mxu0 %v161
  %995 = vmatprep.subr.mxu0 0.0
  %996 = vmatpush1.msra.mxu0 %v162
  %997 = vmatprep.subr.mxu0 0.0
  %998 = vmatpush1.msra.mxu0 %v163
  %999 = vmatprep.mubr.f32.mxu0 %v588
  %1000 = vmatmul.mubr.f32.gmra.mrb[0].mxu0 %v586
  %v1001 = vpop.f32.mrb[0].mxu0
  %v1002 = vadd.f32 %v932, %v1001
  %v1003 = vpop.f32.mrb[0].mxu0
  %1004 = vdwg.mxu0
  %1005 = vmatprep.subr.mxu0 0.0
  %1006 = vmatpush1.msra.mxu0 %v164
  %1007 = vmatprep.subr.mxu0 0.0
  %1008 = vmatpush1.msra.mxu0 %v165
  %1009 = vmatprep.subr.mxu0 0.0
  %1010 = vmatpush1.msra.mxu0 %v166
  %1011 = vmatprep.subr.mxu0 0.0
  %1012 = vmatpush1.msra.mxu0 %v167
  %1013 = vmatprep.subr.mxu0 0.0
  %1014 = vmatpush1.msra.mxu0 %v168
  %1015 = vmatprep.subr.mxu0 0.0
  %1016 = vmatpush1.msra.mxu0 %v169
  %1017 = vmatprep.subr.mxu0 0.0
  %1018 = vmatpush1.msra.mxu0 %v170
  %1019 = vmatprep.subr.mxu0 0.0
  %1020 = vmatpush1.msra.mxu0 %v171
  %1021 = vmatprep.subr.mxu0 0.0
  %1022 = vmatpush1.msra.mxu0 %v172
  %1023 = vmatprep.subr.mxu0 0.0
  %1024 = vmatpush1.msra.mxu0 %v173
  %1025 = vmatprep.subr.mxu0 0.0
  %1026 = vmatpush1.msra.mxu0 %v174
  %1027 = vmatprep.subr.mxu0 0.0
  %1028 = vmatpush1.msra.mxu0 %v175
  %1029 = vmatprep.subr.mxu0 0.0
  %1030 = vmatpush1.msra.mxu0 %v176
  %1031 = vmatprep.subr.mxu0 0.0
  %1032 = vmatpush1.msra.mxu0 %v177
  %1033 = vmatprep.subr.mxu0 0.0
  %1034 = vmatpush1.msra.mxu0 %v178
  %1035 = vmatprep.subr.mxu0 0.0
  %1036 = vmatpush1.msra.mxu0 %v179
  %1037 = vmatprep.subr.mxu0 0.0
  %1038 = vmatpush1.msra.mxu0 %v180
  %1039 = vmatprep.subr.mxu0 0.0
  %1040 = vmatpush1.msra.mxu0 %v181
  %1041 = vmatprep.subr.mxu0 0.0
  %1042 = vmatpush1.msra.mxu0 %v182
  %1043 = vmatprep.subr.mxu0 0.0
  %1044 = vmatpush1.msra.mxu0 %v183
  %1045 = vmatprep.subr.mxu0 0.0
  %1046 = vmatpush1.msra.mxu0 %v184
  %1047 = vmatprep.subr.mxu0 0.0
  %1048 = vmatpush1.msra.mxu0 %v185
  %1049 = vmatprep.subr.mxu0 0.0
  %1050 = vmatpush1.msra.mxu0 %v186
  %1051 = vmatprep.subr.mxu0 0.0
  %1052 = vmatpush1.msra.mxu0 %v187
  %1053 = vmatprep.subr.mxu0 0.0
  %1054 = vmatpush1.msra.mxu0 %v188
  %1055 = vmatprep.subr.mxu0 0.0
  %1056 = vmatpush1.msra.mxu0 %v189
  %1057 = vmatprep.subr.mxu0 0.0
  %1058 = vmatpush1.msra.mxu0 %v190
  %1059 = vmatprep.subr.mxu0 0.0
  %1060 = vmatpush1.msra.mxu0 %v191
  %1061 = vmatprep.subr.mxu0 0.0
  %1062 = vmatpush1.msra.mxu0 %v192
  %1063 = vmatprep.subr.mxu0 0.0
  %1064 = vmatpush1.msra.mxu0 %v193
  %1065 = vmatprep.subr.mxu0 0.0
  %1066 = vmatpush1.msra.mxu0 %v194
  %1067 = vmatprep.subr.mxu0 0.0
  %1068 = vmatpush1.msra.mxu0 %v195
  %1069 = vmatprep.mubr.f32.mxu0 %v604
  %1070 = vmatmul.mubr.f32.gmra.mrb[0].mxu0 %v596
  %v1071 = vpop.f32.mrb[0].mxu0
  %v1072 = vadd.f32 %v1002, %v1071
  %v1073 = vpop.f32.mrb[0].mxu0
  %1074 = vdwg.mxu0
  %1075 = vmatprep.subr.mxu0 0.0
  %1076 = vmatpush1.msra.mxu0 %v196
  %1077 = vmatprep.subr.mxu0 0.0
  %1078 = vmatpush1.msra.mxu0 %v197
  %1079 = vmatprep.subr.mxu0 0.0
  %1080 = vmatpush1.msra.mxu0 %v198
  %1081 = vmatprep.subr.mxu0 0.0
  %1082 = vmatpush1.msra.mxu0 %v199
  %1083 = vmatprep.subr.mxu0 0.0
  %1084 = vmatpush1.msra.mxu0 %v200
  %1085 = vmatprep.subr.mxu0 0.0
  %1086 = vmatpush1.msra.mxu0 %v201
  %1087 = vmatprep.subr.mxu0 0.0
  %1088 = vmatpush1.msra.mxu0 %v202
  %1089 = vmatprep.subr.mxu0 0.0
  %1090 = vmatpush1.msra.mxu0 %v203
  %1091 = vmatprep.subr.mxu0 0.0
  %1092 = vmatpush1.msra.mxu0 %v204
  %1093 = vmatprep.subr.mxu0 0.0
  %1094 = vmatpush1.msra.mxu0 %v205
  %1095 = vmatprep.subr.mxu0 0.0
  %1096 = vmatpush1.msra.mxu0 %v206
  %1097 = vmatprep.subr.mxu0 0.0
  %1098 = vmatpush1.msra.mxu0 %v207
  %1099 = vmatprep.subr.mxu0 0.0
  %1100 = vmatpush1.msra.mxu0 %v208
  %1101 = vmatprep.subr.mxu0 0.0
  %1102 = vmatpush1.msra.mxu0 %v209
  %1103 = vmatprep.subr.mxu0 0.0
  %1104 = vmatpush1.msra.mxu0 %v210
  %1105 = vmatprep.subr.mxu0 0.0
  %1106 = vmatpush1.msra.mxu0 %v211
  %1107 = vmatprep.subr.mxu0 0.0
  %1108 = vmatpush1.msra.mxu0 %v212
  %1109 = vmatprep.subr.mxu0 0.0
  %1110 = vmatpush1.msra.mxu0 %v213
  %1111 = vmatprep.subr.mxu0 0.0
  %1112 = vmatpush1.msra.mxu0 %v214
  %1113 = vmatprep.subr.mxu0 0.0
  %1114 = vmatpush1.msra.mxu0 %v215
  %1115 = vmatprep.subr.mxu0 0.0
  %1116 = vmatpush1.msra.mxu0 %v216
  %1117 = vmatprep.subr.mxu0 0.0
  %1118 = vmatpush1.msra.mxu0 %v217
  %1119 = vmatprep.subr.mxu0 0.0
  %1120 = vmatpush1.msra.mxu0 %v218
  %1121 = vmatprep.subr.mxu0 0.0
  %1122 = vmatpush1.msra.mxu0 %v219
  %1123 = vmatprep.subr.mxu0 0.0
  %1124 = vmatpush1.msra.mxu0 %v220
  %1125 = vmatprep.subr.mxu0 0.0
  %1126 = vmatpush1.msra.mxu0 %v221
  %1127 = vmatprep.subr.mxu0 0.0
  %1128 = vmatpush1.msra.mxu0 %v222
  %1129 = vmatprep.subr.mxu0 0.0
  %1130 = vmatpush1.msra.mxu0 %v223
  %1131 = vmatprep.subr.mxu0 0.0
  %1132 = vmatpush1.msra.mxu0 %v224
  %1133 = vmatprep.subr.mxu0 0.0
  %1134 = vmatpush1.msra.mxu0 %v225
  %1135 = vmatprep.subr.mxu0 0.0
  %1136 = vmatpush1.msra.mxu0 %v226
  %1137 = vmatprep.subr.mxu0 0.0
  %1138 = vmatpush1.msra.mxu0 %v227
  %1139 = vmatprep.mubr.f32.mxu0 %v605
  %1140 = vmatmul.mubr.f32.gmra.mrb[0].mxu0 %v603
  %v1141 = vpop.f32.mrb[0].mxu0
  %v1142 = vadd.f32 %v1072, %v1141
  %v1143 = vpop.f32.mrb[0].mxu0
  %1144 = vdwg.mxu0
  %1145 = vmatprep.subr.mxu0 0.0
  %1146 = vmatpush1.msra.mxu0 %v228
  %1147 = vmatprep.subr.mxu0 0.0
  %1148 = vmatpush1.msra.mxu0 %v229
  %1149 = vmatprep.subr.mxu0 0.0
  %1150 = vmatpush1.msra.mxu0 %v230
  %1151 = vmatprep.subr.mxu0 0.0
  %1152 = vmatpush1.msra.mxu0 %v231
  %1153 = vmatprep.subr.mxu0 0.0
  %1154 = vmatpush1.msra.mxu0 %v232
  %1155 = vmatprep.subr.mxu0 0.0
  %1156 = vmatpush1.msra.mxu0 %v233
  %1157 = vmatprep.subr.mxu0 0.0
  %1158 = vmatpush1.msra.mxu0 %v234
  %1159 = vmatprep.subr.mxu0 0.0
  %1160 = vmatpush1.msra.mxu0 %v235
  %1161 = vmatprep.subr.mxu0 0.0
  %1162 = vmatpush1.msra.mxu0 %v236
  %1163 = vmatprep.subr.mxu0 0.0
  %1164 = vmatpush1.msra.mxu0 %v237
  %1165 = vmatprep.subr.mxu0 0.0
  %1166 = vmatpush1.msra.mxu0 %v238
  %1167 = vmatprep.subr.mxu0 0.0
  %1168 = vmatpush1.msra.mxu0 %v239
  %1169 = vmatprep.subr.mxu0 0.0
  %1170 = vmatpush1.msra.mxu0 %v240
  %1171 = vmatprep.subr.mxu0 0.0
  %1172 = vmatpush1.msra.mxu0 %v241
  %1173 = vmatprep.subr.mxu0 0.0
  %1174 = vmatpush1.msra.mxu0 %v242
  %1175 = vmatprep.subr.mxu0 0.0
  %1176 = vmatpush1.msra.mxu0 %v243
  %1177 = vmatprep.subr.mxu0 0.0
  %1178 = vmatpush1.msra.mxu0 %v244
  %1179 = vmatprep.subr.mxu0 0.0
  %1180 = vmatpush1.msra.mxu0 %v245
  %1181 = vmatprep.subr.mxu0 0.0
  %1182 = vmatpush1.msra.mxu0 %v246
  %1183 = vmatprep.subr.mxu0 0.0
  %1184 = vmatpush1.msra.mxu0 %v247
  %1185 = vmatprep.subr.mxu0 0.0
  %1186 = vmatpush1.msra.mxu0 %v248
  %1187 = vmatprep.subr.mxu0 0.0
  %1188 = vmatpush1.msra.mxu0 %v249
  %1189 = vmatprep.subr.mxu0 0.0
  %1190 = vmatpush1.msra.mxu0 %v250
  %1191 = vmatprep.subr.mxu0 0.0
  %1192 = vmatpush1.msra.mxu0 %v251
  %1193 = vmatprep.subr.mxu0 0.0
  %1194 = vmatpush1.msra.mxu0 %v252
  %1195 = vmatprep.subr.mxu0 0.0
  %1196 = vmatpush1.msra.mxu0 %v253
  %1197 = vmatprep.subr.mxu0 0.0
  %1198 = vmatpush1.msra.mxu0 %v254
  %1199 = vmatprep.subr.mxu0 0.0
  %1200 = vmatpush1.msra.mxu0 %v255
  %1201 = vmatprep.subr.mxu0 0.0
  %1202 = vmatpush1.msra.mxu0 %v256
  %1203 = vmatprep.subr.mxu0 0.0
  %1204 = vmatpush1.msra.mxu0 %v257
  %1205 = vmatprep.subr.mxu0 0.0
  %1206 = vmatpush1.msra.mxu0 %v258
  %1207 = vmatprep.subr.mxu0 0.0
  %1208 = vmatpush1.msra.mxu0 %v259
  %1209 = vmatprep.mubr.f32.mxu0 %v621
  %1210 = vmatmul.mubr.f32.gmra.mrb[0].mxu0 %v613
  %v1211 = vpop.f32.mrb[0].mxu0
  %v1212 = vadd.f32 %v1142, %v1211
  %v1213 = vpop.f32.mrb[0].mxu0
  %1214 = vdwg.mxu0
  %1215 = vmatprep.subr.mxu0 0.0
  %1216 = vmatpush1.msra.mxu0 %v260
  %1217 = vmatprep.subr.mxu0 0.0
  %1218 = vmatpush1.msra.mxu0 %v261
  %1219 = vmatprep.subr.mxu0 0.0
  %1220 = vmatpush1.msra.mxu0 %v262
  %1221 = vmatprep.subr.mxu0 0.0
  %1222 = vmatpush1.msra.mxu0 %v263
  %1223 = vmatprep.subr.mxu0 0.0
  %1224 = vmatpush1.msra.mxu0 %v264
  %1225 = vmatprep.subr.mxu0 0.0
  %1226 = vmatpush1.msra.mxu0 %v265
  %1227 = vmatprep.subr.mxu0 0.0
  %1228 = vmatpush1.msra.mxu0 %v266
  %1229 = vmatprep.subr.mxu0 0.0
  %1230 = vmatpush1.msra.mxu0 %v267
  %1231 = vmatprep.subr.mxu0 0.0
  %1232 = vmatpush1.msra.mxu0 %v268
  %1233 = vmatprep.subr.mxu0 0.0
  %1234 = vmatpush1.msra.mxu0 %v269
  %1235 = vmatprep.subr.mxu0 0.0
  %1236 = vmatpush1.msra.mxu0 %v270
  %1237 = vmatprep.subr.mxu0 0.0
  %1238 = vmatpush1.msra.mxu0 %v271
  %1239 = vmatprep.subr.mxu0 0.0
  %1240 = vmatpush1.msra.mxu0 %v272
  %1241 = vmatprep.subr.mxu0 0.0
  %1242 = vmatpush1.msra.mxu0 %v273
  %1243 = vmatprep.subr.mxu0 0.0
  %1244 = vmatpush1.msra.mxu0 %v274
  %1245 = vmatprep.subr.mxu0 0.0
  %1246 = vmatpush1.msra.mxu0 %v275
  %1247 = vmatprep.subr.mxu0 0.0
  %1248 = vmatpush1.msra.mxu0 %v276
  %1249 = vmatprep.subr.mxu0 0.0
  %1250 = vmatpush1.msra.mxu0 %v277
  %1251 = vmatprep.subr.mxu0 0.0
  %1252 = vmatpush1.msra.mxu0 %v278
  %1253 = vmatprep.subr.mxu0 0.0
  %1254 = vmatpush1.msra.mxu0 %v279
  %1255 = vmatprep.subr.mxu0 0.0
  %1256 = vmatpush1.msra.mxu0 %v280
  %1257 = vmatprep.subr.mxu0 0.0
  %1258 = vmatpush1.msra.mxu0 %v281
  %1259 = vmatprep.subr.mxu0 0.0
  %1260 = vmatpush1.msra.mxu0 %v282
  %1261 = vmatprep.subr.mxu0 0.0
  %1262 = vmatpush1.msra.mxu0 %v283
  %1263 = vmatprep.subr.mxu0 0.0
  %1264 = vmatpush1.msra.mxu0 %v284
  %1265 = vmatprep.subr.mxu0 0.0
  %1266 = vmatpush1.msra.mxu0 %v285
  %1267 = vmatprep.subr.mxu0 0.0
  %1268 = vmatpush1.msra.mxu0 %v286
  %1269 = vmatprep.subr.mxu0 0.0
  %1270 = vmatpush1.msra.mxu0 %v287
  %1271 = vmatprep.subr.mxu0 0.0
  %1272 = vmatpush1.msra.mxu0 %v288
  %1273 = vmatprep.subr.mxu0 0.0
  %1274 = vmatpush1.msra.mxu0 %v289
  %1275 = vmatprep.subr.mxu0 0.0
  %1276 = vmatpush1.msra.mxu0 %v290
  %1277 = vmatprep.subr.mxu0 0.0
  %1278 = vmatpush1.msra.mxu0 %v291
  %1279 = vmatprep.mubr.f32.mxu0 %v622
  %1280 = vmatmul.mubr.f32.gmra.mrb[0].mxu0 %v620
  %v1281 = vpop.f32.mrb[0].mxu0
  %v1282 = vadd.f32 %v1212, %v1281
  %v1283 = vpop.f32.mrb[0].mxu0
  %1284 = vdwg.mxu0
  %1285 = vmatprep.subr.mxu0 0.0
  %1286 = vmatpush1.msra.mxu0 %v292
  %1287 = vmatprep.subr.mxu0 0.0
  %1288 = vmatpush1.msra.mxu0 %v293
  %1289 = vmatprep.subr.mxu0 0.0
  %1290 = vmatpush1.msra.mxu0 %v294
  %1291 = vmatprep.subr.mxu0 0.0
  %1292 = vmatpush1.msra.mxu0 %v295
  %1293 = vmatprep.subr.mxu0 0.0
  %1294 = vmatpush1.msra.mxu0 %v296
  %1295 = vmatprep.subr.mxu0 0.0
  %1296 = vmatpush1.msra.mxu0 %v297
  %1297 = vmatprep.subr.mxu0 0.0
  %1298 = vmatpush1.msra.mxu0 %v298
  %1299 = vmatprep.subr.mxu0 0.0
  %1300 = vmatpush1.msra.mxu0 %v299
  %1301 = vmatprep.subr.mxu0 0.0
  %1302 = vmatpush1.msra.mxu0 %v300
  %1303 = vmatprep.subr.mxu0 0.0
  %1304 = vmatpush1.msra.mxu0 %v301
  %1305 = vmatprep.subr.mxu0 0.0
  %1306 = vmatpush1.msra.mxu0 %v302
  %1307 = vmatprep.subr.mxu0 0.0
  %1308 = vmatpush1.msra.mxu0 %v303
  %1309 = vmatprep.subr.mxu0 0.0
  %1310 = vmatpush1.msra.mxu0 %v304
  %1311 = vmatprep.subr.mxu0 0.0
  %1312 = vmatpush1.msra.mxu0 %v305
  %1313 = vmatprep.subr.mxu0 0.0
  %1314 = vmatpush1.msra.mxu0 %v306
  %1315 = vmatprep.subr.mxu0 0.0
  %1316 = vmatpush1.msra.mxu0 %v307
  %1317 = vmatprep.subr.mxu0 0.0
  %1318 = vmatpush1.msra.mxu0 %v308
  %1319 = vmatprep.subr.mxu0 0.0
  %1320 = vmatpush1.msra.mxu0 %v309
  %1321 = vmatprep.subr.mxu0 0.0
  %1322 = vmatpush1.msra.mxu0 %v310
  %1323 = vmatprep.subr.mxu0 0.0
  %1324 = vmatpush1.msra.mxu0 %v311
  %1325 = vmatprep.subr.mxu0 0.0
  %1326 = vmatpush1.msra.mxu0 %v312
  %1327 = vmatprep.subr.mxu0 0.0
  %1328 = vmatpush1.msra.mxu0 %v313
  %1329 = vmatprep.subr.mxu0 0.0
  %1330 = vmatpush1.msra.mxu0 %v314
  %1331 = vmatprep.subr.mxu0 0.0
  %1332 = vmatpush1.msra.mxu0 %v315
  %1333 = vmatprep.subr.mxu0 0.0
  %1334 = vmatpush1.msra.mxu0 %v316
  %1335 = vmatprep.subr.mxu0 0.0
  %1336 = vmatpush1.msra.mxu0 %v317
  %1337 = vmatprep.subr.mxu0 0.0
  %1338 = vmatpush1.msra.mxu0 %v318
  %1339 = vmatprep.subr.mxu0 0.0
  %1340 = vmatpush1.msra.mxu0 %v319
  %1341 = vmatprep.subr.mxu0 0.0
  %1342 = vmatpush1.msra.mxu0 %v320
  %1343 = vmatprep.subr.mxu0 0.0
  %1344 = vmatpush1.msra.mxu0 %v321
  %1345 = vmatprep.subr.mxu0 0.0
  %1346 = vmatpush1.msra.mxu0 %v322
  %1347 = vmatprep.subr.mxu0 0.0
  %1348 = vmatpush1.msra.mxu0 %v323
  %1349 = vmatprep.mubr.f32.mxu0 %v638
  %1350 = vmatmul.mubr.f32.gmra.mrb[0].mxu0 %v630
  %v1351 = vpop.f32.mrb[0].mxu0
  %v1352 = vadd.f32 %v1282, %v1351
  %v1353 = vpop.f32.mrb[0].mxu0
  %1354 = vdwg.mxu0
  %1355 = vmatprep.subr.mxu0 0.0
  %1356 = vmatpush1.msra.mxu0 %v324
  %1357 = vmatprep.subr.mxu0 0.0
  %1358 = vmatpush1.msra.mxu0 %v325
  %1359 = vmatprep.subr.mxu0 0.0
  %1360 = vmatpush1.msra.mxu0 %v326
  %1361 = vmatprep.subr.mxu0 0.0
  %1362 = vmatpush1.msra.mxu0 %v327
  %1363 = vmatprep.subr.mxu0 0.0
  %1364 = vmatpush1.msra.mxu0 %v328
  %1365 = vmatprep.subr.mxu0 0.0
  %1366 = vmatpush1.msra.mxu0 %v329
  %1367 = vmatprep.subr.mxu0 0.0
  %1368 = vmatpush1.msra.mxu0 %v330
  %1369 = vmatprep.subr.mxu0 0.0
  %1370 = vmatpush1.msra.mxu0 %v331
  %1371 = vmatprep.subr.mxu0 0.0
  %1372 = vmatpush1.msra.mxu0 %v332
  %1373 = vmatprep.subr.mxu0 0.0
  %1374 = vmatpush1.msra.mxu0 %v333
  %1375 = vmatprep.subr.mxu0 0.0
  %1376 = vmatpush1.msra.mxu0 %v334
  %1377 = vmatprep.subr.mxu0 0.0
  %1378 = vmatpush1.msra.mxu0 %v335
  %1379 = vmatprep.subr.mxu0 0.0
  %1380 = vmatpush1.msra.mxu0 %v336
  %1381 = vmatprep.subr.mxu0 0.0
  %1382 = vmatpush1.msra.mxu0 %v337
  %1383 = vmatprep.subr.mxu0 0.0
  %1384 = vmatpush1.msra.mxu0 %v338
  %1385 = vmatprep.subr.mxu0 0.0
  %1386 = vmatpush1.msra.mxu0 %v339
  %1387 = vmatprep.subr.mxu0 0.0
  %1388 = vmatpush1.msra.mxu0 %v340
  %1389 = vmatprep.subr.mxu0 0.0
  %1390 = vmatpush1.msra.mxu0 %v341
  %1391 = vmatprep.subr.mxu0 0.0
  %1392 = vmatpush1.msra.mxu0 %v342
  %1393 = vmatprep.subr.mxu0 0.0
  %1394 = vmatpush1.msra.mxu0 %v343
  %1395 = vmatprep.subr.mxu0 0.0
  %1396 = vmatpush1.msra.mxu0 %v344
  %1397 = vmatprep.subr.mxu0 0.0
  %1398 = vmatpush1.msra.mxu0 %v345
  %1399 = vmatprep.subr.mxu0 0.0
  %1400 = vmatpush1.msra.mxu0 %v346
  %1401 = vmatprep.subr.mxu0 0.0
  %1402 = vmatpush1.msra.mxu0 %v347
  %1403 = vmatprep.subr.mxu0 0.0
  %1404 = vmatpush1.msra.mxu0 %v348
  %1405 = vmatprep.subr.mxu0 0.0
  %1406 = vmatpush1.msra.mxu0 %v349
  %1407 = vmatprep.subr.mxu0 0.0
  %1408 = vmatpush1.msra.mxu0 %v350
  %1409 = vmatprep.subr.mxu0 0.0
  %1410 = vmatpush1.msra.mxu0 %v351
  %1411 = vmatprep.subr.mxu0 0.0
  %1412 = vmatpush1.msra.mxu0 %v352
  %1413 = vmatprep.subr.mxu0 0.0
  %1414 = vmatpush1.msra.mxu0 %v353
  %1415 = vmatprep.subr.mxu0 0.0
  %1416 = vmatpush1.msra.mxu0 %v354
  %1417 = vmatprep.subr.mxu0 0.0
  %1418 = vmatpush1.msra.mxu0 %v355
  %1419 = vmatprep.mubr.f32.mxu0 %v639
  %1420 = vmatmul.mubr.f32.gmra.mrb[0].mxu0 %v637
  %v1421 = vpop.f32.mrb[0].mxu0
  %v1422 = vadd.f32 %v1352, %v1421
  %v1423 = vpop.f32.mrb[0].mxu0
  %1424 = vdwg.mxu0
  %1425 = vmatprep.subr.mxu0 0.0
  %1426 = vmatpush1.msra.mxu0 %v356
  %1427 = vmatprep.subr.mxu0 0.0
  %1428 = vmatpush1.msra.mxu0 %v357
  %1429 = vmatprep.subr.mxu0 0.0
  %1430 = vmatpush1.msra.mxu0 %v358
  %1431 = vmatprep.subr.mxu0 0.0
  %1432 = vmatpush1.msra.mxu0 %v359
  %1433 = vmatprep.subr.mxu0 0.0
  %1434 = vmatpush1.msra.mxu0 %v360
  %1435 = vmatprep.subr.mxu0 0.0
  %1436 = vmatpush1.msra.mxu0 %v361
  %1437 = vmatprep.subr.mxu0 0.0
  %1438 = vmatpush1.msra.mxu0 %v362
  %1439 = vmatprep.subr.mxu0 0.0
  %1440 = vmatpush1.msra.mxu0 %v363
  %1441 = vmatprep.subr.mxu0 0.0
  %1442 = vmatpush1.msra.mxu0 %v364
  %1443 = vmatprep.subr.mxu0 0.0
  %1444 = vmatpush1.msra.mxu0 %v365
  %1445 = vmatprep.subr.mxu0 0.0
  %1446 = vmatpush1.msra.mxu0 %v366
  %1447 = vmatprep.subr.mxu0 0.0
  %1448 = vmatpush1.msra.mxu0 %v367
  %1449 = vmatprep.subr.mxu0 0.0
  %1450 = vmatpush1.msra.mxu0 %v368
  %1451 = vmatprep.subr.mxu0 0.0
  %1452 = vmatpush1.msra.mxu0 %v369
  %1453 = vmatprep.subr.mxu0 0.0
  %1454 = vmatpush1.msra.mxu0 %v370
  %1455 = vmatprep.subr.mxu0 0.0
  %1456 = vmatpush1.msra.mxu0 %v371
  %1457 = vmatprep.subr.mxu0 0.0
  %1458 = vmatpush1.msra.mxu0 %v372
  %1459 = vmatprep.subr.mxu0 0.0
  %1460 = vmatpush1.msra.mxu0 %v373
  %1461 = vmatprep.subr.mxu0 0.0
  %1462 = vmatpush1.msra.mxu0 %v374
  %1463 = vmatprep.subr.mxu0 0.0
  %1464 = vmatpush1.msra.mxu0 %v375
  %1465 = vmatprep.subr.mxu0 0.0
  %1466 = vmatpush1.msra.mxu0 %v376
  %1467 = vmatprep.subr.mxu0 0.0
  %1468 = vmatpush1.msra.mxu0 %v377
  %1469 = vmatprep.subr.mxu0 0.0
  %1470 = vmatpush1.msra.mxu0 %v378
  %1471 = vmatprep.subr.mxu0 0.0
  %1472 = vmatpush1.msra.mxu0 %v379
  %1473 = vmatprep.subr.mxu0 0.0
  %1474 = vmatpush1.msra.mxu0 %v380
  %1475 = vmatprep.subr.mxu0 0.0
  %1476 = vmatpush1.msra.mxu0 %v381
  %1477 = vmatprep.subr.mxu0 0.0
  %1478 = vmatpush1.msra.mxu0 %v382
  %1479 = vmatprep.subr.mxu0 0.0
  %1480 = vmatpush1.msra.mxu0 %v383
  %1481 = vmatprep.subr.mxu0 0.0
  %1482 = vmatpush1.msra.mxu0 %v384
  %1483 = vmatprep.subr.mxu0 0.0
  %1484 = vmatpush1.msra.mxu0 %v385
  %1485 = vmatprep.subr.mxu0 0.0
  %1486 = vmatpush1.msra.mxu0 %v386
  %1487 = vmatprep.subr.mxu0 0.0
  %1488 = vmatpush1.msra.mxu0 %v387
  %1489 = vmatprep.mubr.f32.mxu0 %v655
  %1490 = vmatmul.mubr.f32.gmra.mrb[0].mxu0 %v647
  %v1491 = vpop.f32.mrb[0].mxu0
  %v1492 = vadd.f32 %v1422, %v1491
  %v1493 = vpop.f32.mrb[0].mxu0
  %1494 = vdwg.mxu0
  %1495 = vmatprep.subr.mxu0 0.0
  %1496 = vmatpush1.msra.mxu0 %v388
  %1497 = vmatprep.subr.mxu0 0.0
  %1498 = vmatpush1.msra.mxu0 %v389
  %1499 = vmatprep.subr.mxu0 0.0
  %1500 = vmatpush1.msra.mxu0 %v390
  %1501 = vmatprep.subr.mxu0 0.0
  %1502 = vmatpush1.msra.mxu0 %v391
  %1503 = vmatprep.subr.mxu0 0.0
  %1504 = vmatpush1.msra.mxu0 %v392
  %1505 = vmatprep.subr.mxu0 0.0
  %1506 = vmatpush1.msra.mxu0 %v393
  %1507 = vmatprep.subr.mxu0 0.0
  %1508 = vmatpush1.msra.mxu0 %v394
  %1509 = vmatprep.subr.mxu0 0.0
  %1510 = vmatpush1.msra.mxu0 %v395
  %1511 = vmatprep.subr.mxu0 0.0
  %1512 = vmatpush1.msra.mxu0 %v396
  %1513 = vmatprep.subr.mxu0 0.0
  %1514 = vmatpush1.msra.mxu0 %v397
  %1515 = vmatprep.subr.mxu0 0.0
  %1516 = vmatpush1.msra.mxu0 %v398
  %1517 = vmatprep.subr.mxu0 0.0
  %1518 = vmatpush1.msra.mxu0 %v399
  %1519 = vmatprep.subr.mxu0 0.0
  %1520 = vmatpush1.msra.mxu0 %v400
  %1521 = vmatprep.subr.mxu0 0.0
  %1522 = vmatpush1.msra.mxu0 %v401
  %1523 = vmatprep.subr.mxu0 0.0
  %1524 = vmatpush1.msra.mxu0 %v402
  %1525 = vmatprep.subr.mxu0 0.0
  %1526 = vmatpush1.msra.mxu0 %v403
  %1527 = vmatprep.subr.mxu0 0.0
  %1528 = vmatpush1.msra.mxu0 %v404
  %1529 = vmatprep.subr.mxu0 0.0
  %1530 = vmatpush1.msra.mxu0 %v405
  %1531 = vmatprep.subr.mxu0 0.0
  %1532 = vmatpush1.msra.mxu0 %v406
  %1533 = vmatprep.subr.mxu0 0.0
  %1534 = vmatpush1.msra.mxu0 %v407
  %1535 = vmatprep.subr.mxu0 0.0
  %1536 = vmatpush1.msra.mxu0 %v408
  %1537 = vmatprep.subr.mxu0 0.0
  %1538 = vmatpush1.msra.mxu0 %v409
  %1539 = vmatprep.subr.mxu0 0.0
  %1540 = vmatpush1.msra.mxu0 %v410
  %1541 = vmatprep.subr.mxu0 0.0
  %1542 = vmatpush1.msra.mxu0 %v411
  %1543 = vmatprep.subr.mxu0 0.0
  %1544 = vmatpush1.msra.mxu0 %v412
  %1545 = vmatprep.subr.mxu0 0.0
  %1546 = vmatpush1.msra.mxu0 %v413
  %1547 = vmatprep.subr.mxu0 0.0
  %1548 = vmatpush1.msra.mxu0 %v414
  %1549 = vmatprep.subr.mxu0 0.0
  %1550 = vmatpush1.msra.mxu0 %v415
  %1551 = vmatprep.subr.mxu0 0.0
  %1552 = vmatpush1.msra.mxu0 %v416
  %1553 = vmatprep.subr.mxu0 0.0
  %1554 = vmatpush1.msra.mxu0 %v417
  %1555 = vmatprep.subr.mxu0 0.0
  %1556 = vmatpush1.msra.mxu0 %v418
  %1557 = vmatprep.subr.mxu0 0.0
  %1558 = vmatpush1.msra.mxu0 %v419
  %1559 = vmatprep.mubr.f32.mxu0 %v656
  %1560 = vmatmul.mubr.f32.gmra.mrb[0].mxu0 %v654
  %v1561 = vpop.f32.mrb[0].mxu0
  %v1562 = vadd.f32 %v1492, %v1561
  %v1563 = vpop.f32.mrb[0].mxu0
  %1564 = vdwg.mxu0
  %1565 = vmatprep.subr.mxu0 0.0
  %1566 = vmatpush1.msra.mxu0 %v420
  %1567 = vmatprep.subr.mxu0 0.0
  %1568 = vmatpush1.msra.mxu0 %v421
  %1569 = vmatprep.subr.mxu0 0.0
  %1570 = vmatpush1.msra.mxu0 %v422
  %1571 = vmatprep.subr.mxu0 0.0
  %1572 = vmatpush1.msra.mxu0 %v423
  %1573 = vmatprep.subr.mxu0 0.0
  %1574 = vmatpush1.msra.mxu0 %v424
  %1575 = vmatprep.subr.mxu0 0.0
  %1576 = vmatpush1.msra.mxu0 %v425
  %1577 = vmatprep.subr.mxu0 0.0
  %1578 = vmatpush1.msra.mxu0 %v426
  %1579 = vmatprep.subr.mxu0 0.0
  %1580 = vmatpush1.msra.mxu0 %v427
  %1581 = vmatprep.subr.mxu0 0.0
  %1582 = vmatpush1.msra.mxu0 %v428
  %1583 = vmatprep.subr.mxu0 0.0
  %1584 = vmatpush1.msra.mxu0 %v429
  %1585 = vmatprep.subr.mxu0 0.0
  %1586 = vmatpush1.msra.mxu0 %v430
  %1587 = vmatprep.subr.mxu0 0.0
  %1588 = vmatpush1.msra.mxu0 %v431
  %1589 = vmatprep.subr.mxu0 0.0
  %1590 = vmatpush1.msra.mxu0 %v432
  %1591 = vmatprep.subr.mxu0 0.0
  %1592 = vmatpush1.msra.mxu0 %v433
  %1593 = vmatprep.subr.mxu0 0.0
  %1594 = vmatpush1.msra.mxu0 %v434
  %1595 = vmatprep.subr.mxu0 0.0
  %1596 = vmatpush1.msra.mxu0 %v435
  %1597 = vmatprep.subr.mxu0 0.0
  %1598 = vmatpush1.msra.mxu0 %v436
  %1599 = vmatprep.subr.mxu0 0.0
  %1600 = vmatpush1.msra.mxu0 %v437
  %1601 = vmatprep.subr.mxu0 0.0
  %1602 = vmatpush1.msra.mxu0 %v438
  %1603 = vmatprep.subr.mxu0 0.0
  %1604 = vmatpush1.msra.mxu0 %v439
  %1605 = vmatprep.subr.mxu0 0.0
  %1606 = vmatpush1.msra.mxu0 %v440
  %1607 = vmatprep.subr.mxu0 0.0
  %1608 = vmatpush1.msra.mxu0 %v441
  %1609 = vmatprep.subr.mxu0 0.0
  %1610 = vmatpush1.msra.mxu0 %v442
  %1611 = vmatprep.subr.mxu0 0.0
  %1612 = vmatpush1.msra.mxu0 %v443
  %1613 = vmatprep.subr.mxu0 0.0
  %1614 = vmatpush1.msra.mxu0 %v444
  %1615 = vmatprep.subr.mxu0 0.0
  %1616 = vmatpush1.msra.mxu0 %v445
  %1617 = vmatprep.subr.mxu0 0.0
  %1618 = vmatpush1.msra.mxu0 %v446
  %1619 = vmatprep.subr.mxu0 0.0
  %1620 = vmatpush1.msra.mxu0 %v447
  %1621 = vmatprep.subr.mxu0 0.0
  %1622 = vmatpush1.msra.mxu0 %v448
  %1623 = vmatprep.subr.mxu0 0.0
  %1624 = vmatpush1.msra.mxu0 %v449
  %1625 = vmatprep.subr.mxu0 0.0
  %1626 = vmatpush1.msra.mxu0 %v450
  %1627 = vmatprep.subr.mxu0 0.0
  %1628 = vmatpush1.msra.mxu0 %v451
  %1629 = vmatprep.mubr.f32.mxu0 %v672
  %1630 = vmatmul.mubr.f32.gmra.mrb[0].mxu0 %v664
  %v1631 = vpop.f32.mrb[0].mxu0
  %v1632 = vadd.f32 %v1562, %v1631
  %v1633 = vpop.f32.mrb[0].mxu0
  %1634 = vdwg.mxu0
  %1635 = vmatprep.subr.mxu0 0.0
  %1636 = vmatpush1.msra.mxu0 %v452
  %1637 = vmatprep.subr.mxu0 0.0
  %1638 = vmatpush1.msra.mxu0 %v453
  %1639 = vmatprep.subr.mxu0 0.0
  %1640 = vmatpush1.msra.mxu0 %v454
  %1641 = vmatprep.subr.mxu0 0.0
  %1642 = vmatpush1.msra.mxu0 %v455
  %1643 = vmatprep.subr.mxu0 0.0
  %1644 = vmatpush1.msra.mxu0 %v456
  %1645 = vmatprep.subr.mxu0 0.0
  %1646 = vmatpush1.msra.mxu0 %v457
  %1647 = vmatprep.subr.mxu0 0.0
  %1648 = vmatpush1.msra.mxu0 %v458
  %1649 = vmatprep.subr.mxu0 0.0
  %1650 = vmatpush1.msra.mxu0 %v459
  %1651 = vmatprep.subr.mxu0 0.0
  %1652 = vmatpush1.msra.mxu0 %v460
  %1653 = vmatprep.subr.mxu0 0.0
  %1654 = vmatpush1.msra.mxu0 %v461
  %1655 = vmatprep.subr.mxu0 0.0
  %1656 = vmatpush1.msra.mxu0 %v462
  %1657 = vmatprep.subr.mxu0 0.0
  %1658 = vmatpush1.msra.mxu0 %v463
  %1659 = vmatprep.subr.mxu0 0.0
  %1660 = vmatpush1.msra.mxu0 %v464
  %1661 = vmatprep.subr.mxu0 0.0
  %1662 = vmatpush1.msra.mxu0 %v465
  %1663 = vmatprep.subr.mxu0 0.0
  %1664 = vmatpush1.msra.mxu0 %v466
  %1665 = vmatprep.subr.mxu0 0.0
  %1666 = vmatpush1.msra.mxu0 %v467
  %1667 = vmatprep.subr.mxu0 0.0
  %1668 = vmatpush1.msra.mxu0 %v468
  %1669 = vmatprep.subr.mxu0 0.0
  %1670 = vmatpush1.msra.mxu0 %v469
  %1671 = vmatprep.subr.mxu0 0.0
  %1672 = vmatpush1.msra.mxu0 %v470
  %1673 = vmatprep.subr.mxu0 0.0
  %1674 = vmatpush1.msra.mxu0 %v471
  %1675 = vmatprep.subr.mxu0 0.0
  %1676 = vmatpush1.msra.mxu0 %v472
  %1677 = vmatprep.subr.mxu0 0.0
  %1678 = vmatpush1.msra.mxu0 %v473
  %1679 = vmatprep.subr.mxu0 0.0
  %1680 = vmatpush1.msra.mxu0 %v474
  %1681 = vmatprep.subr.mxu0 0.0
  %1682 = vmatpush1.msra.mxu0 %v475
  %1683 = vmatprep.subr.mxu0 0.0
  %1684 = vmatpush1.msra.mxu0 %v476
  %1685 = vmatprep.subr.mxu0 0.0
  %1686 = vmatpush1.msra.mxu0 %v477
  %1687 = vmatprep.subr.mxu0 0.0
  %1688 = vmatpush1.msra.mxu0 %v478
  %1689 = vmatprep.subr.mxu0 0.0
  %1690 = vmatpush1.msra.mxu0 %v479
  %1691 = vmatprep.subr.mxu0 0.0
  %1692 = vmatpush1.msra.mxu0 %v480
  %1693 = vmatprep.subr.mxu0 0.0
  %1694 = vmatpush1.msra.mxu0 %v481
  %1695 = vmatprep.subr.mxu0 0.0
  %1696 = vmatpush1.msra.mxu0 %v482
  %1697 = vmatprep.subr.mxu0 0.0
  %1698 = vmatpush1.msra.mxu0 %v483
  %1699 = vmatprep.mubr.f32.mxu0 %v673
  %1700 = vmatmul.mubr.f32.gmra.mrb[0].mxu0 %v671
  %v1701 = vpop.f32.mrb[0].mxu0
  %v1702 = vadd.f32 %v1632, %v1701
  %v1703 = vpop.f32.mrb[0].mxu0
  %1704 = vdwg.mxu0
  %1705 = vmatprep.subr.mxu0 0.0
  %1706 = vmatpush1.msra.mxu0 %v484
  %1707 = vmatprep.subr.mxu0 0.0
  %1708 = vmatpush1.msra.mxu0 %v485
  %1709 = vmatprep.subr.mxu0 0.0
  %1710 = vmatpush1.msra.mxu0 %v486
  %1711 = vmatprep.subr.mxu0 0.0
  %1712 = vmatpush1.msra.mxu0 %v487
  %1713 = vmatprep.subr.mxu0 0.0
  %1714 = vmatpush1.msra.mxu0 %v488
  %1715 = vmatprep.subr.mxu0 0.0
  %1716 = vmatpush1.msra.mxu0 %v489
  %1717 = vmatprep.subr.mxu0 0.0
  %1718 = vmatpush1.msra.mxu0 %v490
  %1719 = vmatprep.subr.mxu0 0.0
  %1720 = vmatpush1.msra.mxu0 %v491
  %1721 = vmatprep.subr.mxu0 0.0
  %1722 = vmatpush1.msra.mxu0 %v492
  %1723 = vmatprep.subr.mxu0 0.0
  %1724 = vmatpush1.msra.mxu0 %v493
  %1725 = vmatprep.subr.mxu0 0.0
  %1726 = vmatpush1.msra.mxu0 %v494
  %1727 = vmatprep.subr.mxu0 0.0
  %1728 = vmatpush1.msra.mxu0 %v495
  %1729 = vmatprep.subr.mxu0 0.0
  %1730 = vmatpush1.msra.mxu0 %v496
  %1731 = vmatprep.subr.mxu0 0.0
  %1732 = vmatpush1.msra.mxu0 %v497
  %1733 = vmatprep.subr.mxu0 0.0
  %1734 = vmatpush1.msra.mxu0 %v498
  %1735 = vmatprep.subr.mxu0 0.0
  %1736 = vmatpush1.msra.mxu0 %v499
  %1737 = vmatprep.subr.mxu0 0.0
  %1738 = vmatpush1.msra.mxu0 %v500
  %1739 = vmatprep.subr.mxu0 0.0
  %1740 = vmatpush1.msra.mxu0 %v501
  %1741 = vmatprep.subr.mxu0 0.0
  %1742 = vmatpush1.msra.mxu0 %v502
  %1743 = vmatprep.subr.mxu0 0.0
  %1744 = vmatpush1.msra.mxu0 %v503
  %1745 = vmatprep.subr.mxu0 0.0
  %1746 = vmatpush1.msra.mxu0 %v504
  %1747 = vmatprep.subr.mxu0 0.0
  %1748 = vmatpush1.msra.mxu0 %v505
  %1749 = vmatprep.subr.mxu0 0.0
  %1750 = vmatpush1.msra.mxu0 %v506
  %1751 = vmatprep.subr.mxu0 0.0
  %1752 = vmatpush1.msra.mxu0 %v507
  %1753 = vmatprep.subr.mxu0 0.0
  %1754 = vmatpush1.msra.mxu0 %v508
  %1755 = vmatprep.subr.mxu0 0.0
  %1756 = vmatpush1.msra.mxu0 %v509
  %1757 = vmatprep.subr.mxu0 0.0
  %1758 = vmatpush1.msra.mxu0 %v510
  %1759 = vmatprep.subr.mxu0 0.0
  %1760 = vmatpush1.msra.mxu0 %v511
  %1761 = vmatprep.subr.mxu0 0.0
  %1762 = vmatpush1.msra.mxu0 %v512
  %1763 = vmatprep.subr.mxu0 0.0
  %1764 = vmatpush1.msra.mxu0 %v513
  %1765 = vmatprep.subr.mxu0 0.0
  %1766 = vmatpush1.msra.mxu0 %v514
  %1767 = vmatprep.subr.mxu0 0.0
  %1768 = vmatpush1.msra.mxu0 %v515
  %1769 = vmatprep.mubr.f32.mxu0 %v689
  %1770 = vmatmul.mubr.f32.gmra.mrb[0].mxu0 %v681
  %v1771 = vpop.f32.mrb[0].mxu0
  %v1772 = vadd.f32 %v1702, %v1771
  %v1773 = vpop.f32.mrb[0].mxu0
  %1774 = vdwg.mxu0
  %1775 = vmatprep.subr.mxu0 0.0
  %1776 = vmatpush1.msra.mxu0 %v516
  %1777 = vmatprep.subr.mxu0 0.0
  %1778 = vmatpush1.msra.mxu0 %v517
  %1779 = vmatprep.subr.mxu0 0.0
  %1780 = vmatpush1.msra.mxu0 %v518
  %1781 = vmatprep.subr.mxu0 0.0
  %1782 = vmatpush1.msra.mxu0 %v519
  %1783 = vmatprep.subr.mxu0 0.0
  %1784 = vmatpush1.msra.mxu0 %v520
  %1785 = vmatprep.subr.mxu0 0.0
  %1786 = vmatpush1.msra.mxu0 %v521
  %1787 = vmatprep.subr.mxu0 0.0
  %1788 = vmatpush1.msra.mxu0 %v522
  %1789 = vmatprep.subr.mxu0 0.0
  %1790 = vmatpush1.msra.mxu0 %v523
  %1791 = vmatprep.subr.mxu0 0.0
  %1792 = vmatpush1.msra.mxu0 %v524
  %1793 = vmatprep.subr.mxu0 0.0
  %1794 = vmatpush1.msra.mxu0 %v525
  %1795 = vmatprep.subr.mxu0 0.0
  %1796 = vmatpush1.msra.mxu0 %v526
  %1797 = vmatprep.subr.mxu0 0.0
  %1798 = vmatpush1.msra.mxu0 %v527
  %1799 = vmatprep.subr.mxu0 0.0
  %1800 = vmatpush1.msra.mxu0 %v528
  %1801 = vmatprep.subr.mxu0 0.0
  %1802 = vmatpush1.msra.mxu0 %v529
  %1803 = vmatprep.subr.mxu0 0.0
  %1804 = vmatpush1.msra.mxu0 %v530
  %1805 = vmatprep.subr.mxu0 0.0
  %1806 = vmatpush1.msra.mxu0 %v531
  %1807 = vmatprep.subr.mxu0 0.0
  %1808 = vmatpush1.msra.mxu0 %v532
  %1809 = vmatprep.subr.mxu0 0.0
  %1810 = vmatpush1.msra.mxu0 %v533
  %1811 = vmatprep.subr.mxu0 0.0
  %1812 = vmatpush1.msra.mxu0 %v534
  %1813 = vmatprep.subr.mxu0 0.0
  %1814 = vmatpush1.msra.mxu0 %v535
  %1815 = vmatprep.subr.mxu0 0.0
  %1816 = vmatpush1.msra.mxu0 %v536
  %1817 = vmatprep.subr.mxu0 0.0
  %1818 = vmatpush1.msra.mxu0 %v537
  %1819 = vmatprep.subr.mxu0 0.0
  %1820 = vmatpush1.msra.mxu0 %v538
  %1821 = vmatprep.subr.mxu0 0.0
  %1822 = vmatpush1.msra.mxu0 %v539
  %1823 = vmatprep.subr.mxu0 0.0
  %1824 = vmatpush1.msra.mxu0 0.0
  %1825 = vmatprep.subr.mxu0 0.0
  %1826 = vmatpush1.msra.mxu0 0.0
  %1827 = vmatprep.subr.mxu0 0.0
  %1828 = vmatpush1.msra.mxu0 0.0
  %1829 = vmatprep.subr.mxu0 0.0
  %1830 = vmatpush1.msra.mxu0 0.0
  %1831 = vmatprep.subr.mxu0 0.0
  %1832 = vmatpush1.msra.mxu0 0.0
  %1833 = vmatprep.subr.mxu0 0.0
  %1834 = vmatpush1.msra.mxu0 0.0
  %1835 = vmatprep.subr.mxu0 0.0
  %1836 = vmatpush1.msra.mxu0 0.0
  %1837 = vmatprep.subr.mxu0 0.0
  %1838 = vmatpush1.msra.mxu0 0.0
  %1839 = vmatprep.mubr.f32.mxu0 %v723
  %1840 = vmatmul.mubr.f32.gmra.mrb[0].mxu0 %v688
  %v1841 = vpop.f32.mrb[0].mxu0
  %v1842 = vadd.f32 %v1772, %v1841
  %v1843 = vpop.f32.mrb[0].mxu0
  %1844 = vdwg.mxu0
  %v1845 = vmax.f32 %v1842, 0.0
  %v1846 = vld [vmem:[%s3] sm:$0xff]
  %v1847 = vld [vmem:[%s3 + $0x8] sm:$0xff]
  %v1848 = vld [vmem:[%s3 + $0x10] sm:$0xff]
  %v1849 = vld [vmem:[%s4] sm:$0x1]
  %v1851 = vlaneseq
  %v1852 = vshrl.u32 %v1851, 7
  %v1853 = vsub.s32 0, %v1852
  %v1854 = vrot.slane %v1849, %v1853
  %vm1856 = vcmask 195584
  %v1858 = vsel %vm1856, %v1845, 0
  %1860 = vmatprep.subr.mxu0 0.0
  %1861 = vmatpush1.msra.mxu0 %v1846
  %1862 = vmatprep.subr.mxu0 0.0
  %1863 = vmatpush1.msra.mxu0 %v1847
  %1864 = vmatprep.subr.mxu0 0.0
  %1865 = vmatpush1.msra.mxu0 %v1848
  %1866 = vmatprep.subr.mxu0 0.0
  %1867 = vmatpush1.msra.mxu0 0.0
  %1868 = vmatprep.subr.mxu0 0.0
  %1869 = vmatpush1.msra.mxu0 0.0
  %1870 = vmatprep.subr.mxu0 0.0
  %1871 = vmatpush1.msra.mxu0 0.0
  %1872 = vmatprep.subr.mxu0 0.0
  %1873 = vmatpush1.msra.mxu0 0.0
  %1874 = vmatprep.subr.mxu0 0.0
  %1875 = vmatpush1.msra.mxu0 0.0
  %1876 = vmatprep.subr.mxu0 0.0
  %1877 = vmatpush1.msra.mxu0 0.0
  %1878 = vmatprep.subr.mxu0 0.0
  %1879 = vmatpush1.msra.mxu0 0.0
  %1880 = vmatprep.subr.mxu0 0.0
  %1881 = vmatpush1.msra.mxu0 0.0
  %1882 = vmatprep.subr.mxu0 0.0
  %1883 = vmatpush1.msra.mxu0 0.0
  %1884 = vmatprep.subr.mxu0 0.0
  %1885 = vmatpush1.msra.mxu0 0.0
  %1886 = vmatprep.subr.mxu0 0.0
  %1887 = vmatpush1.msra.mxu0 0.0
  %1888 = vmatprep.subr.mxu0 0.0
  %1889 = vmatpush1.msra.mxu0 0.0
  %1890 = vmatprep.subr.mxu0 0.0
  %1891 = vmatpush1.msra.mxu0 0.0
  %1892 = vmatprep.subr.mxu0 0.0
  %1893 = vmatpush1.msra.mxu0 0.0
  %1894 = vmatprep.subr.mxu0 0.0
  %1895 = vmatpush1.msra.mxu0 0.0
  %1896 = vmatprep.subr.mxu0 0.0
  %1897 = vmatpush1.msra.mxu0 0.0
  %1898 = vmatprep.subr.mxu0 0.0
  %1899 = vmatpush1.msra.mxu0 0.0
  %1900 = vmatprep.subr.mxu0 0.0
  %1901 = vmatpush1.msra.mxu0 0.0
  %1902 = vmatprep.subr.mxu0 0.0
  %1903 = vmatpush1.msra.mxu0 0.0
  %1904 = vmatprep.subr.mxu0 0.0
  %1905 = vmatpush1.msra.mxu0 0.0
  %1906 = vmatprep.subr.mxu0 0.0
  %1907 = vmatpush1.msra.mxu0 0.0
  %1908 = vmatprep.subr.mxu0 0.0
  %1909 = vmatpush1.msra.mxu0 0.0
  %1910 = vmatprep.subr.mxu0 0.0
  %1911 = vmatpush1.msra.mxu0 0.0
  %1912 = vmatprep.subr.mxu0 0.0
  %1913 = vmatpush1.msra.mxu0 0.0
  %1914 = vmatprep.subr.mxu0 0.0
  %1915 = vmatpush1.msra.mxu0 0.0
  %1916 = vmatprep.subr.mxu0 0.0
  %1917 = vmatpush1.msra.mxu0 0.0
  %1918 = vmatprep.subr.mxu0 0.0
  %1919 = vmatpush1.msra.mxu0 0.0
  %1920 = vmatprep.subr.mxu0 0.0
  %1921 = vmatpush1.msra.mxu0 0.0
  %1922 = vmatprep.subr.mxu0 0.0
  %1923 = vmatpush1.msra.mxu0 0.0
  %1924 = vmatprep.mubr.f32.mxu0 0.0
  %1925 = vmatmul.mubr.f32.gmra.mrb[0].mxu0 %v1858
  %v1926 = vpop.f32.mrb[0].mxu0
  %v1927 = vadd.f32 %v1854, %v1926
  %v1928 = vpop.f32.mrb[0].mxu0
  %1929 = vdwg.mxu0
  %v1930 = vmax.f32 %v1927, 0.0
  %v1931 = vld [vmem:[%s5] sm:$0xff]
  %v1932 = vld [vmem:[%s5 + $0x8] sm:$0xff]
  %v1933 = vld [vmem:[%s5 + $0x10] sm:$0xf]
  %v1934 = vld [vmem:[#allocation2] sm:$0x1]
  %v1936 = vlaneseq
  %v1937 = vshrl.u32 %v1936, 7
  %v1938 = vsub.s32 0, %v1937
  %v1939 = vrot.slane %v1934, %v1938
  %vm1941 = vcmask 162816
  %v1943 = vsel %vm1941, %v1930, 0
  %vm1945 = vcmask 1043456
  %v1947 = vsel %vm1945, %v1933, 0
  %1949 = vmatprep.subr.mxu0 0.0
  %1950 = vmatpush1.msra.mxu0 %v1931
  %1951 = vmatprep.subr.mxu0 0.0
  %1952 = vmatpush1.msra.mxu0 %v1932
  %1953 = vmatprep.subr.mxu0 0.0
  %1954 = vmatpush1.msra.mxu0 %v1947
  %1955 = vmatprep.subr.mxu0 0.0
  %1956 = vmatpush1.msra.mxu0 0.0
  %1957 = vmatprep.subr.mxu0 0.0
  %1958 = vmatpush1.msra.mxu0 0.0
  %1959 = vmatprep.subr.mxu0 0.0
  %1960 = vmatpush1.msra.mxu0 0.0
  %1961 = vmatprep.subr.mxu0 0.0
  %1962 = vmatpush1.msra.mxu0 0.0
  %1963 = vmatprep.subr.mxu0 0.0
  %1964 = vmatpush1.msra.mxu0 0.0
  %1965 = vmatprep.subr.mxu0 0.0
  %1966 = vmatpush1.msra.mxu0 0.0
  %1967 = vmatprep.subr.mxu0 0.0
  %1968 = vmatpush1.msra.mxu0 0.0
  %1969 = vmatprep.subr.mxu0 0.0
  %1970 = vmatpush1.msra.mxu0 0.0
  %1971 = vmatprep.subr.mxu0 0.0
  %1972 = vmatpush1.msra.mxu0 0.0
  %1973 = vmatprep.subr.mxu0 0.0
  %1974 = vmatpush1.msra.mxu0 0.0
  %1975 = vmatprep.subr.mxu0 0.0
  %1976 = vmatpush1.msra.mxu0 0.0
  %1977 = vmatprep.subr.mxu0 0.0
  %1978 = vmatpush1.msra.mxu0 0.0
  %1979 = vmatprep.subr.mxu0 0.0
  %1980 = vmatpush1.msra.mxu0 0.0
  %1981 = vmatprep.subr.mxu0 0.0
  %1982 = vmatpush1.msra.mxu0 0.0
  %1983 = vmatprep.subr.mxu0 0.0
  %1984 = vmatpush1.msra.mxu0 0.0
  %1985 = vmatprep.subr.mxu0 0.0
  %1986 = vmatpush1.msra.mxu0 0.0
  %1987 = vmatprep.subr.mxu0 0.0
  %1988 = vmatpush1.msra.mxu0 0.0
  %1989 = vmatprep.subr.mxu0 0.0
  %1990 = vmatpush1.msra.mxu0 0.0
  %1991 = vmatprep.subr.mxu0 0.0
  %1992 = vmatpush1.msra.mxu0 0.0
  %1993 = vmatprep.subr.mxu0 0.0
  %1994 = vmatpush1.msra.mxu0 0.0
  %1995 = vmatprep.subr.mxu0 0.0
  %1996 = vmatpush1.msra.mxu0 0.0
  %1997 = vmatprep.subr.mxu0 0.0
  %1998 = vmatpush1.msra.mxu0 0.0
  %1999 = vmatprep.subr.mxu0 0.0
  %2000 = vmatpush1.msra.mxu0 0.0
  %2001 = vmatprep.subr.mxu0 0.0
  %2002 = vmatpush1.msra.mxu0 0.0
  %2003 = vmatprep.subr.mxu0 0.0
  %2004 = vmatpush1.msra.mxu0 0.0
  %2005 = vmatprep.subr.mxu0 0.0
  %2006 = vmatpush1.msra.mxu0 0.0
  %2007 = vmatprep.subr.mxu0 0.0
  %2008 = vmatpush1.msra.mxu0 0.0
  %2009 = vmatprep.subr.mxu0 0.0
  %2010 = vmatpush1.msra.mxu0 0.0
  %2011 = vmatprep.subr.mxu0 0.0
  %2012 = vmatpush1.msra.mxu0 0.0
  %2013 = vmatprep.mubr.f32.mxu0 0.0
  %2014 = vmatmul.mubr.f32.gmra.mrb[0].mxu0 %v1943
  %v2015 = vpop.f32.mrb[0].mxu0
  %v2016 = vadd.f32 %v1939, %v2015
  %v2017 = vpop.f32.mrb[0].mxu0
  %2018 = vdwg.mxu0
  %vm2019 = vcmask 1024
  %2020 = vst.msk [vmem:[%s7] sm:$0x3] %vm2019, %v2016
  // Predicated region
  $region30: #{cnn_forward.5} parent=0 // pred_check
    _
  $region31: #{cnn_forward.5} parent=0 // pred_check_branch
    %2022 = sbr.rel (0) target = $region33
  $region32: #{cnn_forward.5} parent=0 // pred_region
    _
  $region33: #{cnn_forward.5} parent=0 // pred_fallthru
    _
  // Predicated region
  $region34: #{cnn_forward.5} parent=0 // pred_check
    _
  $region35: #{cnn_forward.5} parent=0 // pred_check_branch
    %2024 = sbr.rel (0) target = $region37
  $region36: #{cnn_forward.5} parent=0 // pred_region
    _
  $region37: #{cnn_forward.5} parent=0 // pred_fallthru
    _

</llo_original>
